<compile_context>
chip_gen: v6e
topology: v6e:2x2x1
jax: 0.10.0
libtpu: 0.0.40
codegen_flags: <defaults>
</compile_context>

<pallas_src>
import functools

import jax
import jax.numpy as jnp
from jax.experimental import pallas as pl
from jax.experimental.pallas import tpu as pltpu


# ----------------------------------------------------------------------------
# Pallas kernels
# ----------------------------------------------------------------------------

def _conv_gemm_kernel(w_ref, b_ref, col_ref, o_ref, *, relu):
    # w_ref: (Cout, K) bf16, b_ref: (Cout, 1) f32, col_ref: (1, K, tn) bf16
    acc = jnp.dot(w_ref[...], col_ref[0], preferred_element_type=jnp.float32)
    acc = acc + b_ref[...]
    if relu:
        acc = jnp.maximum(acc, 0.0)
    o_ref[0] = acc.astype(o_ref.dtype)


def _conv_cls_kernel(w_ref, b_ref, cw_ref, cb_ref, col_ref, f_ref, l_ref):
    # dec1 conv (+ReLU) with the 1x1 classifier fused in the epilogue (tile stays in VMEM).
    acc = jnp.dot(w_ref[...], col_ref[0], preferred_element_type=jnp.float32)
    acc = jnp.maximum(acc + b_ref[...], 0.0)                    # (C1, tn) f32
    f_ref[0] = acc.astype(f_ref.dtype)
    logits = jnp.dot(cw_ref[...], acc, preferred_element_type=jnp.float32) + cb_ref[...]
    l_ref[0] = logits.astype(l_ref.dtype)


def _proto_kernel(logits_ref, feat_ref, sum_ref, cnt_ref):
    # logits_ref: (1, K, HW), feat_ref: (1, C, HW)  -- channel-major, HW lane-dense.
    lg = logits_ref[0]                                          # (K, HW)
    ft = feat_ref[0]                                            # (C, HW)
    k, hw = lg.shape
    iota = jax.lax.broadcasted_iota(jnp.int32, (k, hw), 0)
    mx = jnp.max(lg, axis=0, keepdims=True)                     # (1, HW)
    # first-occurrence argmax over the class axis (matches torch.argmax tie behavior)
    first = jnp.min(jnp.where(lg >= mx, iota, k), axis=0, keepdims=True)
    onehot = (iota == first).astype(jnp.float32)                # (K, HW)
    sums = jax.lax.dot_general(onehot, ft, (((1,), (1,)), ((), ())),
                               preferred_element_type=jnp.float32)   # (K, C)
    sum_ref[0] = sums
    cnt_ref[0] = jnp.sum(onehot, axis=1, keepdims=True)         # (K, 1)


def _sim_weight_kernel(feat_ref, proto_ref, sim_ref, w_ref, wmax_ref, fw_ref):
    # Fused: cosine similarity + softmax over classes + max-weight feature mixing.
    f = feat_ref[0]                                             # (C, HW) f32
    p = proto_ref[0]                                            # (K, C)  f32
    fn = f * jax.lax.rsqrt(jnp.maximum(jnp.sum(f * f, axis=0, keepdims=True), 1e-24))
    pn = p * jax.lax.rsqrt(jnp.maximum(jnp.sum(p * p, axis=1, keepdims=True), 1e-24))
    sim = jnp.dot(pn, fn, preferred_element_type=jnp.float32)   # (K, HW) lane-dense
    sim_ref[0] = sim
    m = jnp.max(sim, axis=0, keepdims=True)
    e = jnp.exp(sim - m)
    w = e * pl.reciprocal(jnp.sum(e, axis=0, keepdims=True), approx=True)
    w_ref[0] = w
    wmax = jnp.max(w, axis=0, keepdims=True)                    # (1, HW)
    wmax_ref[0] = wmax
    fw_ref[0] = (f + wmax) * 0.5


# ----------------------------------------------------------------------------
# Pallas wrappers
# ----------------------------------------------------------------------------

def _pick_tile(m):
    """Largest M tile that is a multiple of 128 and divides M; else the full extent."""
    if m % 128 == 0:
        for t in (1024, 512, 256, 128):
            if t <= m and m % t == 0:
                return t
    return m


def conv_gemm(wm, bias, colT, relu=False, out_dtype=jnp.bfloat16):
    """out[b, :, m] = wm(Cout,K) @ colT[b](K,M) + bias  (+ReLU).  M lane-dense."""
    Cout, K = wm.shape
    B, _, M = colT.shape
    tn = _pick_tile(M)
    return pl.pallas_call(
        functools.partial(_conv_gemm_kernel, relu=relu),
        out_shape=jax.ShapeDtypeStruct((B, Cout, M), out_dtype),
        grid=(B, M // tn),
        in_specs=[
            pl.BlockSpec((Cout, K), lambda b, m: (0, 0)),
            pl.BlockSpec((Cout, 1), lambda b, m: (0, 0)),
            pl.BlockSpec((1, K, tn), lambda b, m: (b, 0, m)),
        ],
        out_specs=pl.BlockSpec((1, Cout, tn), lambda b, m: (b, 0, m)),
        compiler_params=pltpu.CompilerParams(
            dimension_semantics=("parallel", "parallel")),
    )(wm, bias.reshape(Cout, 1), colT)


def conv_gemm_cls(wm, bias, cls_w, cls_b, colT):
    """dec1 conv (+ReLU) with the classifier 1x1 fused; returns (features, logits) f32."""
    C1, K = wm.shape
    Kc, _ = cls_w.shape
    B, _, M = colT.shape
    tn = _pick_tile(M)
    return pl.pallas_call(
        _conv_cls_kernel,
        out_shape=(jax.ShapeDtypeStruct((B, C1, M), jnp.float32),
                   jax.ShapeDtypeStruct((B, Kc, M), jnp.float32)),
        grid=(B, M // tn),
        in_specs=[
            pl.BlockSpec((C1, K), lambda b, m: (0, 0)),
            pl.BlockSpec((C1, 1), lambda b, m: (0, 0)),
            pl.BlockSpec((Kc, C1), lambda b, m: (0, 0)),
            pl.BlockSpec((Kc, 1), lambda b, m: (0, 0)),
            pl.BlockSpec((1, K, tn), lambda b, m: (b, 0, m)),
        ],
        out_specs=(pl.BlockSpec((1, C1, tn), lambda b, m: (b, 0, m)),
                   pl.BlockSpec((1, Kc, tn), lambda b, m: (b, 0, m))),
        compiler_params=pltpu.CompilerParams(
            dimension_semantics=("parallel", "parallel")),
    )(wm, bias.reshape(C1, 1), cls_w, cls_b.reshape(Kc, 1), colT)


def class_prototype_sums(logits_kh, feat_ch):
    B, K, HW = logits_kh.shape
    _, C, _ = feat_ch.shape
    return pl.pallas_call(
        _proto_kernel,
        out_shape=(jax.ShapeDtypeStruct((B, K, C), jnp.float32),
                   jax.ShapeDtypeStruct((B, K, 1), jnp.float32)),
        grid=(B,),
        in_specs=[
            pl.BlockSpec((1, K, HW), lambda b: (b, 0, 0)),
            pl.BlockSpec((1, C, HW), lambda b: (b, 0, 0)),
        ],
        out_specs=(pl.BlockSpec((1, K, C), lambda b: (b, 0, 0)),
                   pl.BlockSpec((1, K, 1), lambda b: (b, 0, 0))),
        compiler_params=pltpu.CompilerParams(dimension_semantics=("parallel",)),
    )(logits_kh, feat_ch)


def sim_softmax_weight(feat_ch, proto_kc):
    B, C, HW = feat_ch.shape
    _, K, _ = proto_kc.shape
    return pl.pallas_call(
        _sim_weight_kernel,
        out_shape=(jax.ShapeDtypeStruct((B, K, HW), jnp.float32),
                   jax.ShapeDtypeStruct((B, K, HW), jnp.float32),
                   jax.ShapeDtypeStruct((B, 1, HW), jnp.float32),
                   jax.ShapeDtypeStruct((B, C, HW), jnp.float32)),
        grid=(B,),
        in_specs=[
            pl.BlockSpec((1, C, HW), lambda b: (b, 0, 0)),
            pl.BlockSpec((1, K, C), lambda b: (b, 0, 0)),
        ],
        out_specs=(pl.BlockSpec((1, K, HW), lambda b: (b, 0, 0)),
                   pl.BlockSpec((1, K, HW), lambda b: (b, 0, 0)),
                   pl.BlockSpec((1, 1, HW), lambda b: (b, 0, 0)),
                   pl.BlockSpec((1, C, HW), lambda b: (b, 0, 0))),
        compiler_params=pltpu.CompilerParams(dimension_semantics=("parallel",)),
    )(feat_ch, proto_kc)


# ----------------------------------------------------------------------------
# Glue: channel-major im2col, pooling, matrix-form bilinear resize
# ----------------------------------------------------------------------------

def _im2col_T(x, kh, kw, stride, padding, dilation):
    """(B,C,H,W) -> (B, C*KH*KW, OH*OW) channel-major (no transposes, no M-padding)."""
    B, C, H, W = x.shape
    OH = (H + 2 * padding - dilation * (kh - 1) - 1) // stride + 1
    OW = (W + 2 * padding - dilation * (kw - 1) - 1) // stride + 1
    xp = jnp.pad(x, ((0, 0), (0, 0), (padding, padding), (padding, padding)))
    cols = []
    for i in range(kh):
        for j in range(kw):
            h0, w0 = i * dilation, j * dilation
            patch = jax.lax.slice(
                xp, (0, 0, h0, w0),
                (B, C, h0 + (OH - 1) * stride + 1, w0 + (OW - 1) * stride + 1),
                (1, 1, stride, stride))                         # (B, C, OH, OW)
            cols.append(patch)
    col = jnp.stack(cols, axis=2)                               # (B, C, KH*KW, OH, OW)
    return col.reshape(B, C * kh * kw, OH * OW), OH, OW


def conv2d(x, w, b, stride=1, padding=0, dilation=1, relu=False, out_dtype=jnp.bfloat16):
    """NCHW conv; GEMM runs lane-dense in the Pallas kernel, bf16 operands / f32 acc."""
    B = x.shape[0]
    Cout, Cin, KH, KW = w.shape
    if KH == 1 and KW == 1 and stride == 1 and padding == 0:
        colT, OH, OW = x.reshape(B, Cin, x.shape[2] * x.shape[3]), x.shape[2], x.shape[3]
    else:
        colT, OH, OW = _im2col_T(x, KH, KW, stride, padding, dilation)
    wm = w.reshape(Cout, Cin * KH * KW).astype(jnp.bfloat16)
    out = conv_gemm(wm, b.astype(jnp.float32), colT.astype(jnp.bfloat16),
                    relu=relu, out_dtype=out_dtype)
    return out.reshape(B, Cout, OH, OW)


def maxpool2d(x, k=3, s=2, p=1):
    return jax.lax.reduce_window(
        x, jnp.array(-jnp.inf, x.dtype), jax.lax.max,
        (1, 1, k, k), (1, 1, s, s), ((0, 0), (0, 0), (p, p), (p, p)))


def _interp_matrix(in_size, out_size):
    """align_corners=True bilinear interpolation as a dense (out,in) matrix."""
    if in_size == 1:
        return jnp.ones((out_size, 1), jnp.float32)
    if out_size == 1:
        return jnp.zeros((1, in_size), jnp.float32).at[0, 0].set(1.0)
    pos = jnp.arange(out_size, dtype=jnp.float32) * ((in_size - 1) / (out_size - 1))
    lo = jnp.clip(jnp.floor(pos).astype(jnp.int32), 0, in_size - 2)
    frac = pos - lo.astype(jnp.float32)
    oh_lo = jax.nn.one_hot(lo, in_size, dtype=jnp.float32)
    oh_hi = jax.nn.one_hot(lo + 1, in_size, dtype=jnp.float32)
    return oh_lo * (1.0 - frac)[:, None] + oh_hi * frac[:, None]


def bilinear_resize_ac(x, out_h, out_w):
    """F.interpolate(mode='bilinear', align_corners=True) via two small matmuls."""
    B, C, H, W = x.shape
    if (H, W) == (out_h, out_w):
        return x
    Rm = _interp_matrix(H, out_h)
    Cm = _interp_matrix(W, out_w)
    y = jnp.einsum('oh,bchw->bcow', Rm, x.astype(jnp.float32))
    y = jnp.einsum('pw,bcow->bcop', Cm, y)
    return y.astype(x.dtype)


# ----------------------------------------------------------------------------
# Parameters (deterministic, reduced channel counts)
# ----------------------------------------------------------------------------

NUM_CLASSES = 6
C_LOW = 16      # stand-in for resnet stem's 64
C_BACK = 64     # stand-in for resnet50's 2048
C_ASPP = 32     # stand-in for 256
C_DEC0 = 32     # stand-in for 256
C_DEC1 = 16     # stand-in for 128


def _fold_bn(w, b, gamma, beta, mean, var, eps=1e-5):
    scale = gamma / jnp.sqrt(var + eps)
    w_f = w * scale[:, None, None, None]
    b0 = b if b is not None else jnp.zeros_like(mean)
    b_f = (b0 - mean) * scale + beta
    return w_f, b_f


def init_params(key):
    keys = iter(jax.random.split(key, 128))

    def nrm(shape, scale=0.1):
        return scale * jax.random.normal(next(keys), shape, jnp.float32)

    def bn(c):
        g = 1.0 + 0.1 * jax.random.normal(next(keys), (c,), jnp.float32)
        b = 0.1 * jax.random.normal(next(keys), (c,), jnp.float32)
        m = 0.1 * jax.random.normal(next(keys), (c,), jnp.float32)
        v = 0.5 + jax.random.uniform(next(keys), (c,), jnp.float32)
        return g, b, m, v

    p = {}
    # backbone stand-in: stem (= backbone[0:4]) + 3 stride-2 stages
    p['stem_w'], p['stem_b'] = _fold_bn(nrm((C_LOW, 3, 7, 7)), None, *bn(C_LOW))
    chans = [C_LOW, 32, 48, C_BACK]
    for i in range(3):
        p[f'bb{i}_w'], p[f'bb{i}_b'] = _fold_bn(nrm((chans[i + 1], chans[i], 3, 3)), None, *bn(chans[i + 1]))
    # ASPP
    p['aspp1_w'], p['aspp1_b'] = nrm((C_ASPP, C_BACK, 1, 1)), nrm((C_ASPP,))
    p['aspp6_w'], p['aspp6_b'] = nrm((C_ASPP, C_BACK, 3, 3)), nrm((C_ASPP,))
    p['aspp12_w'], p['aspp12_b'] = nrm((C_ASPP, C_BACK, 3, 3)), nrm((C_ASPP,))
    p['aspp18_w'], p['aspp18_b'] = nrm((C_ASPP, C_BACK, 3, 3)), nrm((C_ASPP,))
    p['asppgp_w'], p['asppgp_b'] = nrm((C_ASPP, C_BACK, 1, 1)), nrm((C_ASPP,))
    p['asppc_w'], p['asppc_b'] = _fold_bn(nrm((C_ASPP, C_ASPP * 5, 1, 1)), nrm((C_ASPP,)), *bn(C_ASPP))
    # decoder (bias=False convs + BN folded)
    p['dec0_w'], p['dec0_b'] = _fold_bn(nrm((C_DEC0, C_ASPP + C_LOW, 3, 3)), None, *bn(C_DEC0))
    p['dec1_w'], p['dec1_b'] = _fold_bn(nrm((C_DEC1, C_DEC0, 3, 3)), None, *bn(C_DEC1))
    # classifier
    p['cls_w'], p['cls_b'] = nrm((NUM_CLASSES, C_DEC1, 1, 1)), nrm((NUM_CLASSES,))
    return p


# ----------------------------------------------------------------------------
# Forward pass
# ----------------------------------------------------------------------------

def forward(params, x):
    B, _, H, W = x.shape
    xb = x.astype(jnp.bfloat16)

    # ---- backbone stand-in ----
    stem = conv2d(xb, params['stem_w'], params['stem_b'], stride=2, padding=3, relu=True)
    stem = maxpool2d(stem)                                    # (B, C_LOW, H/4, W/4) == backbone[0:4]
    low_level_feat = stem
    feat = stem
    for i in range(3):
        feat = conv2d(feat, params[f'bb{i}_w'], params[f'bb{i}_b'], stride=2, padding=1, relu=True)
    x1 = feat                                                 # (B, C_BACK, H/32, W/32)

    # ---- ASPP ----
    a1 = conv2d(x1, params['aspp1_w'], params['aspp1_b'])
    a2 = conv2d(x1, params['aspp6_w'], params['aspp6_b'], padding=6, dilation=6)
    a3 = conv2d(x1, params['aspp12_w'], params['aspp12_b'], padding=12, dilation=12)
    a4 = conv2d(x1, params['aspp18_w'], params['aspp18_b'], padding=18, dilation=18)
    gp = jnp.mean(x1.astype(jnp.float32), axis=(2, 3), keepdims=True).astype(jnp.bfloat16)
    a5 = conv2d(gp, params['asppgp_w'], params['asppgp_b'])
    a5 = bilinear_resize_ac(a5, a4.shape[2], a4.shape[3])
    cat = jnp.concatenate([a1, a2, a3, a4, a5], axis=1)
    x2 = conv2d(cat, params['asppc_w'], params['asppc_b'], relu=True)    # conv1 + BN + ReLU

    # ---- decoder ----
    x2 = bilinear_resize_ac(x2, H // 4, W // 4)
    low = bilinear_resize_ac(low_level_feat, H // 4, W // 4)
    xcat = jnp.concatenate([x2, low], axis=1)
    d = conv2d(xcat, params['dec0_w'], params['dec0_b'], padding=1, relu=True)

    # ---- dec1 conv + classifier, fused in one Pallas kernel ----
    colT, Hf, Wf = _im2col_T(d, 3, 3, 1, 1, 1)
    feat_flat, logits_flat = conv_gemm_cls(
        params['dec1_w'].reshape(C_DEC1, -1).astype(jnp.bfloat16),
        params['dec1_b'].astype(jnp.float32),
        params['cls_w'].reshape(NUM_CLASSES, C_DEC1).astype(jnp.float32),
        params['cls_b'].astype(jnp.float32),
        colT.astype(jnp.bfloat16))
    HW = Hf * Wf
    assp_features = feat_flat.reshape(B, C_DEC1, Hf, Wf)      # f32
    logits = logits_flat.reshape(B, NUM_CLASSES, Hf, Wf)      # f32 ('out' / pseudo labels)

    # ---- class prototypes (masked mean per argmax class), channel-major head ----
    sums, cnts = class_prototype_sums(logits_flat, feat_flat)  # (B,K,C), (B,K,1)
    cnts2 = cnts[..., 0]                                       # (B, K)
    total = jnp.sum(cnts2, axis=0)                             # (K,)  -- global gate over batch
    proto = jnp.where((total > 0)[None, :, None],
                      sums / (cnts2[..., None] + 1e-5), 0.0)   # (B, K, C)
    prototypesC = proto[..., None, None]                       # (B, K, C, 1, 1)
    prototypes = prototypesC                                   # ProtoInput == None

    # ---- fused cosine similarity + softmax weighting ----
    sim, w, wmax, fw = sim_softmax_weight(feat_flat, proto)

    similarityCat = sim.reshape(B, NUM_CLASSES, Hf, Wf)
    similarityWeiht = w.reshape(B, NUM_CLASSES, Hf, Wf)
    similarityWeihtMax = wmax.reshape(B, Hf, Wf)
    assp_weighted = fw.reshape(B, C_DEC1, Hf, Wf)              # (assp_features + wmax) / 2
    query_outputcat = proto[..., None, None]                   # (B, K, C, 1, 1)

    return ({'out': logits, 'outUp': logits},
            {'CurrentPorotype': prototypesC, 'GetProto': prototypes, 'query': query_outputcat},
            {'asspF': assp_features, 'asspFW': assp_weighted,
             'cat': similarityCat, 'Weight': [similarityWeiht, similarityWeihtMax]})


# ----------------------------------------------------------------------------

if __name__ == "__main__":
    key = jax.random.PRNGKey(0)
    kp, kx = jax.random.split(key)
    params = init_params(kp)
    x = jax.random.normal(kx, (2, 3, 64, 64), jnp.float32)     # small NCHW input

    outputs = jax.jit(forward)(params, x)
    outputs = jax.block_until_ready(outputs)

    # light sanity checks on shapes
    assert outputs[0]['out'].shape == (2, NUM_CLASSES, 16, 16)
    assert outputs[1]['CurrentPorotype'].shape == (2, NUM_CLASSES, C_DEC1, 1, 1)
    assert outputs[2]['asspF'].shape == (2, C_DEC1, 16, 16)
    assert outputs[2]['cat'].shape == (2, NUM_CLASSES, 16, 16)
    assert outputs[2]['Weight'][1].shape == (2, 16, 16)
    print("KERNEL_OK")
</pallas_src>

<mosaic_0001>
module attributes {stable_mosaic.version = 11 : i64} {
  func.func @_conv_gemm_kernel(%arg0: i32, %arg1: i32, %arg2: memref<16x147xbf16, #tpu.memory_space<vmem>>, %arg3: memref<16x1xf32, #tpu.memory_space<vmem>>, %arg4: memref<1x147x1024xbf16, #tpu.memory_space<vmem>>, %arg5: memref<1x16x1024xbf16, #tpu.memory_space<vmem>>) attributes {dimension_semantics = [#tpu.dimension_semantics<parallel>, #tpu.dimension_semantics<parallel>], iteration_bounds = array<i64: 2, 1>, scalar_prefetch = 0 : i64, scratch_operands = 0 : i64, tpu.core_type = #tpu.core_type<tc>, window_params = [{pipeline_mode = #tpu.pipeline_mode<synchronous>, transform_indices = @transform_0, window_bounds = array<i64: 16, 147>}, {pipeline_mode = #tpu.pipeline_mode<synchronous>, transform_indices = @transform_1, window_bounds = array<i64: 16, 1>}, {transform_indices = @transform_2, window_bounds = array<i64: 1, 147, 1024>}, {transform_indices = @transform_3, window_bounds = array<i64: 1, 16, 1024>}]} {
    %c0 = arith.constant 0 : index
    %c0_0 = arith.constant 0 : index
    %0 = vector.load %arg2[%c0, %c0_0] : memref<16x147xbf16, #tpu.memory_space<vmem>>, vector<16x147xbf16>
    %c0_1 = arith.constant 0 : index
    %c0_2 = arith.constant 0 : index
    %c0_3 = arith.constant 0 : index
    %1 = vector.load %arg4[%c0_1, %c0_2, %c0_3] : memref<1x147x1024xbf16, #tpu.memory_space<vmem>>, vector<1x147x1024xbf16>
    %2 = vector.shape_cast %1 : vector<1x147x1024xbf16> to vector<147x1024xbf16>
    %cst = arith.constant dense<0.000000e+00> : vector<16x1024xf32>
    %3 = tpu.matmul %0, %2, %cst {dimension_numbers = #tpu.dot_dimension_numbers<[1], [0], [0], [1], [0, 0, 1, 1], [], []>} : vector<16x147xbf16>, vector<147x1024xbf16>, vector<16x1024xf32> -> vector<16x1024xf32>
    %c0_4 = arith.constant 0 : index
    %c0_5 = arith.constant 0 : index
    %4 = vector.load %arg3[%c0_4, %c0_5] : memref<16x1xf32, #tpu.memory_space<vmem>>, vector<16x1xf32>
    %5 = vector.broadcast %4 : vector<16x1xf32> to vector<16x1024xf32>
    %6 = arith.addf %3, %5 : vector<16x1024xf32>
    %cst_6 = arith.constant 0.000000e+00 : f32
    %7 = vector.broadcast %cst_6 : f32 to vector<16x1024xf32>
    %8 = arith.maximumf %6, %7 : vector<16x1024xf32>
    %9 = arith.truncf %8 : vector<16x1024xf32> to vector<16x1024xbf16>
    %c0_7 = arith.constant 0 : index
    %c0_8 = arith.constant 0 : index
    %c0_9 = arith.constant 0 : index
    %10 = vector.load %arg5[%c0_7, %c0_8, %c0_9] : memref<1x16x1024xbf16, #tpu.memory_space<vmem>>, vector<1x16x1024xbf16>
    %11 = vector.shape_cast %10 : vector<1x16x1024xbf16> to vector<16x1024xbf16>
    %12 = vector.shape_cast %9 : vector<16x1024xbf16> to vector<1x16x1024xbf16>
    tpu.vector_store %arg5[%c0_7, %c0_8, %c0_9], %12 {strides = array<i32>} : memref<1x16x1024xbf16, #tpu.memory_space<vmem>>, vector<1x16x1024xbf16>,
    return
  }
  func.func @transform_0(%arg0: i32, %arg1: i32) -> (i32, i32) {
    %c0_i32 = arith.constant 0 : i32
    %c0_i32_0 = arith.constant 0 : i32
    %c0_i32_1 = arith.constant 0 : i32
    return %c0_i32, %c0_i32_0 : i32, i32
  }
  func.func @transform_1(%arg0: i32, %arg1: i32) -> (i32, i32) {
    %c0_i32 = arith.constant 0 : i32
    %c0_i32_0 = arith.constant 0 : i32
    %c0_i32_1 = arith.constant 0 : i32
    return %c0_i32, %c0_i32_0 : i32, i32
  }
  func.func @transform_2(%arg0: i32, %arg1: i32) -> (i32, i32, i32) {
    %c0_i32 = arith.constant 0 : i32
    %c0_i32_0 = arith.constant 0 : i32
    return %arg0, %c0_i32, %arg1 : i32, i32, i32
  }
  func.func @transform_3(%arg0: i32, %arg1: i32) -> (i32, i32, i32) {
    %c0_i32 = arith.constant 0 : i32
    %c0_i32_0 = arith.constant 0 : i32
    return %arg0, %c0_i32, %arg1 : i32, i32, i32
  }
}

module attributes {stable_mosaic.version = 11 : i64} {
  func.func @_conv_gemm_kernel(%arg0: i32, %arg1: i32, %arg2: memref<32x144xbf16, #tpu.memory_space<vmem>>, %arg3: memref<32x1xf32, #tpu.memory_space<vmem>>, %arg4: memref<1x144x64xbf16, #tpu.memory_space<vmem>>, %arg5: memref<1x32x64xbf16, #tpu.memory_space<vmem>>) attributes {dimension_semantics = [#tpu.dimension_semantics<parallel>, #tpu.dimension_semantics<parallel>], iteration_bounds = array<i64: 2, 1>, scalar_prefetch = 0 : i64, scratch_operands = 0 : i64, tpu.core_type = #tpu.core_type<tc>, window_params = [{pipeline_mode = #tpu.pipeline_mode<synchronous>, transform_indices = @transform_0, window_bounds = array<i64: 32, 144>}, {pipeline_mode = #tpu.pipeline_mode<synchronous>, transform_indices = @transform_1, window_bounds = array<i64: 32, 1>}, {transform_indices = @transform_2, window_bounds = array<i64: 1, 144, 64>}, {transform_indices = @transform_3, window_bounds = array<i64: 1, 32, 64>}]} {
    %c0 = arith.constant 0 : index
    %c0_0 = arith.constant 0 : index
    %0 = vector.load %arg2[%c0, %c0_0] : memref<32x144xbf16, #tpu.memory_space<vmem>>, vector<32x144xbf16>
    %c0_1 = arith.constant 0 : index
    %c0_2 = arith.constant 0 : index
    %c0_3 = arith.constant 0 : index
    %1 = vector.load %arg4[%c0_1, %c0_2, %c0_3] : memref<1x144x64xbf16, #tpu.memory_space<vmem>>, vector<1x144x64xbf16>
    %2 = vector.shape_cast %1 : vector<1x144x64xbf16> to vector<144x64xbf16>
    %cst = arith.constant dense<0.000000e+00> : vector<32x64xf32>
    %3 = tpu.matmul %0, %2, %cst {dimension_numbers = #tpu.dot_dimension_numbers<[1], [0], [0], [1], [0, 0, 1, 1], [], []>} : vector<32x144xbf16>, vector<144x64xbf16>, vector<32x64xf32> -> vector<32x64xf32>
    %c0_4 = arith.constant 0 : index
    %c0_5 = arith.constant 0 : index
    %4 = vector.load %arg3[%c0_4, %c0_5] : memref<32x1xf32, #tpu.memory_space<vmem>>, vector<32x1xf32>
    %5 = vector.broadcast %4 : vector<32x1xf32> to vector<32x64xf32>
    %6 = arith.addf %3, %5 : vector<32x64xf32>
    %cst_6 = arith.constant 0.000000e+00 : f32
    %7 = vector.broadcast %cst_6 : f32 to vector<32x64xf32>
    %8 = arith.maximumf %6, %7 : vector<32x64xf32>
    %9 = arith.truncf %8 : vector<32x64xf32> to vector<32x64xbf16>
    %c0_7 = arith.constant 0 : index
    %c0_8 = arith.constant 0 : index
    %c0_9 = arith.constant 0 : index
    %10 = vector.load %arg5[%c0_7, %c0_8, %c0_9] : memref<1x32x64xbf16, #tpu.memory_space<vmem>>, vector<1x32x64xbf16>
    %11 = vector.shape_cast %10 : vector<1x32x64xbf16> to vector<32x64xbf16>
    %12 = vector.shape_cast %9 : vector<32x64xbf16> to vector<1x32x64xbf16>
    tpu.vector_store %arg5[%c0_7, %c0_8, %c0_9], %12 {strides = array<i32>} : memref<1x32x64xbf16, #tpu.memory_space<vmem>>, vector<1x32x64xbf16>,
    return
  }
  func.func @transform_0(%arg0: i32, %arg1: i32) -> (i32, i32) {
    %c0_i32 = arith.constant 0 : i32
    %c0_i32_0 = arith.constant 0 : i32
    %c0_i32_1 = arith.constant 0 : i32
    return %c0_i32, %c0_i32_0 : i32, i32
  }
  func.func @transform_1(%arg0: i32, %arg1: i32) -> (i32, i32) {
    %c0_i32 = arith.constant 0 : i32
    %c0_i32_0 = arith.constant 0 : i32
    %c0_i32_1 = arith.constant 0 : i32
    return %c0_i32, %c0_i32_0 : i32, i32
  }
  func.func @transform_2(%arg0: i32, %arg1: i32) -> (i32, i32, i32) {
    %c0_i32 = arith.constant 0 : i32
    %c0_i32_0 = arith.constant 0 : i32
    return %arg0, %c0_i32, %arg1 : i32, i32, i32
  }
  func.func @transform_3(%arg0: i32, %arg1: i32) -> (i32, i32, i32) {
    %c0_i32 = arith.constant 0 : i32
    %c0_i32_0 = arith.constant 0 : i32
    return %arg0, %c0_i32, %arg1 : i32, i32, i32
  }
}

module attributes {stable_mosaic.version = 11 : i64} {
  func.func @_conv_gemm_kernel(%arg0: i32, %arg1: i32, %arg2: memref<48x288xbf16, #tpu.memory_space<vmem>>, %arg3: memref<48x1xf32, #tpu.memory_space<vmem>>, %arg4: memref<1x288x16xbf16, #tpu.memory_space<vmem>>, %arg5: memref<1x48x16xbf16, #tpu.memory_space<vmem>>) attributes {dimension_semantics = [#tpu.dimension_semantics<parallel>, #tpu.dimension_semantics<parallel>], iteration_bounds = array<i64: 2, 1>, scalar_prefetch = 0 : i64, scratch_operands = 0 : i64, tpu.core_type = #tpu.core_type<tc>, window_params = [{pipeline_mode = #tpu.pipeline_mode<synchronous>, transform_indices = @transform_0, window_bounds = array<i64: 48, 288>}, {pipeline_mode = #tpu.pipeline_mode<synchronous>, transform_indices = @transform_1, window_bounds = array<i64: 48, 1>}, {transform_indices = @transform_2, window_bounds = array<i64: 1, 288, 16>}, {transform_indices = @transform_3, window_bounds = array<i64: 1, 48, 16>}]} {
    %c0 = arith.constant 0 : index
    %c0_0 = arith.constant 0 : index
    %0 = vector.load %arg2[%c0, %c0_0] : memref<48x288xbf16, #tpu.memory_space<vmem>>, vector<48x288xbf16>
    %c0_1 = arith.constant 0 : index
    %c0_2 = arith.constant 0 : index
    %c0_3 = arith.constant 0 : index
    %1 = vector.load %arg4[%c0_1, %c0_2, %c0_3] : memref<1x288x16xbf16, #tpu.memory_space<vmem>>, vector<1x288x16xbf16>
    %2 = vector.shape_cast %1 : vector<1x288x16xbf16> to vector<288x16xbf16>
    %cst = arith.constant dense<0.000000e+00> : vector<48x16xf32>
    %3 = tpu.matmul %0, %2, %cst {dimension_numbers = #tpu.dot_dimension_numbers<[1], [0], [0], [1], [0, 0, 1, 1], [], []>} : vector<48x288xbf16>, vector<288x16xbf16>, vector<48x16xf32> -> vector<48x16xf32>
    %c0_4 = arith.constant 0 : index
    %c0_5 = arith.constant 0 : index
    %4 = vector.load %arg3[%c0_4, %c0_5] : memref<48x1xf32, #tpu.memory_space<vmem>>, vector<48x1xf32>
    %5 = vector.broadcast %4 : vector<48x1xf32> to vector<48x16xf32>
    %6 = arith.addf %3, %5 : vector<48x16xf32>
    %cst_6 = arith.constant 0.000000e+00 : f32
    %7 = vector.broadcast %cst_6 : f32 to vector<48x16xf32>
    %8 = arith.maximumf %6, %7 : vector<48x16xf32>
    %9 = arith.truncf %8 : vector<48x16xf32> to vector<48x16xbf16>
    %c0_7 = arith.constant 0 : index
    %c0_8 = arith.constant 0 : index
    %c0_9 = arith.constant 0 : index
    %10 = vector.load %arg5[%c0_7, %c0_8, %c0_9] : memref<1x48x16xbf16, #tpu.memory_space<vmem>>, vector<1x48x16xbf16>
    %11 = vector.shape_cast %10 : vector<1x48x16xbf16> to vector<48x16xbf16>
    %12 = vector.shape_cast %9 : vector<48x16xbf16> to vector<1x48x16xbf16>
    tpu.vector_store %arg5[%c0_7, %c0_8, %c0_9], %12 {strides = array<i32>} : memref<1x48x16xbf16, #tpu.memory_space<vmem>>, vector<1x48x16xbf16>,
    return
  }
  func.func @transform_0(%arg0: i32, %arg1: i32) -> (i32, i32) {
    %c0_i32 = arith.constant 0 : i32
    %c0_i32_0 = arith.constant 0 : i32
    %c0_i32_1 = arith.constant 0 : i32
    return %c0_i32, %c0_i32_0 : i32, i32
  }
  func.func @transform_1(%arg0: i32, %arg1: i32) -> (i32, i32) {
    %c0_i32 = arith.constant 0 : i32
    %c0_i32_0 = arith.constant 0 : i32
    %c0_i32_1 = arith.constant 0 : i32
    return %c0_i32, %c0_i32_0 : i32, i32
  }
  func.func @transform_2(%arg0: i32, %arg1: i32) -> (i32, i32, i32) {
    %c0_i32 = arith.constant 0 : i32
    %c0_i32_0 = arith.constant 0 : i32
    return %arg0, %c0_i32, %arg1 : i32, i32, i32
  }
  func.func @transform_3(%arg0: i32, %arg1: i32) -> (i32, i32, i32) {
    %c0_i32 = arith.constant 0 : i32
    %c0_i32_0 = arith.constant 0 : i32
    return %arg0, %c0_i32, %arg1 : i32, i32, i32
  }
}

module attributes {stable_mosaic.version = 11 : i64} {
  func.func @_conv_gemm_kernel(%arg0: i32, %arg1: i32, %arg2: memref<64x432xbf16, #tpu.memory_space<vmem>>, %arg3: memref<64x1xf32, #tpu.memory_space<vmem>>, %arg4: memref<1x432x4xbf16, #tpu.memory_space<vmem>>, %arg5: memref<1x64x4xbf16, #tpu.memory_space<vmem>>) attributes {dimension_semantics = [#tpu.dimension_semantics<parallel>, #tpu.dimension_semantics<parallel>], iteration_bounds = array<i64: 2, 1>, scalar_prefetch = 0 : i64, scratch_operands = 0 : i64, tpu.core_type = #tpu.core_type<tc>, window_params = [{pipeline_mode = #tpu.pipeline_mode<synchronous>, transform_indices = @transform_0, window_bounds = array<i64: 64, 432>}, {pipeline_mode = #tpu.pipeline_mode<synchronous>, transform_indices = @transform_1, window_bounds = array<i64: 64, 1>}, {transform_indices = @transform_2, window_bounds = array<i64: 1, 432, 4>}, {transform_indices = @transform_3, window_bounds = array<i64: 1, 64, 4>}]} {
    %c0 = arith.constant 0 : index
    %c0_0 = arith.constant 0 : index
    %0 = vector.load %arg2[%c0, %c0_0] : memref<64x432xbf16, #tpu.memory_space<vmem>>, vector<64x432xbf16>
    %c0_1 = arith.constant 0 : index
    %c0_2 = arith.constant 0 : index
    %c0_3 = arith.constant 0 : index
    %1 = vector.load %arg4[%c0_1, %c0_2, %c0_3] : memref<1x432x4xbf16, #tpu.memory_space<vmem>>, vector<1x432x4xbf16>
    %2 = vector.shape_cast %1 : vector<1x432x4xbf16> to vector<432x4xbf16>
    %cst = arith.constant dense<0.000000e+00> : vector<64x4xf32>
    %3 = tpu.matmul %0, %2, %cst {dimension_numbers = #tpu.dot_dimension_numbers<[1], [0], [0], [1], [0, 0, 1, 1], [], []>} : vector<64x432xbf16>, vector<432x4xbf16>, vector<64x4xf32> -> vector<64x4xf32>
    %c0_4 = arith.constant 0 : index
    %c0_5 = arith.constant 0 : index
    %4 = vector.load %arg3[%c0_4, %c0_5] : memref<64x1xf32, #tpu.memory_space<vmem>>, vector<64x1xf32>
    %5 = vector.broadcast %4 : vector<64x1xf32> to vector<64x4xf32>
    %6 = arith.addf %3, %5 : vector<64x4xf32>
    %cst_6 = arith.constant 0.000000e+00 : f32
    %7 = vector.broadcast %cst_6 : f32 to vector<64x4xf32>
    %8 = arith.maximumf %6, %7 : vector<64x4xf32>
    %9 = arith.truncf %8 : vector<64x4xf32> to vector<64x4xbf16>
    %c0_7 = arith.constant 0 : index
    %c0_8 = arith.constant 0 : index
    %c0_9 = arith.constant 0 : index
    %10 = vector.load %arg5[%c0_7, %c0_8, %c0_9] : memref<1x64x4xbf16, #tpu.memory_space<vmem>>, vector<1x64x4xbf16>
    %11 = vector.shape_cast %10 : vector<1x64x4xbf16> to vector<64x4xbf16>
    %12 = vector.shape_cast %9 : vector<64x4xbf16> to vector<1x64x4xbf16>
    tpu.vector_store %arg5[%c0_7, %c0_8, %c0_9], %12 {strides = array<i32>} : memref<1x64x4xbf16, #tpu.memory_space<vmem>>, vector<1x64x4xbf16>,
    return
  }
  func.func @transform_0(%arg0: i32, %arg1: i32) -> (i32, i32) {
    %c0_i32 = arith.constant 0 : i32
    %c0_i32_0 = arith.constant 0 : i32
    %c0_i32_1 = arith.constant 0 : i32
    return %c0_i32, %c0_i32_0 : i32, i32
  }
  func.func @transform_1(%arg0: i32, %arg1: i32) -> (i32, i32) {
    %c0_i32 = arith.constant 0 : i32
    %c0_i32_0 = arith.constant 0 : i32
    %c0_i32_1 = arith.constant 0 : i32
    return %c0_i32, %c0_i32_0 : i32, i32
  }
  func.func @transform_2(%arg0: i32, %arg1: i32) -> (i32, i32, i32) {
    %c0_i32 = arith.constant 0 : i32
    %c0_i32_0 = arith.constant 0 : i32
    return %arg0, %c0_i32, %arg1 : i32, i32, i32
  }
  func.func @transform_3(%arg0: i32, %arg1: i32) -> (i32, i32, i32) {
    %c0_i32 = arith.constant 0 : i32
    %c0_i32_0 = arith.constant 0 : i32
    return %arg0, %c0_i32, %arg1 : i32, i32, i32
  }
}

module attributes {stable_mosaic.version = 11 : i64} {
  func.func @_conv_gemm_kernel(%arg0: i32, %arg1: i32, %arg2: memref<32x576xbf16, #tpu.memory_space<vmem>>, %arg3: memref<32x1xf32, #tpu.memory_space<vmem>>, %arg4: memref<1x576x4xbf16, #tpu.memory_space<vmem>>, %arg5: memref<1x32x4xbf16, #tpu.memory_space<vmem>>) attributes {dimension_semantics = [#tpu.dimension_semantics<parallel>, #tpu.dimension_semantics<parallel>], iteration_bounds = array<i64: 2, 1>, scalar_prefetch = 0 : i64, scratch_operands = 0 : i64, tpu.core_type = #tpu.core_type<tc>, window_params = [{pipeline_mode = #tpu.pipeline_mode<synchronous>, transform_indices = @transform_0, window_bounds = array<i64: 32, 576>}, {pipeline_mode = #tpu.pipeline_mode<synchronous>, transform_indices = @transform_1, window_bounds = array<i64: 32, 1>}, {transform_indices = @transform_2, window_bounds = array<i64: 1, 576, 4>}, {transform_indices = @transform_3, window_bounds = array<i64: 1, 32, 4>}]} {
    %c0 = arith.constant 0 : index
    %c0_0 = arith.constant 0 : index
    %0 = vector.load %arg2[%c0, %c0_0] : memref<32x576xbf16, #tpu.memory_space<vmem>>, vector<32x576xbf16>
    %c0_1 = arith.constant 0 : index
    %c0_2 = arith.constant 0 : index
    %c0_3 = arith.constant 0 : index
    %1 = vector.load %arg4[%c0_1, %c0_2, %c0_3] : memref<1x576x4xbf16, #tpu.memory_space<vmem>>, vector<1x576x4xbf16>
    %2 = vector.shape_cast %1 : vector<1x576x4xbf16> to vector<576x4xbf16>
    %cst = arith.constant dense<0.000000e+00> : vector<32x4xf32>
    %3 = tpu.matmul %0, %2, %cst {dimension_numbers = #tpu.dot_dimension_numbers<[1], [0], [0], [1], [0, 0, 1, 1], [], []>} : vector<32x576xbf16>, vector<576x4xbf16>, vector<32x4xf32> -> vector<32x4xf32>
    %c0_4 = arith.constant 0 : index
    %c0_5 = arith.constant 0 : index
    %4 = vector.load %arg3[%c0_4, %c0_5] : memref<32x1xf32, #tpu.memory_space<vmem>>, vector<32x1xf32>
    %5 = vector.broadcast %4 : vector<32x1xf32> to vector<32x4xf32>
    %6 = arith.addf %3, %5 : vector<32x4xf32>
    %7 = arith.truncf %6 : vector<32x4xf32> to vector<32x4xbf16>
    %c0_6 = arith.constant 0 : index
    %c0_7 = arith.constant 0 : index
    %c0_8 = arith.constant 0 : index
    %8 = vector.load %arg5[%c0_6, %c0_7, %c0_8] : memref<1x32x4xbf16, #tpu.memory_space<vmem>>, vector<1x32x4xbf16>
    %9 = vector.shape_cast %8 : vector<1x32x4xbf16> to vector<32x4xbf16>
    %10 = vector.shape_cast %7 : vector<32x4xbf16> to vector<1x32x4xbf16>
    tpu.vector_store %arg5[%c0_6, %c0_7, %c0_8], %10 {strides = array<i32>} : memref<1x32x4xbf16, #tpu.memory_space<vmem>>, vector<1x32x4xbf16>,
    return
  }
  func.func @transform_0(%arg0: i32, %arg1: i32) -> (i32, i32) {
    %c0_i32 = arith.constant 0 : i32
    %c0_i32_0 = arith.constant 0 : i32
    %c0_i32_1 = arith.constant 0 : i32
    return %c0_i32, %c0_i32_0 : i32, i32
  }
  func.func @transform_1(%arg0: i32, %arg1: i32) -> (i32, i32) {
    %c0_i32 = arith.constant 0 : i32
    %c0_i32_0 = arith.constant 0 : i32
    %c0_i32_1 = arith.constant 0 : i32
    return %c0_i32, %c0_i32_0 : i32, i32
  }
  func.func @transform_2(%arg0: i32, %arg1: i32) -> (i32, i32, i32) {
    %c0_i32 = arith.constant 0 : i32
    %c0_i32_0 = arith.constant 0 : i32
    return %arg0, %c0_i32, %arg1 : i32, i32, i32
  }
  func.func @transform_3(%arg0: i32, %arg1: i32) -> (i32, i32, i32) {
    %c0_i32 = arith.constant 0 : i32
    %c0_i32_0 = arith.constant 0 : i32
    return %arg0, %c0_i32, %arg1 : i32, i32, i32
  }
}

module attributes {stable_mosaic.version = 11 : i64} {
  func.func @_conv_gemm_kernel(%arg0: i32, %arg1: i32, %arg2: memref<32x64xbf16, #tpu.memory_space<vmem>>, %arg3: memref<32x1xf32, #tpu.memory_space<vmem>>, %arg4: memref<1x64x4xbf16, #tpu.memory_space<vmem>>, %arg5: memref<1x32x4xbf16, #tpu.memory_space<vmem>>) attributes {dimension_semantics = [#tpu.dimension_semantics<parallel>, #tpu.dimension_semantics<parallel>], iteration_bounds = array<i64: 2, 1>, scalar_prefetch = 0 : i64, scratch_operands = 0 : i64, tpu.core_type = #tpu.core_type<tc>, window_params = [{pipeline_mode = #tpu.pipeline_mode<synchronous>, transform_indices = @transform_0, window_bounds = array<i64: 32, 64>}, {pipeline_mode = #tpu.pipeline_mode<synchronous>, transform_indices = @transform_1, window_bounds = array<i64: 32, 1>}, {transform_indices = @transform_2, window_bounds = array<i64: 1, 64, 4>}, {transform_indices = @transform_3, window_bounds = array<i64: 1, 32, 4>}]} {
    %c0 = arith.constant 0 : index
    %c0_0 = arith.constant 0 : index
    %0 = vector.load %arg2[%c0, %c0_0] : memref<32x64xbf16, #tpu.memory_space<vmem>>, vector<32x64xbf16>
    %c0_1 = arith.constant 0 : index
    %c0_2 = arith.constant 0 : index
    %c0_3 = arith.constant 0 : index
    %1 = vector.load %arg4[%c0_1, %c0_2, %c0_3] : memref<1x64x4xbf16, #tpu.memory_space<vmem>>, vector<1x64x4xbf16>
    %2 = vector.shape_cast %1 : vector<1x64x4xbf16> to vector<64x4xbf16>
    %cst = arith.constant dense<0.000000e+00> : vector<32x4xf32>
    %3 = tpu.matmul %0, %2, %cst {dimension_numbers = #tpu.dot_dimension_numbers<[1], [0], [0], [1], [0, 0, 1, 1], [], []>} : vector<32x64xbf16>, vector<64x4xbf16>, vector<32x4xf32> -> vector<32x4xf32>
    %c0_4 = arith.constant 0 : index
    %c0_5 = arith.constant 0 : index
    %4 = vector.load %arg3[%c0_4, %c0_5] : memref<32x1xf32, #tpu.memory_space<vmem>>, vector<32x1xf32>
    %5 = vector.broadcast %4 : vector<32x1xf32> to vector<32x4xf32>
    %6 = arith.addf %3, %5 : vector<32x4xf32>
    %7 = arith.truncf %6 : vector<32x4xf32> to vector<32x4xbf16>
    %c0_6 = arith.constant 0 : index
    %c0_7 = arith.constant 0 : index
    %c0_8 = arith.constant 0 : index
    %8 = vector.load %arg5[%c0_6, %c0_7, %c0_8] : memref<1x32x4xbf16, #tpu.memory_space<vmem>>, vector<1x32x4xbf16>
    %9 = vector.shape_cast %8 : vector<1x32x4xbf16> to vector<32x4xbf16>
    %10 = vector.shape_cast %7 : vector<32x4xbf16> to vector<1x32x4xbf16>
    tpu.vector_store %arg5[%c0_6, %c0_7, %c0_8], %10 {strides = array<i32>} : memref<1x32x4xbf16, #tpu.memory_space<vmem>>, vector<1x32x4xbf16>,
    return
  }
  func.func @transform_0(%arg0: i32, %arg1: i32) -> (i32, i32) {
    %c0_i32 = arith.constant 0 : i32
    %c0_i32_0 = arith.constant 0 : i32
    %c0_i32_1 = arith.constant 0 : i32
    return %c0_i32, %c0_i32_0 : i32, i32
  }
  func.func @transform_1(%arg0: i32, %arg1: i32) -> (i32, i32) {
    %c0_i32 = arith.constant 0 : i32
    %c0_i32_0 = arith.constant 0 : i32
    %c0_i32_1 = arith.constant 0 : i32
    return %c0_i32, %c0_i32_0 : i32, i32
  }
  func.func @transform_2(%arg0: i32, %arg1: i32) -> (i32, i32, i32) {
    %c0_i32 = arith.constant 0 : i32
    %c0_i32_0 = arith.constant 0 : i32
    return %arg0, %c0_i32, %arg1 : i32, i32, i32
  }
  func.func @transform_3(%arg0: i32, %arg1: i32) -> (i32, i32, i32) {
    %c0_i32 = arith.constant 0 : i32
    %c0_i32_0 = arith.constant 0 : i32
    return %arg0, %c0_i32, %arg1 : i32, i32, i32
  }
}

module attributes {stable_mosaic.version = 11 : i64} {
  func.func @_conv_gemm_kernel(%arg0: i32, %arg1: i32, %arg2: memref<32x64xbf16, #tpu.memory_space<vmem>>, %arg3: memref<32x1xf32, #tpu.memory_space<vmem>>, %arg4: memref<1x64x1xbf16, #tpu.memory_space<vmem>>, %arg5: memref<1x32x1xbf16, #tpu.memory_space<vmem>>) attributes {dimension_semantics = [#tpu.dimension_semantics<parallel>, #tpu.dimension_semantics<parallel>], iteration_bounds = array<i64: 2, 1>, scalar_prefetch = 0 : i64, scratch_operands = 0 : i64, tpu.core_type = #tpu.core_type<tc>, window_params = [{pipeline_mode = #tpu.pipeline_mode<synchronous>, transform_indices = @transform_0, window_bounds = array<i64: 32, 64>}, {pipeline_mode = #tpu.pipeline_mode<synchronous>, transform_indices = @transform_1, window_bounds = array<i64: 32, 1>}, {transform_indices = @transform_2, window_bounds = array<i64: 1, 64, 1>}, {transform_indices = @transform_3, window_bounds = array<i64: 1, 32, 1>}]} {
    %c0 = arith.constant 0 : index
    %c0_0 = arith.constant 0 : index
    %0 = vector.load %arg2[%c0, %c0_0] : memref<32x64xbf16, #tpu.memory_space<vmem>>, vector<32x64xbf16>
    %c0_1 = arith.constant 0 : index
    %c0_2 = arith.constant 0 : index
    %c0_3 = arith.constant 0 : index
    %1 = vector.load %arg4[%c0_1, %c0_2, %c0_3] : memref<1x64x1xbf16, #tpu.memory_space<vmem>>, vector<1x64x1xbf16>
    %2 = vector.shape_cast %1 : vector<1x64x1xbf16> to vector<64x1xbf16>
    %cst = arith.constant dense<0.000000e+00> : vector<32x1xf32>
    %3 = tpu.matmul %0, %2, %cst {dimension_numbers = #tpu.dot_dimension_numbers<[1], [0], [0], [1], [0, 0, 1, 1], [], []>} : vector<32x64xbf16>, vector<64x1xbf16>, vector<32x1xf32> -> vector<32x1xf32>
    %c0_4 = arith.constant 0 : index
    %c0_5 = arith.constant 0 : index
    %4 = vector.load %arg3[%c0_4, %c0_5] : memref<32x1xf32, #tpu.memory_space<vmem>>, vector<32x1xf32>
    %5 = arith.addf %3, %4 : vector<32x1xf32>
    %6 = arith.truncf %5 : vector<32x1xf32> to vector<32x1xbf16>
    %c0_6 = arith.constant 0 : index
    %c0_7 = arith.constant 0 : index
    %c0_8 = arith.constant 0 : index
    %7 = vector.load %arg5[%c0_6, %c0_7, %c0_8] : memref<1x32x1xbf16, #tpu.memory_space<vmem>>, vector<1x32x1xbf16>
    %8 = vector.shape_cast %7 : vector<1x32x1xbf16> to vector<32x1xbf16>
    %9 = vector.shape_cast %6 : vector<32x1xbf16> to vector<1x32x1xbf16>
    tpu.vector_store %arg5[%c0_6, %c0_7, %c0_8], %9 {strides = array<i32>} : memref<1x32x1xbf16, #tpu.memory_space<vmem>>, vector<1x32x1xbf16>,
    return
  }
  func.func @transform_0(%arg0: i32, %arg1: i32) -> (i32, i32) {
    %c0_i32 = arith.constant 0 : i32
    %c0_i32_0 = arith.constant 0 : i32
    %c0_i32_1 = arith.constant 0 : i32
    return %c0_i32, %c0_i32_0 : i32, i32
  }
  func.func @transform_1(%arg0: i32, %arg1: i32) -> (i32, i32) {
    %c0_i32 = arith.constant 0 : i32
    %c0_i32_0 = arith.constant 0 : i32
    %c0_i32_1 = arith.constant 0 : i32
    return %c0_i32, %c0_i32_0 : i32, i32
  }
  func.func @transform_2(%arg0: i32, %arg1: i32) -> (i32, i32, i32) {
    %c0_i32 = arith.constant 0 : i32
    %c0_i32_0 = arith.constant 0 : i32
    return %arg0, %c0_i32, %arg1 : i32, i32, i32
  }
  func.func @transform_3(%arg0: i32, %arg1: i32) -> (i32, i32, i32) {
    %c0_i32 = arith.constant 0 : i32
    %c0_i32_0 = arith.constant 0 : i32
    return %arg0, %c0_i32, %arg1 : i32, i32, i32
  }
}

module attributes {stable_mosaic.version = 11 : i64} {
  func.func @_conv_gemm_kernel(%arg0: i32, %arg1: i32, %arg2: memref<32x160xbf16, #tpu.memory_space<vmem>>, %arg3: memref<32x1xf32, #tpu.memory_space<vmem>>, %arg4: memref<1x160x4xbf16, #tpu.memory_space<vmem>>, %arg5: memref<1x32x4xbf16, #tpu.memory_space<vmem>>) attributes {dimension_semantics = [#tpu.dimension_semantics<parallel>, #tpu.dimension_semantics<parallel>], iteration_bounds = array<i64: 2, 1>, scalar_prefetch = 0 : i64, scratch_operands = 0 : i64, tpu.core_type = #tpu.core_type<tc>, window_params = [{pipeline_mode = #tpu.pipeline_mode<synchronous>, transform_indices = @transform_0, window_bounds = array<i64: 32, 160>}, {pipeline_mode = #tpu.pipeline_mode<synchronous>, transform_indices = @transform_1, window_bounds = array<i64: 32, 1>}, {transform_indices = @transform_2, window_bounds = array<i64: 1, 160, 4>}, {transform_indices = @transform_3, window_bounds = array<i64: 1, 32, 4>}]} {
    %c0 = arith.constant 0 : index
    %c0_0 = arith.constant 0 : index
    %0 = vector.load %arg2[%c0, %c0_0] : memref<32x160xbf16, #tpu.memory_space<vmem>>, vector<32x160xbf16>
    %c0_1 = arith.constant 0 : index
    %c0_2 = arith.constant 0 : index
    %c0_3 = arith.constant 0 : index
    %1 = vector.load %arg4[%c0_1, %c0_2, %c0_3] : memref<1x160x4xbf16, #tpu.memory_space<vmem>>, vector<1x160x4xbf16>
    %2 = vector.shape_cast %1 : vector<1x160x4xbf16> to vector<160x4xbf16>
    %cst = arith.constant dense<0.000000e+00> : vector<32x4xf32>
    %3 = tpu.matmul %0, %2, %cst {dimension_numbers = #tpu.dot_dimension_numbers<[1], [0], [0], [1], [0, 0, 1, 1], [], []>} : vector<32x160xbf16>, vector<160x4xbf16>, vector<32x4xf32> -> vector<32x4xf32>
    %c0_4 = arith.constant 0 : index
    %c0_5 = arith.constant 0 : index
    %4 = vector.load %arg3[%c0_4, %c0_5] : memref<32x1xf32, #tpu.memory_space<vmem>>, vector<32x1xf32>
    %5 = vector.broadcast %4 : vector<32x1xf32> to vector<32x4xf32>
    %6 = arith.addf %3, %5 : vector<32x4xf32>
    %cst_6 = arith.constant 0.000000e+00 : f32
    %7 = vector.broadcast %cst_6 : f32 to vector<32x4xf32>
    %8 = arith.maximumf %6, %7 : vector<32x4xf32>
    %9 = arith.truncf %8 : vector<32x4xf32> to vector<32x4xbf16>
    %c0_7 = arith.constant 0 : index
    %c0_8 = arith.constant 0 : index
    %c0_9 = arith.constant 0 : index
    %10 = vector.load %arg5[%c0_7, %c0_8, %c0_9] : memref<1x32x4xbf16, #tpu.memory_space<vmem>>, vector<1x32x4xbf16>
    %11 = vector.shape_cast %10 : vector<1x32x4xbf16> to vector<32x4xbf16>
    %12 = vector.shape_cast %9 : vector<32x4xbf16> to vector<1x32x4xbf16>
    tpu.vector_store %arg5[%c0_7, %c0_8, %c0_9], %12 {strides = array<i32>} : memref<1x32x4xbf16, #tpu.memory_space<vmem>>, vector<1x32x4xbf16>,
    return
  }
  func.func @transform_0(%arg0: i32, %arg1: i32) -> (i32, i32) {
    %c0_i32 = arith.constant 0 : i32
    %c0_i32_0 = arith.constant 0 : i32
    %c0_i32_1 = arith.constant 0 : i32
    return %c0_i32, %c0_i32_0 : i32, i32
  }
  func.func @transform_1(%arg0: i32, %arg1: i32) -> (i32, i32) {
    %c0_i32 = arith.constant 0 : i32
    %c0_i32_0 = arith.constant 0 : i32
    %c0_i32_1 = arith.constant 0 : i32
    return %c0_i32, %c0_i32_0 : i32, i32
  }
  func.func @transform_2(%arg0: i32, %arg1: i32) -> (i32, i32, i32) {
    %c0_i32 = arith.constant 0 : i32
    %c0_i32_0 = arith.constant 0 : i32
    return %arg0, %c0_i32, %arg1 : i32, i32, i32
  }
  func.func @transform_3(%arg0: i32, %arg1: i32) -> (i32, i32, i32) {
    %c0_i32 = arith.constant 0 : i32
    %c0_i32_0 = arith.constant 0 : i32
    return %arg0, %c0_i32, %arg1 : i32, i32, i32
  }
}

module attributes {stable_mosaic.version = 11 : i64} {
  func.func @_conv_gemm_kernel(%arg0: i32, %arg1: i32, %arg2: memref<32x432xbf16, #tpu.memory_space<vmem>>, %arg3: memref<32x1xf32, #tpu.memory_space<vmem>>, %arg4: memref<1x432x256xbf16, #tpu.memory_space<vmem>>, %arg5: memref<1x32x256xbf16, #tpu.memory_space<vmem>>) attributes {dimension_semantics = [#tpu.dimension_semantics<parallel>, #tpu.dimension_semantics<parallel>], iteration_bounds = array<i64: 2, 1>, scalar_prefetch = 0 : i64, scratch_operands = 0 : i64, tpu.core_type = #tpu.core_type<tc>, window_params = [{pipeline_mode = #tpu.pipeline_mode<synchronous>, transform_indices = @transform_0, window_bounds = array<i64: 32, 432>}, {pipeline_mode = #tpu.pipeline_mode<synchronous>, transform_indices = @transform_1, window_bounds = array<i64: 32, 1>}, {transform_indices = @transform_2, window_bounds = array<i64: 1, 432, 256>}, {transform_indices = @transform_3, window_bounds = array<i64: 1, 32, 256>}]} {
    %c0 = arith.constant 0 : index
    %c0_0 = arith.constant 0 : index
    %0 = vector.load %arg2[%c0, %c0_0] : memref<32x432xbf16, #tpu.memory_space<vmem>>, vector<32x432xbf16>
    %c0_1 = arith.constant 0 : index
    %c0_2 = arith.constant 0 : index
    %c0_3 = arith.constant 0 : index
    %1 = vector.load %arg4[%c0_1, %c0_2, %c0_3] : memref<1x432x256xbf16, #tpu.memory_space<vmem>>, vector<1x432x256xbf16>
    %2 = vector.shape_cast %1 : vector<1x432x256xbf16> to vector<432x256xbf16>
    %cst = arith.constant dense<0.000000e+00> : vector<32x256xf32>
    %3 = tpu.matmul %0, %2, %cst {dimension_numbers = #tpu.dot_dimension_numbers<[1], [0], [0], [1], [0, 0, 1, 1], [], []>} : vector<32x432xbf16>, vector<432x256xbf16>, vector<32x256xf32> -> vector<32x256xf32>
    %c0_4 = arith.constant 0 : index
    %c0_5 = arith.constant 0 : index
    %4 = vector.load %arg3[%c0_4, %c0_5] : memref<32x1xf32, #tpu.memory_space<vmem>>, vector<32x1xf32>
    %5 = vector.broadcast %4 : vector<32x1xf32> to vector<32x256xf32>
    %6 = arith.addf %3, %5 : vector<32x256xf32>
    %cst_6 = arith.constant 0.000000e+00 : f32
    %7 = vector.broadcast %cst_6 : f32 to vector<32x256xf32>
    %8 = arith.maximumf %6, %7 : vector<32x256xf32>
    %9 = arith.truncf %8 : vector<32x256xf32> to vector<32x256xbf16>
    %c0_7 = arith.constant 0 : index
    %c0_8 = arith.constant 0 : index
    %c0_9 = arith.constant 0 : index
    %10 = vector.load %arg5[%c0_7, %c0_8, %c0_9] : memref<1x32x256xbf16, #tpu.memory_space<vmem>>, vector<1x32x256xbf16>
    %11 = vector.shape_cast %10 : vector<1x32x256xbf16> to vector<32x256xbf16>
    %12 = vector.shape_cast %9 : vector<32x256xbf16> to vector<1x32x256xbf16>
    tpu.vector_store %arg5[%c0_7, %c0_8, %c0_9], %12 {strides = array<i32>} : memref<1x32x256xbf16, #tpu.memory_space<vmem>>, vector<1x32x256xbf16>,
    return
  }
  func.func @transform_0(%arg0: i32, %arg1: i32) -> (i32, i32) {
    %c0_i32 = arith.constant 0 : i32
    %c0_i32_0 = arith.constant 0 : i32
    %c0_i32_1 = arith.constant 0 : i32
    return %c0_i32, %c0_i32_0 : i32, i32
  }
  func.func @transform_1(%arg0: i32, %arg1: i32) -> (i32, i32) {
    %c0_i32 = arith.constant 0 : i32
    %c0_i32_0 = arith.constant 0 : i32
    %c0_i32_1 = arith.constant 0 : i32
    return %c0_i32, %c0_i32_0 : i32, i32
  }
  func.func @transform_2(%arg0: i32, %arg1: i32) -> (i32, i32, i32) {
    %c0_i32 = arith.constant 0 : i32
    %c0_i32_0 = arith.constant 0 : i32
    return %arg0, %c0_i32, %arg1 : i32, i32, i32
  }
  func.func @transform_3(%arg0: i32, %arg1: i32) -> (i32, i32, i32) {
    %c0_i32 = arith.constant 0 : i32
    %c0_i32_0 = arith.constant 0 : i32
    return %arg0, %c0_i32, %arg1 : i32, i32, i32
  }
}

module attributes {stable_mosaic.version = 11 : i64} {
  func.func @_conv_cls_kernel(%arg0: i32, %arg1: i32, %arg2: memref<16x288xbf16, #tpu.memory_space<vmem>>, %arg3: memref<16x1xf32, #tpu.memory_space<vmem>>, %arg4: memref<6x16xf32, #tpu.memory_space<vmem>>, %arg5: memref<6x1xf32, #tpu.memory_space<vmem>>, %arg6: memref<1x288x256xbf16, #tpu.memory_space<vmem>>, %arg7: memref<1x16x256xf32, #tpu.memory_space<vmem>>, %arg8: memref<1x6x256xf32, #tpu.memory_space<vmem>>) attributes {dimension_semantics = [#tpu.dimension_semantics<parallel>, #tpu.dimension_semantics<parallel>], iteration_bounds = array<i64: 2, 1>, scalar_prefetch = 0 : i64, scratch_operands = 0 : i64, tpu.core_type = #tpu.core_type<tc>, window_params = [{pipeline_mode = #tpu.pipeline_mode<synchronous>, transform_indices = @transform_0, window_bounds = array<i64: 16, 288>}, {pipeline_mode = #tpu.pipeline_mode<synchronous>, transform_indices = @transform_1, window_bounds = array<i64: 16, 1>}, {pipeline_mode = #tpu.pipeline_mode<synchronous>, transform_indices = @transform_2, window_bounds = array<i64: 6, 16>}, {pipeline_mode = #tpu.pipeline_mode<synchronous>, transform_indices = @transform_3, window_bounds = array<i64: 6, 1>}, {transform_indices = @transform_4, window_bounds = array<i64: 1, 288, 256>}, {transform_indices = @transform_5, window_bounds = array<i64: 1, 16, 256>}, {transform_indices = @transform_6, window_bounds = array<i64: 1, 6, 256>}]} {
    %c0 = arith.constant 0 : index
    %c0_0 = arith.constant 0 : index
    %0 = vector.load %arg2[%c0, %c0_0] : memref<16x288xbf16, #tpu.memory_space<vmem>>, vector<16x288xbf16>
    %c0_1 = arith.constant 0 : index
    %c0_2 = arith.constant 0 : index
    %c0_3 = arith.constant 0 : index
    %1 = vector.load %arg6[%c0_1, %c0_2, %c0_3] : memref<1x288x256xbf16, #tpu.memory_space<vmem>>, vector<1x288x256xbf16>
    %2 = vector.shape_cast %1 : vector<1x288x256xbf16> to vector<288x256xbf16>
    %cst = arith.constant dense<0.000000e+00> : vector<16x256xf32>
    %3 = tpu.matmul %0, %2, %cst {dimension_numbers = #tpu.dot_dimension_numbers<[1], [0], [0], [1], [0, 0, 1, 1], [], []>} : vector<16x288xbf16>, vector<288x256xbf16>, vector<16x256xf32> -> vector<16x256xf32>
    %c0_4 = arith.constant 0 : index
    %c0_5 = arith.constant 0 : index
    %4 = vector.load %arg3[%c0_4, %c0_5] : memref<16x1xf32, #tpu.memory_space<vmem>>, vector<16x1xf32>
    %5 = vector.broadcast %4 : vector<16x1xf32> to vector<16x256xf32>
    %6 = arith.addf %3, %5 : vector<16x256xf32>
    %cst_6 = arith.constant 0.000000e+00 : f32
    %7 = vector.broadcast %cst_6 : f32 to vector<16x256xf32>
    %8 = arith.maximumf %6, %7 : vector<16x256xf32>
    %c0_7 = arith.constant 0 : index
    %c0_8 = arith.constant 0 : index
    %c0_9 = arith.constant 0 : index
    %9 = vector.load %arg7[%c0_7, %c0_8, %c0_9] : memref<1x16x256xf32, #tpu.memory_space<vmem>>, vector<1x16x256xf32>
    %10 = vector.shape_cast %9 : vector<1x16x256xf32> to vector<16x256xf32>
    %11 = vector.shape_cast %8 : vector<16x256xf32> to vector<1x16x256xf32>
    tpu.vector_store %arg7[%c0_7, %c0_8, %c0_9], %11 {strides = array<i32>} : memref<1x16x256xf32, #tpu.memory_space<vmem>>, vector<1x16x256xf32>,
    %c0_10 = arith.constant 0 : index
    %c0_11 = arith.constant 0 : index
    %12 = vector.load %arg4[%c0_10, %c0_11] : memref<6x16xf32, #tpu.memory_space<vmem>>, vector<6x16xf32>
    %cst_12 = arith.constant dense<0.000000e+00> : vector<6x256xf32>
    %13 = tpu.matmul %12, %8, %cst_12 {dimension_numbers = #tpu.dot_dimension_numbers<[1], [0], [0], [1], [0, 0, 1, 1], [], []>} : vector<6x16xf32>, vector<16x256xf32>, vector<6x256xf32> -> vector<6x256xf32>
    %c0_13 = arith.constant 0 : index
    %c0_14 = arith.constant 0 : index
    %14 = vector.load %arg5[%c0_13, %c0_14] : memref<6x1xf32, #tpu.memory_space<vmem>>, vector<6x1xf32>
    %15 = vector.broadcast %14 : vector<6x1xf32> to vector<6x256xf32>
    %16 = arith.addf %13, %15 : vector<6x256xf32>
    %c0_15 = arith.constant 0 : index
    %c0_16 = arith.constant 0 : index
    %c0_17 = arith.constant 0 : index
    %17 = vector.load %arg8[%c0_15, %c0_16, %c0_17] : memref<1x6x256xf32, #tpu.memory_space<vmem>>, vector<1x6x256xf32>
    %18 = vector.shape_cast %17 : vector<1x6x256xf32> to vector<6x256xf32>
    %19 = vector.shape_cast %16 : vector<6x256xf32> to vector<1x6x256xf32>
    tpu.vector_store %arg8[%c0_15, %c0_16, %c0_17], %19 {strides = array<i32>} : memref<1x6x256xf32, #tpu.memory_space<vmem>>, vector<1x6x256xf32>,
    return
  }
  func.func @transform_0(%arg0: i32, %arg1: i32) -> (i32, i32) {
    %c0_i32 = arith.constant 0 : i32
    %c0_i32_0 = arith.constant 0 : i32
    %c0_i32_1 = arith.constant 0 : i32
    return %c0_i32, %c0_i32_0 : i32, i32
  }
  func.func @transform_1(%arg0: i32, %arg1: i32) -> (i32, i32) {
    %c0_i32 = arith.constant 0 : i32
    %c0_i32_0 = arith.constant 0 : i32
    %c0_i32_1 = arith.constant 0 : i32
    return %c0_i32, %c0_i32_0 : i32, i32
  }
  func.func @transform_2(%arg0: i32, %arg1: i32) -> (i32, i32) {
    %c0_i32 = arith.constant 0 : i32
    %c0_i32_0 = arith.constant 0 : i32
    %c0_i32_1 = arith.constant 0 : i32
    return %c0_i32, %c0_i32_0 : i32, i32
  }
  func.func @transform_3(%arg0: i32, %arg1: i32) -> (i32, i32) {
    %c0_i32 = arith.constant 0 : i32
    %c0_i32_0 = arith.constant 0 : i32
    %c0_i32_1 = arith.constant 0 : i32
    return %c0_i32, %c0_i32_0 : i32, i32
  }
  func.func @transform_4(%arg0: i32, %arg1: i32) -> (i32, i32, i32) {
    %c0_i32 = arith.constant 0 : i32
    %c0_i32_0 = arith.constant 0 : i32
    return %arg0, %c0_i32, %arg1 : i32, i32, i32
  }
  func.func @transform_5(%arg0: i32, %arg1: i32) -> (i32, i32, i32) {
    %c0_i32 = arith.constant 0 : i32
    %c0_i32_0 = arith.constant 0 : i32
    return %arg0, %c0_i32, %arg1 : i32, i32, i32
  }
  func.func @transform_6(%arg0: i32, %arg1: i32) -> (i32, i32, i32) {
    %c0_i32 = arith.constant 0 : i32
    %c0_i32_0 = arith.constant 0 : i32
    return %arg0, %c0_i32, %arg1 : i32, i32, i32
  }
}

module attributes {stable_mosaic.version = 11 : i64} {
  func.func @_proto_kernel(%arg0: i32, %arg1: memref<1x6x256xf32, #tpu.memory_space<vmem>>, %arg2: memref<1x16x256xf32, #tpu.memory_space<vmem>>, %arg3: memref<1x6x16xf32, #tpu.memory_space<vmem>>, %arg4: memref<1x6x1xf32, #tpu.memory_space<vmem>>) attributes {dimension_semantics = [#tpu.dimension_semantics<parallel>], iteration_bounds = array<i64: 2>, scalar_prefetch = 0 : i64, scratch_operands = 0 : i64, tpu.core_type = #tpu.core_type<tc>, window_params = [{transform_indices = @transform_0, window_bounds = array<i64: 1, 6, 256>}, {transform_indices = @transform_1, window_bounds = array<i64: 1, 16, 256>}, {transform_indices = @transform_2, window_bounds = array<i64: 1, 6, 16>}, {transform_indices = @transform_3, window_bounds = array<i64: 1, 6, 1>}]} {
    %c0 = arith.constant 0 : index
    %c0_0 = arith.constant 0 : index
    %c0_1 = arith.constant 0 : index
    %0 = vector.load %arg1[%c0, %c0_0, %c0_1] : memref<1x6x256xf32, #tpu.memory_space<vmem>>, vector<1x6x256xf32>
    %1 = vector.shape_cast %0 : vector<1x6x256xf32> to vector<6x256xf32>
    %c0_2 = arith.constant 0 : index
    %c0_3 = arith.constant 0 : index
    %c0_4 = arith.constant 0 : index
    %2 = vector.load %arg2[%c0_2, %c0_3, %c0_4] : memref<1x16x256xf32, #tpu.memory_space<vmem>>, vector<1x16x256xf32>
    %3 = vector.shape_cast %2 : vector<1x16x256xf32> to vector<16x256xf32>
    %4 = tpu.iota {dimensions = array<i32: 0>} : vector<6x256xi32>
    %cst = arith.constant dense<0xFF800000> : vector<256xf32>
    %5 = vector.multi_reduction <maximumf>, %1, %cst [0] : vector<6x256xf32> to vector<256xf32>
    %6 = vector.shape_cast %5 : vector<256xf32> to vector<1x256xf32>
    %7 = vector.broadcast %6 : vector<1x256xf32> to vector<6x256xf32>
    %8 = arith.cmpf oge, %1, %7 : vector<6x256xf32>
    %c6_i32 = arith.constant 6 : i32
    %9 = vector.broadcast %c6_i32 : i32 to vector<6x256xi32>
    %10 = arith.select %8, %4, %9 : vector<6x256xi1>, vector<6x256xi32>
    %cst_5 = arith.constant dense<2147483647> : vector<256xi32>
    %11 = vector.multi_reduction <minsi>, %10, %cst_5 [0] : vector<6x256xi32> to vector<256xi32>
    %12 = vector.shape_cast %11 : vector<256xi32> to vector<1x256xi32>
    %13 = vector.broadcast %12 : vector<1x256xi32> to vector<6x256xi32>
    %14 = arith.cmpi eq, %4, %13 : vector<6x256xi32>
    %15 = arith.extui %14 : vector<6x256xi1> to vector<6x256xi32>
    %16 = arith.sitofp %15 : vector<6x256xi32> to vector<6x256xf32>
    %cst_6 = arith.constant dense<0.000000e+00> : vector<6x16xf32>
    %17 = tpu.matmul %16, %3, %cst_6 {dimension_numbers = #tpu.dot_dimension_numbers<[1], [1], [0], [0], [0, 0, 1, 0], [], []>} : vector<6x256xf32>, vector<16x256xf32>, vector<6x16xf32> -> vector<6x16xf32>
    %c0_7 = arith.constant 0 : index
    %c0_8 = arith.constant 0 : index
    %c0_9 = arith.constant 0 : index
    %18 = vector.load %arg3[%c0_7, %c0_8, %c0_9] : memref<1x6x16xf32, #tpu.memory_space<vmem>>, vector<1x6x16xf32>
    %19 = vector.shape_cast %18 : vector<1x6x16xf32> to vector<6x16xf32>
    %20 = vector.shape_cast %17 : vector<6x16xf32> to vector<1x6x16xf32>
    tpu.vector_store %arg3[%c0_7, %c0_8, %c0_9], %20 {strides = array<i32>} : memref<1x6x16xf32, #tpu.memory_space<vmem>>, vector<1x6x16xf32>,
    %cst_10 = arith.constant dense<0.000000e+00> : vector<6xf32>
    %21 = vector.multi_reduction <add>, %16, %cst_10 [1] : vector<6x256xf32> to vector<6xf32>
    %22 = vector.shape_cast %21 : vector<6xf32> to vector<6x1xf32>
    %c0_11 = arith.constant 0 : index
    %c0_12 = arith.constant 0 : index
    %c0_13 = arith.constant 0 : index
    %23 = vector.load %arg4[%c0_11, %c0_12, %c0_13] : memref<1x6x1xf32, #tpu.memory_space<vmem>>, vector<1x6x1xf32>
    %24 = vector.shape_cast %23 : vector<1x6x1xf32> to vector<6x1xf32>
    %25 = vector.shape_cast %22 : vector<6x1xf32> to vector<1x6x1xf32>
    tpu.vector_store %arg4[%c0_11, %c0_12, %c0_13], %25 {strides = array<i32>} : memref<1x6x1xf32, #tpu.memory_space<vmem>>, vector<1x6x1xf32>,
    return
  }
  func.func @transform_0(%arg0: i32) -> (i32, i32, i32) {
    %c0_i32 = arith.constant 0 : i32
    %c0_i32_0 = arith.constant 0 : i32
    %c0_i32_1 = arith.constant 0 : i32
    return %arg0, %c0_i32, %c0_i32_0 : i32, i32, i32
  }
  func.func @transform_1(%arg0: i32) -> (i32, i32, i32) {
    %c0_i32 = arith.constant 0 : i32
    %c0_i32_0 = arith.constant 0 : i32
    %c0_i32_1 = arith.constant 0 : i32
    return %arg0, %c0_i32, %c0_i32_0 : i32, i32, i32
  }
  func.func @transform_2(%arg0: i32) -> (i32, i32, i32) {
    %c0_i32 = arith.constant 0 : i32
    %c0_i32_0 = arith.constant 0 : i32
    %c0_i32_1 = arith.constant 0 : i32
    return %arg0, %c0_i32, %c0_i32_0 : i32, i32, i32
  }
  func.func @transform_3(%arg0: i32) -> (i32, i32, i32) {
    %c0_i32 = arith.constant 0 : i32
    %c0_i32_0 = arith.constant 0 : i32
    %c0_i32_1 = arith.constant 0 : i32
    return %arg0, %c0_i32, %c0_i32_0 : i32, i32, i32
  }
}

module attributes {stable_mosaic.version = 11 : i64} {
  func.func @_sim_weight_kernel(%arg0: i32, %arg1: memref<1x16x256xf32, #tpu.memory_space<vmem>>, %arg2: memref<1x6x16xf32, #tpu.memory_space<vmem>>, %arg3: memref<1x6x256xf32, #tpu.memory_space<vmem>>, %arg4: memref<1x6x256xf32, #tpu.memory_space<vmem>>, %arg5: memref<1x1x256xf32, #tpu.memory_space<vmem>>, %arg6: memref<1x16x256xf32, #tpu.memory_space<vmem>>) attributes {dimension_semantics = [#tpu.dimension_semantics<parallel>], iteration_bounds = array<i64: 2>, scalar_prefetch = 0 : i64, scratch_operands = 0 : i64, tpu.core_type = #tpu.core_type<tc>, window_params = [{transform_indices = @transform_0, window_bounds = array<i64: 1, 16, 256>}, {transform_indices = @transform_1, window_bounds = array<i64: 1, 6, 16>}, {transform_indices = @transform_2, window_bounds = array<i64: 1, 6, 256>}, {transform_indices = @transform_3, window_bounds = array<i64: 1, 6, 256>}, {transform_indices = @transform_4, window_bounds = array<i64: 1, 1, 256>}, {transform_indices = @transform_5, window_bounds = array<i64: 1, 16, 256>}]} {
    %c0 = arith.constant 0 : index
    %c0_0 = arith.constant 0 : index
    %c0_1 = arith.constant 0 : index
    %0 = vector.load %arg1[%c0, %c0_0, %c0_1] : memref<1x16x256xf32, #tpu.memory_space<vmem>>, vector<1x16x256xf32>
    %1 = vector.shape_cast %0 : vector<1x16x256xf32> to vector<16x256xf32>
    %c0_2 = arith.constant 0 : index
    %c0_3 = arith.constant 0 : index
    %c0_4 = arith.constant 0 : index
    %2 = vector.load %arg2[%c0_2, %c0_3, %c0_4] : memref<1x6x16xf32, #tpu.memory_space<vmem>>, vector<1x6x16xf32>
    %3 = vector.shape_cast %2 : vector<1x6x16xf32> to vector<6x16xf32>
    %4 = arith.mulf %1, %1 : vector<16x256xf32>
    %cst = arith.constant dense<0.000000e+00> : vector<256xf32>
    %5 = vector.multi_reduction <add>, %4, %cst [0] : vector<16x256xf32> to vector<256xf32>
    %6 = vector.shape_cast %5 : vector<256xf32> to vector<1x256xf32>
    %cst_5 = arith.constant 1.000000e-24 : f32
    %7 = vector.broadcast %cst_5 : f32 to vector<1x256xf32>
    %8 = arith.maximumf %6, %7 : vector<1x256xf32>
    %9 = math.rsqrt %8 : vector<1x256xf32>
    %10 = vector.broadcast %9 : vector<1x256xf32> to vector<16x256xf32>
    %11 = arith.mulf %1, %10 : vector<16x256xf32>
    %12 = arith.mulf %3, %3 : vector<6x16xf32>
    %cst_6 = arith.constant dense<0.000000e+00> : vector<6xf32>
    %13 = vector.multi_reduction <add>, %12, %cst_6 [1] : vector<6x16xf32> to vector<6xf32>
    %14 = vector.shape_cast %13 : vector<6xf32> to vector<6x1xf32>
    %cst_7 = arith.constant 1.000000e-24 : f32
    %15 = vector.broadcast %cst_7 : f32 to vector<6x1xf32>
    %16 = arith.maximumf %14, %15 : vector<6x1xf32>
    %17 = math.rsqrt %16 : vector<6x1xf32>
    %18 = vector.broadcast %17 : vector<6x1xf32> to vector<6x16xf32>
    %19 = arith.mulf %3, %18 : vector<6x16xf32>
    %cst_8 = arith.constant dense<0.000000e+00> : vector<6x256xf32>
    %20 = tpu.matmul %19, %11, %cst_8 {dimension_numbers = #tpu.dot_dimension_numbers<[1], [0], [0], [1], [0, 0, 1, 1], [], []>} : vector<6x16xf32>, vector<16x256xf32>, vector<6x256xf32> -> vector<6x256xf32>
    %c0_9 = arith.constant 0 : index
    %c0_10 = arith.constant 0 : index
    %c0_11 = arith.constant 0 : index
    %21 = vector.load %arg3[%c0_9, %c0_10, %c0_11] : memref<1x6x256xf32, #tpu.memory_space<vmem>>, vector<1x6x256xf32>
    %22 = vector.shape_cast %21 : vector<1x6x256xf32> to vector<6x256xf32>
    %23 = vector.shape_cast %20 : vector<6x256xf32> to vector<1x6x256xf32>
    tpu.vector_store %arg3[%c0_9, %c0_10, %c0_11], %23 {strides = array<i32>} : memref<1x6x256xf32, #tpu.memory_space<vmem>>, vector<1x6x256xf32>,
    %cst_12 = arith.constant dense<0xFF800000> : vector<256xf32>
    %24 = vector.multi_reduction <maximumf>, %20, %cst_12 [0] : vector<6x256xf32> to vector<256xf32>
    %25 = vector.shape_cast %24 : vector<256xf32> to vector<1x256xf32>
    %26 = vector.broadcast %25 : vector<1x256xf32> to vector<6x256xf32>
    %27 = arith.subf %20, %26 : vector<6x256xf32>
    %28 = math.exp %27 : vector<6x256xf32>
    %cst_13 = arith.constant dense<0.000000e+00> : vector<256xf32>
    %29 = vector.multi_reduction <add>, %28, %cst_13 [0] : vector<6x256xf32> to vector<256xf32>
    %30 = vector.shape_cast %29 : vector<256xf32> to vector<1x256xf32>
    %31 = tpu.reciprocal %30 {approx = true} : vector<1x256xf32> -> vector<1x256xf32>
    %32 = vector.broadcast %31 : vector<1x256xf32> to vector<6x256xf32>
    %33 = arith.mulf %28, %32 : vector<6x256xf32>
    %c0_14 = arith.constant 0 : index
    %c0_15 = arith.constant 0 : index
    %c0_16 = arith.constant 0 : index
    %34 = vector.load %arg4[%c0_14, %c0_15, %c0_16] : memref<1x6x256xf32, #tpu.memory_space<vmem>>, vector<1x6x256xf32>
    %35 = vector.shape_cast %34 : vector<1x6x256xf32> to vector<6x256xf32>
    %36 = vector.shape_cast %33 : vector<6x256xf32> to vector<1x6x256xf32>
    tpu.vector_store %arg4[%c0_14, %c0_15, %c0_16], %36 {strides = array<i32>} : memref<1x6x256xf32, #tpu.memory_space<vmem>>, vector<1x6x256xf32>,
    %cst_17 = arith.constant dense<0xFF800000> : vector<256xf32>
    %37 = vector.multi_reduction <maximumf>, %33, %cst_17 [0] : vector<6x256xf32> to vector<256xf32>
    %38 = vector.shape_cast %37 : vector<256xf32> to vector<1x256xf32>
    %c0_18 = arith.constant 0 : index
    %c0_19 = arith.constant 0 : index
    %c0_20 = arith.constant 0 : index
    %39 = vector.load %arg5[%c0_18, %c0_19, %c0_20] : memref<1x1x256xf32, #tpu.memory_space<vmem>>, vector<1x1x256xf32>
    %40 = vector.shape_cast %39 : vector<1x1x256xf32> to vector<1x256xf32>
    %41 = vector.shape_cast %38 : vector<1x256xf32> to vector<1x1x256xf32>
    tpu.vector_store %arg5[%c0_18, %c0_19, %c0_20], %41 {strides = array<i32>} : memref<1x1x256xf32, #tpu.memory_space<vmem>>, vector<1x1x256xf32>,
    %42 = vector.broadcast %38 : vector<1x256xf32> to vector<16x256xf32>
    %43 = arith.addf %1, %42 : vector<16x256xf32>
    %cst_21 = arith.constant 5.000000e-01 : f32
    %44 = vector.broadcast %cst_21 : f32 to vector<16x256xf32>
    %45 = arith.mulf %43, %44 : vector<16x256xf32>
    %c0_22 = arith.constant 0 : index
    %c0_23 = arith.constant 0 : index
    %c0_24 = arith.constant 0 : index
    %46 = vector.load %arg6[%c0_22, %c0_23, %c0_24] : memref<1x16x256xf32, #tpu.memory_space<vmem>>, vector<1x16x256xf32>
    %47 = vector.shape_cast %46 : vector<1x16x256xf32> to vector<16x256xf32>
    %48 = vector.shape_cast %45 : vector<16x256xf32> to vector<1x16x256xf32>
    tpu.vector_store %arg6[%c0_22, %c0_23, %c0_24], %48 {strides = array<i32>} : memref<1x16x256xf32, #tpu.memory_space<vmem>>, vector<1x16x256xf32>,
    return
  }
  func.func @transform_0(%arg0: i32) -> (i32, i32, i32) {
    %c0_i32 = arith.constant 0 : i32
    %c0_i32_0 = arith.constant 0 : i32
    %c0_i32_1 = arith.constant 0 : i32
    return %arg0, %c0_i32, %c0_i32_0 : i32, i32, i32
  }
  func.func @transform_1(%arg0: i32) -> (i32, i32, i32) {
    %c0_i32 = arith.constant 0 : i32
    %c0_i32_0 = arith.constant 0 : i32
    %c0_i32_1 = arith.constant 0 : i32
    return %arg0, %c0_i32, %c0_i32_0 : i32, i32, i32
  }
  func.func @transform_2(%arg0: i32) -> (i32, i32, i32) {
    %c0_i32 = arith.constant 0 : i32
    %c0_i32_0 = arith.constant 0 : i32
    %c0_i32_1 = arith.constant 0 : i32
    return %arg0, %c0_i32, %c0_i32_0 : i32, i32, i32
  }
  func.func @transform_3(%arg0: i32) -> (i32, i32, i32) {
    %c0_i32 = arith.constant 0 : i32
    %c0_i32_0 = arith.constant 0 : i32
    %c0_i32_1 = arith.constant 0 : i32
    return %arg0, %c0_i32, %c0_i32_0 : i32, i32, i32
  }
  func.func @transform_4(%arg0: i32) -> (i32, i32, i32) {
    %c0_i32 = arith.constant 0 : i32
    %c0_i32_0 = arith.constant 0 : i32
    %c0_i32_1 = arith.constant 0 : i32
    return %arg0, %c0_i32, %c0_i32_0 : i32, i32, i32
  }
  func.func @transform_5(%arg0: i32) -> (i32, i32, i32) {
    %c0_i32 = arith.constant 0 : i32
    %c0_i32_0 = arith.constant 0 : i32
    %c0_i32_1 = arith.constant 0 : i32
    return %arg0, %c0_i32, %c0_i32_0 : i32, i32, i32
  }
}

</mosaic_0001>

<llo_original>
// kernel: forward.14
$region0: #{forward.14}
  #allocation0 [shape = 'u32[]', space=smem, size = 0x4, offset = 0x4, fixed_abs, tag = 'smem constant byte address 0x4 - core index']
  #allocation1 [shape = 'u32[144,128]{1,0:T(1,128)}', space=vmem, size = 0x12000, scoped, tag = 'internal scratch']
  %s0 = inlined_call_operand.vmem [shape: bf16[16,147], index: 0, kind: input, shape index: {}]
  %s1 = inlined_call_operand.vmem [shape: f32[16,1], index: 1, kind: input, shape index: {}]
  %s2 = inlined_call_operand.vmem [shape: bf16[2,147,1024], index: 2, kind: input, shape index: {}]
  %s3 = inlined_call_operand.vmem [shape: bf16[2,16,1024], index: 3, kind: output, shape index: {}]
  %s4 = sld [smem:[#allocation0]]
  $region45: #{forward.14} parent=0
    _
  %s6 = ssub.s32 1, %s4
  %s7 = scalar_select 0, %s6, %s4
  loop: start=0, step=1, limit=4
  $region2: #{forward.14} parent=0 // loop_pre_header
    _
  $region3: #{forward.14} parent=0 // loop_header
    %s9 = sphi 0, %s13
    %p10 = scmp.ge.s32.totalorder %s9, 4
    %s16 = sphi 0, %s28
    %s17 = sphi 0, %s24
    %s18 = sphi 0, %s16
    %s19 = sphi 0, %s17
    %s20 = sphi 0, %s18
    %s21 = sphi 0, %s19
    %s29 = sphi 0, %s29
    %s31 = sphi 0, %s29
    %s32 = sphi 0, %s31
    %s46 = sphi 0, %s32
    %s50 = sphi 0, %s50
    %s52 = sphi 0, %s50
    %s53 = sphi 0, %s52
    %s67 = sphi 0, %s53
    %s75 = sphi 0, %s77
    %s78 = sphi 0, %s75
    %s79 = sphi 0, %s78
    %s95 = sphi 0, %s79
    %s103 = sphi 0, %s105
    %s106 = sphi 0, %s103
    %s107 = sphi 0, %s106
    %s123 = sphi 0, %s107
  $region4: #{forward.14} parent=0 // loop_header_branch
    %12 = sbr.rel (%p10) target = $region8
  $region5: #{forward.14} parent=0 // loop_body
    %s14 = ssub.s32 %s9, 1
    %s15 = ssub.s32 %s9, 2
    %s22 = sadd.s32 1, %s17
    %p23 = scmp.ge.s32.totalorder %s22, 1
    %s24 = scalar_select %p23, 0, %s22
    %s25 = sadd.s32 1, %s16
    %s26 = scalar_select %p23, %s25, %s16
    %p27 = scmp.ge.s32.totalorder %s26, 2
    %s28 = scalar_select %p27, 0, %s26
    %s30 = sadd.s32 %s29, 1
    %p33 = scmp.eq.s32.totalorder %s9, 1
    %p34 = scmp.ne.s32.totalorder %s29, %s31
    %p35 = scmp.eq.s32.totalorder %s9, 0
    %p36 = por %p34, %p35
    %p37 = scmp.ne.s32.totalorder %s29, %s31
    %p38 = scmp.eq.s32.totalorder %s14, 1
    %p39 = por %p37, %p38
    %p40 = scmp.ne.s32.totalorder %s31, %s32
    %p41 = scmp.eq.s32.totalorder %s14, 0
    %p42 = por %p40, %p41
    %p43 = scmp.ne.s32.totalorder %s31, %s32
    %p44 = scmp.eq.s32.totalorder %s15, 1
    %p45 = por %p43, %p44
    %p47 = scmp.ne.s32.totalorder %s32, %s46
    %p48 = scmp.eq.s32.totalorder %s15, 0
    %p49 = por %p47, %p48
    %s51 = sadd.s32 %s50, 1
    %p54 = scmp.eq.s32.totalorder %s9, 1
    %p55 = scmp.ne.s32.totalorder %s50, %s52
    %p56 = scmp.eq.s32.totalorder %s9, 0
    %p57 = por %p55, %p56
    %p58 = scmp.ne.s32.totalorder %s50, %s52
    %p59 = scmp.eq.s32.totalorder %s14, 1
    %p60 = por %p58, %p59
    %p61 = scmp.ne.s32.totalorder %s52, %s53
    %p62 = scmp.eq.s32.totalorder %s14, 0
    %p63 = por %p61, %p62
    %p64 = scmp.ne.s32.totalorder %s52, %s53
    %p65 = scmp.eq.s32.totalorder %s15, 1
    %p66 = por %p64, %p65
    %p68 = scmp.ne.s32.totalorder %s53, %s67
    %p69 = scmp.eq.s32.totalorder %s15, 0
    %p70 = por %p68, %p69
    %s71 = ssub.s32 %s16, %s28
    %s72 = ssub.s32 %s17, %s24
    %s73 = sor.u32 %s71, %s72
    %p74 = scmp.eq.s32.totalorder %s73, 0
    %s76 = sadd.s32 %s75, 1
    %s77 = scalar_select %p74, %s75, %s76
    %p80 = pneg %p74
    %p81 = scmp.eq.s32.totalorder %s9, 1
    %p82 = por %p80, %p81
    %p83 = scmp.ne.s32.totalorder %s75, %s78
    %p84 = scmp.eq.s32.totalorder %s9, 0
    %p85 = por %p83, %p84
    %p86 = scmp.ne.s32.totalorder %s75, %s78
    %p87 = scmp.eq.s32.totalorder %s14, 1
    %p88 = por %p86, %p87
    %p89 = scmp.ne.s32.totalorder %s78, %s79
    %p90 = scmp.eq.s32.totalorder %s14, 0
    %p91 = por %p89, %p90
    %p92 = scmp.ne.s32.totalorder %s78, %s79
    %p93 = scmp.eq.s32.totalorder %s15, 1
    %p94 = por %p92, %p93
    %p96 = scmp.ne.s32.totalorder %s79, %s95
    %p97 = scmp.eq.s32.totalorder %s15, 0
    %p98 = por %p96, %p97
    %s99 = ssub.s32 %s16, %s28
    %s100 = ssub.s32 %s17, %s24
    %s101 = sor.u32 %s99, %s100
    %p102 = scmp.eq.s32.totalorder %s101, 0
    %s104 = sadd.s32 %s103, 1
    %s105 = scalar_select %p102, %s103, %s104
    %p108 = pneg %p102
    %p109 = scmp.eq.s32.totalorder %s9, 1
    %p110 = por %p108, %p109
    %p111 = scmp.ne.s32.totalorder %s103, %s106
    %p112 = scmp.eq.s32.totalorder %s9, 0
    %p113 = por %p111, %p112
    %p114 = scmp.ne.s32.totalorder %s103, %s106
    %p115 = scmp.eq.s32.totalorder %s14, 1
    %p116 = por %p114, %p115
    %p117 = scmp.ne.s32.totalorder %s106, %s107
    %p118 = scmp.eq.s32.totalorder %s14, 0
    %p119 = por %p117, %p118
    %p120 = scmp.ne.s32.totalorder %s106, %s107
    %p121 = scmp.eq.s32.totalorder %s15, 1
    %p122 = por %p120, %p121
    %p124 = scmp.ne.s32.totalorder %s107, %s123
    %p125 = scmp.eq.s32.totalorder %s15, 0
    %p126 = por %p124, %p125
    %p127 = scmp.le.s32.totalorder 1, %s9
    %p128 = scmp.lt.s32.totalorder %s9, 3
    %p129 = pnand %p127, %p128
    %p130 = pneg %p129
    // Predicated region
    $region9: #{forward.14} parent=5 // pred_check
      _
    $region10: #{forward.14} parent=5 // pred_check_branch
      %132 = sbr.rel (%p129) target = $region12
    $region11: #{forward.14} parent=5 // pred_region
      %s133 = ssub.s32 %s9, 1
      // Predicated region
      $region13: #{forward.14} parent=11 // pred_check
        %p134 = pneg %p42
      $region14: #{forward.14} parent=11 // pred_check_branch
        %136 = sbr.rel (%p134) target = $region16
      $region15: #{forward.14} parent=11 // pred_region
        _
      $region16: #{forward.14} parent=11 // pred_fallthru
        _
      // Predicated region
      $region17: #{forward.14} parent=11 // pred_check
        %p137 = pneg %p63
      $region18: #{forward.14} parent=11 // pred_check_branch
        %139 = sbr.rel (%p137) target = $region20
      $region19: #{forward.14} parent=11 // pred_region
        _
      $region20: #{forward.14} parent=11 // pred_fallthru
        _
    $region12: #{forward.14} parent=5 // pred_fallthru
      _
    %p140 = scmp.lt.s32.totalorder %s9, 2
    // Predicated region
    $region21: #{forward.14} parent=5 // pred_check
      %p141 = pneg %p140
    $region22: #{forward.14} parent=5 // pred_check_branch
      %143 = sbr.rel (%p141) target = $region24
    $region23: #{forward.14} parent=5 // pred_region
      // Predicated region
      $region25: #{forward.14} parent=23 // pred_check
        %p144 = pneg %p85
      $region26: #{forward.14} parent=23 // pred_check_branch
        %146 = sbr.rel (%p144) target = $region28
      $region27: #{forward.14} parent=23 // pred_region
        %s147 = smul.u32 8, %s17
        %p148 = scmp.lt.s32.totalorder %s16, 1
        %s149 = scalar_select %p148, %s16, 1
        %p150 = scmp.lt.s32.totalorder %s147, 7
        %s151 = scalar_select %p150, %s147, 7
        %s152 = smul.addr %s149, 152
        %s153 = sadd.s32 %s151, %s152
        %s154 = smul.addr %s153, 4
        %s155 = scalar_lea.vmem %s2, %s154
        %s156 = smul.u32 8, %s17
      $region28: #{forward.14} parent=23 // pred_fallthru
        _
    $region24: #{forward.14} parent=5 // pred_fallthru
      _
    %p157 = scmp.le.s32.totalorder 1, %s9
    %p158 = scmp.lt.s32.totalorder %s9, 3
    %p159 = pnand %p157, %p158
    %p160 = pneg %p159
    // Predicated region
    $region29: #{forward.14} parent=5 // pred_check
      _
    $region30: #{forward.14} parent=5 // pred_check_branch
      %162 = sbr.rel (%p159) target = $region32
    $region31: #{forward.14} parent=5 // pred_region
      %s163 = ssub.s32 %s9, 1
      %p164 = pneg %p42
      %p165 = pneg %p39
      %p166 = pneg %p63
      %p167 = pneg %p60
      %s168 = smul.u32 8, %s19
      %p169 = scmp.lt.s32.totalorder %s18, 1
      %s170 = scalar_select %p169, %s18, 1
      %p171 = scmp.lt.s32.totalorder %s168, 7
      %s172 = scalar_select %p171, %s168, 7
      %s173 = smul.addr %s170, 152
      %s174 = sadd.s32 %s172, %s173
      %s175 = smul.addr %s174, 4
      %s176 = scalar_lea.vmem %s2, %s175
      %p177 = pneg %p91
      %p178 = pneg %p88
      %p179 = pneg %p119
      %p180 = pneg %p116
      %s181 = smul.u32 8, %s19
      %p182 = scmp.lt.s32.totalorder %s18, 1
      %s183 = scalar_select %p182, %s18, 1
      %p184 = scmp.lt.s32.totalorder %s181, 7
      %s185 = scalar_select %p184, %s181, 7
      %s186 = smul.addr %s183, 16
      %s187 = sadd.s32 %s185, %s186
      %s188 = smul.addr %s187, 4
      %s189 = scalar_lea.vmem %s3, %s188
      %s190 = smul.u32 8, %s19
      %p191 = scmp.lt.s32.totalorder %s18, 1
      %s192 = scalar_select %p191, %s18, 1
      %p193 = scmp.lt.s32.totalorder %s190, 7
      %s194 = scalar_select %p193, %s190, 7
      %s195 = smul.addr %s192, 152
      %s196 = sadd.s32 %s194, %s195
      %s197 = smul.addr %s196, 4
      %s198 = scalar_lea.vmem %s2, %s197
      %s199 = smul.u32 8, %s19
      %s200 = smul.u32 8, %s19
      %p201 = scmp.lt.s32.totalorder %s18, 1
      %s202 = scalar_select %p201, %s18, 1
      %p203 = scmp.lt.s32.totalorder %s200, 7
      %s204 = scalar_select %p203, %s200, 7
      %s205 = smul.addr %s202, 16
      %s206 = sadd.s32 %s204, %s205
      %s207 = smul.addr %s206, 4
      %s208 = scalar_lea.vmem %s3, %s207
      %s209 = smul.u32 8, %s19
      %v211 = vld [vmem:[%s0] sm:$0xff]
      %v212 = vld [vmem:[%s0 + $0x8] sm:$0xff]
      %v213 = vld [vmem:[%s198] sm:$0xff]
      %v214 = vld [vmem:[%s198 + $0x8] sm:$0xff]
      %v215 = vld [vmem:[%s198 + $0x10] sm:$0xff]
      %v216 = vld [vmem:[%s198 + $0x18] sm:$0xff]
      %v217 = vld [vmem:[%s198 + $0x20] sm:$0xff]
      %v218 = vld [vmem:[%s198 + $0x28] sm:$0xff]
      %v219 = vld [vmem:[%s198 + $0x30] sm:$0xff]
      %v220 = vld [vmem:[%s198 + $0x38] sm:$0xff]
      %v221 = vld [vmem:[%s198 + $0x40] sm:$0xff]
      %v222 = vld [vmem:[%s198 + $0x48] sm:$0xff]
      %v223 = vld [vmem:[%s198 + $0x50] sm:$0xff]
      %v224 = vld [vmem:[%s198 + $0x58] sm:$0xff]
      %v225 = vld [vmem:[%s198 + $0x60] sm:$0xff]
      %v226 = vld [vmem:[%s198 + $0x68] sm:$0xff]
      %v227 = vld [vmem:[%s198 + $0x70] sm:$0xff]
      %v228 = vld [vmem:[%s198 + $0x78] sm:$0xff]
      %v229 = vld [vmem:[%s198 + $0x80] sm:$0xff]
      %v230 = vld [vmem:[%s198 + $0x88] sm:$0xff]
      %v231 = vld [vmem:[%s198 + $0x90] sm:$0xff]
      %v232 = vld [vmem:[%s198 + $0x98] sm:$0xff]
      %v233 = vld [vmem:[%s198 + $0xa0] sm:$0xff]
      %v234 = vld [vmem:[%s198 + $0xa8] sm:$0xff]
      %v235 = vld [vmem:[%s198 + $0xb0] sm:$0xff]
      %v236 = vld [vmem:[%s198 + $0xb8] sm:$0xff]
      %v237 = vld [vmem:[%s198 + $0xc0] sm:$0xff]
      %v238 = vld [vmem:[%s198 + $0xc8] sm:$0xff]
      %v239 = vld [vmem:[%s198 + $0xd0] sm:$0xff]
      %v240 = vld [vmem:[%s198 + $0xd8] sm:$0xff]
      %v241 = vld [vmem:[%s198 + $0xe0] sm:$0xff]
      %v242 = vld [vmem:[%s198 + $0xe8] sm:$0xff]
      %v243 = vld [vmem:[%s198 + $0xf0] sm:$0xff]
      %v244 = vld [vmem:[%s198 + $0xf8] sm:$0xff]
      %v245 = vld [vmem:[%s198 + $0x100] sm:$0xff]
      %v246 = vld [vmem:[%s198 + $0x108] sm:$0xff]
      %v247 = vld [vmem:[%s198 + $0x110] sm:$0xff]
      %v248 = vld [vmem:[%s198 + $0x118] sm:$0xff]
      %v249 = vld [vmem:[%s198 + $0x120] sm:$0xff]
      %v250 = vld [vmem:[%s198 + $0x128] sm:$0xff]
      %v251 = vld [vmem:[%s198 + $0x130] sm:$0xff]
      %v252 = vld [vmem:[%s198 + $0x138] sm:$0xff]
      %v253 = vld [vmem:[%s198 + $0x140] sm:$0xff]
      %v254 = vld [vmem:[%s198 + $0x148] sm:$0xff]
      %v255 = vld [vmem:[%s198 + $0x150] sm:$0xff]
      %v256 = vld [vmem:[%s198 + $0x158] sm:$0xff]
      %v257 = vld [vmem:[%s198 + $0x160] sm:$0xff]
      %v258 = vld [vmem:[%s198 + $0x168] sm:$0xff]
      %v259 = vld [vmem:[%s198 + $0x170] sm:$0xff]
      %v260 = vld [vmem:[%s198 + $0x178] sm:$0xff]
      %v261 = vld [vmem:[%s198 + $0x180] sm:$0xff]
      %v262 = vld [vmem:[%s198 + $0x188] sm:$0xff]
      %v263 = vld [vmem:[%s198 + $0x190] sm:$0xff]
      %v264 = vld [vmem:[%s198 + $0x198] sm:$0xff]
      %v265 = vld [vmem:[%s198 + $0x1a0] sm:$0xff]
      %v266 = vld [vmem:[%s198 + $0x1a8] sm:$0xff]
      %v267 = vld [vmem:[%s198 + $0x1b0] sm:$0xff]
      %v268 = vld [vmem:[%s198 + $0x1b8] sm:$0xff]
      %v269 = vld [vmem:[%s198 + $0x1c0] sm:$0xff]
      %v270 = vld [vmem:[%s198 + $0x1c8] sm:$0xff]
      %v271 = vld [vmem:[%s198 + $0x1d0] sm:$0xff]
      %v272 = vld [vmem:[%s198 + $0x1d8] sm:$0xff]
      %v273 = vld [vmem:[%s198 + $0x1e0] sm:$0xff]
      %v274 = vld [vmem:[%s198 + $0x1e8] sm:$0xff]
      %v275 = vld [vmem:[%s198 + $0x1f0] sm:$0xff]
      %v276 = vld [vmem:[%s198 + $0x1f8] sm:$0xff]
      %v277 = vld [vmem:[%s198 + $0x200] sm:$0xff]
      %v278 = vld [vmem:[%s198 + $0x208] sm:$0xff]
      %v279 = vld [vmem:[%s198 + $0x210] sm:$0xff]
      %v280 = vld [vmem:[%s198 + $0x218] sm:$0xff]
      %v281 = vld [vmem:[%s198 + $0x220] sm:$0xff]
      %v282 = vld [vmem:[%s198 + $0x228] sm:$0xff]
      %v283 = vld [vmem:[%s198 + $0x230] sm:$0xff]
      %v284 = vld [vmem:[%s198 + $0x238] sm:$0xff]
      %v285 = vld [vmem:[%s198 + $0x240] sm:$0x33]
      %v286 = vld [vmem:[%s198 + $0x248] sm:$0x33]
      %v287 = vld [vmem:[%s198 + $0x250] sm:$0x33]
      %v288 = vld [vmem:[%s198 + $0x258] sm:$0x33]
      %v289 = vld [vmem:[%s1] sm:$0xff]
      %v290 = vld [vmem:[%s1 + $0x8] sm:$0xff]
      %292 = vset.pattern.permute.xlu0 0
      %293 = vperm.xlu0 %292, %v289
      %v294 = vpop.permute.xlu0 %293
      %297 = vset.pattern.permute.xlu0 0
      %298 = vperm.xlu0 %297, %v290
      %v299 = vpop.permute.xlu0 %298
      %v303 = vunpack.c.l.b16 %v211
      %v304 = vunpack.c.h.b16 %v211
      %v305 = vunpack.c.l.b16 %v212
      %v306 = vunpack.c.h.b16 %v212
      %v307 = vpack.c.b16 %v305, %v303
      %v308 = vpack.c.b16 %v306, %v304
      %v386 = vunpack.c.l.b16 %v213
      %v387 = vunpack.c.h.b16 %v213
      %v388 = vunpack.c.l.b16 %v214
      %v389 = vunpack.c.h.b16 %v214
      %v390 = vunpack.c.l.b16 %v215
      %v391 = vunpack.c.h.b16 %v215
      %v392 = vunpack.c.l.b16 %v216
      %v393 = vunpack.c.h.b16 %v216
      %v394 = vunpack.c.l.b16 %v217
      %v395 = vunpack.c.h.b16 %v217
      %v396 = vunpack.c.l.b16 %v218
      %v397 = vunpack.c.h.b16 %v218
      %v398 = vunpack.c.l.b16 %v219
      %v399 = vunpack.c.h.b16 %v219
      %v400 = vunpack.c.l.b16 %v220
      %v401 = vunpack.c.h.b16 %v220
      %v402 = vunpack.c.l.b16 %v221
      %v403 = vunpack.c.h.b16 %v221
      %v404 = vunpack.c.l.b16 %v222
      %v405 = vunpack.c.h.b16 %v222
      %v406 = vunpack.c.l.b16 %v223
      %v407 = vunpack.c.h.b16 %v223
      %v408 = vunpack.c.l.b16 %v224
      %v409 = vunpack.c.h.b16 %v224
      %v410 = vunpack.c.l.b16 %v225
      %v411 = vunpack.c.h.b16 %v225
      %v412 = vunpack.c.l.b16 %v226
      %v413 = vunpack.c.h.b16 %v226
      %v414 = vunpack.c.l.b16 %v227
      %v415 = vunpack.c.h.b16 %v227
      %v416 = vunpack.c.l.b16 %v228
      %v417 = vunpack.c.h.b16 %v228
      %v418 = vunpack.c.l.b16 %v229
      %v419 = vunpack.c.h.b16 %v229
      %v420 = vunpack.c.l.b16 %v230
      %v421 = vunpack.c.h.b16 %v230
      %v422 = vunpack.c.l.b16 %v231
      %v423 = vunpack.c.h.b16 %v231
      %v424 = vunpack.c.l.b16 %v232
      %v425 = vunpack.c.h.b16 %v232
      %v426 = vunpack.c.l.b16 %v233
      %v427 = vunpack.c.h.b16 %v233
      %v428 = vunpack.c.l.b16 %v234
      %v429 = vunpack.c.h.b16 %v234
      %v430 = vunpack.c.l.b16 %v235
      %v431 = vunpack.c.h.b16 %v235
      %v432 = vunpack.c.l.b16 %v236
      %v433 = vunpack.c.h.b16 %v236
      %v434 = vunpack.c.l.b16 %v237
      %v435 = vunpack.c.h.b16 %v237
      %v436 = vunpack.c.l.b16 %v238
      %v437 = vunpack.c.h.b16 %v238
      %v438 = vunpack.c.l.b16 %v239
      %v439 = vunpack.c.h.b16 %v239
      %v440 = vunpack.c.l.b16 %v240
      %v441 = vunpack.c.h.b16 %v240
      %v442 = vunpack.c.l.b16 %v241
      %v443 = vunpack.c.h.b16 %v241
      %v444 = vunpack.c.l.b16 %v242
      %v445 = vunpack.c.h.b16 %v242
      %v446 = vunpack.c.l.b16 %v243
      %v447 = vunpack.c.h.b16 %v243
      %v448 = vunpack.c.l.b16 %v244
      %v449 = vunpack.c.h.b16 %v244
      %v450 = vunpack.c.l.b16 %v245
      %v451 = vunpack.c.h.b16 %v245
      %v452 = vunpack.c.l.b16 %v246
      %v453 = vunpack.c.h.b16 %v246
      %v454 = vunpack.c.l.b16 %v247
      %v455 = vunpack.c.h.b16 %v247
      %v456 = vunpack.c.l.b16 %v248
      %v457 = vunpack.c.h.b16 %v248
      %v458 = vunpack.c.l.b16 %v249
      %v459 = vunpack.c.h.b16 %v249
      %v460 = vunpack.c.l.b16 %v250
      %v461 = vunpack.c.h.b16 %v250
      %v462 = vunpack.c.l.b16 %v251
      %v463 = vunpack.c.h.b16 %v251
      %v464 = vunpack.c.l.b16 %v252
      %v465 = vunpack.c.h.b16 %v252
      %v466 = vunpack.c.l.b16 %v253
      %v467 = vunpack.c.h.b16 %v253
      %v468 = vunpack.c.l.b16 %v254
      %v469 = vunpack.c.h.b16 %v254
      %v470 = vunpack.c.l.b16 %v255
      %v471 = vunpack.c.h.b16 %v255
      %v472 = vunpack.c.l.b16 %v256
      %v473 = vunpack.c.h.b16 %v256
      %v474 = vunpack.c.l.b16 %v257
      %v475 = vunpack.c.h.b16 %v257
      %v476 = vunpack.c.l.b16 %v258
      %v477 = vunpack.c.h.b16 %v258
      %v478 = vunpack.c.l.b16 %v259
      %v479 = vunpack.c.h.b16 %v259
      %v480 = vunpack.c.l.b16 %v260
      %v481 = vunpack.c.h.b16 %v260
      %v482 = vunpack.c.l.b16 %v261
      %v483 = vunpack.c.h.b16 %v261
      %v484 = vunpack.c.l.b16 %v262
      %v485 = vunpack.c.h.b16 %v262
      %v486 = vunpack.c.l.b16 %v263
      %v487 = vunpack.c.h.b16 %v263
      %v488 = vunpack.c.l.b16 %v264
      %v489 = vunpack.c.h.b16 %v264
      %v490 = vunpack.c.l.b16 %v265
      %v491 = vunpack.c.h.b16 %v265
      %v492 = vunpack.c.l.b16 %v266
      %v493 = vunpack.c.h.b16 %v266
      %v494 = vunpack.c.l.b16 %v267
      %v495 = vunpack.c.h.b16 %v267
      %v496 = vunpack.c.l.b16 %v268
      %v497 = vunpack.c.h.b16 %v268
      %v498 = vunpack.c.l.b16 %v269
      %v499 = vunpack.c.h.b16 %v269
      %v500 = vunpack.c.l.b16 %v270
      %v501 = vunpack.c.h.b16 %v270
      %v502 = vunpack.c.l.b16 %v271
      %v503 = vunpack.c.h.b16 %v271
      %v504 = vunpack.c.l.b16 %v272
      %v505 = vunpack.c.h.b16 %v272
      %v506 = vunpack.c.l.b16 %v273
      %v507 = vunpack.c.h.b16 %v273
      %v508 = vunpack.c.l.b16 %v274
      %v509 = vunpack.c.h.b16 %v274
      %v510 = vunpack.c.l.b16 %v275
      %v511 = vunpack.c.h.b16 %v275
      %v512 = vunpack.c.l.b16 %v276
      %v513 = vunpack.c.h.b16 %v276
      %v514 = vunpack.c.l.b16 %v277
      %v515 = vunpack.c.h.b16 %v277
      %v516 = vunpack.c.l.b16 %v278
      %v517 = vunpack.c.h.b16 %v278
      %v518 = vunpack.c.l.b16 %v279
      %v519 = vunpack.c.h.b16 %v279
      %v520 = vunpack.c.l.b16 %v280
      %v521 = vunpack.c.h.b16 %v280
      %v522 = vunpack.c.l.b16 %v281
      %v523 = vunpack.c.h.b16 %v281
      %v524 = vunpack.c.l.b16 %v282
      %v525 = vunpack.c.h.b16 %v282
      %v526 = vunpack.c.l.b16 %v283
      %v527 = vunpack.c.h.b16 %v283
      %v528 = vunpack.c.l.b16 %v284
      %v529 = vunpack.c.h.b16 %v284
      %v530 = vunpack.c.l.b16 %v285
      %v531 = vunpack.c.h.b16 %v285
      %v532 = vunpack.c.l.b16 %v286
      %v533 = vunpack.c.h.b16 %v286
      %v534 = vunpack.c.l.b16 %v287
      %v535 = vunpack.c.h.b16 %v287
      %v536 = vunpack.c.l.b16 %v288
      %v537 = vunpack.c.h.b16 %v288
      %v538 = vpack.c.b16 %v394, %v386
      %v539 = vpack.c.b16 %v395, %v387
      %v540 = vpack.c.b16 %v396, %v388
      %v541 = vpack.c.b16 %v397, %v389
      %v542 = vpack.c.b16 %v398, %v390
      %v543 = vpack.c.b16 %v399, %v391
      %v544 = vpack.c.b16 %v400, %v392
      %v545 = vpack.c.b16 %v401, %v393
      %v546 = vpack.c.b16 %v410, %v402
      %v547 = vpack.c.b16 %v411, %v403
      %v548 = vpack.c.b16 %v412, %v404
      %v549 = vpack.c.b16 %v413, %v405
      %v550 = vpack.c.b16 %v414, %v406
      %v551 = vpack.c.b16 %v415, %v407
      %v552 = vpack.c.b16 %v416, %v408
      %v553 = vpack.c.b16 %v417, %v409
      %v554 = vpack.c.b16 %v426, %v418
      %v555 = vpack.c.b16 %v427, %v419
      %v556 = vpack.c.b16 %v428, %v420
      %v557 = vpack.c.b16 %v429, %v421
      %v558 = vpack.c.b16 %v430, %v422
      %v559 = vpack.c.b16 %v431, %v423
      %v560 = vpack.c.b16 %v432, %v424
      %v561 = vpack.c.b16 %v433, %v425
      %v562 = vpack.c.b16 %v442, %v434
      %v563 = vpack.c.b16 %v443, %v435
      %v564 = vpack.c.b16 %v444, %v436
      %v565 = vpack.c.b16 %v445, %v437
      %v566 = vpack.c.b16 %v446, %v438
      %v567 = vpack.c.b16 %v447, %v439
      %v568 = vpack.c.b16 %v448, %v440
      %v569 = vpack.c.b16 %v449, %v441
      %v570 = vpack.c.b16 %v458, %v450
      %v571 = vpack.c.b16 %v459, %v451
      %v572 = vpack.c.b16 %v460, %v452
      %v573 = vpack.c.b16 %v461, %v453
      %v574 = vpack.c.b16 %v462, %v454
      %v575 = vpack.c.b16 %v463, %v455
      %v576 = vpack.c.b16 %v464, %v456
      %v577 = vpack.c.b16 %v465, %v457
      %v578 = vpack.c.b16 %v474, %v466
      %v579 = vpack.c.b16 %v475, %v467
      %v580 = vpack.c.b16 %v476, %v468
      %v581 = vpack.c.b16 %v477, %v469
      %v582 = vpack.c.b16 %v478, %v470
      %v583 = vpack.c.b16 %v479, %v471
      %v584 = vpack.c.b16 %v480, %v472
      %v585 = vpack.c.b16 %v481, %v473
      %v586 = vpack.c.b16 %v490, %v482
      %v587 = vpack.c.b16 %v491, %v483
      %v588 = vpack.c.b16 %v492, %v484
      %v589 = vpack.c.b16 %v493, %v485
      %v590 = vpack.c.b16 %v494, %v486
      %v591 = vpack.c.b16 %v495, %v487
      %v592 = vpack.c.b16 %v496, %v488
      %v593 = vpack.c.b16 %v497, %v489
      %v594 = vpack.c.b16 %v506, %v498
      %v595 = vpack.c.b16 %v507, %v499
      %v596 = vpack.c.b16 %v508, %v500
      %v597 = vpack.c.b16 %v509, %v501
      %v598 = vpack.c.b16 %v510, %v502
      %v599 = vpack.c.b16 %v511, %v503
      %v600 = vpack.c.b16 %v512, %v504
      %v601 = vpack.c.b16 %v513, %v505
      %v602 = vpack.c.b16 %v522, %v514
      %v603 = vpack.c.b16 %v523, %v515
      %v604 = vpack.c.b16 %v524, %v516
      %v605 = vpack.c.b16 %v525, %v517
      %v606 = vpack.c.b16 %v526, %v518
      %v607 = vpack.c.b16 %v527, %v519
      %v608 = vpack.c.b16 %v528, %v520
      %v609 = vpack.c.b16 %v529, %v521
      %v610 = vpack.c.b16 %v530, %v530
      %v611 = vpack.c.b16 %v531, %v531
      %v612 = vpack.c.b16 %v532, %v532
      %v613 = vpack.c.b16 %v533, %v533
      %v614 = vpack.c.b16 %v534, %v534
      %v615 = vpack.c.b16 %v535, %v535
      %v616 = vpack.c.b16 %v536, %v536
      %v617 = vpack.c.b16 %v537, %v537
      %vm690 = vcmask 154624
      %v692 = vsel %vm690, %v308, 0
      %vm694 = vcmask 1040384
      %vm695 = vcmask 1041408
      %v696 = vsel %vm694, 4294967295, 65535
      %v697 = vsel %vm695, %v696, 0
      %v699 = vand.u32 %v610, %v697
      %v702 = vand.u32 %v611, %v697
      %v705 = vand.u32 %v612, %v697
      %v708 = vand.u32 %v613, %v697
      %v711 = vand.u32 %v614, %v697
      %v714 = vand.u32 %v615, %v697
      %v717 = vand.u32 %v616, %v697
      %v720 = vand.u32 %v617, %v697
      %722 = vmatprep.subr.bf16.mxu0 %v595
      %723 = vmatpush1.bf16.msra.mxu0 %v594
      %724 = vmatprep.subr.bf16.mxu0 %v587
      %725 = vmatpush1.bf16.msra.mxu0 %v586
      %726 = vmatprep.subr.bf16.mxu0 %v579
      %727 = vmatpush1.bf16.msra.mxu0 %v578
      %728 = vmatprep.subr.bf16.mxu0 %v571
      %729 = vmatpush1.bf16.msra.mxu0 %v570
      %730 = vmatprep.subr.bf16.mxu0 %v563
      %731 = vmatpush1.bf16.msra.mxu0 %v562
      %732 = vmatprep.subr.bf16.mxu0 %v555
      %733 = vmatpush1.bf16.msra.mxu0 %v554
      %734 = vmatprep.subr.bf16.mxu0 %v547
      %735 = vmatpush1.bf16.msra.mxu0 %v546
      %736 = vmatprep.subr.bf16.mxu0 %v539
      %737 = vmatpush1.bf16.msra.mxu0 %v538
      %738 = vmatprep.subr.bf16.mxu0 0
      %739 = vmatpush2.bf16.msra.mxu0 0
      %740 = vmatprep.subr.bf16.mxu0 0
      %741 = vmatpush2.bf16.msra.mxu0 0
      %742 = vmatprep.subr.bf16.mxu0 0
      %743 = vmatpush2.bf16.msra.mxu0 0
      %744 = vmatprep.subr.bf16.mxu0 0
      %745 = vmatpush2.bf16.msra.mxu0 0
      %746 = vmatprep.subr.bf16.mxu0 0
      %747 = vmatpush2.bf16.msra.mxu0 0
      %748 = vmatprep.subr.bf16.mxu0 0
      %749 = vmatpush2.bf16.msra.mxu0 0
      %750 = vmatprep.subr.bf16.mxu0 %v702
      %751 = vmatpush2.bf16.msra.mxu0 %v699
      %752 = vmatprep.subr.bf16.mxu0 %v603
      %753 = vmatpush2.bf16.msra.mxu0 %v602
      %754 = vmatprep.mubr.bf16.mxu0 %v692
      %755 = vmatmul.mubr.bf16.gmra.mxu0 %v307
      %v756 = vpop.f32.mrf.mxu0
      %v757 = vadd.f32 %v294, %v756
      %v758 = vpop.f32.mrf.mxu0
      %v759 = vadd.f32 %v294, %v758
      %v760 = vpop.f32.mrf.mxu0
      %v761 = vadd.f32 %v299, %v760
      %v762 = vpop.f32.mrf.mxu0
      %v763 = vadd.f32 %v299, %v762
      %764 = vdwg.mxu0
      %765 = vmatprep.subr.bf16.mxu0 %v597
      %766 = vmatpush1.bf16.msra.mxu0 %v596
      %767 = vmatprep.subr.bf16.mxu0 %v589
      %768 = vmatpush1.bf16.msra.mxu0 %v588
      %769 = vmatprep.subr.bf16.mxu0 %v581
      %770 = vmatpush1.bf16.msra.mxu0 %v580
      %771 = vmatprep.subr.bf16.mxu0 %v573
      %772 = vmatpush1.bf16.msra.mxu0 %v572
      %773 = vmatprep.subr.bf16.mxu0 %v565
      %774 = vmatpush1.bf16.msra.mxu0 %v564
      %775 = vmatprep.subr.bf16.mxu0 %v557
      %776 = vmatpush1.bf16.msra.mxu0 %v556
      %777 = vmatprep.subr.bf16.mxu0 %v549
      %778 = vmatpush1.bf16.msra.mxu0 %v548
      %779 = vmatprep.subr.bf16.mxu0 %v541
      %780 = vmatpush1.bf16.msra.mxu0 %v540
      %781 = vmatprep.subr.bf16.mxu0 0
      %782 = vmatpush2.bf16.msra.mxu0 0
      %783 = vmatprep.subr.bf16.mxu0 0
      %784 = vmatpush2.bf16.msra.mxu0 0
      %785 = vmatprep.subr.bf16.mxu0 0
      %786 = vmatpush2.bf16.msra.mxu0 0
      %787 = vmatprep.subr.bf16.mxu0 0
      %788 = vmatpush2.bf16.msra.mxu0 0
      %789 = vmatprep.subr.bf16.mxu0 0
      %790 = vmatpush2.bf16.msra.mxu0 0
      %791 = vmatprep.subr.bf16.mxu0 0
      %792 = vmatpush2.bf16.msra.mxu0 0
      %793 = vmatprep.subr.bf16.mxu0 %v708
      %794 = vmatpush2.bf16.msra.mxu0 %v705
      %795 = vmatprep.subr.bf16.mxu0 %v605
      %796 = vmatpush2.bf16.msra.mxu0 %v604
      %797 = vmatprep.mubr.bf16.mxu0 %v692
      %798 = vmatmul.mubr.bf16.gmra.mxu0 %v307
      %v799 = vpop.f32.mrf.mxu0
      %v800 = vadd.f32 %v294, %v799
      %v801 = vpop.f32.mrf.mxu0
      %v802 = vadd.f32 %v294, %v801
      %v803 = vpop.f32.mrf.mxu0
      %v804 = vadd.f32 %v299, %v803
      %v805 = vpop.f32.mrf.mxu0
      %v806 = vadd.f32 %v299, %v805
      %807 = vdwg.mxu0
      %808 = vmatprep.subr.bf16.mxu0 %v599
      %809 = vmatpush1.bf16.msra.mxu0 %v598
      %810 = vmatprep.subr.bf16.mxu0 %v591
      %811 = vmatpush1.bf16.msra.mxu0 %v590
      %812 = vmatprep.subr.bf16.mxu0 %v583
      %813 = vmatpush1.bf16.msra.mxu0 %v582
      %814 = vmatprep.subr.bf16.mxu0 %v575
      %815 = vmatpush1.bf16.msra.mxu0 %v574
      %816 = vmatprep.subr.bf16.mxu0 %v567
      %817 = vmatpush1.bf16.msra.mxu0 %v566
      %818 = vmatprep.subr.bf16.mxu0 %v559
      %819 = vmatpush1.bf16.msra.mxu0 %v558
      %820 = vmatprep.subr.bf16.mxu0 %v551
      %821 = vmatpush1.bf16.msra.mxu0 %v550
      %822 = vmatprep.subr.bf16.mxu0 %v543
      %823 = vmatpush1.bf16.msra.mxu0 %v542
      %824 = vmatprep.subr.bf16.mxu0 0
      %825 = vmatpush2.bf16.msra.mxu0 0
      %826 = vmatprep.subr.bf16.mxu0 0
      %827 = vmatpush2.bf16.msra.mxu0 0
      %828 = vmatprep.subr.bf16.mxu0 0
      %829 = vmatpush2.bf16.msra.mxu0 0
      %830 = vmatprep.subr.bf16.mxu0 0
      %831 = vmatpush2.bf16.msra.mxu0 0
      %832 = vmatprep.subr.bf16.mxu0 0
      %833 = vmatpush2.bf16.msra.mxu0 0
      %834 = vmatprep.subr.bf16.mxu0 0
      %835 = vmatpush2.bf16.msra.mxu0 0
      %836 = vmatprep.subr.bf16.mxu0 %v714
      %837 = vmatpush2.bf16.msra.mxu0 %v711
      %838 = vmatprep.subr.bf16.mxu0 %v607
      %839 = vmatpush2.bf16.msra.mxu0 %v606
      %840 = vmatprep.mubr.bf16.mxu0 %v692
      %841 = vmatmul.mubr.bf16.gmra.mxu0 %v307
      %v842 = vpop.f32.mrf.mxu0
      %v843 = vadd.f32 %v294, %v842
      %v844 = vpop.f32.mrf.mxu0
      %v845 = vadd.f32 %v294, %v844
      %v846 = vpop.f32.mrf.mxu0
      %v847 = vadd.f32 %v299, %v846
      %v848 = vpop.f32.mrf.mxu0
      %v849 = vadd.f32 %v299, %v848
      %850 = vdwg.mxu0
      %851 = vmatprep.subr.bf16.mxu0 %v601
      %852 = vmatpush1.bf16.msra.mxu0 %v600
      %853 = vmatprep.subr.bf16.mxu0 %v593
      %854 = vmatpush1.bf16.msra.mxu0 %v592
      %855 = vmatprep.subr.bf16.mxu0 %v585
      %856 = vmatpush1.bf16.msra.mxu0 %v584
      %857 = vmatprep.subr.bf16.mxu0 %v577
      %858 = vmatpush1.bf16.msra.mxu0 %v576
      %859 = vmatprep.subr.bf16.mxu0 %v569
      %860 = vmatpush1.bf16.msra.mxu0 %v568
      %861 = vmatprep.subr.bf16.mxu0 %v561
      %862 = vmatpush1.bf16.msra.mxu0 %v560
      %863 = vmatprep.subr.bf16.mxu0 %v553
      %864 = vmatpush1.bf16.msra.mxu0 %v552
      %865 = vmatprep.subr.bf16.mxu0 %v545
      %866 = vmatpush1.bf16.msra.mxu0 %v544
      %867 = vmatprep.subr.bf16.mxu0 0
      %868 = vmatpush2.bf16.msra.mxu0 0
      %869 = vmatprep.subr.bf16.mxu0 0
      %870 = vmatpush2.bf16.msra.mxu0 0
      %871 = vmatprep.subr.bf16.mxu0 0
      %872 = vmatpush2.bf16.msra.mxu0 0
      %873 = vmatprep.subr.bf16.mxu0 0
      %874 = vmatpush2.bf16.msra.mxu0 0
      %875 = vmatprep.subr.bf16.mxu0 0
      %876 = vmatpush2.bf16.msra.mxu0 0
      %877 = vmatprep.subr.bf16.mxu0 0
      %878 = vmatpush2.bf16.msra.mxu0 0
      %879 = vmatprep.subr.bf16.mxu0 %v720
      %880 = vmatpush2.bf16.msra.mxu0 %v717
      %881 = vmatprep.subr.bf16.mxu0 %v609
      %882 = vmatpush2.bf16.msra.mxu0 %v608
      %883 = vmatprep.mubr.bf16.mxu0 %v692
      %884 = vmatmul.mubr.bf16.gmra.mxu0 %v307
      %v885 = vpop.f32.mrf.mxu0
      %v886 = vadd.f32 %v294, %v885
      %v887 = vpop.f32.mrf.mxu0
      %v888 = vadd.f32 %v294, %v887
      %v889 = vpop.f32.mrf.mxu0
      %v890 = vadd.f32 %v299, %v889
      %v891 = vpop.f32.mrf.mxu0
      %v892 = vadd.f32 %v299, %v891
      %893 = vdwg.mxu0
      %v894 = vmax.f32 %v757, 0.0
      %v895 = vmax.f32 %v759, 0.0
      %v896 = vmax.f32 %v800, 0.0
      %v897 = vmax.f32 %v802, 0.0
      %v898 = vmax.f32 %v843, 0.0
      %v899 = vmax.f32 %v845, 0.0
      %v900 = vmax.f32 %v886, 0.0
      %v901 = vmax.f32 %v888, 0.0
      %v902 = vmax.f32 %v761, 0.0
      %v903 = vmax.f32 %v763, 0.0
      %v904 = vmax.f32 %v804, 0.0
      %v905 = vmax.f32 %v806, 0.0
      %v906 = vmax.f32 %v847, 0.0
      %v907 = vmax.f32 %v849, 0.0
      %v908 = vmax.f32 %v890, 0.0
      %v909 = vmax.f32 %v892, 0.0
      %v910 = vpack.c.bf16 %v902, %v894
      %v911 = vpack.c.bf16 %v903, %v895
      %v912 = vpack.c.bf16 %v904, %v896
      %v913 = vpack.c.bf16 %v905, %v897
      %v914 = vpack.c.bf16 %v906, %v898
      %v915 = vpack.c.bf16 %v907, %v899
      %v916 = vpack.c.bf16 %v908, %v900
      %v917 = vpack.c.bf16 %v909, %v901
      %v926 = vunpack.c.l.b16 %v910
      %v927 = vunpack.c.l.b16 %v911
      %v928 = vunpack.c.l.b16 %v912
      %v929 = vunpack.c.l.b16 %v913
      %v930 = vunpack.c.l.b16 %v914
      %v931 = vunpack.c.l.b16 %v915
      %v932 = vunpack.c.l.b16 %v916
      %v933 = vunpack.c.l.b16 %v917
      %v934 = vunpack.c.h.b16 %v910
      %v935 = vunpack.c.h.b16 %v911
      %v936 = vunpack.c.h.b16 %v912
      %v937 = vunpack.c.h.b16 %v913
      %v938 = vunpack.c.h.b16 %v914
      %v939 = vunpack.c.h.b16 %v915
      %v940 = vunpack.c.h.b16 %v916
      %v941 = vunpack.c.h.b16 %v917
      %v942 = vpack.c.b16 %v927, %v926
      %v943 = vpack.c.b16 %v929, %v928
      %v944 = vpack.c.b16 %v931, %v930
      %v945 = vpack.c.b16 %v933, %v932
      %v946 = vpack.c.b16 %v935, %v934
      %v947 = vpack.c.b16 %v937, %v936
      %v948 = vpack.c.b16 %v939, %v938
      %v949 = vpack.c.b16 %v941, %v940
      %958 = vst [vmem:[%s208] sm:$0xff] %v942
      %959 = vst [vmem:[%s208 + $0x8] sm:$0xff] %v943
      %960 = vst [vmem:[%s208 + $0x10] sm:$0xff] %v944
      %961 = vst [vmem:[%s208 + $0x18] sm:$0xff] %v945
      %962 = vst [vmem:[%s208 + $0x20] sm:$0xff] %v946
      %963 = vst [vmem:[%s208 + $0x28] sm:$0xff] %v947
      %964 = vst [vmem:[%s208 + $0x30] sm:$0xff] %v948
      %965 = vst [vmem:[%s208 + $0x38] sm:$0xff] %v949
      %s966 = smul.u32 8, %s19
      %p967 = scmp.lt.s32.totalorder %s18, 1
      %s968 = scalar_select %p967, %s18, 1
      %p969 = scmp.lt.s32.totalorder %s966, 7
      %s970 = scalar_select %p969, %s966, 7
      %s971 = smul.addr %s968, 16
      %s972 = sadd.s32 %s970, %s971
      %s973 = smul.addr %s972, 4
      %s974 = scalar_lea.vmem %s3, %s973
      // Predicated region
      $region33: #{forward.14} parent=31 // pred_check
        %p975 = pneg %p116
      $region34: #{forward.14} parent=31 // pred_check_branch
        %977 = sbr.rel (%p975) target = $region36
      $region35: #{forward.14} parent=31 // pred_region
        %s978 = smul.u32 8, %s19
      $region36: #{forward.14} parent=31 // pred_fallthru
        _
    $region32: #{forward.14} parent=5 // pred_fallthru
      _
    %p979 = scmp.le.s32.totalorder 2, %s9
    // Predicated region
    $region37: #{forward.14} parent=5 // pred_check
      %p980 = pneg %p979
    $region38: #{forward.14} parent=5 // pred_check_branch
      %982 = sbr.rel (%p980) target = $region40
    $region39: #{forward.14} parent=5 // pred_region
      %s983 = ssub.s32 %s9, 2
      // Predicated region
      $region41: #{forward.14} parent=39 // pred_check
        %p984 = pneg %p122
      $region42: #{forward.14} parent=39 // pred_check_branch
        %986 = sbr.rel (%p984) target = $region44
      $region43: #{forward.14} parent=39 // pred_region
        %s987 = smul.u32 8, %s21
        %p988 = scmp.lt.s32.totalorder %s20, 1
        %s989 = scalar_select %p988, %s20, 1
        %p990 = scmp.lt.s32.totalorder %s987, 7
        %s991 = scalar_select %p990, %s987, 7
        %s992 = smul.addr %s989, 16
        %s993 = sadd.s32 %s991, %s992
        %s994 = smul.addr %s993, 4
        %s995 = scalar_lea.vmem %s3, %s994
      $region44: #{forward.14} parent=39 // pred_fallthru
        _
    $region40: #{forward.14} parent=5 // pred_fallthru
      _
  $region6: #{forward.14} parent=0 // loop_footer
    %s13 = sadd.s32 1, %s9
  $region7: #{forward.14} parent=0 // loop_footer_branch
    %8 = sbr.rel target = $region3
  $region8: #{forward.14} parent=0 // loop_exit
    _

// kernel: forward.15
$region0: #{forward.15}
  #allocation0 [shape = 'u32[]', space=smem, size = 0x4, offset = 0x4, fixed_abs, tag = 'smem constant byte address 0x4 - core index']
  #allocation1 [shape = 'u32[144,128]{1,0:T(1,128)}', space=vmem, size = 0x12000, scoped, tag = 'internal scratch']
  %s0 = inlined_call_operand.vmem [shape: bf16[32,144], index: 0, kind: input, shape index: {}]
  %s1 = inlined_call_operand.vmem [shape: f32[32,1], index: 1, kind: input, shape index: {}]
  %s2 = inlined_call_operand.vmem [shape: bf16[2,144,64], index: 2, kind: input, shape index: {}]
  %s3 = inlined_call_operand.vmem [shape: bf16[2,32,64], index: 3, kind: output, shape index: {}]
  %s4 = sld [smem:[#allocation0]]
  $region45: #{forward.15} parent=0
    _
  %s6 = ssub.s32 1, %s4
  %s7 = scalar_select 0, %s6, %s4
  loop: start=0, step=1, limit=4
  $region2: #{forward.15} parent=0 // loop_pre_header
    _
  $region3: #{forward.15} parent=0 // loop_header
    %s9 = sphi 0, %s13
    %p10 = scmp.ge.s32.totalorder %s9, 4
    %s16 = sphi 0, %s28
    %s17 = sphi 0, %s24
    %s18 = sphi 0, %s16
    %s19 = sphi 0, %s17
    %s20 = sphi 0, %s18
    %s21 = sphi 0, %s19
    %s29 = sphi 0, %s29
    %s31 = sphi 0, %s29
    %s32 = sphi 0, %s31
    %s46 = sphi 0, %s32
    %s50 = sphi 0, %s50
    %s52 = sphi 0, %s50
    %s53 = sphi 0, %s52
    %s67 = sphi 0, %s53
    %s75 = sphi 0, %s77
    %s78 = sphi 0, %s75
    %s79 = sphi 0, %s78
    %s95 = sphi 0, %s79
    %s103 = sphi 0, %s105
    %s106 = sphi 0, %s103
    %s107 = sphi 0, %s106
    %s123 = sphi 0, %s107
  $region4: #{forward.15} parent=0 // loop_header_branch
    %12 = sbr.rel (%p10) target = $region8
  $region5: #{forward.15} parent=0 // loop_body
    %s14 = ssub.s32 %s9, 1
    %s15 = ssub.s32 %s9, 2
    %s22 = sadd.s32 1, %s17
    %p23 = scmp.ge.s32.totalorder %s22, 1
    %s24 = scalar_select %p23, 0, %s22
    %s25 = sadd.s32 1, %s16
    %s26 = scalar_select %p23, %s25, %s16
    %p27 = scmp.ge.s32.totalorder %s26, 2
    %s28 = scalar_select %p27, 0, %s26
    %s30 = sadd.s32 %s29, 1
    %p33 = scmp.eq.s32.totalorder %s9, 1
    %p34 = scmp.ne.s32.totalorder %s29, %s31
    %p35 = scmp.eq.s32.totalorder %s9, 0
    %p36 = por %p34, %p35
    %p37 = scmp.ne.s32.totalorder %s29, %s31
    %p38 = scmp.eq.s32.totalorder %s14, 1
    %p39 = por %p37, %p38
    %p40 = scmp.ne.s32.totalorder %s31, %s32
    %p41 = scmp.eq.s32.totalorder %s14, 0
    %p42 = por %p40, %p41
    %p43 = scmp.ne.s32.totalorder %s31, %s32
    %p44 = scmp.eq.s32.totalorder %s15, 1
    %p45 = por %p43, %p44
    %p47 = scmp.ne.s32.totalorder %s32, %s46
    %p48 = scmp.eq.s32.totalorder %s15, 0
    %p49 = por %p47, %p48
    %s51 = sadd.s32 %s50, 1
    %p54 = scmp.eq.s32.totalorder %s9, 1
    %p55 = scmp.ne.s32.totalorder %s50, %s52
    %p56 = scmp.eq.s32.totalorder %s9, 0
    %p57 = por %p55, %p56
    %p58 = scmp.ne.s32.totalorder %s50, %s52
    %p59 = scmp.eq.s32.totalorder %s14, 1
    %p60 = por %p58, %p59
    %p61 = scmp.ne.s32.totalorder %s52, %s53
    %p62 = scmp.eq.s32.totalorder %s14, 0
    %p63 = por %p61, %p62
    %p64 = scmp.ne.s32.totalorder %s52, %s53
    %p65 = scmp.eq.s32.totalorder %s15, 1
    %p66 = por %p64, %p65
    %p68 = scmp.ne.s32.totalorder %s53, %s67
    %p69 = scmp.eq.s32.totalorder %s15, 0
    %p70 = por %p68, %p69
    %s71 = ssub.s32 %s16, %s28
    %s72 = ssub.s32 %s17, %s24
    %s73 = sor.u32 %s71, %s72
    %p74 = scmp.eq.s32.totalorder %s73, 0
    %s76 = sadd.s32 %s75, 1
    %s77 = scalar_select %p74, %s75, %s76
    %p80 = pneg %p74
    %p81 = scmp.eq.s32.totalorder %s9, 1
    %p82 = por %p80, %p81
    %p83 = scmp.ne.s32.totalorder %s75, %s78
    %p84 = scmp.eq.s32.totalorder %s9, 0
    %p85 = por %p83, %p84
    %p86 = scmp.ne.s32.totalorder %s75, %s78
    %p87 = scmp.eq.s32.totalorder %s14, 1
    %p88 = por %p86, %p87
    %p89 = scmp.ne.s32.totalorder %s78, %s79
    %p90 = scmp.eq.s32.totalorder %s14, 0
    %p91 = por %p89, %p90
    %p92 = scmp.ne.s32.totalorder %s78, %s79
    %p93 = scmp.eq.s32.totalorder %s15, 1
    %p94 = por %p92, %p93
    %p96 = scmp.ne.s32.totalorder %s79, %s95
    %p97 = scmp.eq.s32.totalorder %s15, 0
    %p98 = por %p96, %p97
    %s99 = ssub.s32 %s16, %s28
    %s100 = ssub.s32 %s17, %s24
    %s101 = sor.u32 %s99, %s100
    %p102 = scmp.eq.s32.totalorder %s101, 0
    %s104 = sadd.s32 %s103, 1
    %s105 = scalar_select %p102, %s103, %s104
    %p108 = pneg %p102
    %p109 = scmp.eq.s32.totalorder %s9, 1
    %p110 = por %p108, %p109
    %p111 = scmp.ne.s32.totalorder %s103, %s106
    %p112 = scmp.eq.s32.totalorder %s9, 0
    %p113 = por %p111, %p112
    %p114 = scmp.ne.s32.totalorder %s103, %s106
    %p115 = scmp.eq.s32.totalorder %s14, 1
    %p116 = por %p114, %p115
    %p117 = scmp.ne.s32.totalorder %s106, %s107
    %p118 = scmp.eq.s32.totalorder %s14, 0
    %p119 = por %p117, %p118
    %p120 = scmp.ne.s32.totalorder %s106, %s107
    %p121 = scmp.eq.s32.totalorder %s15, 1
    %p122 = por %p120, %p121
    %p124 = scmp.ne.s32.totalorder %s107, %s123
    %p125 = scmp.eq.s32.totalorder %s15, 0
    %p126 = por %p124, %p125
    %p127 = scmp.le.s32.totalorder 1, %s9
    %p128 = scmp.lt.s32.totalorder %s9, 3
    %p129 = pnand %p127, %p128
    %p130 = pneg %p129
    // Predicated region
    $region9: #{forward.15} parent=5 // pred_check
      _
    $region10: #{forward.15} parent=5 // pred_check_branch
      %132 = sbr.rel (%p129) target = $region12
    $region11: #{forward.15} parent=5 // pred_region
      %s133 = ssub.s32 %s9, 1
      // Predicated region
      $region13: #{forward.15} parent=11 // pred_check
        %p134 = pneg %p42
      $region14: #{forward.15} parent=11 // pred_check_branch
        %136 = sbr.rel (%p134) target = $region16
      $region15: #{forward.15} parent=11 // pred_region
        _
      $region16: #{forward.15} parent=11 // pred_fallthru
        _
      // Predicated region
      $region17: #{forward.15} parent=11 // pred_check
        %p137 = pneg %p63
      $region18: #{forward.15} parent=11 // pred_check_branch
        %139 = sbr.rel (%p137) target = $region20
      $region19: #{forward.15} parent=11 // pred_region
        _
      $region20: #{forward.15} parent=11 // pred_fallthru
        _
    $region12: #{forward.15} parent=5 // pred_fallthru
      _
    %p140 = scmp.lt.s32.totalorder %s9, 2
    // Predicated region
    $region21: #{forward.15} parent=5 // pred_check
      %p141 = pneg %p140
    $region22: #{forward.15} parent=5 // pred_check_branch
      %143 = sbr.rel (%p141) target = $region24
    $region23: #{forward.15} parent=5 // pred_region
      // Predicated region
      $region25: #{forward.15} parent=23 // pred_check
        %p144 = pneg %p85
      $region26: #{forward.15} parent=23 // pred_check_branch
        %146 = sbr.rel (%p144) target = $region28
      $region27: #{forward.15} parent=23 // pred_region
        %p147 = scmp.lt.s32.totalorder %s16, 1
        %s148 = scalar_select %p147, %s16, 1
        %p149 = scmp.lt.s32.totalorder %s17, 0
        %s150 = scalar_select %p149, %s17, 0
        %s151 = smul.addr %s148, 18
        %s152 = sadd.s32 %s150, %s151
        %s153 = smul.addr %s152, 4
        %s154 = scalar_lea.vmem %s2, %s153
      $region28: #{forward.15} parent=23 // pred_fallthru
        _
    $region24: #{forward.15} parent=5 // pred_fallthru
      _
    %p155 = scmp.le.s32.totalorder 1, %s9
    %p156 = scmp.lt.s32.totalorder %s9, 3
    %p157 = pnand %p155, %p156
    %p158 = pneg %p157
    // Predicated region
    $region29: #{forward.15} parent=5 // pred_check
      _
    $region30: #{forward.15} parent=5 // pred_check_branch
      %160 = sbr.rel (%p157) target = $region32
    $region31: #{forward.15} parent=5 // pred_region
      %s161 = ssub.s32 %s9, 1
      %p162 = pneg %p42
      %p163 = pneg %p39
      %p164 = pneg %p63
      %p165 = pneg %p60
      %p166 = scmp.lt.s32.totalorder %s18, 1
      %s167 = scalar_select %p166, %s18, 1
      %p168 = scmp.lt.s32.totalorder %s19, 0
      %s169 = scalar_select %p168, %s19, 0
      %s170 = smul.addr %s167, 18
      %s171 = sadd.s32 %s169, %s170
      %s172 = smul.addr %s171, 4
      %s173 = scalar_lea.vmem %s2, %s172
      %p174 = pneg %p91
      %p175 = pneg %p88
      %p176 = pneg %p119
      %p177 = pneg %p116
      %p178 = scmp.lt.s32.totalorder %s18, 1
      %s179 = scalar_select %p178, %s18, 1
      %p180 = scmp.lt.s32.totalorder %s19, 0
      %s181 = scalar_select %p180, %s19, 0
      %s182 = smul.addr %s179, 4
      %s183 = sadd.s32 %s181, %s182
      %s184 = smul.addr %s183, 4
      %s185 = scalar_lea.vmem %s3, %s184
      %p186 = scmp.lt.s32.totalorder %s18, 1
      %s187 = scalar_select %p186, %s18, 1
      %p188 = scmp.lt.s32.totalorder %s19, 0
      %s189 = scalar_select %p188, %s19, 0
      %s190 = smul.addr %s187, 18
      %s191 = sadd.s32 %s189, %s190
      %s192 = smul.addr %s191, 4
      %s193 = scalar_lea.vmem %s2, %s192
      %p194 = scmp.lt.s32.totalorder %s18, 1
      %s195 = scalar_select %p194, %s18, 1
      %p196 = scmp.lt.s32.totalorder %s19, 0
      %s197 = scalar_select %p196, %s19, 0
      %s198 = smul.addr %s195, 4
      %s199 = sadd.s32 %s197, %s198
      %s200 = smul.addr %s199, 4
      %s201 = scalar_lea.vmem %s3, %s200
      %v203 = vld [vmem:[%s0] sm:$0xff]
      %v204 = vld [vmem:[%s0 + $0x8] sm:$0xff]
      %v205 = vld [vmem:[%s0 + $0x10] sm:$0xff]
      %v206 = vld [vmem:[%s0 + $0x18] sm:$0xff]
      %v207 = vld [vmem:[%s193] sm:$0xf]
      %v208 = vld [vmem:[%s193 + $0x4] sm:$0xf]
      %v209 = vld [vmem:[%s193 + $0x8] sm:$0xf]
      %v210 = vld [vmem:[%s193 + $0xc] sm:$0xf]
      %v211 = vld [vmem:[%s193 + $0x10] sm:$0xf]
      %v212 = vld [vmem:[%s193 + $0x14] sm:$0xf]
      %v213 = vld [vmem:[%s193 + $0x18] sm:$0xf]
      %v214 = vld [vmem:[%s193 + $0x1c] sm:$0xf]
      %v215 = vld [vmem:[%s193 + $0x20] sm:$0xf]
      %v216 = vld [vmem:[%s193 + $0x24] sm:$0xf]
      %v217 = vld [vmem:[%s193 + $0x28] sm:$0xf]
      %v218 = vld [vmem:[%s193 + $0x2c] sm:$0xf]
      %v219 = vld [vmem:[%s193 + $0x30] sm:$0xf]
      %v220 = vld [vmem:[%s193 + $0x34] sm:$0xf]
      %v221 = vld [vmem:[%s193 + $0x38] sm:$0xf]
      %v222 = vld [vmem:[%s193 + $0x3c] sm:$0xf]
      %v223 = vld [vmem:[%s193 + $0x40] sm:$0xf]
      %v224 = vld [vmem:[%s193 + $0x44] sm:$0xf]
      %v225 = vld [vmem:[%s1] sm:$0xff]
      %v226 = vld [vmem:[%s1 + $0x8] sm:$0xff]
      %v227 = vld [vmem:[%s1 + $0x10] sm:$0xff]
      %v228 = vld [vmem:[%s1 + $0x18] sm:$0xff]
      %230 = vset.pattern.permute.xlu0 0
      %231 = vperm.xlu0 %230, %v225
      %v232 = vpop.permute.xlu0 %231
      %235 = vset.pattern.permute.xlu0 0
      %236 = vperm.xlu0 %235, %v226
      %v237 = vpop.permute.xlu0 %236
      %240 = vset.pattern.permute.xlu0 0
      %241 = vperm.xlu0 %240, %v227
      %v242 = vpop.permute.xlu0 %241
      %245 = vset.pattern.permute.xlu0 0
      %246 = vperm.xlu0 %245, %v228
      %v247 = vpop.permute.xlu0 %246
      %v253 = vunpack.c.l.b16 %v203
      %v254 = vunpack.c.h.b16 %v203
      %v255 = vunpack.c.l.b16 %v204
      %v256 = vunpack.c.h.b16 %v204
      %v257 = vunpack.c.l.b16 %v205
      %v258 = vunpack.c.h.b16 %v205
      %v259 = vunpack.c.l.b16 %v206
      %v260 = vunpack.c.h.b16 %v206
      %v261 = vpack.c.b16 %v255, %v253
      %v262 = vpack.c.b16 %v256, %v254
      %v263 = vpack.c.b16 %v259, %v257
      %v264 = vpack.c.b16 %v260, %v258
      %v285 = vunpack.c.l.b16 %v207
      %v286 = vunpack.c.l.b16 %v208
      %v287 = vunpack.c.l.b16 %v209
      %v288 = vunpack.c.l.b16 %v210
      %v289 = vunpack.c.l.b16 %v211
      %v290 = vunpack.c.l.b16 %v212
      %v291 = vunpack.c.l.b16 %v213
      %v292 = vunpack.c.l.b16 %v214
      %v293 = vunpack.c.l.b16 %v215
      %v294 = vunpack.c.l.b16 %v216
      %v295 = vunpack.c.l.b16 %v217
      %v296 = vunpack.c.l.b16 %v218
      %v297 = vunpack.c.l.b16 %v219
      %v298 = vunpack.c.l.b16 %v220
      %v299 = vunpack.c.l.b16 %v221
      %v300 = vunpack.c.l.b16 %v222
      %v301 = vunpack.c.l.b16 %v223
      %v302 = vunpack.c.l.b16 %v224
      %v303 = vpack.c.b16 %v286, %v285
      %v304 = vpack.c.b16 %v288, %v287
      %v305 = vpack.c.b16 %v290, %v289
      %v306 = vpack.c.b16 %v292, %v291
      %v307 = vpack.c.b16 %v294, %v293
      %v308 = vpack.c.b16 %v296, %v295
      %v309 = vpack.c.b16 %v298, %v297
      %v310 = vpack.c.b16 %v300, %v299
      %v311 = vpack.c.b16 %v302, %v301
      %vm321 = vcmask 130048
      %v323 = vsel %vm321, %v262, 0
      %v326 = vsel %vm321, %v264, 0
      %328 = vmatprep.subr.bf16.mxu0 0
      %329 = vmatpush1.bf16.msra.mxu0 %v310
      %330 = vmatprep.subr.bf16.mxu0 0
      %331 = vmatpush1.bf16.msra.mxu0 %v309
      %332 = vmatprep.subr.bf16.mxu0 0
      %333 = vmatpush1.bf16.msra.mxu0 %v308
      %334 = vmatprep.subr.bf16.mxu0 0
      %335 = vmatpush1.bf16.msra.mxu0 %v307
      %336 = vmatprep.subr.bf16.mxu0 0
      %337 = vmatpush1.bf16.msra.mxu0 %v306
      %338 = vmatprep.subr.bf16.mxu0 0
      %339 = vmatpush1.bf16.msra.mxu0 %v305
      %340 = vmatprep.subr.bf16.mxu0 0
      %341 = vmatpush1.bf16.msra.mxu0 %v304
      %342 = vmatprep.subr.bf16.mxu0 0
      %343 = vmatpush1.bf16.msra.mxu0 %v303
      %344 = vmatprep.subr.bf16.mxu0 0
      %345 = vmatpush2.bf16.msra.mxu0 0
      %346 = vmatprep.subr.bf16.mxu0 0
      %347 = vmatpush2.bf16.msra.mxu0 0
      %348 = vmatprep.subr.bf16.mxu0 0
      %349 = vmatpush2.bf16.msra.mxu0 0
      %350 = vmatprep.subr.bf16.mxu0 0
      %351 = vmatpush2.bf16.msra.mxu0 0
      %352 = vmatprep.subr.bf16.mxu0 0
      %353 = vmatpush2.bf16.msra.mxu0 0
      %354 = vmatprep.subr.bf16.mxu0 0
      %355 = vmatpush2.bf16.msra.mxu0 0
      %356 = vmatprep.subr.bf16.mxu0 0
      %357 = vmatpush2.bf16.msra.mxu0 0
      %358 = vmatprep.subr.bf16.mxu0 0
      %359 = vmatpush2.bf16.msra.mxu0 %v311
      %360 = vmatprep.mubr.bf16.mxu0 %v323
      %361 = vmatmul.mubr.bf16.gmra.mxu0 %v261
      %v362 = vpop.f32.mrf.mxu0
      %v363 = vadd.f32 %v232, %v362
      %v364 = vpop.f32.mrf.mxu0
      %v365 = vpop.f32.mrf.mxu0
      %v366 = vadd.f32 %v237, %v365
      %v367 = vpop.f32.mrf.mxu0
      %368 = vmatprep.mubr.bf16.mxu0 %v326
      %369 = vmatmul.mubr.bf16.gmra.mxu0 %v263
      %v370 = vpop.f32.mrf.mxu0
      %v371 = vadd.f32 %v242, %v370
      %v372 = vpop.f32.mrf.mxu0
      %v373 = vpop.f32.mrf.mxu0
      %v374 = vadd.f32 %v247, %v373
      %v375 = vpop.f32.mrf.mxu0
      %376 = vdwg.mxu0
      %v377 = vmax.f32 %v363, 0.0
      %v378 = vmax.f32 %v366, 0.0
      %v379 = vmax.f32 %v371, 0.0
      %v380 = vmax.f32 %v374, 0.0
      %v381 = vpack.c.bf16 %v378, %v377
      %v382 = vpack.c.bf16 %v380, %v379
      %v385 = vunpack.c.l.b16 %v381
      %v386 = vunpack.c.h.b16 %v381
      %v387 = vunpack.c.l.b16 %v382
      %v388 = vunpack.c.h.b16 %v382
      %v389 = vpack.c.b16 %v385, %v385
      %v390 = vpack.c.b16 %v386, %v386
      %v391 = vpack.c.b16 %v387, %v387
      %v392 = vpack.c.b16 %v388, %v388
      %vm397 = vcmask 519168
      %398 = vst.msk [vmem:[%s201] sm:$0xf] %vm397, %v389
      %399 = vst.msk [vmem:[%s201 + $0x4] sm:$0xf] %vm397, %v390
      %400 = vst.msk [vmem:[%s201 + $0x8] sm:$0xf] %vm397, %v391
      %401 = vst.msk [vmem:[%s201 + $0xc] sm:$0xf] %vm397, %v392
      %p402 = scmp.lt.s32.totalorder %s18, 1
      %s403 = scalar_select %p402, %s18, 1
      %p404 = scmp.lt.s32.totalorder %s19, 0
      %s405 = scalar_select %p404, %s19, 0
      %s406 = smul.addr %s403, 4
      %s407 = sadd.s32 %s405, %s406
      %s408 = smul.addr %s407, 4
      %s409 = scalar_lea.vmem %s3, %s408
      // Predicated region
      $region33: #{forward.15} parent=31 // pred_check
        %p410 = pneg %p116
      $region34: #{forward.15} parent=31 // pred_check_branch
        %412 = sbr.rel (%p410) target = $region36
      $region35: #{forward.15} parent=31 // pred_region
        _
      $region36: #{forward.15} parent=31 // pred_fallthru
        _
    $region32: #{forward.15} parent=5 // pred_fallthru
      _
    %p413 = scmp.le.s32.totalorder 2, %s9
    // Predicated region
    $region37: #{forward.15} parent=5 // pred_check
      %p414 = pneg %p413
    $region38: #{forward.15} parent=5 // pred_check_branch
      %416 = sbr.rel (%p414) target = $region40
    $region39: #{forward.15} parent=5 // pred_region
      %s417 = ssub.s32 %s9, 2
      // Predicated region
      $region41: #{forward.15} parent=39 // pred_check
        %p418 = pneg %p122
      $region42: #{forward.15} parent=39 // pred_check_branch
        %420 = sbr.rel (%p418) target = $region44
      $region43: #{forward.15} parent=39 // pred_region
        %p421 = scmp.lt.s32.totalorder %s20, 1
        %s422 = scalar_select %p421, %s20, 1
        %p423 = scmp.lt.s32.totalorder %s21, 0
        %s424 = scalar_select %p423, %s21, 0
        %s425 = smul.addr %s422, 4
        %s426 = sadd.s32 %s424, %s425
        %s427 = smul.addr %s426, 4
        %s428 = scalar_lea.vmem %s3, %s427
      $region44: #{forward.15} parent=39 // pred_fallthru
        _
    $region40: #{forward.15} parent=5 // pred_fallthru
      _
  $region6: #{forward.15} parent=0 // loop_footer
    %s13 = sadd.s32 1, %s9
  $region7: #{forward.15} parent=0 // loop_footer_branch
    %8 = sbr.rel target = $region3
  $region8: #{forward.15} parent=0 // loop_exit
    _

// kernel: forward.16
$region0: #{forward.16}
  #allocation0 [shape = 'u32[]', space=smem, size = 0x4, offset = 0x4, fixed_abs, tag = 'smem constant byte address 0x4 - core index']
  #allocation1 [shape = 'u32[144,128]{1,0:T(1,128)}', space=vmem, size = 0x12000, scoped, tag = 'internal scratch']
  %s0 = inlined_call_operand.vmem [shape: bf16[48,288], index: 0, kind: input, shape index: {}]
  %s1 = inlined_call_operand.vmem [shape: f32[48,1], index: 1, kind: input, shape index: {}]
  %s2 = inlined_call_operand.vmem [shape: bf16[2,288,16], index: 2, kind: input, shape index: {}]
  %s3 = inlined_call_operand.vmem [shape: bf16[2,48,16], index: 3, kind: output, shape index: {}]
  %s4 = sld [smem:[#allocation0]]
  $region45: #{forward.16} parent=0
    _
  %s6 = ssub.s32 1, %s4
  %s7 = scalar_select 0, %s6, %s4
  loop: start=0, step=1, limit=4
  $region2: #{forward.16} parent=0 // loop_pre_header
    _
  $region3: #{forward.16} parent=0 // loop_header
    %s9 = sphi 0, %s13
    %p10 = scmp.ge.s32.totalorder %s9, 4
    %s16 = sphi 0, %s28
    %s17 = sphi 0, %s24
    %s18 = sphi 0, %s16
    %s19 = sphi 0, %s17
    %s20 = sphi 0, %s18
    %s21 = sphi 0, %s19
    %s29 = sphi 0, %s29
    %s31 = sphi 0, %s29
    %s32 = sphi 0, %s31
    %s46 = sphi 0, %s32
    %s50 = sphi 0, %s50
    %s52 = sphi 0, %s50
    %s53 = sphi 0, %s52
    %s67 = sphi 0, %s53
    %s75 = sphi 0, %s77
    %s78 = sphi 0, %s75
    %s79 = sphi 0, %s78
    %s95 = sphi 0, %s79
    %s103 = sphi 0, %s105
    %s106 = sphi 0, %s103
    %s107 = sphi 0, %s106
    %s123 = sphi 0, %s107
  $region4: #{forward.16} parent=0 // loop_header_branch
    %12 = sbr.rel (%p10) target = $region8
  $region5: #{forward.16} parent=0 // loop_body
    %s14 = ssub.s32 %s9, 1
    %s15 = ssub.s32 %s9, 2
    %s22 = sadd.s32 1, %s17
    %p23 = scmp.ge.s32.totalorder %s22, 1
    %s24 = scalar_select %p23, 0, %s22
    %s25 = sadd.s32 1, %s16
    %s26 = scalar_select %p23, %s25, %s16
    %p27 = scmp.ge.s32.totalorder %s26, 2
    %s28 = scalar_select %p27, 0, %s26
    %s30 = sadd.s32 %s29, 1
    %p33 = scmp.eq.s32.totalorder %s9, 1
    %p34 = scmp.ne.s32.totalorder %s29, %s31
    %p35 = scmp.eq.s32.totalorder %s9, 0
    %p36 = por %p34, %p35
    %p37 = scmp.ne.s32.totalorder %s29, %s31
    %p38 = scmp.eq.s32.totalorder %s14, 1
    %p39 = por %p37, %p38
    %p40 = scmp.ne.s32.totalorder %s31, %s32
    %p41 = scmp.eq.s32.totalorder %s14, 0
    %p42 = por %p40, %p41
    %p43 = scmp.ne.s32.totalorder %s31, %s32
    %p44 = scmp.eq.s32.totalorder %s15, 1
    %p45 = por %p43, %p44
    %p47 = scmp.ne.s32.totalorder %s32, %s46
    %p48 = scmp.eq.s32.totalorder %s15, 0
    %p49 = por %p47, %p48
    %s51 = sadd.s32 %s50, 1
    %p54 = scmp.eq.s32.totalorder %s9, 1
    %p55 = scmp.ne.s32.totalorder %s50, %s52
    %p56 = scmp.eq.s32.totalorder %s9, 0
    %p57 = por %p55, %p56
    %p58 = scmp.ne.s32.totalorder %s50, %s52
    %p59 = scmp.eq.s32.totalorder %s14, 1
    %p60 = por %p58, %p59
    %p61 = scmp.ne.s32.totalorder %s52, %s53
    %p62 = scmp.eq.s32.totalorder %s14, 0
    %p63 = por %p61, %p62
    %p64 = scmp.ne.s32.totalorder %s52, %s53
    %p65 = scmp.eq.s32.totalorder %s15, 1
    %p66 = por %p64, %p65
    %p68 = scmp.ne.s32.totalorder %s53, %s67
    %p69 = scmp.eq.s32.totalorder %s15, 0
    %p70 = por %p68, %p69
    %s71 = ssub.s32 %s16, %s28
    %s72 = ssub.s32 %s17, %s24
    %s73 = sor.u32 %s71, %s72
    %p74 = scmp.eq.s32.totalorder %s73, 0
    %s76 = sadd.s32 %s75, 1
    %s77 = scalar_select %p74, %s75, %s76
    %p80 = pneg %p74
    %p81 = scmp.eq.s32.totalorder %s9, 1
    %p82 = por %p80, %p81
    %p83 = scmp.ne.s32.totalorder %s75, %s78
    %p84 = scmp.eq.s32.totalorder %s9, 0
    %p85 = por %p83, %p84
    %p86 = scmp.ne.s32.totalorder %s75, %s78
    %p87 = scmp.eq.s32.totalorder %s14, 1
    %p88 = por %p86, %p87
    %p89 = scmp.ne.s32.totalorder %s78, %s79
    %p90 = scmp.eq.s32.totalorder %s14, 0
    %p91 = por %p89, %p90
    %p92 = scmp.ne.s32.totalorder %s78, %s79
    %p93 = scmp.eq.s32.totalorder %s15, 1
    %p94 = por %p92, %p93
    %p96 = scmp.ne.s32.totalorder %s79, %s95
    %p97 = scmp.eq.s32.totalorder %s15, 0
    %p98 = por %p96, %p97
    %s99 = ssub.s32 %s16, %s28
    %s100 = ssub.s32 %s17, %s24
    %s101 = sor.u32 %s99, %s100
    %p102 = scmp.eq.s32.totalorder %s101, 0
    %s104 = sadd.s32 %s103, 1
    %s105 = scalar_select %p102, %s103, %s104
    %p108 = pneg %p102
    %p109 = scmp.eq.s32.totalorder %s9, 1
    %p110 = por %p108, %p109
    %p111 = scmp.ne.s32.totalorder %s103, %s106
    %p112 = scmp.eq.s32.totalorder %s9, 0
    %p113 = por %p111, %p112
    %p114 = scmp.ne.s32.totalorder %s103, %s106
    %p115 = scmp.eq.s32.totalorder %s14, 1
    %p116 = por %p114, %p115
    %p117 = scmp.ne.s32.totalorder %s106, %s107
    %p118 = scmp.eq.s32.totalorder %s14, 0
    %p119 = por %p117, %p118
    %p120 = scmp.ne.s32.totalorder %s106, %s107
    %p121 = scmp.eq.s32.totalorder %s15, 1
    %p122 = por %p120, %p121
    %p124 = scmp.ne.s32.totalorder %s107, %s123
    %p125 = scmp.eq.s32.totalorder %s15, 0
    %p126 = por %p124, %p125
    %p127 = scmp.le.s32.totalorder 1, %s9
    %p128 = scmp.lt.s32.totalorder %s9, 3
    %p129 = pnand %p127, %p128
    %p130 = pneg %p129
    // Predicated region
    $region9: #{forward.16} parent=5 // pred_check
      _
    $region10: #{forward.16} parent=5 // pred_check_branch
      %132 = sbr.rel (%p129) target = $region12
    $region11: #{forward.16} parent=5 // pred_region
      %s133 = ssub.s32 %s9, 1
      // Predicated region
      $region13: #{forward.16} parent=11 // pred_check
        %p134 = pneg %p42
      $region14: #{forward.16} parent=11 // pred_check_branch
        %136 = sbr.rel (%p134) target = $region16
      $region15: #{forward.16} parent=11 // pred_region
        _
      $region16: #{forward.16} parent=11 // pred_fallthru
        _
      // Predicated region
      $region17: #{forward.16} parent=11 // pred_check
        %p137 = pneg %p63
      $region18: #{forward.16} parent=11 // pred_check_branch
        %139 = sbr.rel (%p137) target = $region20
      $region19: #{forward.16} parent=11 // pred_region
        _
      $region20: #{forward.16} parent=11 // pred_fallthru
        _
    $region12: #{forward.16} parent=5 // pred_fallthru
      _
    %p140 = scmp.lt.s32.totalorder %s9, 2
    // Predicated region
    $region21: #{forward.16} parent=5 // pred_check
      %p141 = pneg %p140
    $region22: #{forward.16} parent=5 // pred_check_branch
      %143 = sbr.rel (%p141) target = $region24
    $region23: #{forward.16} parent=5 // pred_region
      // Predicated region
      $region25: #{forward.16} parent=23 // pred_check
        %p144 = pneg %p85
      $region26: #{forward.16} parent=23 // pred_check_branch
        %146 = sbr.rel (%p144) target = $region28
      $region27: #{forward.16} parent=23 // pred_region
        %p147 = scmp.lt.s32.totalorder %s16, 1
        %s148 = scalar_select %p147, %s16, 1
        %p149 = scmp.lt.s32.totalorder %s17, 0
        %s150 = scalar_select %p149, %s17, 0
        %s151 = smul.addr %s148, 36
        %s152 = sadd.s32 %s150, %s151
        %s153 = smul.addr %s152, 4
        %s154 = scalar_lea.vmem %s2, %s153
      $region28: #{forward.16} parent=23 // pred_fallthru
        _
    $region24: #{forward.16} parent=5 // pred_fallthru
      _
    %p155 = scmp.le.s32.totalorder 1, %s9
    %p156 = scmp.lt.s32.totalorder %s9, 3
    %p157 = pnand %p155, %p156
    %p158 = pneg %p157
    // Predicated region
    $region29: #{forward.16} parent=5 // pred_check
      _
    $region30: #{forward.16} parent=5 // pred_check_branch
      %160 = sbr.rel (%p157) target = $region32
    $region31: #{forward.16} parent=5 // pred_region
      %s161 = ssub.s32 %s9, 1
      %p162 = pneg %p42
      %p163 = pneg %p39
      %p164 = pneg %p63
      %p165 = pneg %p60
      %p166 = scmp.lt.s32.totalorder %s18, 1
      %s167 = scalar_select %p166, %s18, 1
      %p168 = scmp.lt.s32.totalorder %s19, 0
      %s169 = scalar_select %p168, %s19, 0
      %s170 = smul.addr %s167, 36
      %s171 = sadd.s32 %s169, %s170
      %s172 = smul.addr %s171, 4
      %s173 = scalar_lea.vmem %s2, %s172
      %p174 = pneg %p91
      %p175 = pneg %p88
      %p176 = pneg %p119
      %p177 = pneg %p116
      %p178 = scmp.lt.s32.totalorder %s18, 1
      %s179 = scalar_select %p178, %s18, 1
      %p180 = scmp.lt.s32.totalorder %s19, 0
      %s181 = scalar_select %p180, %s19, 0
      %s182 = smul.addr %s179, 6
      %s183 = sadd.s32 %s181, %s182
      %s184 = smul.addr %s183, 4
      %s185 = scalar_lea.vmem %s3, %s184
      %p186 = scmp.lt.s32.totalorder %s18, 1
      %s187 = scalar_select %p186, %s18, 1
      %p188 = scmp.lt.s32.totalorder %s19, 0
      %s189 = scalar_select %p188, %s19, 0
      %s190 = smul.addr %s187, 36
      %s191 = sadd.s32 %s189, %s190
      %s192 = smul.addr %s191, 4
      %s193 = scalar_lea.vmem %s2, %s192
      %p194 = scmp.lt.s32.totalorder %s18, 1
      %s195 = scalar_select %p194, %s18, 1
      %p196 = scmp.lt.s32.totalorder %s19, 0
      %s197 = scalar_select %p196, %s19, 0
      %s198 = smul.addr %s195, 6
      %s199 = sadd.s32 %s197, %s198
      %s200 = smul.addr %s199, 4
      %s201 = scalar_lea.vmem %s3, %s200
      %v203 = vld [vmem:[%s0] sm:$0xff]
      %v204 = vld [vmem:[%s0 + $0x8] sm:$0xf]
      %v205 = vld [vmem:[%s0 + $0xc] sm:$0xff]
      %v206 = vld [vmem:[%s0 + $0x14] sm:$0xf]
      %v207 = vld [vmem:[%s0 + $0x18] sm:$0xff]
      %v208 = vld [vmem:[%s0 + $0x20] sm:$0xf]
      %v209 = vld [vmem:[%s0 + $0x24] sm:$0xff]
      %v210 = vld [vmem:[%s0 + $0x2c] sm:$0xf]
      %v211 = vld [vmem:[%s0 + $0x30] sm:$0xff]
      %v212 = vld [vmem:[%s0 + $0x38] sm:$0xf]
      %v213 = vld [vmem:[%s0 + $0x3c] sm:$0xff]
      %v214 = vld [vmem:[%s0 + $0x44] sm:$0xf]
      %v215 = vld [vmem:[%s193] sm:$0xf]
      %v216 = vld [vmem:[%s193 + $0x4] sm:$0xf]
      %v217 = vld [vmem:[%s193 + $0x8] sm:$0xf]
      %v218 = vld [vmem:[%s193 + $0xc] sm:$0xf]
      %v219 = vld [vmem:[%s193 + $0x10] sm:$0xf]
      %v220 = vld [vmem:[%s193 + $0x14] sm:$0xf]
      %v221 = vld [vmem:[%s193 + $0x18] sm:$0xf]
      %v222 = vld [vmem:[%s193 + $0x1c] sm:$0xf]
      %v223 = vld [vmem:[%s193 + $0x20] sm:$0xf]
      %v224 = vld [vmem:[%s193 + $0x24] sm:$0xf]
      %v225 = vld [vmem:[%s193 + $0x28] sm:$0xf]
      %v226 = vld [vmem:[%s193 + $0x2c] sm:$0xf]
      %v227 = vld [vmem:[%s193 + $0x30] sm:$0xf]
      %v228 = vld [vmem:[%s193 + $0x34] sm:$0xf]
      %v229 = vld [vmem:[%s193 + $0x38] sm:$0xf]
      %v230 = vld [vmem:[%s193 + $0x3c] sm:$0xf]
      %v231 = vld [vmem:[%s193 + $0x40] sm:$0xf]
      %v232 = vld [vmem:[%s193 + $0x44] sm:$0xf]
      %v233 = vld [vmem:[%s193 + $0x48] sm:$0xf]
      %v234 = vld [vmem:[%s193 + $0x4c] sm:$0xf]
      %v235 = vld [vmem:[%s193 + $0x50] sm:$0xf]
      %v236 = vld [vmem:[%s193 + $0x54] sm:$0xf]
      %v237 = vld [vmem:[%s193 + $0x58] sm:$0xf]
      %v238 = vld [vmem:[%s193 + $0x5c] sm:$0xf]
      %v239 = vld [vmem:[%s193 + $0x60] sm:$0xf]
      %v240 = vld [vmem:[%s193 + $0x64] sm:$0xf]
      %v241 = vld [vmem:[%s193 + $0x68] sm:$0xf]
      %v242 = vld [vmem:[%s193 + $0x6c] sm:$0xf]
      %v243 = vld [vmem:[%s193 + $0x70] sm:$0xf]
      %v244 = vld [vmem:[%s193 + $0x74] sm:$0xf]
      %v245 = vld [vmem:[%s193 + $0x78] sm:$0xf]
      %v246 = vld [vmem:[%s193 + $0x7c] sm:$0xf]
      %v247 = vld [vmem:[%s193 + $0x80] sm:$0xf]
      %v248 = vld [vmem:[%s193 + $0x84] sm:$0xf]
      %v249 = vld [vmem:[%s193 + $0x88] sm:$0xf]
      %v250 = vld [vmem:[%s193 + $0x8c] sm:$0xf]
      %v251 = vld [vmem:[%s1] sm:$0xff]
      %v252 = vld [vmem:[%s1 + $0x8] sm:$0xff]
      %v253 = vld [vmem:[%s1 + $0x10] sm:$0xff]
      %v254 = vld [vmem:[%s1 + $0x18] sm:$0xff]
      %v255 = vld [vmem:[%s1 + $0x20] sm:$0xff]
      %v256 = vld [vmem:[%s1 + $0x28] sm:$0xff]
      %258 = vset.pattern.permute.xlu0 0
      %259 = vperm.xlu0 %258, %v251
      %v260 = vpop.permute.xlu0 %259
      %263 = vset.pattern.permute.xlu0 0
      %264 = vperm.xlu0 %263, %v252
      %v265 = vpop.permute.xlu0 %264
      %268 = vset.pattern.permute.xlu0 0
      %269 = vperm.xlu0 %268, %v253
      %v270 = vpop.permute.xlu0 %269
      %273 = vset.pattern.permute.xlu0 0
      %274 = vperm.xlu0 %273, %v254
      %v275 = vpop.permute.xlu0 %274
      %278 = vset.pattern.permute.xlu0 0
      %279 = vperm.xlu0 %278, %v255
      %v280 = vpop.permute.xlu0 %279
      %283 = vset.pattern.permute.xlu0 0
      %284 = vperm.xlu0 %283, %v256
      %v285 = vpop.permute.xlu0 %284
      %v299 = vunpack.c.l.b16 %v203
      %v300 = vunpack.c.h.b16 %v203
      %v301 = vunpack.c.l.b16 %v204
      %v302 = vunpack.c.l.b16 %v205
      %v303 = vunpack.c.h.b16 %v205
      %v304 = vunpack.c.l.b16 %v206
      %v305 = vunpack.c.l.b16 %v207
      %v306 = vunpack.c.h.b16 %v207
      %v307 = vunpack.c.l.b16 %v208
      %v308 = vunpack.c.l.b16 %v209
      %v309 = vunpack.c.h.b16 %v209
      %v310 = vunpack.c.l.b16 %v210
      %v311 = vunpack.c.l.b16 %v211
      %v312 = vunpack.c.h.b16 %v211
      %v313 = vunpack.c.l.b16 %v212
      %v314 = vunpack.c.l.b16 %v213
      %v315 = vunpack.c.h.b16 %v213
      %v316 = vunpack.c.l.b16 %v214
      %v317 = vpack.c.b16 %v302, %v299
      %v318 = vpack.c.b16 %v303, %v300
      %v319 = vpack.c.b16 %v304, %v301
      %v320 = vpack.c.b16 %v308, %v305
      %v321 = vpack.c.b16 %v309, %v306
      %v322 = vpack.c.b16 %v310, %v307
      %v323 = vpack.c.b16 %v314, %v311
      %v324 = vpack.c.b16 %v315, %v312
      %v325 = vpack.c.b16 %v316, %v313
      %v368 = vunpack.c.l.b16 %v215
      %v369 = vunpack.c.l.b16 %v216
      %v370 = vunpack.c.l.b16 %v217
      %v371 = vunpack.c.l.b16 %v218
      %v372 = vunpack.c.l.b16 %v219
      %v373 = vunpack.c.l.b16 %v220
      %v374 = vunpack.c.l.b16 %v221
      %v375 = vunpack.c.l.b16 %v222
      %v376 = vunpack.c.l.b16 %v223
      %v377 = vunpack.c.l.b16 %v224
      %v378 = vunpack.c.l.b16 %v225
      %v379 = vunpack.c.l.b16 %v226
      %v380 = vunpack.c.l.b16 %v227
      %v381 = vunpack.c.l.b16 %v228
      %v382 = vunpack.c.l.b16 %v229
      %v383 = vunpack.c.l.b16 %v230
      %v384 = vunpack.c.l.b16 %v231
      %v385 = vunpack.c.l.b16 %v232
      %v386 = vunpack.c.l.b16 %v233
      %v387 = vunpack.c.l.b16 %v234
      %v388 = vunpack.c.l.b16 %v235
      %v389 = vunpack.c.l.b16 %v236
      %v390 = vunpack.c.l.b16 %v237
      %v391 = vunpack.c.l.b16 %v238
      %v392 = vunpack.c.l.b16 %v239
      %v393 = vunpack.c.l.b16 %v240
      %v394 = vunpack.c.l.b16 %v241
      %v395 = vunpack.c.l.b16 %v242
      %v396 = vunpack.c.l.b16 %v243
      %v397 = vunpack.c.l.b16 %v244
      %v398 = vunpack.c.l.b16 %v245
      %v399 = vunpack.c.l.b16 %v246
      %v400 = vunpack.c.l.b16 %v247
      %v401 = vunpack.c.l.b16 %v248
      %v402 = vunpack.c.l.b16 %v249
      %v403 = vunpack.c.l.b16 %v250
      %v404 = vpack.c.b16 %v369, %v368
      %v405 = vpack.c.b16 %v371, %v370
      %v406 = vpack.c.b16 %v373, %v372
      %v407 = vpack.c.b16 %v375, %v374
      %v408 = vpack.c.b16 %v377, %v376
      %v409 = vpack.c.b16 %v379, %v378
      %v410 = vpack.c.b16 %v381, %v380
      %v411 = vpack.c.b16 %v383, %v382
      %v412 = vpack.c.b16 %v385, %v384
      %v413 = vpack.c.b16 %v387, %v386
      %v414 = vpack.c.b16 %v389, %v388
      %v415 = vpack.c.b16 %v391, %v390
      %v416 = vpack.c.b16 %v393, %v392
      %v417 = vpack.c.b16 %v395, %v394
      %v418 = vpack.c.b16 %v397, %v396
      %v419 = vpack.c.b16 %v399, %v398
      %v420 = vpack.c.b16 %v401, %v400
      %v421 = vpack.c.b16 %v403, %v402
      %vm440 = vcmask 261120
      %v442 = vsel %vm440, %v319, 0
      %v445 = vsel %vm440, %v322, 0
      %v448 = vsel %vm440, %v325, 0
      %450 = vmatprep.subr.bf16.mxu0 0
      %451 = vmatpush1.bf16.msra.mxu0 %v411
      %452 = vmatprep.subr.bf16.mxu0 0
      %453 = vmatpush1.bf16.msra.mxu0 %v410
      %454 = vmatprep.subr.bf16.mxu0 0
      %455 = vmatpush1.bf16.msra.mxu0 %v409
      %456 = vmatprep.subr.bf16.mxu0 0
      %457 = vmatpush1.bf16.msra.mxu0 %v408
      %458 = vmatprep.subr.bf16.mxu0 0
      %459 = vmatpush1.bf16.msra.mxu0 %v407
      %460 = vmatprep.subr.bf16.mxu0 0
      %461 = vmatpush1.bf16.msra.mxu0 %v406
      %462 = vmatprep.subr.bf16.mxu0 0
      %463 = vmatpush1.bf16.msra.mxu0 %v405
      %464 = vmatprep.subr.bf16.mxu0 0
      %465 = vmatpush1.bf16.msra.mxu0 %v404
      %466 = vmatprep.subr.bf16.mxu0 0
      %467 = vmatpush2.bf16.msra.mxu0 %v419
      %468 = vmatprep.subr.bf16.mxu0 0
      %469 = vmatpush2.bf16.msra.mxu0 %v418
      %470 = vmatprep.subr.bf16.mxu0 0
      %471 = vmatpush2.bf16.msra.mxu0 %v417
      %472 = vmatprep.subr.bf16.mxu0 0
      %473 = vmatpush2.bf16.msra.mxu0 %v416
      %474 = vmatprep.subr.bf16.mxu0 0
      %475 = vmatpush2.bf16.msra.mxu0 %v415
      %476 = vmatprep.subr.bf16.mxu0 0
      %477 = vmatpush2.bf16.msra.mxu0 %v414
      %478 = vmatprep.subr.bf16.mxu0 0
      %479 = vmatpush2.bf16.msra.mxu0 %v413
      %480 = vmatprep.subr.bf16.mxu0 0
      %481 = vmatpush2.bf16.msra.mxu0 %v412
      %482 = vmatprep.mubr.bf16.mxu0 %v318
      %483 = vmatmul.mubr.bf16.gmra.mxu0 %v317
      %v484 = vpop.f32.mrf.mxu0
      %v485 = vadd.f32 %v260, %v484
      %v486 = vpop.f32.mrf.mxu0
      %v487 = vpop.f32.mrf.mxu0
      %v488 = vadd.f32 %v265, %v487
      %v489 = vpop.f32.mrf.mxu0
      %490 = vmatprep.mubr.bf16.mxu0 %v321
      %491 = vmatmul.mubr.bf16.gmra.mxu0 %v320
      %v492 = vpop.f32.mrf.mxu0
      %v493 = vadd.f32 %v270, %v492
      %v494 = vpop.f32.mrf.mxu0
      %v495 = vpop.f32.mrf.mxu0
      %v496 = vadd.f32 %v275, %v495
      %v497 = vpop.f32.mrf.mxu0
      %498 = vmatprep.mubr.bf16.mxu0 %v324
      %499 = vmatmul.mubr.bf16.gmra.mxu0 %v323
      %v500 = vpop.f32.mrf.mxu0
      %v501 = vadd.f32 %v280, %v500
      %v502 = vpop.f32.mrf.mxu0
      %v503 = vpop.f32.mrf.mxu0
      %v504 = vadd.f32 %v285, %v503
      %v505 = vpop.f32.mrf.mxu0
      %506 = vdwg.mxu0
      %507 = vmatprep.subr.bf16.mxu0 0
      %508 = vmatpush1.bf16.msra.mxu0 0
      %509 = vmatprep.subr.bf16.mxu0 0
      %510 = vmatpush1.bf16.msra.mxu0 0
      %511 = vmatprep.subr.bf16.mxu0 0
      %512 = vmatpush1.bf16.msra.mxu0 0
      %513 = vmatprep.subr.bf16.mxu0 0
      %514 = vmatpush1.bf16.msra.mxu0 0
      %515 = vmatprep.subr.bf16.mxu0 0
      %516 = vmatpush1.bf16.msra.mxu0 0
      %517 = vmatprep.subr.bf16.mxu0 0
      %518 = vmatpush1.bf16.msra.mxu0 0
      %519 = vmatprep.subr.bf16.mxu0 0
      %520 = vmatpush1.bf16.msra.mxu0 %v421
      %521 = vmatprep.subr.bf16.mxu0 0
      %522 = vmatpush1.bf16.msra.mxu0 %v420
      %523 = vmatprep.subr.bf16.mxu0 0
      %524 = vmatpush2.bf16.msra.mxu0 0
      %525 = vmatprep.subr.bf16.mxu0 0
      %526 = vmatpush2.bf16.msra.mxu0 0
      %527 = vmatprep.subr.bf16.mxu0 0
      %528 = vmatpush2.bf16.msra.mxu0 0
      %529 = vmatprep.subr.bf16.mxu0 0
      %530 = vmatpush2.bf16.msra.mxu0 0
      %531 = vmatprep.subr.bf16.mxu0 0
      %532 = vmatpush2.bf16.msra.mxu0 0
      %533 = vmatprep.subr.bf16.mxu0 0
      %534 = vmatpush2.bf16.msra.mxu0 0
      %535 = vmatprep.subr.bf16.mxu0 0
      %536 = vmatpush2.bf16.msra.mxu0 0
      %537 = vmatprep.subr.bf16.mxu0 0
      %538 = vmatpush2.bf16.msra.mxu0 0
      %539 = vmatprep.mubr.bf16.mxu0 0
      %540 = vmatmul.mubr.bf16.gmra.mxu0 %v442
      %v541 = vpop.f32.mrf.mxu0
      %v542 = vadd.f32 %v485, %v541
      %v543 = vpop.f32.mrf.mxu0
      %v544 = vpop.f32.mrf.mxu0
      %v545 = vadd.f32 %v488, %v544
      %v546 = vpop.f32.mrf.mxu0
      %547 = vmatprep.mubr.bf16.mxu0 0
      %548 = vmatmul.mubr.bf16.gmra.mxu0 %v445
      %v549 = vpop.f32.mrf.mxu0
      %v550 = vadd.f32 %v493, %v549
      %v551 = vpop.f32.mrf.mxu0
      %v552 = vpop.f32.mrf.mxu0
      %v553 = vadd.f32 %v496, %v552
      %v554 = vpop.f32.mrf.mxu0
      %555 = vmatprep.mubr.bf16.mxu0 0
      %556 = vmatmul.mubr.bf16.gmra.mxu0 %v448
      %v557 = vpop.f32.mrf.mxu0
      %v558 = vadd.f32 %v501, %v557
      %v559 = vpop.f32.mrf.mxu0
      %v560 = vpop.f32.mrf.mxu0
      %v561 = vadd.f32 %v504, %v560
      %v562 = vpop.f32.mrf.mxu0
      %563 = vdwg.mxu0
      %v564 = vmax.f32 %v542, 0.0
      %v565 = vmax.f32 %v545, 0.0
      %v566 = vmax.f32 %v550, 0.0
      %v567 = vmax.f32 %v553, 0.0
      %v568 = vmax.f32 %v558, 0.0
      %v569 = vmax.f32 %v561, 0.0
      %v570 = vpack.c.bf16 %v565, %v564
      %v571 = vpack.c.bf16 %v567, %v566
      %v572 = vpack.c.bf16 %v569, %v568
      %v576 = vunpack.c.l.b16 %v570
      %v577 = vunpack.c.h.b16 %v570
      %v578 = vunpack.c.l.b16 %v571
      %v579 = vunpack.c.h.b16 %v571
      %v580 = vunpack.c.l.b16 %v572
      %v581 = vunpack.c.h.b16 %v572
      %v582 = vpack.c.b16 %v576, %v576
      %v583 = vpack.c.b16 %v577, %v577
      %v584 = vpack.c.b16 %v578, %v578
      %v585 = vpack.c.b16 %v579, %v579
      %v586 = vpack.c.b16 %v580, %v580
      %v587 = vpack.c.b16 %v581, %v581
      %vm594 = vcmask 125952
      %595 = vst.msk [vmem:[%s201] sm:$0xf] %vm594, %v582
      %596 = vst.msk [vmem:[%s201 + $0x4] sm:$0xf] %vm594, %v583
      %597 = vst.msk [vmem:[%s201 + $0x8] sm:$0xf] %vm594, %v584
      %598 = vst.msk [vmem:[%s201 + $0xc] sm:$0xf] %vm594, %v585
      %599 = vst.msk [vmem:[%s201 + $0x10] sm:$0xf] %vm594, %v586
      %600 = vst.msk [vmem:[%s201 + $0x14] sm:$0xf] %vm594, %v587
      %p601 = scmp.lt.s32.totalorder %s18, 1
      %s602 = scalar_select %p601, %s18, 1
      %p603 = scmp.lt.s32.totalorder %s19, 0
      %s604 = scalar_select %p603, %s19, 0
      %s605 = smul.addr %s602, 6
      %s606 = sadd.s32 %s604, %s605
      %s607 = smul.addr %s606, 4
      %s608 = scalar_lea.vmem %s3, %s607
      // Predicated region
      $region33: #{forward.16} parent=31 // pred_check
        %p609 = pneg %p116
      $region34: #{forward.16} parent=31 // pred_check_branch
        %611 = sbr.rel (%p609) target = $region36
      $region35: #{forward.16} parent=31 // pred_region
        _
      $region36: #{forward.16} parent=31 // pred_fallthru
        _
    $region32: #{forward.16} parent=5 // pred_fallthru
      _
    %p612 = scmp.le.s32.totalorder 2, %s9
    // Predicated region
    $region37: #{forward.16} parent=5 // pred_check
      %p613 = pneg %p612
    $region38: #{forward.16} parent=5 // pred_check_branch
      %615 = sbr.rel (%p613) target = $region40
    $region39: #{forward.16} parent=5 // pred_region
      %s616 = ssub.s32 %s9, 2
      // Predicated region
      $region41: #{forward.16} parent=39 // pred_check
        %p617 = pneg %p122
      $region42: #{forward.16} parent=39 // pred_check_branch
        %619 = sbr.rel (%p617) target = $region44
      $region43: #{forward.16} parent=39 // pred_region
        %p620 = scmp.lt.s32.totalorder %s20, 1
        %s621 = scalar_select %p620, %s20, 1
        %p622 = scmp.lt.s32.totalorder %s21, 0
        %s623 = scalar_select %p622, %s21, 0
        %s624 = smul.addr %s621, 6
        %s625 = sadd.s32 %s623, %s624
        %s626 = smul.addr %s625, 4
        %s627 = scalar_lea.vmem %s3, %s626
      $region44: #{forward.16} parent=39 // pred_fallthru
        _
    $region40: #{forward.16} parent=5 // pred_fallthru
      _
  $region6: #{forward.16} parent=0 // loop_footer
    %s13 = sadd.s32 1, %s9
  $region7: #{forward.16} parent=0 // loop_footer_branch
    %8 = sbr.rel target = $region3
  $region8: #{forward.16} parent=0 // loop_exit
    _

// kernel: forward.17
$region0: #{forward.17}
  #allocation0 [shape = 'u32[]', space=smem, size = 0x4, offset = 0x4, fixed_abs, tag = 'smem constant byte address 0x4 - core index']
  #allocation1 [shape = 'u32[144,128]{1,0:T(1,128)}', space=vmem, size = 0x12000, scoped, tag = 'internal scratch']
  %s0 = inlined_call_operand.vmem [shape: bf16[64,432], index: 0, kind: input, shape index: {}]
  %s1 = inlined_call_operand.vmem [shape: f32[64,1], index: 1, kind: input, shape index: {}]
  %s2 = inlined_call_operand.vmem [shape: bf16[2,432,4], index: 2, kind: input, shape index: {}]
  %s3 = inlined_call_operand.vmem [shape: bf16[2,64,4], index: 3, kind: output, shape index: {}]
  %s4 = sld [smem:[#allocation0]]
  $region45: #{forward.17} parent=0
    _
  %s6 = ssub.s32 1, %s4
  %s7 = scalar_select 0, %s6, %s4
  loop: start=0, step=1, limit=4
  $region2: #{forward.17} parent=0 // loop_pre_header
    _
  $region3: #{forward.17} parent=0 // loop_header
    %s9 = sphi 0, %s13
    %p10 = scmp.ge.s32.totalorder %s9, 4
    %s16 = sphi 0, %s28
    %s17 = sphi 0, %s24
    %s18 = sphi 0, %s16
    %s19 = sphi 0, %s17
    %s20 = sphi 0, %s18
    %s21 = sphi 0, %s19
    %s29 = sphi 0, %s29
    %s31 = sphi 0, %s29
    %s32 = sphi 0, %s31
    %s46 = sphi 0, %s32
    %s50 = sphi 0, %s50
    %s52 = sphi 0, %s50
    %s53 = sphi 0, %s52
    %s67 = sphi 0, %s53
    %s75 = sphi 0, %s77
    %s78 = sphi 0, %s75
    %s79 = sphi 0, %s78
    %s95 = sphi 0, %s79
    %s103 = sphi 0, %s105
    %s106 = sphi 0, %s103
    %s107 = sphi 0, %s106
    %s123 = sphi 0, %s107
  $region4: #{forward.17} parent=0 // loop_header_branch
    %12 = sbr.rel (%p10) target = $region8
  $region5: #{forward.17} parent=0 // loop_body
    %s14 = ssub.s32 %s9, 1
    %s15 = ssub.s32 %s9, 2
    %s22 = sadd.s32 1, %s17
    %p23 = scmp.ge.s32.totalorder %s22, 1
    %s24 = scalar_select %p23, 0, %s22
    %s25 = sadd.s32 1, %s16
    %s26 = scalar_select %p23, %s25, %s16
    %p27 = scmp.ge.s32.totalorder %s26, 2
    %s28 = scalar_select %p27, 0, %s26
    %s30 = sadd.s32 %s29, 1
    %p33 = scmp.eq.s32.totalorder %s9, 1
    %p34 = scmp.ne.s32.totalorder %s29, %s31
    %p35 = scmp.eq.s32.totalorder %s9, 0
    %p36 = por %p34, %p35
    %p37 = scmp.ne.s32.totalorder %s29, %s31
    %p38 = scmp.eq.s32.totalorder %s14, 1
    %p39 = por %p37, %p38
    %p40 = scmp.ne.s32.totalorder %s31, %s32
    %p41 = scmp.eq.s32.totalorder %s14, 0
    %p42 = por %p40, %p41
    %p43 = scmp.ne.s32.totalorder %s31, %s32
    %p44 = scmp.eq.s32.totalorder %s15, 1
    %p45 = por %p43, %p44
    %p47 = scmp.ne.s32.totalorder %s32, %s46
    %p48 = scmp.eq.s32.totalorder %s15, 0
    %p49 = por %p47, %p48
    %s51 = sadd.s32 %s50, 1
    %p54 = scmp.eq.s32.totalorder %s9, 1
    %p55 = scmp.ne.s32.totalorder %s50, %s52
    %p56 = scmp.eq.s32.totalorder %s9, 0
    %p57 = por %p55, %p56
    %p58 = scmp.ne.s32.totalorder %s50, %s52
    %p59 = scmp.eq.s32.totalorder %s14, 1
    %p60 = por %p58, %p59
    %p61 = scmp.ne.s32.totalorder %s52, %s53
    %p62 = scmp.eq.s32.totalorder %s14, 0
    %p63 = por %p61, %p62
    %p64 = scmp.ne.s32.totalorder %s52, %s53
    %p65 = scmp.eq.s32.totalorder %s15, 1
    %p66 = por %p64, %p65
    %p68 = scmp.ne.s32.totalorder %s53, %s67
    %p69 = scmp.eq.s32.totalorder %s15, 0
    %p70 = por %p68, %p69
    %s71 = ssub.s32 %s16, %s28
    %s72 = ssub.s32 %s17, %s24
    %s73 = sor.u32 %s71, %s72
    %p74 = scmp.eq.s32.totalorder %s73, 0
    %s76 = sadd.s32 %s75, 1
    %s77 = scalar_select %p74, %s75, %s76
    %p80 = pneg %p74
    %p81 = scmp.eq.s32.totalorder %s9, 1
    %p82 = por %p80, %p81
    %p83 = scmp.ne.s32.totalorder %s75, %s78
    %p84 = scmp.eq.s32.totalorder %s9, 0
    %p85 = por %p83, %p84
    %p86 = scmp.ne.s32.totalorder %s75, %s78
    %p87 = scmp.eq.s32.totalorder %s14, 1
    %p88 = por %p86, %p87
    %p89 = scmp.ne.s32.totalorder %s78, %s79
    %p90 = scmp.eq.s32.totalorder %s14, 0
    %p91 = por %p89, %p90
    %p92 = scmp.ne.s32.totalorder %s78, %s79
    %p93 = scmp.eq.s32.totalorder %s15, 1
    %p94 = por %p92, %p93
    %p96 = scmp.ne.s32.totalorder %s79, %s95
    %p97 = scmp.eq.s32.totalorder %s15, 0
    %p98 = por %p96, %p97
    %s99 = ssub.s32 %s16, %s28
    %s100 = ssub.s32 %s17, %s24
    %s101 = sor.u32 %s99, %s100
    %p102 = scmp.eq.s32.totalorder %s101, 0
    %s104 = sadd.s32 %s103, 1
    %s105 = scalar_select %p102, %s103, %s104
    %p108 = pneg %p102
    %p109 = scmp.eq.s32.totalorder %s9, 1
    %p110 = por %p108, %p109
    %p111 = scmp.ne.s32.totalorder %s103, %s106
    %p112 = scmp.eq.s32.totalorder %s9, 0
    %p113 = por %p111, %p112
    %p114 = scmp.ne.s32.totalorder %s103, %s106
    %p115 = scmp.eq.s32.totalorder %s14, 1
    %p116 = por %p114, %p115
    %p117 = scmp.ne.s32.totalorder %s106, %s107
    %p118 = scmp.eq.s32.totalorder %s14, 0
    %p119 = por %p117, %p118
    %p120 = scmp.ne.s32.totalorder %s106, %s107
    %p121 = scmp.eq.s32.totalorder %s15, 1
    %p122 = por %p120, %p121
    %p124 = scmp.ne.s32.totalorder %s107, %s123
    %p125 = scmp.eq.s32.totalorder %s15, 0
    %p126 = por %p124, %p125
    %p127 = scmp.le.s32.totalorder 1, %s9
    %p128 = scmp.lt.s32.totalorder %s9, 3
    %p129 = pnand %p127, %p128
    %p130 = pneg %p129
    // Predicated region
    $region9: #{forward.17} parent=5 // pred_check
      _
    $region10: #{forward.17} parent=5 // pred_check_branch
      %132 = sbr.rel (%p129) target = $region12
    $region11: #{forward.17} parent=5 // pred_region
      %s133 = ssub.s32 %s9, 1
      // Predicated region
      $region13: #{forward.17} parent=11 // pred_check
        %p134 = pneg %p42
      $region14: #{forward.17} parent=11 // pred_check_branch
        %136 = sbr.rel (%p134) target = $region16
      $region15: #{forward.17} parent=11 // pred_region
        _
      $region16: #{forward.17} parent=11 // pred_fallthru
        _
      // Predicated region
      $region17: #{forward.17} parent=11 // pred_check
        %p137 = pneg %p63
      $region18: #{forward.17} parent=11 // pred_check_branch
        %139 = sbr.rel (%p137) target = $region20
      $region19: #{forward.17} parent=11 // pred_region
        _
      $region20: #{forward.17} parent=11 // pred_fallthru
        _
    $region12: #{forward.17} parent=5 // pred_fallthru
      _
    %p140 = scmp.lt.s32.totalorder %s9, 2
    // Predicated region
    $region21: #{forward.17} parent=5 // pred_check
      %p141 = pneg %p140
    $region22: #{forward.17} parent=5 // pred_check_branch
      %143 = sbr.rel (%p141) target = $region24
    $region23: #{forward.17} parent=5 // pred_region
      // Predicated region
      $region25: #{forward.17} parent=23 // pred_check
        %p144 = pneg %p85
      $region26: #{forward.17} parent=23 // pred_check_branch
        %146 = sbr.rel (%p144) target = $region28
      $region27: #{forward.17} parent=23 // pred_region
        %p147 = scmp.lt.s32.totalorder %s16, 1
        %s148 = scalar_select %p147, %s16, 1
        %p149 = scmp.lt.s32.totalorder %s17, 0
        %s150 = scalar_select %p149, %s17, 0
        %s151 = smul.addr %s148, 54
        %s152 = sadd.s32 %s150, %s151
        %s153 = smul.addr %s152, 4
        %s154 = scalar_lea.vmem %s2, %s153
      $region28: #{forward.17} parent=23 // pred_fallthru
        _
    $region24: #{forward.17} parent=5 // pred_fallthru
      _
    %p155 = scmp.le.s32.totalorder 1, %s9
    %p156 = scmp.lt.s32.totalorder %s9, 3
    %p157 = pnand %p155, %p156
    %p158 = pneg %p157
    // Predicated region
    $region29: #{forward.17} parent=5 // pred_check
      _
    $region30: #{forward.17} parent=5 // pred_check_branch
      %160 = sbr.rel (%p157) target = $region32
    $region31: #{forward.17} parent=5 // pred_region
      %s161 = ssub.s32 %s9, 1
      %p162 = pneg %p42
      %p163 = pneg %p39
      %p164 = pneg %p63
      %p165 = pneg %p60
      %p166 = scmp.lt.s32.totalorder %s18, 1
      %s167 = scalar_select %p166, %s18, 1
      %p168 = scmp.lt.s32.totalorder %s19, 0
      %s169 = scalar_select %p168, %s19, 0
      %s170 = smul.addr %s167, 54
      %s171 = sadd.s32 %s169, %s170
      %s172 = smul.addr %s171, 4
      %s173 = scalar_lea.vmem %s2, %s172
      %p174 = pneg %p91
      %p175 = pneg %p88
      %p176 = pneg %p119
      %p177 = pneg %p116
      %p178 = scmp.lt.s32.totalorder %s18, 1
      %s179 = scalar_select %p178, %s18, 1
      %p180 = scmp.lt.s32.totalorder %s19, 0
      %s181 = scalar_select %p180, %s19, 0
      %s182 = smul.addr %s179, 8
      %s183 = sadd.s32 %s181, %s182
      %s184 = smul.addr %s183, 4
      %s185 = scalar_lea.vmem %s3, %s184
      %p186 = scmp.lt.s32.totalorder %s18, 1
      %s187 = scalar_select %p186, %s18, 1
      %p188 = scmp.lt.s32.totalorder %s19, 0
      %s189 = scalar_select %p188, %s19, 0
      %s190 = smul.addr %s187, 54
      %s191 = sadd.s32 %s189, %s190
      %s192 = smul.addr %s191, 4
      %s193 = scalar_lea.vmem %s2, %s192
      %p194 = scmp.lt.s32.totalorder %s18, 1
      %s195 = scalar_select %p194, %s18, 1
      %p196 = scmp.lt.s32.totalorder %s19, 0
      %s197 = scalar_select %p196, %s19, 0
      %s198 = smul.addr %s195, 8
      %s199 = sadd.s32 %s197, %s198
      %s200 = smul.addr %s199, 4
      %s201 = scalar_lea.vmem %s3, %s200
      %v203 = vld [vmem:[%s0] sm:$0xff]
      %v204 = vld [vmem:[%s0 + $0x8] sm:$0xff]
      %v205 = vld [vmem:[%s0 + $0x10] sm:$0xff]
      %v206 = vld [vmem:[%s0 + $0x18] sm:$0xff]
      %v207 = vld [vmem:[%s0 + $0x20] sm:$0xff]
      %v208 = vld [vmem:[%s0 + $0x28] sm:$0xff]
      %v209 = vld [vmem:[%s0 + $0x30] sm:$0xff]
      %v210 = vld [vmem:[%s0 + $0x38] sm:$0xff]
      %v211 = vld [vmem:[%s0 + $0x40] sm:$0xff]
      %v212 = vld [vmem:[%s0 + $0x48] sm:$0xff]
      %v213 = vld [vmem:[%s0 + $0x50] sm:$0xff]
      %v214 = vld [vmem:[%s0 + $0x58] sm:$0xff]
      %v215 = vld [vmem:[%s0 + $0x60] sm:$0xff]
      %v216 = vld [vmem:[%s0 + $0x68] sm:$0xff]
      %v217 = vld [vmem:[%s0 + $0x70] sm:$0xff]
      %v218 = vld [vmem:[%s0 + $0x78] sm:$0xff]
      %v219 = vld [vmem:[%s193] sm:$0xf]
      %v220 = vld [vmem:[%s193 + $0x4] sm:$0xf]
      %v221 = vld [vmem:[%s193 + $0x8] sm:$0xf]
      %v222 = vld [vmem:[%s193 + $0xc] sm:$0xf]
      %v223 = vld [vmem:[%s193 + $0x10] sm:$0xf]
      %v224 = vld [vmem:[%s193 + $0x14] sm:$0xf]
      %v225 = vld [vmem:[%s193 + $0x18] sm:$0xf]
      %v226 = vld [vmem:[%s193 + $0x1c] sm:$0xf]
      %v227 = vld [vmem:[%s193 + $0x20] sm:$0xf]
      %v228 = vld [vmem:[%s193 + $0x24] sm:$0xf]
      %v229 = vld [vmem:[%s193 + $0x28] sm:$0xf]
      %v230 = vld [vmem:[%s193 + $0x2c] sm:$0xf]
      %v231 = vld [vmem:[%s193 + $0x30] sm:$0xf]
      %v232 = vld [vmem:[%s193 + $0x34] sm:$0xf]
      %v233 = vld [vmem:[%s193 + $0x38] sm:$0xf]
      %v234 = vld [vmem:[%s193 + $0x3c] sm:$0xf]
      %v235 = vld [vmem:[%s193 + $0x40] sm:$0xf]
      %v236 = vld [vmem:[%s193 + $0x44] sm:$0xf]
      %v237 = vld [vmem:[%s193 + $0x48] sm:$0xf]
      %v238 = vld [vmem:[%s193 + $0x4c] sm:$0xf]
      %v239 = vld [vmem:[%s193 + $0x50] sm:$0xf]
      %v240 = vld [vmem:[%s193 + $0x54] sm:$0xf]
      %v241 = vld [vmem:[%s193 + $0x58] sm:$0xf]
      %v242 = vld [vmem:[%s193 + $0x5c] sm:$0xf]
      %v243 = vld [vmem:[%s193 + $0x60] sm:$0xf]
      %v244 = vld [vmem:[%s193 + $0x64] sm:$0xf]
      %v245 = vld [vmem:[%s193 + $0x68] sm:$0xf]
      %v246 = vld [vmem:[%s193 + $0x6c] sm:$0xf]
      %v247 = vld [vmem:[%s193 + $0x70] sm:$0xf]
      %v248 = vld [vmem:[%s193 + $0x74] sm:$0xf]
      %v249 = vld [vmem:[%s193 + $0x78] sm:$0xf]
      %v250 = vld [vmem:[%s193 + $0x7c] sm:$0xf]
      %v251 = vld [vmem:[%s193 + $0x80] sm:$0xf]
      %v252 = vld [vmem:[%s193 + $0x84] sm:$0xf]
      %v253 = vld [vmem:[%s193 + $0x88] sm:$0xf]
      %v254 = vld [vmem:[%s193 + $0x8c] sm:$0xf]
      %v255 = vld [vmem:[%s193 + $0x90] sm:$0xf]
      %v256 = vld [vmem:[%s193 + $0x94] sm:$0xf]
      %v257 = vld [vmem:[%s193 + $0x98] sm:$0xf]
      %v258 = vld [vmem:[%s193 + $0x9c] sm:$0xf]
      %v259 = vld [vmem:[%s193 + $0xa0] sm:$0xf]
      %v260 = vld [vmem:[%s193 + $0xa4] sm:$0xf]
      %v261 = vld [vmem:[%s193 + $0xa8] sm:$0xf]
      %v262 = vld [vmem:[%s193 + $0xac] sm:$0xf]
      %v263 = vld [vmem:[%s193 + $0xb0] sm:$0xf]
      %v264 = vld [vmem:[%s193 + $0xb4] sm:$0xf]
      %v265 = vld [vmem:[%s193 + $0xb8] sm:$0xf]
      %v266 = vld [vmem:[%s193 + $0xbc] sm:$0xf]
      %v267 = vld [vmem:[%s193 + $0xc0] sm:$0xf]
      %v268 = vld [vmem:[%s193 + $0xc4] sm:$0xf]
      %v269 = vld [vmem:[%s193 + $0xc8] sm:$0xf]
      %v270 = vld [vmem:[%s193 + $0xcc] sm:$0xf]
      %v271 = vld [vmem:[%s193 + $0xd0] sm:$0xf]
      %v272 = vld [vmem:[%s193 + $0xd4] sm:$0xf]
      %v273 = vld [vmem:[%s1] sm:$0xff]
      %v274 = vld [vmem:[%s1 + $0x8] sm:$0xff]
      %v275 = vld [vmem:[%s1 + $0x10] sm:$0xff]
      %v276 = vld [vmem:[%s1 + $0x18] sm:$0xff]
      %v277 = vld [vmem:[%s1 + $0x20] sm:$0xff]
      %v278 = vld [vmem:[%s1 + $0x28] sm:$0xff]
      %v279 = vld [vmem:[%s1 + $0x30] sm:$0xff]
      %v280 = vld [vmem:[%s1 + $0x38] sm:$0xff]
      %282 = vset.pattern.permute.xlu0 0
      %283 = vperm.xlu0 %282, %v273
      %v284 = vpop.permute.xlu0 %283
      %287 = vset.pattern.permute.xlu0 0
      %288 = vperm.xlu0 %287, %v274
      %v289 = vpop.permute.xlu0 %288
      %292 = vset.pattern.permute.xlu0 0
      %293 = vperm.xlu0 %292, %v275
      %v294 = vpop.permute.xlu0 %293
      %297 = vset.pattern.permute.xlu0 0
      %298 = vperm.xlu0 %297, %v276
      %v299 = vpop.permute.xlu0 %298
      %302 = vset.pattern.permute.xlu0 0
      %303 = vperm.xlu0 %302, %v277
      %v304 = vpop.permute.xlu0 %303
      %307 = vset.pattern.permute.xlu0 0
      %308 = vperm.xlu0 %307, %v278
      %v309 = vpop.permute.xlu0 %308
      %312 = vset.pattern.permute.xlu0 0
      %313 = vperm.xlu0 %312, %v279
      %v314 = vpop.permute.xlu0 %313
      %317 = vset.pattern.permute.xlu0 0
      %318 = vperm.xlu0 %317, %v280
      %v319 = vpop.permute.xlu0 %318
      %v337 = vunpack.c.l.b16 %v203
      %v338 = vunpack.c.h.b16 %v203
      %v339 = vunpack.c.l.b16 %v204
      %v340 = vunpack.c.h.b16 %v204
      %v341 = vunpack.c.l.b16 %v205
      %v342 = vunpack.c.h.b16 %v205
      %v343 = vunpack.c.l.b16 %v206
      %v344 = vunpack.c.h.b16 %v206
      %v345 = vunpack.c.l.b16 %v207
      %v346 = vunpack.c.h.b16 %v207
      %v347 = vunpack.c.l.b16 %v208
      %v348 = vunpack.c.h.b16 %v208
      %v349 = vunpack.c.l.b16 %v209
      %v350 = vunpack.c.h.b16 %v209
      %v351 = vunpack.c.l.b16 %v210
      %v352 = vunpack.c.h.b16 %v210
      %v353 = vunpack.c.l.b16 %v211
      %v354 = vunpack.c.h.b16 %v211
      %v355 = vunpack.c.l.b16 %v212
      %v356 = vunpack.c.h.b16 %v212
      %v357 = vunpack.c.l.b16 %v213
      %v358 = vunpack.c.h.b16 %v213
      %v359 = vunpack.c.l.b16 %v214
      %v360 = vunpack.c.h.b16 %v214
      %v361 = vunpack.c.l.b16 %v215
      %v362 = vunpack.c.h.b16 %v215
      %v363 = vunpack.c.l.b16 %v216
      %v364 = vunpack.c.h.b16 %v216
      %v365 = vunpack.c.l.b16 %v217
      %v366 = vunpack.c.h.b16 %v217
      %v367 = vunpack.c.l.b16 %v218
      %v368 = vunpack.c.h.b16 %v218
      %v369 = vpack.c.b16 %v341, %v337
      %v370 = vpack.c.b16 %v342, %v338
      %v371 = vpack.c.b16 %v343, %v339
      %v372 = vpack.c.b16 %v344, %v340
      %v373 = vpack.c.b16 %v349, %v345
      %v374 = vpack.c.b16 %v350, %v346
      %v375 = vpack.c.b16 %v351, %v347
      %v376 = vpack.c.b16 %v352, %v348
      %v377 = vpack.c.b16 %v357, %v353
      %v378 = vpack.c.b16 %v358, %v354
      %v379 = vpack.c.b16 %v359, %v355
      %v380 = vpack.c.b16 %v360, %v356
      %v381 = vpack.c.b16 %v365, %v361
      %v382 = vpack.c.b16 %v366, %v362
      %v383 = vpack.c.b16 %v367, %v363
      %v384 = vpack.c.b16 %v368, %v364
      %v451 = vunpack.c.l.b16 %v219
      %v452 = vunpack.c.l.b16 %v220
      %v453 = vunpack.c.l.b16 %v221
      %v454 = vunpack.c.l.b16 %v222
      %v455 = vunpack.c.l.b16 %v223
      %v456 = vunpack.c.l.b16 %v224
      %v457 = vunpack.c.l.b16 %v225
      %v458 = vunpack.c.l.b16 %v226
      %v459 = vunpack.c.l.b16 %v227
      %v460 = vunpack.c.l.b16 %v228
      %v461 = vunpack.c.l.b16 %v229
      %v462 = vunpack.c.l.b16 %v230
      %v463 = vunpack.c.l.b16 %v231
      %v464 = vunpack.c.l.b16 %v232
      %v465 = vunpack.c.l.b16 %v233
      %v466 = vunpack.c.l.b16 %v234
      %v467 = vunpack.c.l.b16 %v235
      %v468 = vunpack.c.l.b16 %v236
      %v469 = vunpack.c.l.b16 %v237
      %v470 = vunpack.c.l.b16 %v238
      %v471 = vunpack.c.l.b16 %v239
      %v472 = vunpack.c.l.b16 %v240
      %v473 = vunpack.c.l.b16 %v241
      %v474 = vunpack.c.l.b16 %v242
      %v475 = vunpack.c.l.b16 %v243
      %v476 = vunpack.c.l.b16 %v244
      %v477 = vunpack.c.l.b16 %v245
      %v478 = vunpack.c.l.b16 %v246
      %v479 = vunpack.c.l.b16 %v247
      %v480 = vunpack.c.l.b16 %v248
      %v481 = vunpack.c.l.b16 %v249
      %v482 = vunpack.c.l.b16 %v250
      %v483 = vunpack.c.l.b16 %v251
      %v484 = vunpack.c.l.b16 %v252
      %v485 = vunpack.c.l.b16 %v253
      %v486 = vunpack.c.l.b16 %v254
      %v487 = vunpack.c.l.b16 %v255
      %v488 = vunpack.c.l.b16 %v256
      %v489 = vunpack.c.l.b16 %v257
      %v490 = vunpack.c.l.b16 %v258
      %v491 = vunpack.c.l.b16 %v259
      %v492 = vunpack.c.l.b16 %v260
      %v493 = vunpack.c.l.b16 %v261
      %v494 = vunpack.c.l.b16 %v262
      %v495 = vunpack.c.l.b16 %v263
      %v496 = vunpack.c.l.b16 %v264
      %v497 = vunpack.c.l.b16 %v265
      %v498 = vunpack.c.l.b16 %v266
      %v499 = vunpack.c.l.b16 %v267
      %v500 = vunpack.c.l.b16 %v268
      %v501 = vunpack.c.l.b16 %v269
      %v502 = vunpack.c.l.b16 %v270
      %v503 = vunpack.c.l.b16 %v271
      %v504 = vunpack.c.l.b16 %v272
      %v505 = vpack.c.b16 %v452, %v451
      %v506 = vpack.c.b16 %v454, %v453
      %v507 = vpack.c.b16 %v456, %v455
      %v508 = vpack.c.b16 %v458, %v457
      %v509 = vpack.c.b16 %v460, %v459
      %v510 = vpack.c.b16 %v462, %v461
      %v511 = vpack.c.b16 %v464, %v463
      %v512 = vpack.c.b16 %v466, %v465
      %v513 = vpack.c.b16 %v468, %v467
      %v514 = vpack.c.b16 %v470, %v469
      %v515 = vpack.c.b16 %v472, %v471
      %v516 = vpack.c.b16 %v474, %v473
      %v517 = vpack.c.b16 %v476, %v475
      %v518 = vpack.c.b16 %v478, %v477
      %v519 = vpack.c.b16 %v480, %v479
      %v520 = vpack.c.b16 %v482, %v481
      %v521 = vpack.c.b16 %v484, %v483
      %v522 = vpack.c.b16 %v486, %v485
      %v523 = vpack.c.b16 %v488, %v487
      %v524 = vpack.c.b16 %v490, %v489
      %v525 = vpack.c.b16 %v492, %v491
      %v526 = vpack.c.b16 %v494, %v493
      %v527 = vpack.c.b16 %v496, %v495
      %v528 = vpack.c.b16 %v498, %v497
      %v529 = vpack.c.b16 %v500, %v499
      %v530 = vpack.c.b16 %v502, %v501
      %v531 = vpack.c.b16 %v504, %v503
      %vm559 = vcmask 392192
      %v561 = vsel %vm559, %v372, 0
      %v564 = vsel %vm559, %v376, 0
      %v567 = vsel %vm559, %v380, 0
      %v570 = vsel %vm559, %v384, 0
      %572 = vmatprep.subr.bf16.mxu0 0
      %573 = vmatpush1.bf16.msra.mxu0 %v512
      %574 = vmatprep.subr.bf16.mxu0 0
      %575 = vmatpush1.bf16.msra.mxu0 %v511
      %576 = vmatprep.subr.bf16.mxu0 0
      %577 = vmatpush1.bf16.msra.mxu0 %v510
      %578 = vmatprep.subr.bf16.mxu0 0
      %579 = vmatpush1.bf16.msra.mxu0 %v509
      %580 = vmatprep.subr.bf16.mxu0 0
      %581 = vmatpush1.bf16.msra.mxu0 %v508
      %582 = vmatprep.subr.bf16.mxu0 0
      %583 = vmatpush1.bf16.msra.mxu0 %v507
      %584 = vmatprep.subr.bf16.mxu0 0
      %585 = vmatpush1.bf16.msra.mxu0 %v506
      %586 = vmatprep.subr.bf16.mxu0 0
      %587 = vmatpush1.bf16.msra.mxu0 %v505
      %588 = vmatprep.subr.bf16.mxu0 0
      %589 = vmatpush2.bf16.msra.mxu0 %v520
      %590 = vmatprep.subr.bf16.mxu0 0
      %591 = vmatpush2.bf16.msra.mxu0 %v519
      %592 = vmatprep.subr.bf16.mxu0 0
      %593 = vmatpush2.bf16.msra.mxu0 %v518
      %594 = vmatprep.subr.bf16.mxu0 0
      %595 = vmatpush2.bf16.msra.mxu0 %v517
      %596 = vmatprep.subr.bf16.mxu0 0
      %597 = vmatpush2.bf16.msra.mxu0 %v516
      %598 = vmatprep.subr.bf16.mxu0 0
      %599 = vmatpush2.bf16.msra.mxu0 %v515
      %600 = vmatprep.subr.bf16.mxu0 0
      %601 = vmatpush2.bf16.msra.mxu0 %v514
      %602 = vmatprep.subr.bf16.mxu0 0
      %603 = vmatpush2.bf16.msra.mxu0 %v513
      %604 = vmatprep.mubr.bf16.mxu0 %v370
      %605 = vmatmul.mubr.bf16.gmra.mxu0 %v369
      %v606 = vpop.f32.mrf.mxu0
      %v607 = vadd.f32 %v284, %v606
      %v608 = vpop.f32.mrf.mxu0
      %v609 = vpop.f32.mrf.mxu0
      %v610 = vadd.f32 %v289, %v609
      %v611 = vpop.f32.mrf.mxu0
      %612 = vmatprep.mubr.bf16.mxu0 %v374
      %613 = vmatmul.mubr.bf16.gmra.mxu0 %v373
      %v614 = vpop.f32.mrf.mxu0
      %v615 = vadd.f32 %v294, %v614
      %v616 = vpop.f32.mrf.mxu0
      %v617 = vpop.f32.mrf.mxu0
      %v618 = vadd.f32 %v299, %v617
      %v619 = vpop.f32.mrf.mxu0
      %620 = vmatprep.mubr.bf16.mxu0 %v378
      %621 = vmatmul.mubr.bf16.gmra.mxu0 %v377
      %v622 = vpop.f32.mrf.mxu0
      %v623 = vadd.f32 %v304, %v622
      %v624 = vpop.f32.mrf.mxu0
      %v625 = vpop.f32.mrf.mxu0
      %v626 = vadd.f32 %v309, %v625
      %v627 = vpop.f32.mrf.mxu0
      %628 = vmatprep.mubr.bf16.mxu0 %v382
      %629 = vmatmul.mubr.bf16.gmra.mxu0 %v381
      %v630 = vpop.f32.mrf.mxu0
      %v631 = vadd.f32 %v314, %v630
      %v632 = vpop.f32.mrf.mxu0
      %v633 = vpop.f32.mrf.mxu0
      %v634 = vadd.f32 %v319, %v633
      %v635 = vpop.f32.mrf.mxu0
      %636 = vdwg.mxu0
      %637 = vmatprep.subr.bf16.mxu0 0
      %638 = vmatpush1.bf16.msra.mxu0 %v528
      %639 = vmatprep.subr.bf16.mxu0 0
      %640 = vmatpush1.bf16.msra.mxu0 %v527
      %641 = vmatprep.subr.bf16.mxu0 0
      %642 = vmatpush1.bf16.msra.mxu0 %v526
      %643 = vmatprep.subr.bf16.mxu0 0
      %644 = vmatpush1.bf16.msra.mxu0 %v525
      %645 = vmatprep.subr.bf16.mxu0 0
      %646 = vmatpush1.bf16.msra.mxu0 %v524
      %647 = vmatprep.subr.bf16.mxu0 0
      %648 = vmatpush1.bf16.msra.mxu0 %v523
      %649 = vmatprep.subr.bf16.mxu0 0
      %650 = vmatpush1.bf16.msra.mxu0 %v522
      %651 = vmatprep.subr.bf16.mxu0 0
      %652 = vmatpush1.bf16.msra.mxu0 %v521
      %653 = vmatprep.subr.bf16.mxu0 0
      %654 = vmatpush2.bf16.msra.mxu0 0
      %655 = vmatprep.subr.bf16.mxu0 0
      %656 = vmatpush2.bf16.msra.mxu0 0
      %657 = vmatprep.subr.bf16.mxu0 0
      %658 = vmatpush2.bf16.msra.mxu0 0
      %659 = vmatprep.subr.bf16.mxu0 0
      %660 = vmatpush2.bf16.msra.mxu0 0
      %661 = vmatprep.subr.bf16.mxu0 0
      %662 = vmatpush2.bf16.msra.mxu0 0
      %663 = vmatprep.subr.bf16.mxu0 0
      %664 = vmatpush2.bf16.msra.mxu0 %v531
      %665 = vmatprep.subr.bf16.mxu0 0
      %666 = vmatpush2.bf16.msra.mxu0 %v530
      %667 = vmatprep.subr.bf16.mxu0 0
      %668 = vmatpush2.bf16.msra.mxu0 %v529
      %669 = vmatprep.mubr.bf16.mxu0 %v561
      %670 = vmatmul.mubr.bf16.gmra.mxu0 %v371
      %v671 = vpop.f32.mrf.mxu0
      %v672 = vadd.f32 %v607, %v671
      %v673 = vpop.f32.mrf.mxu0
      %v674 = vpop.f32.mrf.mxu0
      %v675 = vadd.f32 %v610, %v674
      %v676 = vpop.f32.mrf.mxu0
      %677 = vmatprep.mubr.bf16.mxu0 %v564
      %678 = vmatmul.mubr.bf16.gmra.mxu0 %v375
      %v679 = vpop.f32.mrf.mxu0
      %v680 = vadd.f32 %v615, %v679
      %v681 = vpop.f32.mrf.mxu0
      %v682 = vpop.f32.mrf.mxu0
      %v683 = vadd.f32 %v618, %v682
      %v684 = vpop.f32.mrf.mxu0
      %685 = vmatprep.mubr.bf16.mxu0 %v567
      %686 = vmatmul.mubr.bf16.gmra.mxu0 %v379
      %v687 = vpop.f32.mrf.mxu0
      %v688 = vadd.f32 %v623, %v687
      %v689 = vpop.f32.mrf.mxu0
      %v690 = vpop.f32.mrf.mxu0
      %v691 = vadd.f32 %v626, %v690
      %v692 = vpop.f32.mrf.mxu0
      %693 = vmatprep.mubr.bf16.mxu0 %v570
      %694 = vmatmul.mubr.bf16.gmra.mxu0 %v383
      %v695 = vpop.f32.mrf.mxu0
      %v696 = vadd.f32 %v631, %v695
      %v697 = vpop.f32.mrf.mxu0
      %v698 = vpop.f32.mrf.mxu0
      %v699 = vadd.f32 %v634, %v698
      %v700 = vpop.f32.mrf.mxu0
      %701 = vdwg.mxu0
      %v702 = vmax.f32 %v672, 0.0
      %v703 = vmax.f32 %v675, 0.0
      %v704 = vmax.f32 %v680, 0.0
      %v705 = vmax.f32 %v683, 0.0
      %v706 = vmax.f32 %v688, 0.0
      %v707 = vmax.f32 %v691, 0.0
      %v708 = vmax.f32 %v696, 0.0
      %v709 = vmax.f32 %v699, 0.0
      %v710 = vpack.c.bf16 %v703, %v702
      %v711 = vpack.c.bf16 %v705, %v704
      %v712 = vpack.c.bf16 %v707, %v706
      %v713 = vpack.c.bf16 %v709, %v708
      %v718 = vunpack.c.l.b16 %v710
      %v719 = vunpack.c.h.b16 %v710
      %v720 = vunpack.c.l.b16 %v711
      %v721 = vunpack.c.h.b16 %v711
      %v722 = vunpack.c.l.b16 %v712
      %v723 = vunpack.c.h.b16 %v712
      %v724 = vunpack.c.l.b16 %v713
      %v725 = vunpack.c.h.b16 %v713
      %v726 = vpack.c.b16 %v718, %v718
      %v727 = vpack.c.b16 %v719, %v719
      %v728 = vpack.c.b16 %v720, %v720
      %v729 = vpack.c.b16 %v721, %v721
      %v730 = vpack.c.b16 %v722, %v722
      %v731 = vpack.c.b16 %v723, %v723
      %v732 = vpack.c.b16 %v724, %v724
      %v733 = vpack.c.b16 %v725, %v725
      %vm742 = vcmask 27648
      %743 = vst.msk [vmem:[%s201] sm:$0xf] %vm742, %v726
      %744 = vst.msk [vmem:[%s201 + $0x4] sm:$0xf] %vm742, %v727
      %745 = vst.msk [vmem:[%s201 + $0x8] sm:$0xf] %vm742, %v728
      %746 = vst.msk [vmem:[%s201 + $0xc] sm:$0xf] %vm742, %v729
      %747 = vst.msk [vmem:[%s201 + $0x10] sm:$0xf] %vm742, %v730
      %748 = vst.msk [vmem:[%s201 + $0x14] sm:$0xf] %vm742, %v731
      %749 = vst.msk [vmem:[%s201 + $0x18] sm:$0xf] %vm742, %v732
      %750 = vst.msk [vmem:[%s201 + $0x1c] sm:$0xf] %vm742, %v733
      %p751 = scmp.lt.s32.totalorder %s18, 1
      %s752 = scalar_select %p751, %s18, 1
      %p753 = scmp.lt.s32.totalorder %s19, 0
      %s754 = scalar_select %p753, %s19, 0
      %s755 = smul.addr %s752, 8
      %s756 = sadd.s32 %s754, %s755
      %s757 = smul.addr %s756, 4
      %s758 = scalar_lea.vmem %s3, %s757
      // Predicated region
      $region33: #{forward.17} parent=31 // pred_check
        %p759 = pneg %p116
      $region34: #{forward.17} parent=31 // pred_check_branch
        %761 = sbr.rel (%p759) target = $region36
      $region35: #{forward.17} parent=31 // pred_region
        _
      $region36: #{forward.17} parent=31 // pred_fallthru
        _
    $region32: #{forward.17} parent=5 // pred_fallthru
      _
    %p762 = scmp.le.s32.totalorder 2, %s9
    // Predicated region
    $region37: #{forward.17} parent=5 // pred_check
      %p763 = pneg %p762
    $region38: #{forward.17} parent=5 // pred_check_branch
      %765 = sbr.rel (%p763) target = $region40
    $region39: #{forward.17} parent=5 // pred_region
      %s766 = ssub.s32 %s9, 2
      // Predicated region
      $region41: #{forward.17} parent=39 // pred_check
        %p767 = pneg %p122
      $region42: #{forward.17} parent=39 // pred_check_branch
        %769 = sbr.rel (%p767) target = $region44
      $region43: #{forward.17} parent=39 // pred_region
        %p770 = scmp.lt.s32.totalorder %s20, 1
        %s771 = scalar_select %p770, %s20, 1
        %p772 = scmp.lt.s32.totalorder %s21, 0
        %s773 = scalar_select %p772, %s21, 0
        %s774 = smul.addr %s771, 8
        %s775 = sadd.s32 %s773, %s774
        %s776 = smul.addr %s775, 4
        %s777 = scalar_lea.vmem %s3, %s776
      $region44: #{forward.17} parent=39 // pred_fallthru
        _
    $region40: #{forward.17} parent=5 // pred_fallthru
      _
  $region6: #{forward.17} parent=0 // loop_footer
    %s13 = sadd.s32 1, %s9
  $region7: #{forward.17} parent=0 // loop_footer_branch
    %8 = sbr.rel target = $region3
  $region8: #{forward.17} parent=0 // loop_exit
    _

// kernel: forward.18
$region0: #{forward.18}
  #allocation0 [shape = 'u32[]', space=smem, size = 0x4, offset = 0x4, fixed_abs, tag = 'smem constant byte address 0x4 - core index']
  #allocation1 [shape = 'u32[144,128]{1,0:T(1,128)}', space=vmem, size = 0x12000, scoped, tag = 'internal scratch']
  %s0 = inlined_call_operand.vmem [shape: bf16[32,64], index: 0, kind: input, shape index: {}]
  %s1 = inlined_call_operand.vmem [shape: f32[32,1], index: 1, kind: input, shape index: {}]
  %s2 = inlined_call_operand.vmem [shape: bf16[2,64,4], index: 2, kind: input, shape index: {}]
  %s3 = inlined_call_operand.vmem [shape: bf16[2,32,4], index: 3, kind: output, shape index: {}]
  %s4 = sld [smem:[#allocation0]]
  $region45: #{forward.18} parent=0
    _
  %s6 = ssub.s32 1, %s4
  %s7 = scalar_select 0, %s6, %s4
  loop: start=0, step=1, limit=4
  $region2: #{forward.18} parent=0 // loop_pre_header
    _
  $region3: #{forward.18} parent=0 // loop_header
    %s9 = sphi 0, %s13
    %p10 = scmp.ge.s32.totalorder %s9, 4
    %s16 = sphi 0, %s28
    %s17 = sphi 0, %s24
    %s18 = sphi 0, %s16
    %s19 = sphi 0, %s17
    %s20 = sphi 0, %s18
    %s21 = sphi 0, %s19
    %s29 = sphi 0, %s29
    %s31 = sphi 0, %s29
    %s32 = sphi 0, %s31
    %s46 = sphi 0, %s32
    %s50 = sphi 0, %s50
    %s52 = sphi 0, %s50
    %s53 = sphi 0, %s52
    %s67 = sphi 0, %s53
    %s75 = sphi 0, %s77
    %s78 = sphi 0, %s75
    %s79 = sphi 0, %s78
    %s95 = sphi 0, %s79
    %s103 = sphi 0, %s105
    %s106 = sphi 0, %s103
    %s107 = sphi 0, %s106
    %s123 = sphi 0, %s107
  $region4: #{forward.18} parent=0 // loop_header_branch
    %12 = sbr.rel (%p10) target = $region8
  $region5: #{forward.18} parent=0 // loop_body
    %s14 = ssub.s32 %s9, 1
    %s15 = ssub.s32 %s9, 2
    %s22 = sadd.s32 1, %s17
    %p23 = scmp.ge.s32.totalorder %s22, 1
    %s24 = scalar_select %p23, 0, %s22
    %s25 = sadd.s32 1, %s16
    %s26 = scalar_select %p23, %s25, %s16
    %p27 = scmp.ge.s32.totalorder %s26, 2
    %s28 = scalar_select %p27, 0, %s26
    %s30 = sadd.s32 %s29, 1
    %p33 = scmp.eq.s32.totalorder %s9, 1
    %p34 = scmp.ne.s32.totalorder %s29, %s31
    %p35 = scmp.eq.s32.totalorder %s9, 0
    %p36 = por %p34, %p35
    %p37 = scmp.ne.s32.totalorder %s29, %s31
    %p38 = scmp.eq.s32.totalorder %s14, 1
    %p39 = por %p37, %p38
    %p40 = scmp.ne.s32.totalorder %s31, %s32
    %p41 = scmp.eq.s32.totalorder %s14, 0
    %p42 = por %p40, %p41
    %p43 = scmp.ne.s32.totalorder %s31, %s32
    %p44 = scmp.eq.s32.totalorder %s15, 1
    %p45 = por %p43, %p44
    %p47 = scmp.ne.s32.totalorder %s32, %s46
    %p48 = scmp.eq.s32.totalorder %s15, 0
    %p49 = por %p47, %p48
    %s51 = sadd.s32 %s50, 1
    %p54 = scmp.eq.s32.totalorder %s9, 1
    %p55 = scmp.ne.s32.totalorder %s50, %s52
    %p56 = scmp.eq.s32.totalorder %s9, 0
    %p57 = por %p55, %p56
    %p58 = scmp.ne.s32.totalorder %s50, %s52
    %p59 = scmp.eq.s32.totalorder %s14, 1
    %p60 = por %p58, %p59
    %p61 = scmp.ne.s32.totalorder %s52, %s53
    %p62 = scmp.eq.s32.totalorder %s14, 0
    %p63 = por %p61, %p62
    %p64 = scmp.ne.s32.totalorder %s52, %s53
    %p65 = scmp.eq.s32.totalorder %s15, 1
    %p66 = por %p64, %p65
    %p68 = scmp.ne.s32.totalorder %s53, %s67
    %p69 = scmp.eq.s32.totalorder %s15, 0
    %p70 = por %p68, %p69
    %s71 = ssub.s32 %s16, %s28
    %s72 = ssub.s32 %s17, %s24
    %s73 = sor.u32 %s71, %s72
    %p74 = scmp.eq.s32.totalorder %s73, 0
    %s76 = sadd.s32 %s75, 1
    %s77 = scalar_select %p74, %s75, %s76
    %p80 = pneg %p74
    %p81 = scmp.eq.s32.totalorder %s9, 1
    %p82 = por %p80, %p81
    %p83 = scmp.ne.s32.totalorder %s75, %s78
    %p84 = scmp.eq.s32.totalorder %s9, 0
    %p85 = por %p83, %p84
    %p86 = scmp.ne.s32.totalorder %s75, %s78
    %p87 = scmp.eq.s32.totalorder %s14, 1
    %p88 = por %p86, %p87
    %p89 = scmp.ne.s32.totalorder %s78, %s79
    %p90 = scmp.eq.s32.totalorder %s14, 0
    %p91 = por %p89, %p90
    %p92 = scmp.ne.s32.totalorder %s78, %s79
    %p93 = scmp.eq.s32.totalorder %s15, 1
    %p94 = por %p92, %p93
    %p96 = scmp.ne.s32.totalorder %s79, %s95
    %p97 = scmp.eq.s32.totalorder %s15, 0
    %p98 = por %p96, %p97
    %s99 = ssub.s32 %s16, %s28
    %s100 = ssub.s32 %s17, %s24
    %s101 = sor.u32 %s99, %s100
    %p102 = scmp.eq.s32.totalorder %s101, 0
    %s104 = sadd.s32 %s103, 1
    %s105 = scalar_select %p102, %s103, %s104
    %p108 = pneg %p102
    %p109 = scmp.eq.s32.totalorder %s9, 1
    %p110 = por %p108, %p109
    %p111 = scmp.ne.s32.totalorder %s103, %s106
    %p112 = scmp.eq.s32.totalorder %s9, 0
    %p113 = por %p111, %p112
    %p114 = scmp.ne.s32.totalorder %s103, %s106
    %p115 = scmp.eq.s32.totalorder %s14, 1
    %p116 = por %p114, %p115
    %p117 = scmp.ne.s32.totalorder %s106, %s107
    %p118 = scmp.eq.s32.totalorder %s14, 0
    %p119 = por %p117, %p118
    %p120 = scmp.ne.s32.totalorder %s106, %s107
    %p121 = scmp.eq.s32.totalorder %s15, 1
    %p122 = por %p120, %p121
    %p124 = scmp.ne.s32.totalorder %s107, %s123
    %p125 = scmp.eq.s32.totalorder %s15, 0
    %p126 = por %p124, %p125
    %p127 = scmp.le.s32.totalorder 1, %s9
    %p128 = scmp.lt.s32.totalorder %s9, 3
    %p129 = pnand %p127, %p128
    %p130 = pneg %p129
    // Predicated region
    $region9: #{forward.18} parent=5 // pred_check
      _
    $region10: #{forward.18} parent=5 // pred_check_branch
      %132 = sbr.rel (%p129) target = $region12
    $region11: #{forward.18} parent=5 // pred_region
      %s133 = ssub.s32 %s9, 1
      // Predicated region
      $region13: #{forward.18} parent=11 // pred_check
        %p134 = pneg %p42
      $region14: #{forward.18} parent=11 // pred_check_branch
        %136 = sbr.rel (%p134) target = $region16
      $region15: #{forward.18} parent=11 // pred_region
        _
      $region16: #{forward.18} parent=11 // pred_fallthru
        _
      // Predicated region
      $region17: #{forward.18} parent=11 // pred_check
        %p137 = pneg %p63
      $region18: #{forward.18} parent=11 // pred_check_branch
        %139 = sbr.rel (%p137) target = $region20
      $region19: #{forward.18} parent=11 // pred_region
        _
      $region20: #{forward.18} parent=11 // pred_fallthru
        _
    $region12: #{forward.18} parent=5 // pred_fallthru
      _
    %p140 = scmp.lt.s32.totalorder %s9, 2
    // Predicated region
    $region21: #{forward.18} parent=5 // pred_check
      %p141 = pneg %p140
    $region22: #{forward.18} parent=5 // pred_check_branch
      %143 = sbr.rel (%p141) target = $region24
    $region23: #{forward.18} parent=5 // pred_region
      // Predicated region
      $region25: #{forward.18} parent=23 // pred_check
        %p144 = pneg %p85
      $region26: #{forward.18} parent=23 // pred_check_branch
        %146 = sbr.rel (%p144) target = $region28
      $region27: #{forward.18} parent=23 // pred_region
        %p147 = scmp.lt.s32.totalorder %s16, 1
        %s148 = scalar_select %p147, %s16, 1
        %p149 = scmp.lt.s32.totalorder %s17, 0
        %s150 = scalar_select %p149, %s17, 0
        %s151 = smul.addr %s148, 8
        %s152 = sadd.s32 %s150, %s151
        %s153 = smul.addr %s152, 4
        %s154 = scalar_lea.vmem %s2, %s153
      $region28: #{forward.18} parent=23 // pred_fallthru
        _
    $region24: #{forward.18} parent=5 // pred_fallthru
      _
    %p155 = scmp.le.s32.totalorder 1, %s9
    %p156 = scmp.lt.s32.totalorder %s9, 3
    %p157 = pnand %p155, %p156
    %p158 = pneg %p157
    // Predicated region
    $region29: #{forward.18} parent=5 // pred_check
      _
    $region30: #{forward.18} parent=5 // pred_check_branch
      %160 = sbr.rel (%p157) target = $region32
    $region31: #{forward.18} parent=5 // pred_region
      %s161 = ssub.s32 %s9, 1
      %p162 = pneg %p42
      %p163 = pneg %p39
      %p164 = pneg %p63
      %p165 = pneg %p60
      %p166 = scmp.lt.s32.totalorder %s18, 1
      %s167 = scalar_select %p166, %s18, 1
      %p168 = scmp.lt.s32.totalorder %s19, 0
      %s169 = scalar_select %p168, %s19, 0
      %s170 = smul.addr %s167, 8
      %s171 = sadd.s32 %s169, %s170
      %s172 = smul.addr %s171, 4
      %s173 = scalar_lea.vmem %s2, %s172
      %p174 = pneg %p91
      %p175 = pneg %p88
      %p176 = pneg %p119
      %p177 = pneg %p116
      %p178 = scmp.lt.s32.totalorder %s18, 1
      %s179 = scalar_select %p178, %s18, 1
      %p180 = scmp.lt.s32.totalorder %s19, 0
      %s181 = scalar_select %p180, %s19, 0
      %s182 = smul.addr %s179, 4
      %s183 = sadd.s32 %s181, %s182
      %s184 = smul.addr %s183, 4
      %s185 = scalar_lea.vmem %s3, %s184
      %p186 = scmp.lt.s32.totalorder %s18, 1
      %s187 = scalar_select %p186, %s18, 1
      %p188 = scmp.lt.s32.totalorder %s19, 0
      %s189 = scalar_select %p188, %s19, 0
      %s190 = smul.addr %s187, 8
      %s191 = sadd.s32 %s189, %s190
      %s192 = smul.addr %s191, 4
      %s193 = scalar_lea.vmem %s2, %s192
      %p194 = scmp.lt.s32.totalorder %s18, 1
      %s195 = scalar_select %p194, %s18, 1
      %p196 = scmp.lt.s32.totalorder %s19, 0
      %s197 = scalar_select %p196, %s19, 0
      %s198 = smul.addr %s195, 4
      %s199 = sadd.s32 %s197, %s198
      %s200 = smul.addr %s199, 4
      %s201 = scalar_lea.vmem %s3, %s200
      %v203 = vld [vmem:[%s0] sm:$0xf]
      %v204 = vld [vmem:[%s0 + $0x4] sm:$0xf]
      %v205 = vld [vmem:[%s0 + $0x8] sm:$0xf]
      %v206 = vld [vmem:[%s0 + $0xc] sm:$0xf]
      %v207 = vld [vmem:[%s193] sm:$0xf]
      %v208 = vld [vmem:[%s193 + $0x4] sm:$0xf]
      %v209 = vld [vmem:[%s193 + $0x8] sm:$0xf]
      %v210 = vld [vmem:[%s193 + $0xc] sm:$0xf]
      %v211 = vld [vmem:[%s193 + $0x10] sm:$0xf]
      %v212 = vld [vmem:[%s193 + $0x14] sm:$0xf]
      %v213 = vld [vmem:[%s193 + $0x18] sm:$0xf]
      %v214 = vld [vmem:[%s193 + $0x1c] sm:$0xf]
      %v215 = vld [vmem:[%s1] sm:$0xff]
      %v216 = vld [vmem:[%s1 + $0x8] sm:$0xff]
      %v217 = vld [vmem:[%s1 + $0x10] sm:$0xff]
      %v218 = vld [vmem:[%s1 + $0x18] sm:$0xff]
      %220 = vset.pattern.permute.xlu0 0
      %221 = vperm.xlu0 %220, %v215
      %v222 = vpop.permute.xlu0 %221
      %225 = vset.pattern.permute.xlu0 0
      %226 = vperm.xlu0 %225, %v216
      %v227 = vpop.permute.xlu0 %226
      %230 = vset.pattern.permute.xlu0 0
      %231 = vperm.xlu0 %230, %v217
      %v232 = vpop.permute.xlu0 %231
      %235 = vset.pattern.permute.xlu0 0
      %236 = vperm.xlu0 %235, %v218
      %v237 = vpop.permute.xlu0 %236
      %v243 = vunpack.c.l.b16 %v203
      %v244 = vunpack.c.l.b16 %v204
      %v245 = vunpack.c.l.b16 %v205
      %v246 = vunpack.c.l.b16 %v206
      %v247 = vpack.c.b16 %v244, %v243
      %v248 = vpack.c.b16 %v246, %v245
      %v257 = vunpack.c.l.b16 %v207
      %v258 = vunpack.c.l.b16 %v208
      %v259 = vunpack.c.l.b16 %v209
      %v260 = vunpack.c.l.b16 %v210
      %v261 = vunpack.c.l.b16 %v211
      %v262 = vunpack.c.l.b16 %v212
      %v263 = vunpack.c.l.b16 %v213
      %v264 = vunpack.c.l.b16 %v214
      %v265 = vpack.c.b16 %v258, %v257
      %v266 = vpack.c.b16 %v260, %v259
      %v267 = vpack.c.b16 %v262, %v261
      %v268 = vpack.c.b16 %v264, %v263
      %vm273 = vcmask 523264
      %v275 = vsel %vm273, %v247, 0
      %v278 = vsel %vm273, %v248, 0
      %280 = vmatprep.subr.bf16.mxu0 0
      %281 = vmatpush1.bf16.msra.mxu0 0
      %282 = vmatprep.subr.bf16.mxu0 0
      %283 = vmatpush1.bf16.msra.mxu0 0
      %284 = vmatprep.subr.bf16.mxu0 0
      %285 = vmatpush1.bf16.msra.mxu0 0
      %286 = vmatprep.subr.bf16.mxu0 0
      %287 = vmatpush1.bf16.msra.mxu0 0
      %288 = vmatprep.subr.bf16.mxu0 0
      %289 = vmatpush1.bf16.msra.mxu0 %v268
      %290 = vmatprep.subr.bf16.mxu0 0
      %291 = vmatpush1.bf16.msra.mxu0 %v267
      %292 = vmatprep.subr.bf16.mxu0 0
      %293 = vmatpush1.bf16.msra.mxu0 %v266
      %294 = vmatprep.subr.bf16.mxu0 0
      %295 = vmatpush1.bf16.msra.mxu0 %v265
      %296 = vmatprep.subr.bf16.mxu0 0
      %297 = vmatpush2.bf16.msra.mxu0 0
      %298 = vmatprep.subr.bf16.mxu0 0
      %299 = vmatpush2.bf16.msra.mxu0 0
      %300 = vmatprep.subr.bf16.mxu0 0
      %301 = vmatpush2.bf16.msra.mxu0 0
      %302 = vmatprep.subr.bf16.mxu0 0
      %303 = vmatpush2.bf16.msra.mxu0 0
      %304 = vmatprep.subr.bf16.mxu0 0
      %305 = vmatpush2.bf16.msra.mxu0 0
      %306 = vmatprep.subr.bf16.mxu0 0
      %307 = vmatpush2.bf16.msra.mxu0 0
      %308 = vmatprep.subr.bf16.mxu0 0
      %309 = vmatpush2.bf16.msra.mxu0 0
      %310 = vmatprep.subr.bf16.mxu0 0
      %311 = vmatpush2.bf16.msra.mxu0 0
      %312 = vmatprep.mubr.bf16.mxu0 0
      %313 = vmatmul.mubr.bf16.gmra.mxu0 %v275
      %v314 = vpop.f32.mrf.mxu0
      %v315 = vadd.f32 %v222, %v314
      %v316 = vpop.f32.mrf.mxu0
      %v317 = vpop.f32.mrf.mxu0
      %v318 = vadd.f32 %v227, %v317
      %v319 = vpop.f32.mrf.mxu0
      %320 = vmatprep.mubr.bf16.mxu0 0
      %321 = vmatmul.mubr.bf16.gmra.mxu0 %v278
      %v322 = vpop.f32.mrf.mxu0
      %v323 = vadd.f32 %v232, %v322
      %v324 = vpop.f32.mrf.mxu0
      %v325 = vpop.f32.mrf.mxu0
      %v326 = vadd.f32 %v237, %v325
      %v327 = vpop.f32.mrf.mxu0
      %328 = vdwg.mxu0
      %v329 = vpack.c.bf16 %v318, %v315
      %v330 = vpack.c.bf16 %v326, %v323
      %v333 = vunpack.c.l.b16 %v329
      %v334 = vunpack.c.h.b16 %v329
      %v335 = vunpack.c.l.b16 %v330
      %v336 = vunpack.c.h.b16 %v330
      %v337 = vpack.c.b16 %v333, %v333
      %v338 = vpack.c.b16 %v334, %v334
      %v339 = vpack.c.b16 %v335, %v335
      %v340 = vpack.c.b16 %v336, %v336
      %vm345 = vcmask 27648
      %346 = vst.msk [vmem:[%s201] sm:$0xf] %vm345, %v337
      %347 = vst.msk [vmem:[%s201 + $0x4] sm:$0xf] %vm345, %v338
      %348 = vst.msk [vmem:[%s201 + $0x8] sm:$0xf] %vm345, %v339
      %349 = vst.msk [vmem:[%s201 + $0xc] sm:$0xf] %vm345, %v340
      %p350 = scmp.lt.s32.totalorder %s18, 1
      %s351 = scalar_select %p350, %s18, 1
      %p352 = scmp.lt.s32.totalorder %s19, 0
      %s353 = scalar_select %p352, %s19, 0
      %s354 = smul.addr %s351, 4
      %s355 = sadd.s32 %s353, %s354
      %s356 = smul.addr %s355, 4
      %s357 = scalar_lea.vmem %s3, %s356
      // Predicated region
      $region33: #{forward.18} parent=31 // pred_check
        %p358 = pneg %p116
      $region34: #{forward.18} parent=31 // pred_check_branch
        %360 = sbr.rel (%p358) target = $region36
      $region35: #{forward.18} parent=31 // pred_region
        _
      $region36: #{forward.18} parent=31 // pred_fallthru
        _
    $region32: #{forward.18} parent=5 // pred_fallthru
      _
    %p361 = scmp.le.s32.totalorder 2, %s9
    // Predicated region
    $region37: #{forward.18} parent=5 // pred_check
      %p362 = pneg %p361
    $region38: #{forward.18} parent=5 // pred_check_branch
      %364 = sbr.rel (%p362) target = $region40
    $region39: #{forward.18} parent=5 // pred_region
      %s365 = ssub.s32 %s9, 2
      // Predicated region
      $region41: #{forward.18} parent=39 // pred_check
        %p366 = pneg %p122
      $region42: #{forward.18} parent=39 // pred_check_branch
        %368 = sbr.rel (%p366) target = $region44
      $region43: #{forward.18} parent=39 // pred_region
        %p369 = scmp.lt.s32.totalorder %s20, 1
        %s370 = scalar_select %p369, %s20, 1
        %p371 = scmp.lt.s32.totalorder %s21, 0
        %s372 = scalar_select %p371, %s21, 0
        %s373 = smul.addr %s370, 4
        %s374 = sadd.s32 %s372, %s373
        %s375 = smul.addr %s374, 4
        %s376 = scalar_lea.vmem %s3, %s375
      $region44: #{forward.18} parent=39 // pred_fallthru
        _
    $region40: #{forward.18} parent=5 // pred_fallthru
      _
  $region6: #{forward.18} parent=0 // loop_footer
    %s13 = sadd.s32 1, %s9
  $region7: #{forward.18} parent=0 // loop_footer_branch
    %8 = sbr.rel target = $region3
  $region8: #{forward.18} parent=0 // loop_exit
    _

// kernel: forward.19
$region0: #{forward.19}
  #allocation0 [shape = 'u32[]', space=smem, size = 0x4, offset = 0x4, fixed_abs, tag = 'smem constant byte address 0x4 - core index']
  #allocation1 [shape = 'u32[144,128]{1,0:T(1,128)}', space=vmem, size = 0x12000, scoped, tag = 'internal scratch']
  %s0 = inlined_call_operand.vmem [shape: bf16[32,576], index: 0, kind: input, shape index: {}]
  %s1 = inlined_call_operand.vmem [shape: f32[32,1], index: 1, kind: input, shape index: {}]
  %s2 = inlined_call_operand.vmem [shape: bf16[2,576,4], index: 2, kind: input, shape index: {}]
  %s3 = inlined_call_operand.vmem [shape: bf16[2,32,4], index: 3, kind: output, shape index: {}]
  %s4 = sld [smem:[#allocation0]]
  $region45: #{forward.19} parent=0
    _
  %s6 = ssub.s32 1, %s4
  %s7 = scalar_select 0, %s6, %s4
  loop: start=0, step=1, limit=4
  $region2: #{forward.19} parent=0 // loop_pre_header
    _
  $region3: #{forward.19} parent=0 // loop_header
    %s9 = sphi 0, %s13
    %p10 = scmp.ge.s32.totalorder %s9, 4
    %s16 = sphi 0, %s28
    %s17 = sphi 0, %s24
    %s18 = sphi 0, %s16
    %s19 = sphi 0, %s17
    %s20 = sphi 0, %s18
    %s21 = sphi 0, %s19
    %s29 = sphi 0, %s29
    %s31 = sphi 0, %s29
    %s32 = sphi 0, %s31
    %s46 = sphi 0, %s32
    %s50 = sphi 0, %s50
    %s52 = sphi 0, %s50
    %s53 = sphi 0, %s52
    %s67 = sphi 0, %s53
    %s75 = sphi 0, %s77
    %s78 = sphi 0, %s75
    %s79 = sphi 0, %s78
    %s95 = sphi 0, %s79
    %s103 = sphi 0, %s105
    %s106 = sphi 0, %s103
    %s107 = sphi 0, %s106
    %s123 = sphi 0, %s107
  $region4: #{forward.19} parent=0 // loop_header_branch
    %12 = sbr.rel (%p10) target = $region8
  $region5: #{forward.19} parent=0 // loop_body
    %s14 = ssub.s32 %s9, 1
    %s15 = ssub.s32 %s9, 2
    %s22 = sadd.s32 1, %s17
    %p23 = scmp.ge.s32.totalorder %s22, 1
    %s24 = scalar_select %p23, 0, %s22
    %s25 = sadd.s32 1, %s16
    %s26 = scalar_select %p23, %s25, %s16
    %p27 = scmp.ge.s32.totalorder %s26, 2
    %s28 = scalar_select %p27, 0, %s26
    %s30 = sadd.s32 %s29, 1
    %p33 = scmp.eq.s32.totalorder %s9, 1
    %p34 = scmp.ne.s32.totalorder %s29, %s31
    %p35 = scmp.eq.s32.totalorder %s9, 0
    %p36 = por %p34, %p35
    %p37 = scmp.ne.s32.totalorder %s29, %s31
    %p38 = scmp.eq.s32.totalorder %s14, 1
    %p39 = por %p37, %p38
    %p40 = scmp.ne.s32.totalorder %s31, %s32
    %p41 = scmp.eq.s32.totalorder %s14, 0
    %p42 = por %p40, %p41
    %p43 = scmp.ne.s32.totalorder %s31, %s32
    %p44 = scmp.eq.s32.totalorder %s15, 1
    %p45 = por %p43, %p44
    %p47 = scmp.ne.s32.totalorder %s32, %s46
    %p48 = scmp.eq.s32.totalorder %s15, 0
    %p49 = por %p47, %p48
    %s51 = sadd.s32 %s50, 1
    %p54 = scmp.eq.s32.totalorder %s9, 1
    %p55 = scmp.ne.s32.totalorder %s50, %s52
    %p56 = scmp.eq.s32.totalorder %s9, 0
    %p57 = por %p55, %p56
    %p58 = scmp.ne.s32.totalorder %s50, %s52
    %p59 = scmp.eq.s32.totalorder %s14, 1
    %p60 = por %p58, %p59
    %p61 = scmp.ne.s32.totalorder %s52, %s53
    %p62 = scmp.eq.s32.totalorder %s14, 0
    %p63 = por %p61, %p62
    %p64 = scmp.ne.s32.totalorder %s52, %s53
    %p65 = scmp.eq.s32.totalorder %s15, 1
    %p66 = por %p64, %p65
    %p68 = scmp.ne.s32.totalorder %s53, %s67
    %p69 = scmp.eq.s32.totalorder %s15, 0
    %p70 = por %p68, %p69
    %s71 = ssub.s32 %s16, %s28
    %s72 = ssub.s32 %s17, %s24
    %s73 = sor.u32 %s71, %s72
    %p74 = scmp.eq.s32.totalorder %s73, 0
    %s76 = sadd.s32 %s75, 1
    %s77 = scalar_select %p74, %s75, %s76
    %p80 = pneg %p74
    %p81 = scmp.eq.s32.totalorder %s9, 1
    %p82 = por %p80, %p81
    %p83 = scmp.ne.s32.totalorder %s75, %s78
    %p84 = scmp.eq.s32.totalorder %s9, 0
    %p85 = por %p83, %p84
    %p86 = scmp.ne.s32.totalorder %s75, %s78
    %p87 = scmp.eq.s32.totalorder %s14, 1
    %p88 = por %p86, %p87
    %p89 = scmp.ne.s32.totalorder %s78, %s79
    %p90 = scmp.eq.s32.totalorder %s14, 0
    %p91 = por %p89, %p90
    %p92 = scmp.ne.s32.totalorder %s78, %s79
    %p93 = scmp.eq.s32.totalorder %s15, 1
    %p94 = por %p92, %p93
    %p96 = scmp.ne.s32.totalorder %s79, %s95
    %p97 = scmp.eq.s32.totalorder %s15, 0
    %p98 = por %p96, %p97
    %s99 = ssub.s32 %s16, %s28
    %s100 = ssub.s32 %s17, %s24
    %s101 = sor.u32 %s99, %s100
    %p102 = scmp.eq.s32.totalorder %s101, 0
    %s104 = sadd.s32 %s103, 1
    %s105 = scalar_select %p102, %s103, %s104
    %p108 = pneg %p102
    %p109 = scmp.eq.s32.totalorder %s9, 1
    %p110 = por %p108, %p109
    %p111 = scmp.ne.s32.totalorder %s103, %s106
    %p112 = scmp.eq.s32.totalorder %s9, 0
    %p113 = por %p111, %p112
    %p114 = scmp.ne.s32.totalorder %s103, %s106
    %p115 = scmp.eq.s32.totalorder %s14, 1
    %p116 = por %p114, %p115
    %p117 = scmp.ne.s32.totalorder %s106, %s107
    %p118 = scmp.eq.s32.totalorder %s14, 0
    %p119 = por %p117, %p118
    %p120 = scmp.ne.s32.totalorder %s106, %s107
    %p121 = scmp.eq.s32.totalorder %s15, 1
    %p122 = por %p120, %p121
    %p124 = scmp.ne.s32.totalorder %s107, %s123
    %p125 = scmp.eq.s32.totalorder %s15, 0
    %p126 = por %p124, %p125
    %p127 = scmp.le.s32.totalorder 1, %s9
    %p128 = scmp.lt.s32.totalorder %s9, 3
    %p129 = pnand %p127, %p128
    %p130 = pneg %p129
    // Predicated region
    $region9: #{forward.19} parent=5 // pred_check
      _
    $region10: #{forward.19} parent=5 // pred_check_branch
      %132 = sbr.rel (%p129) target = $region12
    $region11: #{forward.19} parent=5 // pred_region
      %s133 = ssub.s32 %s9, 1
      // Predicated region
      $region13: #{forward.19} parent=11 // pred_check
        %p134 = pneg %p42
      $region14: #{forward.19} parent=11 // pred_check_branch
        %136 = sbr.rel (%p134) target = $region16
      $region15: #{forward.19} parent=11 // pred_region
        _
      $region16: #{forward.19} parent=11 // pred_fallthru
        _
      // Predicated region
      $region17: #{forward.19} parent=11 // pred_check
        %p137 = pneg %p63
      $region18: #{forward.19} parent=11 // pred_check_branch
        %139 = sbr.rel (%p137) target = $region20
      $region19: #{forward.19} parent=11 // pred_region
        _
      $region20: #{forward.19} parent=11 // pred_fallthru
        _
    $region12: #{forward.19} parent=5 // pred_fallthru
      _
    %p140 = scmp.lt.s32.totalorder %s9, 2
    // Predicated region
    $region21: #{forward.19} parent=5 // pred_check
      %p141 = pneg %p140
    $region22: #{forward.19} parent=5 // pred_check_branch
      %143 = sbr.rel (%p141) target = $region24
    $region23: #{forward.19} parent=5 // pred_region
      // Predicated region
      $region25: #{forward.19} parent=23 // pred_check
        %p144 = pneg %p85
      $region26: #{forward.19} parent=23 // pred_check_branch
        %146 = sbr.rel (%p144) target = $region28
      $region27: #{forward.19} parent=23 // pred_region
        %p147 = scmp.lt.s32.totalorder %s16, 1
        %s148 = scalar_select %p147, %s16, 1
        %p149 = scmp.lt.s32.totalorder %s17, 0
        %s150 = scalar_select %p149, %s17, 0
        %s151 = smul.addr %s148, 72
        %s152 = sadd.s32 %s150, %s151
        %s153 = smul.addr %s152, 4
        %s154 = scalar_lea.vmem %s2, %s153
      $region28: #{forward.19} parent=23 // pred_fallthru
        _
    $region24: #{forward.19} parent=5 // pred_fallthru
      _
    %p155 = scmp.le.s32.totalorder 1, %s9
    %p156 = scmp.lt.s32.totalorder %s9, 3
    %p157 = pnand %p155, %p156
    %p158 = pneg %p157
    // Predicated region
    $region29: #{forward.19} parent=5 // pred_check
      _
    $region30: #{forward.19} parent=5 // pred_check_branch
      %160 = sbr.rel (%p157) target = $region32
    $region31: #{forward.19} parent=5 // pred_region
      %s161 = ssub.s32 %s9, 1
      %p162 = pneg %p42
      %p163 = pneg %p39
      %p164 = pneg %p63
      %p165 = pneg %p60
      %p166 = scmp.lt.s32.totalorder %s18, 1
      %s167 = scalar_select %p166, %s18, 1
      %p168 = scmp.lt.s32.totalorder %s19, 0
      %s169 = scalar_select %p168, %s19, 0
      %s170 = smul.addr %s167, 72
      %s171 = sadd.s32 %s169, %s170
      %s172 = smul.addr %s171, 4
      %s173 = scalar_lea.vmem %s2, %s172
      %p174 = pneg %p91
      %p175 = pneg %p88
      %p176 = pneg %p119
      %p177 = pneg %p116
      %p178 = scmp.lt.s32.totalorder %s18, 1
      %s179 = scalar_select %p178, %s18, 1
      %p180 = scmp.lt.s32.totalorder %s19, 0
      %s181 = scalar_select %p180, %s19, 0
      %s182 = smul.addr %s179, 4
      %s183 = sadd.s32 %s181, %s182
      %s184 = smul.addr %s183, 4
      %s185 = scalar_lea.vmem %s3, %s184
      %p186 = scmp.lt.s32.totalorder %s18, 1
      %s187 = scalar_select %p186, %s18, 1
      %p188 = scmp.lt.s32.totalorder %s19, 0
      %s189 = scalar_select %p188, %s19, 0
      %s190 = smul.addr %s187, 72
      %s191 = sadd.s32 %s189, %s190
      %s192 = smul.addr %s191, 4
      %s193 = scalar_lea.vmem %s2, %s192
      %p194 = scmp.lt.s32.totalorder %s18, 1
      %s195 = scalar_select %p194, %s18, 1
      %p196 = scmp.lt.s32.totalorder %s19, 0
      %s197 = scalar_select %p196, %s19, 0
      %s198 = smul.addr %s195, 4
      %s199 = sadd.s32 %s197, %s198
      %s200 = smul.addr %s199, 4
      %s201 = scalar_lea.vmem %s3, %s200
      %v203 = vld [vmem:[%s0] sm:$0xff]
      %v204 = vld [vmem:[%s0 + $0x8] sm:$0xff]
      %v205 = vld [vmem:[%s0 + $0x10] sm:$0xf]
      %v206 = vld [vmem:[%s0 + $0x14] sm:$0xff]
      %v207 = vld [vmem:[%s0 + $0x1c] sm:$0xff]
      %v208 = vld [vmem:[%s0 + $0x24] sm:$0xf]
      %v209 = vld [vmem:[%s0 + $0x28] sm:$0xff]
      %v210 = vld [vmem:[%s0 + $0x30] sm:$0xff]
      %v211 = vld [vmem:[%s0 + $0x38] sm:$0xf]
      %v212 = vld [vmem:[%s0 + $0x3c] sm:$0xff]
      %v213 = vld [vmem:[%s0 + $0x44] sm:$0xff]
      %v214 = vld [vmem:[%s0 + $0x4c] sm:$0xf]
      %v215 = vld [vmem:[%s193] sm:$0xf]
      %v216 = vld [vmem:[%s193 + $0x4] sm:$0xf]
      %v217 = vld [vmem:[%s193 + $0x8] sm:$0xf]
      %v218 = vld [vmem:[%s193 + $0xc] sm:$0xf]
      %v219 = vld [vmem:[%s193 + $0x10] sm:$0xf]
      %v220 = vld [vmem:[%s193 + $0x14] sm:$0xf]
      %v221 = vld [vmem:[%s193 + $0x18] sm:$0xf]
      %v222 = vld [vmem:[%s193 + $0x1c] sm:$0xf]
      %v223 = vld [vmem:[%s193 + $0x20] sm:$0xf]
      %v224 = vld [vmem:[%s193 + $0x24] sm:$0xf]
      %v225 = vld [vmem:[%s193 + $0x28] sm:$0xf]
      %v226 = vld [vmem:[%s193 + $0x2c] sm:$0xf]
      %v227 = vld [vmem:[%s193 + $0x30] sm:$0xf]
      %v228 = vld [vmem:[%s193 + $0x34] sm:$0xf]
      %v229 = vld [vmem:[%s193 + $0x38] sm:$0xf]
      %v230 = vld [vmem:[%s193 + $0x3c] sm:$0xf]
      %v231 = vld [vmem:[%s193 + $0x40] sm:$0xf]
      %v232 = vld [vmem:[%s193 + $0x44] sm:$0xf]
      %v233 = vld [vmem:[%s193 + $0x48] sm:$0xf]
      %v234 = vld [vmem:[%s193 + $0x4c] sm:$0xf]
      %v235 = vld [vmem:[%s193 + $0x50] sm:$0xf]
      %v236 = vld [vmem:[%s193 + $0x54] sm:$0xf]
      %v237 = vld [vmem:[%s193 + $0x58] sm:$0xf]
      %v238 = vld [vmem:[%s193 + $0x5c] sm:$0xf]
      %v239 = vld [vmem:[%s193 + $0x60] sm:$0xf]
      %v240 = vld [vmem:[%s193 + $0x64] sm:$0xf]
      %v241 = vld [vmem:[%s193 + $0x68] sm:$0xf]
      %v242 = vld [vmem:[%s193 + $0x6c] sm:$0xf]
      %v243 = vld [vmem:[%s193 + $0x70] sm:$0xf]
      %v244 = vld [vmem:[%s193 + $0x74] sm:$0xf]
      %v245 = vld [vmem:[%s193 + $0x78] sm:$0xf]
      %v246 = vld [vmem:[%s193 + $0x7c] sm:$0xf]
      %v247 = vld [vmem:[%s193 + $0x80] sm:$0xf]
      %v248 = vld [vmem:[%s193 + $0x84] sm:$0xf]
      %v249 = vld [vmem:[%s193 + $0x88] sm:$0xf]
      %v250 = vld [vmem:[%s193 + $0x8c] sm:$0xf]
      %v251 = vld [vmem:[%s193 + $0x90] sm:$0xf]
      %v252 = vld [vmem:[%s193 + $0x94] sm:$0xf]
      %v253 = vld [vmem:[%s193 + $0x98] sm:$0xf]
      %v254 = vld [vmem:[%s193 + $0x9c] sm:$0xf]
      %v255 = vld [vmem:[%s193 + $0xa0] sm:$0xf]
      %v256 = vld [vmem:[%s193 + $0xa4] sm:$0xf]
      %v257 = vld [vmem:[%s193 + $0xa8] sm:$0xf]
      %v258 = vld [vmem:[%s193 + $0xac] sm:$0xf]
      %v259 = vld [vmem:[%s193 + $0xb0] sm:$0xf]
      %v260 = vld [vmem:[%s193 + $0xb4] sm:$0xf]
      %v261 = vld [vmem:[%s193 + $0xb8] sm:$0xf]
      %v262 = vld [vmem:[%s193 + $0xbc] sm:$0xf]
      %v263 = vld [vmem:[%s193 + $0xc0] sm:$0xf]
      %v264 = vld [vmem:[%s193 + $0xc4] sm:$0xf]
      %v265 = vld [vmem:[%s193 + $0xc8] sm:$0xf]
      %v266 = vld [vmem:[%s193 + $0xcc] sm:$0xf]
      %v267 = vld [vmem:[%s193 + $0xd0] sm:$0xf]
      %v268 = vld [vmem:[%s193 + $0xd4] sm:$0xf]
      %v269 = vld [vmem:[%s193 + $0xd8] sm:$0xf]
      %v270 = vld [vmem:[%s193 + $0xdc] sm:$0xf]
      %v271 = vld [vmem:[%s193 + $0xe0] sm:$0xf]
      %v272 = vld [vmem:[%s193 + $0xe4] sm:$0xf]
      %v273 = vld [vmem:[%s193 + $0xe8] sm:$0xf]
      %v274 = vld [vmem:[%s193 + $0xec] sm:$0xf]
      %v275 = vld [vmem:[%s193 + $0xf0] sm:$0xf]
      %v276 = vld [vmem:[%s193 + $0xf4] sm:$0xf]
      %v277 = vld [vmem:[%s193 + $0xf8] sm:$0xf]
      %v278 = vld [vmem:[%s193 + $0xfc] sm:$0xf]
      %v279 = vld [vmem:[%s193 + $0x100] sm:$0xf]
      %v280 = vld [vmem:[%s193 + $0x104] sm:$0xf]
      %v281 = vld [vmem:[%s193 + $0x108] sm:$0xf]
      %v282 = vld [vmem:[%s193 + $0x10c] sm:$0xf]
      %v283 = vld [vmem:[%s193 + $0x110] sm:$0xf]
      %v284 = vld [vmem:[%s193 + $0x114] sm:$0xf]
      %v285 = vld [vmem:[%s193 + $0x118] sm:$0xf]
      %v286 = vld [vmem:[%s193 + $0x11c] sm:$0xf]
      %v287 = vld [vmem:[%s1] sm:$0xff]
      %v288 = vld [vmem:[%s1 + $0x8] sm:$0xff]
      %v289 = vld [vmem:[%s1 + $0x10] sm:$0xff]
      %v290 = vld [vmem:[%s1 + $0x18] sm:$0xff]
      %292 = vset.pattern.permute.xlu0 0
      %293 = vperm.xlu0 %292, %v287
      %v294 = vpop.permute.xlu0 %293
      %297 = vset.pattern.permute.xlu0 0
      %298 = vperm.xlu0 %297, %v288
      %v299 = vpop.permute.xlu0 %298
      %302 = vset.pattern.permute.xlu0 0
      %303 = vperm.xlu0 %302, %v289
      %v304 = vpop.permute.xlu0 %303
      %307 = vset.pattern.permute.xlu0 0
      %308 = vperm.xlu0 %307, %v290
      %v309 = vpop.permute.xlu0 %308
      %v323 = vunpack.c.l.b16 %v203
      %v324 = vunpack.c.h.b16 %v203
      %v325 = vunpack.c.l.b16 %v204
      %v326 = vunpack.c.h.b16 %v204
      %v327 = vunpack.c.l.b16 %v205
      %v328 = vunpack.c.l.b16 %v206
      %v329 = vunpack.c.h.b16 %v206
      %v330 = vunpack.c.l.b16 %v207
      %v331 = vunpack.c.h.b16 %v207
      %v332 = vunpack.c.l.b16 %v208
      %v333 = vunpack.c.l.b16 %v209
      %v334 = vunpack.c.h.b16 %v209
      %v335 = vunpack.c.l.b16 %v210
      %v336 = vunpack.c.h.b16 %v210
      %v337 = vunpack.c.l.b16 %v211
      %v338 = vunpack.c.l.b16 %v212
      %v339 = vunpack.c.h.b16 %v212
      %v340 = vunpack.c.l.b16 %v213
      %v341 = vunpack.c.h.b16 %v213
      %v342 = vunpack.c.l.b16 %v214
      %v343 = vpack.c.b16 %v328, %v323
      %v344 = vpack.c.b16 %v329, %v324
      %v345 = vpack.c.b16 %v330, %v325
      %v346 = vpack.c.b16 %v331, %v326
      %v347 = vpack.c.b16 %v332, %v327
      %v348 = vpack.c.b16 %v338, %v333
      %v349 = vpack.c.b16 %v339, %v334
      %v350 = vpack.c.b16 %v340, %v335
      %v351 = vpack.c.b16 %v341, %v336
      %v352 = vpack.c.b16 %v342, %v337
      %v433 = vunpack.c.l.b16 %v215
      %v434 = vunpack.c.l.b16 %v216
      %v435 = vunpack.c.l.b16 %v217
      %v436 = vunpack.c.l.b16 %v218
      %v437 = vunpack.c.l.b16 %v219
      %v438 = vunpack.c.l.b16 %v220
      %v439 = vunpack.c.l.b16 %v221
      %v440 = vunpack.c.l.b16 %v222
      %v441 = vunpack.c.l.b16 %v223
      %v442 = vunpack.c.l.b16 %v224
      %v443 = vunpack.c.l.b16 %v225
      %v444 = vunpack.c.l.b16 %v226
      %v445 = vunpack.c.l.b16 %v227
      %v446 = vunpack.c.l.b16 %v228
      %v447 = vunpack.c.l.b16 %v229
      %v448 = vunpack.c.l.b16 %v230
      %v449 = vunpack.c.l.b16 %v231
      %v450 = vunpack.c.l.b16 %v232
      %v451 = vunpack.c.l.b16 %v233
      %v452 = vunpack.c.l.b16 %v234
      %v453 = vunpack.c.l.b16 %v235
      %v454 = vunpack.c.l.b16 %v236
      %v455 = vunpack.c.l.b16 %v237
      %v456 = vunpack.c.l.b16 %v238
      %v457 = vunpack.c.l.b16 %v239
      %v458 = vunpack.c.l.b16 %v240
      %v459 = vunpack.c.l.b16 %v241
      %v460 = vunpack.c.l.b16 %v242
      %v461 = vunpack.c.l.b16 %v243
      %v462 = vunpack.c.l.b16 %v244
      %v463 = vunpack.c.l.b16 %v245
      %v464 = vunpack.c.l.b16 %v246
      %v465 = vunpack.c.l.b16 %v247
      %v466 = vunpack.c.l.b16 %v248
      %v467 = vunpack.c.l.b16 %v249
      %v468 = vunpack.c.l.b16 %v250
      %v469 = vunpack.c.l.b16 %v251
      %v470 = vunpack.c.l.b16 %v252
      %v471 = vunpack.c.l.b16 %v253
      %v472 = vunpack.c.l.b16 %v254
      %v473 = vunpack.c.l.b16 %v255
      %v474 = vunpack.c.l.b16 %v256
      %v475 = vunpack.c.l.b16 %v257
      %v476 = vunpack.c.l.b16 %v258
      %v477 = vunpack.c.l.b16 %v259
      %v478 = vunpack.c.l.b16 %v260
      %v479 = vunpack.c.l.b16 %v261
      %v480 = vunpack.c.l.b16 %v262
      %v481 = vunpack.c.l.b16 %v263
      %v482 = vunpack.c.l.b16 %v264
      %v483 = vunpack.c.l.b16 %v265
      %v484 = vunpack.c.l.b16 %v266
      %v485 = vunpack.c.l.b16 %v267
      %v486 = vunpack.c.l.b16 %v268
      %v487 = vunpack.c.l.b16 %v269
      %v488 = vunpack.c.l.b16 %v270
      %v489 = vunpack.c.l.b16 %v271
      %v490 = vunpack.c.l.b16 %v272
      %v491 = vunpack.c.l.b16 %v273
      %v492 = vunpack.c.l.b16 %v274
      %v493 = vunpack.c.l.b16 %v275
      %v494 = vunpack.c.l.b16 %v276
      %v495 = vunpack.c.l.b16 %v277
      %v496 = vunpack.c.l.b16 %v278
      %v497 = vunpack.c.l.b16 %v279
      %v498 = vunpack.c.l.b16 %v280
      %v499 = vunpack.c.l.b16 %v281
      %v500 = vunpack.c.l.b16 %v282
      %v501 = vunpack.c.l.b16 %v283
      %v502 = vunpack.c.l.b16 %v284
      %v503 = vunpack.c.l.b16 %v285
      %v504 = vunpack.c.l.b16 %v286
      %v505 = vpack.c.b16 %v434, %v433
      %v506 = vpack.c.b16 %v436, %v435
      %v507 = vpack.c.b16 %v438, %v437
      %v508 = vpack.c.b16 %v440, %v439
      %v509 = vpack.c.b16 %v442, %v441
      %v510 = vpack.c.b16 %v444, %v443
      %v511 = vpack.c.b16 %v446, %v445
      %v512 = vpack.c.b16 %v448, %v447
      %v513 = vpack.c.b16 %v450, %v449
      %v514 = vpack.c.b16 %v452, %v451
      %v515 = vpack.c.b16 %v454, %v453
      %v516 = vpack.c.b16 %v456, %v455
      %v517 = vpack.c.b16 %v458, %v457
      %v518 = vpack.c.b16 %v460, %v459
      %v519 = vpack.c.b16 %v462, %v461
      %v520 = vpack.c.b16 %v464, %v463
      %v521 = vpack.c.b16 %v466, %v465
      %v522 = vpack.c.b16 %v468, %v467
      %v523 = vpack.c.b16 %v470, %v469
      %v524 = vpack.c.b16 %v472, %v471
      %v525 = vpack.c.b16 %v474, %v473
      %v526 = vpack.c.b16 %v476, %v475
      %v527 = vpack.c.b16 %v478, %v477
      %v528 = vpack.c.b16 %v480, %v479
      %v529 = vpack.c.b16 %v482, %v481
      %v530 = vpack.c.b16 %v484, %v483
      %v531 = vpack.c.b16 %v486, %v485
      %v532 = vpack.c.b16 %v488, %v487
      %v533 = vpack.c.b16 %v490, %v489
      %v534 = vpack.c.b16 %v492, %v491
      %v535 = vpack.c.b16 %v494, %v493
      %v536 = vpack.c.b16 %v496, %v495
      %v537 = vpack.c.b16 %v498, %v497
      %v538 = vpack.c.b16 %v500, %v499
      %v539 = vpack.c.b16 %v502, %v501
      %v540 = vpack.c.b16 %v504, %v503
      %vm577 = vcmask 523264
      %v579 = vsel %vm577, %v347, 0
      %v582 = vsel %vm577, %v352, 0
      %584 = vmatprep.subr.bf16.mxu0 0
      %585 = vmatpush1.bf16.msra.mxu0 %v512
      %586 = vmatprep.subr.bf16.mxu0 0
      %587 = vmatpush1.bf16.msra.mxu0 %v511
      %588 = vmatprep.subr.bf16.mxu0 0
      %589 = vmatpush1.bf16.msra.mxu0 %v510
      %590 = vmatprep.subr.bf16.mxu0 0
      %591 = vmatpush1.bf16.msra.mxu0 %v509
      %592 = vmatprep.subr.bf16.mxu0 0
      %593 = vmatpush1.bf16.msra.mxu0 %v508
      %594 = vmatprep.subr.bf16.mxu0 0
      %595 = vmatpush1.bf16.msra.mxu0 %v507
      %596 = vmatprep.subr.bf16.mxu0 0
      %597 = vmatpush1.bf16.msra.mxu0 %v506
      %598 = vmatprep.subr.bf16.mxu0 0
      %599 = vmatpush1.bf16.msra.mxu0 %v505
      %600 = vmatprep.subr.bf16.mxu0 0
      %601 = vmatpush2.bf16.msra.mxu0 %v520
      %602 = vmatprep.subr.bf16.mxu0 0
      %603 = vmatpush2.bf16.msra.mxu0 %v519
      %604 = vmatprep.subr.bf16.mxu0 0
      %605 = vmatpush2.bf16.msra.mxu0 %v518
      %606 = vmatprep.subr.bf16.mxu0 0
      %607 = vmatpush2.bf16.msra.mxu0 %v517
      %608 = vmatprep.subr.bf16.mxu0 0
      %609 = vmatpush2.bf16.msra.mxu0 %v516
      %610 = vmatprep.subr.bf16.mxu0 0
      %611 = vmatpush2.bf16.msra.mxu0 %v515
      %612 = vmatprep.subr.bf16.mxu0 0
      %613 = vmatpush2.bf16.msra.mxu0 %v514
      %614 = vmatprep.subr.bf16.mxu0 0
      %615 = vmatpush2.bf16.msra.mxu0 %v513
      %616 = vmatprep.mubr.bf16.mxu0 %v344
      %617 = vmatmul.mubr.bf16.gmra.mxu0 %v343
      %v618 = vpop.f32.mrf.mxu0
      %v619 = vadd.f32 %v294, %v618
      %v620 = vpop.f32.mrf.mxu0
      %v621 = vpop.f32.mrf.mxu0
      %v622 = vadd.f32 %v299, %v621
      %v623 = vpop.f32.mrf.mxu0
      %624 = vmatprep.mubr.bf16.mxu0 %v349
      %625 = vmatmul.mubr.bf16.gmra.mxu0 %v348
      %v626 = vpop.f32.mrf.mxu0
      %v627 = vadd.f32 %v304, %v626
      %v628 = vpop.f32.mrf.mxu0
      %v629 = vpop.f32.mrf.mxu0
      %v630 = vadd.f32 %v309, %v629
      %v631 = vpop.f32.mrf.mxu0
      %632 = vdwg.mxu0
      %633 = vmatprep.subr.bf16.mxu0 0
      %634 = vmatpush1.bf16.msra.mxu0 %v528
      %635 = vmatprep.subr.bf16.mxu0 0
      %636 = vmatpush1.bf16.msra.mxu0 %v527
      %637 = vmatprep.subr.bf16.mxu0 0
      %638 = vmatpush1.bf16.msra.mxu0 %v526
      %639 = vmatprep.subr.bf16.mxu0 0
      %640 = vmatpush1.bf16.msra.mxu0 %v525
      %641 = vmatprep.subr.bf16.mxu0 0
      %642 = vmatpush1.bf16.msra.mxu0 %v524
      %643 = vmatprep.subr.bf16.mxu0 0
      %644 = vmatpush1.bf16.msra.mxu0 %v523
      %645 = vmatprep.subr.bf16.mxu0 0
      %646 = vmatpush1.bf16.msra.mxu0 %v522
      %647 = vmatprep.subr.bf16.mxu0 0
      %648 = vmatpush1.bf16.msra.mxu0 %v521
      %649 = vmatprep.subr.bf16.mxu0 0
      %650 = vmatpush2.bf16.msra.mxu0 %v536
      %651 = vmatprep.subr.bf16.mxu0 0
      %652 = vmatpush2.bf16.msra.mxu0 %v535
      %653 = vmatprep.subr.bf16.mxu0 0
      %654 = vmatpush2.bf16.msra.mxu0 %v534
      %655 = vmatprep.subr.bf16.mxu0 0
      %656 = vmatpush2.bf16.msra.mxu0 %v533
      %657 = vmatprep.subr.bf16.mxu0 0
      %658 = vmatpush2.bf16.msra.mxu0 %v532
      %659 = vmatprep.subr.bf16.mxu0 0
      %660 = vmatpush2.bf16.msra.mxu0 %v531
      %661 = vmatprep.subr.bf16.mxu0 0
      %662 = vmatpush2.bf16.msra.mxu0 %v530
      %663 = vmatprep.subr.bf16.mxu0 0
      %664 = vmatpush2.bf16.msra.mxu0 %v529
      %665 = vmatprep.mubr.bf16.mxu0 %v346
      %666 = vmatmul.mubr.bf16.gmra.mxu0 %v345
      %v667 = vpop.f32.mrf.mxu0
      %v668 = vadd.f32 %v619, %v667
      %v669 = vpop.f32.mrf.mxu0
      %v670 = vpop.f32.mrf.mxu0
      %v671 = vadd.f32 %v622, %v670
      %v672 = vpop.f32.mrf.mxu0
      %673 = vmatprep.mubr.bf16.mxu0 %v351
      %674 = vmatmul.mubr.bf16.gmra.mxu0 %v350
      %v675 = vpop.f32.mrf.mxu0
      %v676 = vadd.f32 %v627, %v675
      %v677 = vpop.f32.mrf.mxu0
      %v678 = vpop.f32.mrf.mxu0
      %v679 = vadd.f32 %v630, %v678
      %v680 = vpop.f32.mrf.mxu0
      %681 = vdwg.mxu0
      %682 = vmatprep.subr.bf16.mxu0 0
      %683 = vmatpush1.bf16.msra.mxu0 0
      %684 = vmatprep.subr.bf16.mxu0 0
      %685 = vmatpush1.bf16.msra.mxu0 0
      %686 = vmatprep.subr.bf16.mxu0 0
      %687 = vmatpush1.bf16.msra.mxu0 0
      %688 = vmatprep.subr.bf16.mxu0 0
      %689 = vmatpush1.bf16.msra.mxu0 0
      %690 = vmatprep.subr.bf16.mxu0 0
      %691 = vmatpush1.bf16.msra.mxu0 %v540
      %692 = vmatprep.subr.bf16.mxu0 0
      %693 = vmatpush1.bf16.msra.mxu0 %v539
      %694 = vmatprep.subr.bf16.mxu0 0
      %695 = vmatpush1.bf16.msra.mxu0 %v538
      %696 = vmatprep.subr.bf16.mxu0 0
      %697 = vmatpush1.bf16.msra.mxu0 %v537
      %698 = vmatprep.subr.bf16.mxu0 0
      %699 = vmatpush2.bf16.msra.mxu0 0
      %700 = vmatprep.subr.bf16.mxu0 0
      %701 = vmatpush2.bf16.msra.mxu0 0
      %702 = vmatprep.subr.bf16.mxu0 0
      %703 = vmatpush2.bf16.msra.mxu0 0
      %704 = vmatprep.subr.bf16.mxu0 0
      %705 = vmatpush2.bf16.msra.mxu0 0
      %706 = vmatprep.subr.bf16.mxu0 0
      %707 = vmatpush2.bf16.msra.mxu0 0
      %708 = vmatprep.subr.bf16.mxu0 0
      %709 = vmatpush2.bf16.msra.mxu0 0
      %710 = vmatprep.subr.bf16.mxu0 0
      %711 = vmatpush2.bf16.msra.mxu0 0
      %712 = vmatprep.subr.bf16.mxu0 0
      %713 = vmatpush2.bf16.msra.mxu0 0
      %714 = vmatprep.mubr.bf16.mxu0 0
      %715 = vmatmul.mubr.bf16.gmra.mxu0 %v579
      %v716 = vpop.f32.mrf.mxu0
      %v717 = vadd.f32 %v668, %v716
      %v718 = vpop.f32.mrf.mxu0
      %v719 = vpop.f32.mrf.mxu0
      %v720 = vadd.f32 %v671, %v719
      %v721 = vpop.f32.mrf.mxu0
      %722 = vmatprep.mubr.bf16.mxu0 0
      %723 = vmatmul.mubr.bf16.gmra.mxu0 %v582
      %v724 = vpop.f32.mrf.mxu0
      %v725 = vadd.f32 %v676, %v724
      %v726 = vpop.f32.mrf.mxu0
      %v727 = vpop.f32.mrf.mxu0
      %v728 = vadd.f32 %v679, %v727
      %v729 = vpop.f32.mrf.mxu0
      %730 = vdwg.mxu0
      %v731 = vpack.c.bf16 %v720, %v717
      %v732 = vpack.c.bf16 %v728, %v725
      %v735 = vunpack.c.l.b16 %v731
      %v736 = vunpack.c.h.b16 %v731
      %v737 = vunpack.c.l.b16 %v732
      %v738 = vunpack.c.h.b16 %v732
      %v739 = vpack.c.b16 %v735, %v735
      %v740 = vpack.c.b16 %v736, %v736
      %v741 = vpack.c.b16 %v737, %v737
      %v742 = vpack.c.b16 %v738, %v738
      %vm747 = vcmask 27648
      %748 = vst.msk [vmem:[%s201] sm:$0xf] %vm747, %v739
      %749 = vst.msk [vmem:[%s201 + $0x4] sm:$0xf] %vm747, %v740
      %750 = vst.msk [vmem:[%s201 + $0x8] sm:$0xf] %vm747, %v741
      %751 = vst.msk [vmem:[%s201 + $0xc] sm:$0xf] %vm747, %v742
      %p752 = scmp.lt.s32.totalorder %s18, 1
      %s753 = scalar_select %p752, %s18, 1
      %p754 = scmp.lt.s32.totalorder %s19, 0
      %s755 = scalar_select %p754, %s19, 0
      %s756 = smul.addr %s753, 4
      %s757 = sadd.s32 %s755, %s756
      %s758 = smul.addr %s757, 4
      %s759 = scalar_lea.vmem %s3, %s758
      // Predicated region
      $region33: #{forward.19} parent=31 // pred_check
        %p760 = pneg %p116
      $region34: #{forward.19} parent=31 // pred_check_branch
        %762 = sbr.rel (%p760) target = $region36
      $region35: #{forward.19} parent=31 // pred_region
        _
      $region36: #{forward.19} parent=31 // pred_fallthru
        _
    $region32: #{forward.19} parent=5 // pred_fallthru
      _
    %p763 = scmp.le.s32.totalorder 2, %s9
    // Predicated region
    $region37: #{forward.19} parent=5 // pred_check
      %p764 = pneg %p763
    $region38: #{forward.19} parent=5 // pred_check_branch
      %766 = sbr.rel (%p764) target = $region40
    $region39: #{forward.19} parent=5 // pred_region
      %s767 = ssub.s32 %s9, 2
      // Predicated region
      $region41: #{forward.19} parent=39 // pred_check
        %p768 = pneg %p122
      $region42: #{forward.19} parent=39 // pred_check_branch
        %770 = sbr.rel (%p768) target = $region44
      $region43: #{forward.19} parent=39 // pred_region
        %p771 = scmp.lt.s32.totalorder %s20, 1
        %s772 = scalar_select %p771, %s20, 1
        %p773 = scmp.lt.s32.totalorder %s21, 0
        %s774 = scalar_select %p773, %s21, 0
        %s775 = smul.addr %s772, 4
        %s776 = sadd.s32 %s774, %s775
        %s777 = smul.addr %s776, 4
        %s778 = scalar_lea.vmem %s3, %s777
      $region44: #{forward.19} parent=39 // pred_fallthru
        _
    $region40: #{forward.19} parent=5 // pred_fallthru
      _
  $region6: #{forward.19} parent=0 // loop_footer
    %s13 = sadd.s32 1, %s9
  $region7: #{forward.19} parent=0 // loop_footer_branch
    %8 = sbr.rel target = $region3
  $region8: #{forward.19} parent=0 // loop_exit
    _

// kernel: forward.22
$region0: #{forward.22}
  #allocation0 [shape = 'u32[]', space=smem, size = 0x4, offset = 0x4, fixed_abs, tag = 'smem constant byte address 0x4 - core index']
  #allocation1 [shape = 'u32[144,128]{1,0:T(1,128)}', space=vmem, size = 0x12000, scoped, tag = 'internal scratch']
  %s0 = inlined_call_operand.vmem [shape: bf16[32,64], index: 0, kind: input, shape index: {}]
  %s1 = inlined_call_operand.vmem [shape: f32[32,1], index: 1, kind: input, shape index: {}]
  %s2 = inlined_call_operand.vmem [shape: bf16[2,64,1], index: 2, kind: input, shape index: {}]
  %s3 = inlined_call_operand.vmem [shape: bf16[2,32,1], index: 3, kind: output, shape index: {}]
  %s4 = sld [smem:[#allocation0]]
  $region45: #{forward.22} parent=0
    _
  %s6 = ssub.s32 1, %s4
  %s7 = scalar_select 0, %s6, %s4
  loop: start=0, step=1, limit=4
  $region2: #{forward.22} parent=0 // loop_pre_header
    _
  $region3: #{forward.22} parent=0 // loop_header
    %s9 = sphi 0, %s13
    %p10 = scmp.ge.s32.totalorder %s9, 4
    %s16 = sphi 0, %s28
    %s17 = sphi 0, %s24
    %s18 = sphi 0, %s16
    %s19 = sphi 0, %s17
    %s20 = sphi 0, %s18
    %s21 = sphi 0, %s19
    %s29 = sphi 0, %s29
    %s31 = sphi 0, %s29
    %s32 = sphi 0, %s31
    %s46 = sphi 0, %s32
    %s50 = sphi 0, %s50
    %s52 = sphi 0, %s50
    %s53 = sphi 0, %s52
    %s67 = sphi 0, %s53
    %s75 = sphi 0, %s77
    %s78 = sphi 0, %s75
    %s79 = sphi 0, %s78
    %s95 = sphi 0, %s79
    %s103 = sphi 0, %s105
    %s106 = sphi 0, %s103
    %s107 = sphi 0, %s106
    %s123 = sphi 0, %s107
  $region4: #{forward.22} parent=0 // loop_header_branch
    %12 = sbr.rel (%p10) target = $region8
  $region5: #{forward.22} parent=0 // loop_body
    %s14 = ssub.s32 %s9, 1
    %s15 = ssub.s32 %s9, 2
    %s22 = sadd.s32 1, %s17
    %p23 = scmp.ge.s32.totalorder %s22, 1
    %s24 = scalar_select %p23, 0, %s22
    %s25 = sadd.s32 1, %s16
    %s26 = scalar_select %p23, %s25, %s16
    %p27 = scmp.ge.s32.totalorder %s26, 2
    %s28 = scalar_select %p27, 0, %s26
    %s30 = sadd.s32 %s29, 1
    %p33 = scmp.eq.s32.totalorder %s9, 1
    %p34 = scmp.ne.s32.totalorder %s29, %s31
    %p35 = scmp.eq.s32.totalorder %s9, 0
    %p36 = por %p34, %p35
    %p37 = scmp.ne.s32.totalorder %s29, %s31
    %p38 = scmp.eq.s32.totalorder %s14, 1
    %p39 = por %p37, %p38
    %p40 = scmp.ne.s32.totalorder %s31, %s32
    %p41 = scmp.eq.s32.totalorder %s14, 0
    %p42 = por %p40, %p41
    %p43 = scmp.ne.s32.totalorder %s31, %s32
    %p44 = scmp.eq.s32.totalorder %s15, 1
    %p45 = por %p43, %p44
    %p47 = scmp.ne.s32.totalorder %s32, %s46
    %p48 = scmp.eq.s32.totalorder %s15, 0
    %p49 = por %p47, %p48
    %s51 = sadd.s32 %s50, 1
    %p54 = scmp.eq.s32.totalorder %s9, 1
    %p55 = scmp.ne.s32.totalorder %s50, %s52
    %p56 = scmp.eq.s32.totalorder %s9, 0
    %p57 = por %p55, %p56
    %p58 = scmp.ne.s32.totalorder %s50, %s52
    %p59 = scmp.eq.s32.totalorder %s14, 1
    %p60 = por %p58, %p59
    %p61 = scmp.ne.s32.totalorder %s52, %s53
    %p62 = scmp.eq.s32.totalorder %s14, 0
    %p63 = por %p61, %p62
    %p64 = scmp.ne.s32.totalorder %s52, %s53
    %p65 = scmp.eq.s32.totalorder %s15, 1
    %p66 = por %p64, %p65
    %p68 = scmp.ne.s32.totalorder %s53, %s67
    %p69 = scmp.eq.s32.totalorder %s15, 0
    %p70 = por %p68, %p69
    %s71 = ssub.s32 %s16, %s28
    %s72 = ssub.s32 %s17, %s24
    %s73 = sor.u32 %s71, %s72
    %p74 = scmp.eq.s32.totalorder %s73, 0
    %s76 = sadd.s32 %s75, 1
    %s77 = scalar_select %p74, %s75, %s76
    %p80 = pneg %p74
    %p81 = scmp.eq.s32.totalorder %s9, 1
    %p82 = por %p80, %p81
    %p83 = scmp.ne.s32.totalorder %s75, %s78
    %p84 = scmp.eq.s32.totalorder %s9, 0
    %p85 = por %p83, %p84
    %p86 = scmp.ne.s32.totalorder %s75, %s78
    %p87 = scmp.eq.s32.totalorder %s14, 1
    %p88 = por %p86, %p87
    %p89 = scmp.ne.s32.totalorder %s78, %s79
    %p90 = scmp.eq.s32.totalorder %s14, 0
    %p91 = por %p89, %p90
    %p92 = scmp.ne.s32.totalorder %s78, %s79
    %p93 = scmp.eq.s32.totalorder %s15, 1
    %p94 = por %p92, %p93
    %p96 = scmp.ne.s32.totalorder %s79, %s95
    %p97 = scmp.eq.s32.totalorder %s15, 0
    %p98 = por %p96, %p97
    %s99 = ssub.s32 %s16, %s28
    %s100 = ssub.s32 %s17, %s24
    %s101 = sor.u32 %s99, %s100
    %p102 = scmp.eq.s32.totalorder %s101, 0
    %s104 = sadd.s32 %s103, 1
    %s105 = scalar_select %p102, %s103, %s104
    %p108 = pneg %p102
    %p109 = scmp.eq.s32.totalorder %s9, 1
    %p110 = por %p108, %p109
    %p111 = scmp.ne.s32.totalorder %s103, %s106
    %p112 = scmp.eq.s32.totalorder %s9, 0
    %p113 = por %p111, %p112
    %p114 = scmp.ne.s32.totalorder %s103, %s106
    %p115 = scmp.eq.s32.totalorder %s14, 1
    %p116 = por %p114, %p115
    %p117 = scmp.ne.s32.totalorder %s106, %s107
    %p118 = scmp.eq.s32.totalorder %s14, 0
    %p119 = por %p117, %p118
    %p120 = scmp.ne.s32.totalorder %s106, %s107
    %p121 = scmp.eq.s32.totalorder %s15, 1
    %p122 = por %p120, %p121
    %p124 = scmp.ne.s32.totalorder %s107, %s123
    %p125 = scmp.eq.s32.totalorder %s15, 0
    %p126 = por %p124, %p125
    %p127 = scmp.le.s32.totalorder 1, %s9
    %p128 = scmp.lt.s32.totalorder %s9, 3
    %p129 = pnand %p127, %p128
    %p130 = pneg %p129
    // Predicated region
    $region9: #{forward.22} parent=5 // pred_check
      _
    $region10: #{forward.22} parent=5 // pred_check_branch
      %132 = sbr.rel (%p129) target = $region12
    $region11: #{forward.22} parent=5 // pred_region
      %s133 = ssub.s32 %s9, 1
      // Predicated region
      $region13: #{forward.22} parent=11 // pred_check
        %p134 = pneg %p42
      $region14: #{forward.22} parent=11 // pred_check_branch
        %136 = sbr.rel (%p134) target = $region16
      $region15: #{forward.22} parent=11 // pred_region
        _
      $region16: #{forward.22} parent=11 // pred_fallthru
        _
      // Predicated region
      $region17: #{forward.22} parent=11 // pred_check
        %p137 = pneg %p63
      $region18: #{forward.22} parent=11 // pred_check_branch
        %139 = sbr.rel (%p137) target = $region20
      $region19: #{forward.22} parent=11 // pred_region
        _
      $region20: #{forward.22} parent=11 // pred_fallthru
        _
    $region12: #{forward.22} parent=5 // pred_fallthru
      _
    %p140 = scmp.lt.s32.totalorder %s9, 2
    // Predicated region
    $region21: #{forward.22} parent=5 // pred_check
      %p141 = pneg %p140
    $region22: #{forward.22} parent=5 // pred_check_branch
      %143 = sbr.rel (%p141) target = $region24
    $region23: #{forward.22} parent=5 // pred_region
      // Predicated region
      $region25: #{forward.22} parent=23 // pred_check
        %p144 = pneg %p85
      $region26: #{forward.22} parent=23 // pred_check_branch
        %146 = sbr.rel (%p144) target = $region28
      $region27: #{forward.22} parent=23 // pred_region
        %p147 = scmp.lt.s32.totalorder %s16, 1
        %s148 = scalar_select %p147, %s16, 1
        %p149 = scmp.lt.s32.totalorder %s17, 0
        %s150 = scalar_select %p149, %s17, 0
        %s151 = smul.addr %s148, 8
        %s152 = sadd.s32 %s150, %s151
        %s153 = smul.addr %s152, 4
        %s154 = scalar_lea.vmem %s2, %s153
      $region28: #{forward.22} parent=23 // pred_fallthru
        _
    $region24: #{forward.22} parent=5 // pred_fallthru
      _
    %p155 = scmp.le.s32.totalorder 1, %s9
    %p156 = scmp.lt.s32.totalorder %s9, 3
    %p157 = pnand %p155, %p156
    %p158 = pneg %p157
    // Predicated region
    $region29: #{forward.22} parent=5 // pred_check
      _
    $region30: #{forward.22} parent=5 // pred_check_branch
      %160 = sbr.rel (%p157) target = $region32
    $region31: #{forward.22} parent=5 // pred_region
      %s161 = ssub.s32 %s9, 1
      %p162 = pneg %p42
      %p163 = pneg %p39
      %p164 = pneg %p63
      %p165 = pneg %p60
      %p166 = scmp.lt.s32.totalorder %s18, 1
      %s167 = scalar_select %p166, %s18, 1
      %p168 = scmp.lt.s32.totalorder %s19, 0
      %s169 = scalar_select %p168, %s19, 0
      %s170 = smul.addr %s167, 8
      %s171 = sadd.s32 %s169, %s170
      %s172 = smul.addr %s171, 4
      %s173 = scalar_lea.vmem %s2, %s172
      %p174 = pneg %p91
      %p175 = pneg %p88
      %p176 = pneg %p119
      %p177 = pneg %p116
      %p178 = scmp.lt.s32.totalorder %s18, 1
      %s179 = scalar_select %p178, %s18, 1
      %p180 = scmp.lt.s32.totalorder %s19, 0
      %s181 = scalar_select %p180, %s19, 0
      %s182 = smul.addr %s179, 4
      %s183 = sadd.s32 %s181, %s182
      %s184 = smul.addr %s183, 4
      %s185 = scalar_lea.vmem %s3, %s184
      %p186 = scmp.lt.s32.totalorder %s18, 1
      %s187 = scalar_select %p186, %s18, 1
      %p188 = scmp.lt.s32.totalorder %s19, 0
      %s189 = scalar_select %p188, %s19, 0
      %s190 = smul.addr %s187, 8
      %s191 = sadd.s32 %s189, %s190
      %s192 = smul.addr %s191, 4
      %s193 = scalar_lea.vmem %s2, %s192
      %p194 = scmp.lt.s32.totalorder %s18, 1
      %s195 = scalar_select %p194, %s18, 1
      %p196 = scmp.lt.s32.totalorder %s19, 0
      %s197 = scalar_select %p196, %s19, 0
      %s198 = smul.addr %s195, 4
      %s199 = sadd.s32 %s197, %s198
      %s200 = smul.addr %s199, 4
      %s201 = scalar_lea.vmem %s3, %s200
      %v203 = vld [vmem:[%s0] sm:$0xf]
      %v204 = vld [vmem:[%s0 + $0x4] sm:$0xf]
      %v205 = vld [vmem:[%s0 + $0x8] sm:$0xf]
      %v206 = vld [vmem:[%s0 + $0xc] sm:$0xf]
      %v207 = vld [vmem:[%s193] sm:$0xf]
      %v208 = vld [vmem:[%s193 + $0x4] sm:$0xf]
      %v209 = vld [vmem:[%s193 + $0x8] sm:$0xf]
      %v210 = vld [vmem:[%s193 + $0xc] sm:$0xf]
      %v211 = vld [vmem:[%s193 + $0x10] sm:$0xf]
      %v212 = vld [vmem:[%s193 + $0x14] sm:$0xf]
      %v213 = vld [vmem:[%s193 + $0x18] sm:$0xf]
      %v214 = vld [vmem:[%s193 + $0x1c] sm:$0xf]
      %v215 = vld [vmem:[%s1] sm:$0xff]
      %v216 = vld [vmem:[%s1 + $0x8] sm:$0xff]
      %v217 = vld [vmem:[%s1 + $0x10] sm:$0xff]
      %v218 = vld [vmem:[%s1 + $0x18] sm:$0xff]
      %v223 = vunpack.c.l.b16 %v203
      %v224 = vunpack.c.l.b16 %v204
      %v225 = vunpack.c.l.b16 %v205
      %v226 = vunpack.c.l.b16 %v206
      %v227 = vpack.c.b16 %v224, %v223
      %v228 = vpack.c.b16 %v226, %v225
      %v237 = vunpack.c.l.b16 %v207
      %v238 = vunpack.c.l.b16 %v208
      %v239 = vunpack.c.l.b16 %v209
      %v240 = vunpack.c.l.b16 %v210
      %v241 = vunpack.c.l.b16 %v211
      %v242 = vunpack.c.l.b16 %v212
      %v243 = vunpack.c.l.b16 %v213
      %v244 = vunpack.c.l.b16 %v214
      %v245 = vpack.c.b16 %v238, %v237
      %v246 = vpack.c.b16 %v240, %v239
      %v247 = vpack.c.b16 %v242, %v241
      %v248 = vpack.c.b16 %v244, %v243
      %vm253 = vcmask 523264
      %v255 = vsel %vm253, %v227, 0
      %v258 = vsel %vm253, %v228, 0
      %260 = vmatprep.subr.bf16.mxu0 0
      %261 = vmatpush1.bf16.msra.mxu0 0
      %262 = vmatprep.subr.bf16.mxu0 0
      %263 = vmatpush1.bf16.msra.mxu0 0
      %264 = vmatprep.subr.bf16.mxu0 0
      %265 = vmatpush1.bf16.msra.mxu0 0
      %266 = vmatprep.subr.bf16.mxu0 0
      %267 = vmatpush1.bf16.msra.mxu0 0
      %268 = vmatprep.subr.bf16.mxu0 0
      %269 = vmatpush1.bf16.msra.mxu0 %v248
      %270 = vmatprep.subr.bf16.mxu0 0
      %271 = vmatpush1.bf16.msra.mxu0 %v247
      %272 = vmatprep.subr.bf16.mxu0 0
      %273 = vmatpush1.bf16.msra.mxu0 %v246
      %274 = vmatprep.subr.bf16.mxu0 0
      %275 = vmatpush1.bf16.msra.mxu0 %v245
      %276 = vmatprep.subr.bf16.mxu0 0
      %277 = vmatpush2.bf16.msra.mxu0 0
      %278 = vmatprep.subr.bf16.mxu0 0
      %279 = vmatpush2.bf16.msra.mxu0 0
      %280 = vmatprep.subr.bf16.mxu0 0
      %281 = vmatpush2.bf16.msra.mxu0 0
      %282 = vmatprep.subr.bf16.mxu0 0
      %283 = vmatpush2.bf16.msra.mxu0 0
      %284 = vmatprep.subr.bf16.mxu0 0
      %285 = vmatpush2.bf16.msra.mxu0 0
      %286 = vmatprep.subr.bf16.mxu0 0
      %287 = vmatpush2.bf16.msra.mxu0 0
      %288 = vmatprep.subr.bf16.mxu0 0
      %289 = vmatpush2.bf16.msra.mxu0 0
      %290 = vmatprep.subr.bf16.mxu0 0
      %291 = vmatpush2.bf16.msra.mxu0 0
      %292 = vmatprep.mubr.bf16.mxu0 0
      %293 = vmatmul.mubr.bf16.gmra.mxu0 %v255
      %v294 = vpop.f32.mrf.mxu0
      %v295 = vadd.f32 %v215, %v294
      %v296 = vpop.f32.mrf.mxu0
      %v297 = vpop.f32.mrf.mxu0
      %v298 = vadd.f32 %v216, %v297
      %v299 = vpop.f32.mrf.mxu0
      %300 = vmatprep.mubr.bf16.mxu0 0
      %301 = vmatmul.mubr.bf16.gmra.mxu0 %v258
      %v302 = vpop.f32.mrf.mxu0
      %v303 = vadd.f32 %v217, %v302
      %v304 = vpop.f32.mrf.mxu0
      %v305 = vpop.f32.mrf.mxu0
      %v306 = vadd.f32 %v218, %v305
      %v307 = vpop.f32.mrf.mxu0
      %308 = vdwg.mxu0
      %v309 = vpack.c.bf16 %v298, %v295
      %v310 = vpack.c.bf16 %v306, %v303
      %v313 = vunpack.c.l.b16 %v309
      %v314 = vunpack.c.h.b16 %v309
      %v315 = vunpack.c.l.b16 %v310
      %v316 = vunpack.c.h.b16 %v310
      %v317 = vpack.c.b16 %v313, %v313
      %v318 = vpack.c.b16 %v314, %v314
      %v319 = vpack.c.b16 %v315, %v315
      %v320 = vpack.c.b16 %v316, %v316
      %vm325 = vcmask 3072
      %326 = vst.msk [vmem:[%s201] sm:$0xf] %vm325, %v317
      %327 = vst.msk [vmem:[%s201 + $0x4] sm:$0xf] %vm325, %v318
      %328 = vst.msk [vmem:[%s201 + $0x8] sm:$0xf] %vm325, %v319
      %329 = vst.msk [vmem:[%s201 + $0xc] sm:$0xf] %vm325, %v320
      %p330 = scmp.lt.s32.totalorder %s18, 1
      %s331 = scalar_select %p330, %s18, 1
      %p332 = scmp.lt.s32.totalorder %s19, 0
      %s333 = scalar_select %p332, %s19, 0
      %s334 = smul.addr %s331, 4
      %s335 = sadd.s32 %s333, %s334
      %s336 = smul.addr %s335, 4
      %s337 = scalar_lea.vmem %s3, %s336
      // Predicated region
      $region33: #{forward.22} parent=31 // pred_check
        %p338 = pneg %p116
      $region34: #{forward.22} parent=31 // pred_check_branch
        %340 = sbr.rel (%p338) target = $region36
      $region35: #{forward.22} parent=31 // pred_region
        _
      $region36: #{forward.22} parent=31 // pred_fallthru
        _
    $region32: #{forward.22} parent=5 // pred_fallthru
      _
    %p341 = scmp.le.s32.totalorder 2, %s9
    // Predicated region
    $region37: #{forward.22} parent=5 // pred_check
      %p342 = pneg %p341
    $region38: #{forward.22} parent=5 // pred_check_branch
      %344 = sbr.rel (%p342) target = $region40
    $region39: #{forward.22} parent=5 // pred_region
      %s345 = ssub.s32 %s9, 2
      // Predicated region
      $region41: #{forward.22} parent=39 // pred_check
        %p346 = pneg %p122
      $region42: #{forward.22} parent=39 // pred_check_branch
        %348 = sbr.rel (%p346) target = $region44
      $region43: #{forward.22} parent=39 // pred_region
        %p349 = scmp.lt.s32.totalorder %s20, 1
        %s350 = scalar_select %p349, %s20, 1
        %p351 = scmp.lt.s32.totalorder %s21, 0
        %s352 = scalar_select %p351, %s21, 0
        %s353 = smul.addr %s350, 4
        %s354 = sadd.s32 %s352, %s353
        %s355 = smul.addr %s354, 4
        %s356 = scalar_lea.vmem %s3, %s355
      $region44: #{forward.22} parent=39 // pred_fallthru
        _
    $region40: #{forward.22} parent=5 // pred_fallthru
      _
  $region6: #{forward.22} parent=0 // loop_footer
    %s13 = sadd.s32 1, %s9
  $region7: #{forward.22} parent=0 // loop_footer_branch
    %8 = sbr.rel target = $region3
  $region8: #{forward.22} parent=0 // loop_exit
    _

// kernel: forward.23
$region0: #{forward.23}
  #allocation0 [shape = 'u32[]', space=smem, size = 0x4, offset = 0x4, fixed_abs, tag = 'smem constant byte address 0x4 - core index']
  #allocation1 [shape = 'u32[144,128]{1,0:T(1,128)}', space=vmem, size = 0x12000, scoped, tag = 'internal scratch']
  %s0 = inlined_call_operand.vmem [shape: bf16[32,160], index: 0, kind: input, shape index: {}]
  %s1 = inlined_call_operand.vmem [shape: f32[32,1], index: 1, kind: input, shape index: {}]
  %s2 = inlined_call_operand.vmem [shape: bf16[2,160,4], index: 2, kind: input, shape index: {}]
  %s3 = inlined_call_operand.vmem [shape: bf16[2,32,4], index: 3, kind: output, shape index: {}]
  %s4 = sld [smem:[#allocation0]]
  $region45: #{forward.23} parent=0
    _
  %s6 = ssub.s32 1, %s4
  %s7 = scalar_select 0, %s6, %s4
  loop: start=0, step=1, limit=4
  $region2: #{forward.23} parent=0 // loop_pre_header
    _
  $region3: #{forward.23} parent=0 // loop_header
    %s9 = sphi 0, %s13
    %p10 = scmp.ge.s32.totalorder %s9, 4
    %s16 = sphi 0, %s28
    %s17 = sphi 0, %s24
    %s18 = sphi 0, %s16
    %s19 = sphi 0, %s17
    %s20 = sphi 0, %s18
    %s21 = sphi 0, %s19
    %s29 = sphi 0, %s29
    %s31 = sphi 0, %s29
    %s32 = sphi 0, %s31
    %s46 = sphi 0, %s32
    %s50 = sphi 0, %s50
    %s52 = sphi 0, %s50
    %s53 = sphi 0, %s52
    %s67 = sphi 0, %s53
    %s75 = sphi 0, %s77
    %s78 = sphi 0, %s75
    %s79 = sphi 0, %s78
    %s95 = sphi 0, %s79
    %s103 = sphi 0, %s105
    %s106 = sphi 0, %s103
    %s107 = sphi 0, %s106
    %s123 = sphi 0, %s107
  $region4: #{forward.23} parent=0 // loop_header_branch
    %12 = sbr.rel (%p10) target = $region8
  $region5: #{forward.23} parent=0 // loop_body
    %s14 = ssub.s32 %s9, 1
    %s15 = ssub.s32 %s9, 2
    %s22 = sadd.s32 1, %s17
    %p23 = scmp.ge.s32.totalorder %s22, 1
    %s24 = scalar_select %p23, 0, %s22
    %s25 = sadd.s32 1, %s16
    %s26 = scalar_select %p23, %s25, %s16
    %p27 = scmp.ge.s32.totalorder %s26, 2
    %s28 = scalar_select %p27, 0, %s26
    %s30 = sadd.s32 %s29, 1
    %p33 = scmp.eq.s32.totalorder %s9, 1
    %p34 = scmp.ne.s32.totalorder %s29, %s31
    %p35 = scmp.eq.s32.totalorder %s9, 0
    %p36 = por %p34, %p35
    %p37 = scmp.ne.s32.totalorder %s29, %s31
    %p38 = scmp.eq.s32.totalorder %s14, 1
    %p39 = por %p37, %p38
    %p40 = scmp.ne.s32.totalorder %s31, %s32
    %p41 = scmp.eq.s32.totalorder %s14, 0
    %p42 = por %p40, %p41
    %p43 = scmp.ne.s32.totalorder %s31, %s32
    %p44 = scmp.eq.s32.totalorder %s15, 1
    %p45 = por %p43, %p44
    %p47 = scmp.ne.s32.totalorder %s32, %s46
    %p48 = scmp.eq.s32.totalorder %s15, 0
    %p49 = por %p47, %p48
    %s51 = sadd.s32 %s50, 1
    %p54 = scmp.eq.s32.totalorder %s9, 1
    %p55 = scmp.ne.s32.totalorder %s50, %s52
    %p56 = scmp.eq.s32.totalorder %s9, 0
    %p57 = por %p55, %p56
    %p58 = scmp.ne.s32.totalorder %s50, %s52
    %p59 = scmp.eq.s32.totalorder %s14, 1
    %p60 = por %p58, %p59
    %p61 = scmp.ne.s32.totalorder %s52, %s53
    %p62 = scmp.eq.s32.totalorder %s14, 0
    %p63 = por %p61, %p62
    %p64 = scmp.ne.s32.totalorder %s52, %s53
    %p65 = scmp.eq.s32.totalorder %s15, 1
    %p66 = por %p64, %p65
    %p68 = scmp.ne.s32.totalorder %s53, %s67
    %p69 = scmp.eq.s32.totalorder %s15, 0
    %p70 = por %p68, %p69
    %s71 = ssub.s32 %s16, %s28
    %s72 = ssub.s32 %s17, %s24
    %s73 = sor.u32 %s71, %s72
    %p74 = scmp.eq.s32.totalorder %s73, 0
    %s76 = sadd.s32 %s75, 1
    %s77 = scalar_select %p74, %s75, %s76
    %p80 = pneg %p74
    %p81 = scmp.eq.s32.totalorder %s9, 1
    %p82 = por %p80, %p81
    %p83 = scmp.ne.s32.totalorder %s75, %s78
    %p84 = scmp.eq.s32.totalorder %s9, 0
    %p85 = por %p83, %p84
    %p86 = scmp.ne.s32.totalorder %s75, %s78
    %p87 = scmp.eq.s32.totalorder %s14, 1
    %p88 = por %p86, %p87
    %p89 = scmp.ne.s32.totalorder %s78, %s79
    %p90 = scmp.eq.s32.totalorder %s14, 0
    %p91 = por %p89, %p90
    %p92 = scmp.ne.s32.totalorder %s78, %s79
    %p93 = scmp.eq.s32.totalorder %s15, 1
    %p94 = por %p92, %p93
    %p96 = scmp.ne.s32.totalorder %s79, %s95
    %p97 = scmp.eq.s32.totalorder %s15, 0
    %p98 = por %p96, %p97
    %s99 = ssub.s32 %s16, %s28
    %s100 = ssub.s32 %s17, %s24
    %s101 = sor.u32 %s99, %s100
    %p102 = scmp.eq.s32.totalorder %s101, 0
    %s104 = sadd.s32 %s103, 1
    %s105 = scalar_select %p102, %s103, %s104
    %p108 = pneg %p102
    %p109 = scmp.eq.s32.totalorder %s9, 1
    %p110 = por %p108, %p109
    %p111 = scmp.ne.s32.totalorder %s103, %s106
    %p112 = scmp.eq.s32.totalorder %s9, 0
    %p113 = por %p111, %p112
    %p114 = scmp.ne.s32.totalorder %s103, %s106
    %p115 = scmp.eq.s32.totalorder %s14, 1
    %p116 = por %p114, %p115
    %p117 = scmp.ne.s32.totalorder %s106, %s107
    %p118 = scmp.eq.s32.totalorder %s14, 0
    %p119 = por %p117, %p118
    %p120 = scmp.ne.s32.totalorder %s106, %s107
    %p121 = scmp.eq.s32.totalorder %s15, 1
    %p122 = por %p120, %p121
    %p124 = scmp.ne.s32.totalorder %s107, %s123
    %p125 = scmp.eq.s32.totalorder %s15, 0
    %p126 = por %p124, %p125
    %p127 = scmp.le.s32.totalorder 1, %s9
    %p128 = scmp.lt.s32.totalorder %s9, 3
    %p129 = pnand %p127, %p128
    %p130 = pneg %p129
    // Predicated region
    $region9: #{forward.23} parent=5 // pred_check
      _
    $region10: #{forward.23} parent=5 // pred_check_branch
      %132 = sbr.rel (%p129) target = $region12
    $region11: #{forward.23} parent=5 // pred_region
      %s133 = ssub.s32 %s9, 1
      // Predicated region
      $region13: #{forward.23} parent=11 // pred_check
        %p134 = pneg %p42
      $region14: #{forward.23} parent=11 // pred_check_branch
        %136 = sbr.rel (%p134) target = $region16
      $region15: #{forward.23} parent=11 // pred_region
        _
      $region16: #{forward.23} parent=11 // pred_fallthru
        _
      // Predicated region
      $region17: #{forward.23} parent=11 // pred_check
        %p137 = pneg %p63
      $region18: #{forward.23} parent=11 // pred_check_branch
        %139 = sbr.rel (%p137) target = $region20
      $region19: #{forward.23} parent=11 // pred_region
        _
      $region20: #{forward.23} parent=11 // pred_fallthru
        _
    $region12: #{forward.23} parent=5 // pred_fallthru
      _
    %p140 = scmp.lt.s32.totalorder %s9, 2
    // Predicated region
    $region21: #{forward.23} parent=5 // pred_check
      %p141 = pneg %p140
    $region22: #{forward.23} parent=5 // pred_check_branch
      %143 = sbr.rel (%p141) target = $region24
    $region23: #{forward.23} parent=5 // pred_region
      // Predicated region
      $region25: #{forward.23} parent=23 // pred_check
        %p144 = pneg %p85
      $region26: #{forward.23} parent=23 // pred_check_branch
        %146 = sbr.rel (%p144) target = $region28
      $region27: #{forward.23} parent=23 // pred_region
        %p147 = scmp.lt.s32.totalorder %s16, 1
        %s148 = scalar_select %p147, %s16, 1
        %p149 = scmp.lt.s32.totalorder %s17, 0
        %s150 = scalar_select %p149, %s17, 0
        %s151 = smul.addr %s148, 20
        %s152 = sadd.s32 %s150, %s151
        %s153 = smul.addr %s152, 4
        %s154 = scalar_lea.vmem %s2, %s153
      $region28: #{forward.23} parent=23 // pred_fallthru
        _
    $region24: #{forward.23} parent=5 // pred_fallthru
      _
    %p155 = scmp.le.s32.totalorder 1, %s9
    %p156 = scmp.lt.s32.totalorder %s9, 3
    %p157 = pnand %p155, %p156
    %p158 = pneg %p157
    // Predicated region
    $region29: #{forward.23} parent=5 // pred_check
      _
    $region30: #{forward.23} parent=5 // pred_check_branch
      %160 = sbr.rel (%p157) target = $region32
    $region31: #{forward.23} parent=5 // pred_region
      %s161 = ssub.s32 %s9, 1
      %p162 = pneg %p42
      %p163 = pneg %p39
      %p164 = pneg %p63
      %p165 = pneg %p60
      %p166 = scmp.lt.s32.totalorder %s18, 1
      %s167 = scalar_select %p166, %s18, 1
      %p168 = scmp.lt.s32.totalorder %s19, 0
      %s169 = scalar_select %p168, %s19, 0
      %s170 = smul.addr %s167, 20
      %s171 = sadd.s32 %s169, %s170
      %s172 = smul.addr %s171, 4
      %s173 = scalar_lea.vmem %s2, %s172
      %p174 = pneg %p91
      %p175 = pneg %p88
      %p176 = pneg %p119
      %p177 = pneg %p116
      %p178 = scmp.lt.s32.totalorder %s18, 1
      %s179 = scalar_select %p178, %s18, 1
      %p180 = scmp.lt.s32.totalorder %s19, 0
      %s181 = scalar_select %p180, %s19, 0
      %s182 = smul.addr %s179, 4
      %s183 = sadd.s32 %s181, %s182
      %s184 = smul.addr %s183, 4
      %s185 = scalar_lea.vmem %s3, %s184
      %p186 = scmp.lt.s32.totalorder %s18, 1
      %s187 = scalar_select %p186, %s18, 1
      %p188 = scmp.lt.s32.totalorder %s19, 0
      %s189 = scalar_select %p188, %s19, 0
      %s190 = smul.addr %s187, 20
      %s191 = sadd.s32 %s189, %s190
      %s192 = smul.addr %s191, 4
      %s193 = scalar_lea.vmem %s2, %s192
      %p194 = scmp.lt.s32.totalorder %s18, 1
      %s195 = scalar_select %p194, %s18, 1
      %p196 = scmp.lt.s32.totalorder %s19, 0
      %s197 = scalar_select %p196, %s19, 0
      %s198 = smul.addr %s195, 4
      %s199 = sadd.s32 %s197, %s198
      %s200 = smul.addr %s199, 4
      %s201 = scalar_lea.vmem %s3, %s200
      %v203 = vld [vmem:[%s0] sm:$0xff]
      %v204 = vld [vmem:[%s0 + $0x8] sm:$0xff]
      %v205 = vld [vmem:[%s0 + $0x10] sm:$0xff]
      %v206 = vld [vmem:[%s0 + $0x18] sm:$0xff]
      %v207 = vld [vmem:[%s193] sm:$0xf]
      %v208 = vld [vmem:[%s193 + $0x4] sm:$0xf]
      %v209 = vld [vmem:[%s193 + $0x8] sm:$0xf]
      %v210 = vld [vmem:[%s193 + $0xc] sm:$0xf]
      %v211 = vld [vmem:[%s193 + $0x10] sm:$0xf]
      %v212 = vld [vmem:[%s193 + $0x14] sm:$0xf]
      %v213 = vld [vmem:[%s193 + $0x18] sm:$0xf]
      %v214 = vld [vmem:[%s193 + $0x1c] sm:$0xf]
      %v215 = vld [vmem:[%s193 + $0x20] sm:$0xf]
      %v216 = vld [vmem:[%s193 + $0x24] sm:$0xf]
      %v217 = vld [vmem:[%s193 + $0x28] sm:$0xf]
      %v218 = vld [vmem:[%s193 + $0x2c] sm:$0xf]
      %v219 = vld [vmem:[%s193 + $0x30] sm:$0xf]
      %v220 = vld [vmem:[%s193 + $0x34] sm:$0xf]
      %v221 = vld [vmem:[%s193 + $0x38] sm:$0xf]
      %v222 = vld [vmem:[%s193 + $0x3c] sm:$0xf]
      %v223 = vld [vmem:[%s193 + $0x40] sm:$0xf]
      %v224 = vld [vmem:[%s193 + $0x44] sm:$0xf]
      %v225 = vld [vmem:[%s193 + $0x48] sm:$0xf]
      %v226 = vld [vmem:[%s193 + $0x4c] sm:$0xf]
      %v227 = vld [vmem:[%s1] sm:$0xff]
      %v228 = vld [vmem:[%s1 + $0x8] sm:$0xff]
      %v229 = vld [vmem:[%s1 + $0x10] sm:$0xff]
      %v230 = vld [vmem:[%s1 + $0x18] sm:$0xff]
      %232 = vset.pattern.permute.xlu0 0
      %233 = vperm.xlu0 %232, %v227
      %v234 = vpop.permute.xlu0 %233
      %237 = vset.pattern.permute.xlu0 0
      %238 = vperm.xlu0 %237, %v228
      %v239 = vpop.permute.xlu0 %238
      %242 = vset.pattern.permute.xlu0 0
      %243 = vperm.xlu0 %242, %v229
      %v244 = vpop.permute.xlu0 %243
      %247 = vset.pattern.permute.xlu0 0
      %248 = vperm.xlu0 %247, %v230
      %v249 = vpop.permute.xlu0 %248
      %v255 = vunpack.c.l.b16 %v203
      %v256 = vunpack.c.h.b16 %v203
      %v257 = vunpack.c.l.b16 %v204
      %v258 = vunpack.c.h.b16 %v204
      %v259 = vunpack.c.l.b16 %v205
      %v260 = vunpack.c.h.b16 %v205
      %v261 = vunpack.c.l.b16 %v206
      %v262 = vunpack.c.h.b16 %v206
      %v263 = vpack.c.b16 %v257, %v255
      %v264 = vpack.c.b16 %v258, %v256
      %v265 = vpack.c.b16 %v261, %v259
      %v266 = vpack.c.b16 %v262, %v260
      %v289 = vunpack.c.l.b16 %v207
      %v290 = vunpack.c.l.b16 %v208
      %v291 = vunpack.c.l.b16 %v209
      %v292 = vunpack.c.l.b16 %v210
      %v293 = vunpack.c.l.b16 %v211
      %v294 = vunpack.c.l.b16 %v212
      %v295 = vunpack.c.l.b16 %v213
      %v296 = vunpack.c.l.b16 %v214
      %v297 = vunpack.c.l.b16 %v215
      %v298 = vunpack.c.l.b16 %v216
      %v299 = vunpack.c.l.b16 %v217
      %v300 = vunpack.c.l.b16 %v218
      %v301 = vunpack.c.l.b16 %v219
      %v302 = vunpack.c.l.b16 %v220
      %v303 = vunpack.c.l.b16 %v221
      %v304 = vunpack.c.l.b16 %v222
      %v305 = vunpack.c.l.b16 %v223
      %v306 = vunpack.c.l.b16 %v224
      %v307 = vunpack.c.l.b16 %v225
      %v308 = vunpack.c.l.b16 %v226
      %v309 = vpack.c.b16 %v290, %v289
      %v310 = vpack.c.b16 %v292, %v291
      %v311 = vpack.c.b16 %v294, %v293
      %v312 = vpack.c.b16 %v296, %v295
      %v313 = vpack.c.b16 %v298, %v297
      %v314 = vpack.c.b16 %v300, %v299
      %v315 = vpack.c.b16 %v302, %v301
      %v316 = vpack.c.b16 %v304, %v303
      %v317 = vpack.c.b16 %v306, %v305
      %v318 = vpack.c.b16 %v308, %v307
      %vm329 = vcmask 261120
      %v331 = vsel %vm329, %v264, 0
      %v334 = vsel %vm329, %v266, 0
      %336 = vmatprep.subr.bf16.mxu0 0
      %337 = vmatpush1.bf16.msra.mxu0 %v316
      %338 = vmatprep.subr.bf16.mxu0 0
      %339 = vmatpush1.bf16.msra.mxu0 %v315
      %340 = vmatprep.subr.bf16.mxu0 0
      %341 = vmatpush1.bf16.msra.mxu0 %v314
      %342 = vmatprep.subr.bf16.mxu0 0
      %343 = vmatpush1.bf16.msra.mxu0 %v313
      %344 = vmatprep.subr.bf16.mxu0 0
      %345 = vmatpush1.bf16.msra.mxu0 %v312
      %346 = vmatprep.subr.bf16.mxu0 0
      %347 = vmatpush1.bf16.msra.mxu0 %v311
      %348 = vmatprep.subr.bf16.mxu0 0
      %349 = vmatpush1.bf16.msra.mxu0 %v310
      %350 = vmatprep.subr.bf16.mxu0 0
      %351 = vmatpush1.bf16.msra.mxu0 %v309
      %352 = vmatprep.subr.bf16.mxu0 0
      %353 = vmatpush2.bf16.msra.mxu0 0
      %354 = vmatprep.subr.bf16.mxu0 0
      %355 = vmatpush2.bf16.msra.mxu0 0
      %356 = vmatprep.subr.bf16.mxu0 0
      %357 = vmatpush2.bf16.msra.mxu0 0
      %358 = vmatprep.subr.bf16.mxu0 0
      %359 = vmatpush2.bf16.msra.mxu0 0
      %360 = vmatprep.subr.bf16.mxu0 0
      %361 = vmatpush2.bf16.msra.mxu0 0
      %362 = vmatprep.subr.bf16.mxu0 0
      %363 = vmatpush2.bf16.msra.mxu0 0
      %364 = vmatprep.subr.bf16.mxu0 0
      %365 = vmatpush2.bf16.msra.mxu0 %v318
      %366 = vmatprep.subr.bf16.mxu0 0
      %367 = vmatpush2.bf16.msra.mxu0 %v317
      %368 = vmatprep.mubr.bf16.mxu0 %v331
      %369 = vmatmul.mubr.bf16.gmra.mxu0 %v263
      %v370 = vpop.f32.mrf.mxu0
      %v371 = vadd.f32 %v234, %v370
      %v372 = vpop.f32.mrf.mxu0
      %v373 = vpop.f32.mrf.mxu0
      %v374 = vadd.f32 %v239, %v373
      %v375 = vpop.f32.mrf.mxu0
      %376 = vmatprep.mubr.bf16.mxu0 %v334
      %377 = vmatmul.mubr.bf16.gmra.mxu0 %v265
      %v378 = vpop.f32.mrf.mxu0
      %v379 = vadd.f32 %v244, %v378
      %v380 = vpop.f32.mrf.mxu0
      %v381 = vpop.f32.mrf.mxu0
      %v382 = vadd.f32 %v249, %v381
      %v383 = vpop.f32.mrf.mxu0
      %384 = vdwg.mxu0
      %v385 = vmax.f32 %v371, 0.0
      %v386 = vmax.f32 %v374, 0.0
      %v387 = vmax.f32 %v379, 0.0
      %v388 = vmax.f32 %v382, 0.0
      %v389 = vpack.c.bf16 %v386, %v385
      %v390 = vpack.c.bf16 %v388, %v387
      %v393 = vunpack.c.l.b16 %v389
      %v394 = vunpack.c.h.b16 %v389
      %v395 = vunpack.c.l.b16 %v390
      %v396 = vunpack.c.h.b16 %v390
      %v397 = vpack.c.b16 %v393, %v393
      %v398 = vpack.c.b16 %v394, %v394
      %v399 = vpack.c.b16 %v395, %v395
      %v400 = vpack.c.b16 %v396, %v396
      %vm405 = vcmask 27648
      %406 = vst.msk [vmem:[%s201] sm:$0xf] %vm405, %v397
      %407 = vst.msk [vmem:[%s201 + $0x4] sm:$0xf] %vm405, %v398
      %408 = vst.msk [vmem:[%s201 + $0x8] sm:$0xf] %vm405, %v399
      %409 = vst.msk [vmem:[%s201 + $0xc] sm:$0xf] %vm405, %v400
      %p410 = scmp.lt.s32.totalorder %s18, 1
      %s411 = scalar_select %p410, %s18, 1
      %p412 = scmp.lt.s32.totalorder %s19, 0
      %s413 = scalar_select %p412, %s19, 0
      %s414 = smul.addr %s411, 4
      %s415 = sadd.s32 %s413, %s414
      %s416 = smul.addr %s415, 4
      %s417 = scalar_lea.vmem %s3, %s416
      // Predicated region
      $region33: #{forward.23} parent=31 // pred_check
        %p418 = pneg %p116
      $region34: #{forward.23} parent=31 // pred_check_branch
        %420 = sbr.rel (%p418) target = $region36
      $region35: #{forward.23} parent=31 // pred_region
        _
      $region36: #{forward.23} parent=31 // pred_fallthru
        _
    $region32: #{forward.23} parent=5 // pred_fallthru
      _
    %p421 = scmp.le.s32.totalorder 2, %s9
    // Predicated region
    $region37: #{forward.23} parent=5 // pred_check
      %p422 = pneg %p421
    $region38: #{forward.23} parent=5 // pred_check_branch
      %424 = sbr.rel (%p422) target = $region40
    $region39: #{forward.23} parent=5 // pred_region
      %s425 = ssub.s32 %s9, 2
      // Predicated region
      $region41: #{forward.23} parent=39 // pred_check
        %p426 = pneg %p122
      $region42: #{forward.23} parent=39 // pred_check_branch
        %428 = sbr.rel (%p426) target = $region44
      $region43: #{forward.23} parent=39 // pred_region
        %p429 = scmp.lt.s32.totalorder %s20, 1
        %s430 = scalar_select %p429, %s20, 1
        %p431 = scmp.lt.s32.totalorder %s21, 0
        %s432 = scalar_select %p431, %s21, 0
        %s433 = smul.addr %s430, 4
        %s434 = sadd.s32 %s432, %s433
        %s435 = smul.addr %s434, 4
        %s436 = scalar_lea.vmem %s3, %s435
      $region44: #{forward.23} parent=39 // pred_fallthru
        _
    $region40: #{forward.23} parent=5 // pred_fallthru
      _
  $region6: #{forward.23} parent=0 // loop_footer
    %s13 = sadd.s32 1, %s9
  $region7: #{forward.23} parent=0 // loop_footer_branch
    %8 = sbr.rel target = $region3
  $region8: #{forward.23} parent=0 // loop_exit
    _

// kernel: forward.24
$region0: #{forward.24}
  #allocation0 [shape = 'u32[]', space=smem, size = 0x4, offset = 0x4, fixed_abs, tag = 'smem constant byte address 0x4 - core index']
  #allocation1 [shape = 'u32[144,128]{1,0:T(1,128)}', space=vmem, size = 0x12000, scoped, tag = 'internal scratch']
  %s0 = inlined_call_operand.vmem [shape: bf16[32,432], index: 0, kind: input, shape index: {}]
  %s1 = inlined_call_operand.vmem [shape: f32[32,1], index: 1, kind: input, shape index: {}]
  %s2 = inlined_call_operand.vmem [shape: bf16[2,432,256], index: 2, kind: input, shape index: {}]
  %s3 = inlined_call_operand.vmem [shape: bf16[2,32,256], index: 3, kind: output, shape index: {}]
  %s4 = sld [smem:[#allocation0]]
  $region45: #{forward.24} parent=0
    _
  %s6 = ssub.s32 1, %s4
  %s7 = scalar_select 0, %s6, %s4
  loop: start=0, step=1, limit=4
  $region2: #{forward.24} parent=0 // loop_pre_header
    _
  $region3: #{forward.24} parent=0 // loop_header
    %s9 = sphi 0, %s13
    %p10 = scmp.ge.s32.totalorder %s9, 4
    %s16 = sphi 0, %s28
    %s17 = sphi 0, %s24
    %s18 = sphi 0, %s16
    %s19 = sphi 0, %s17
    %s20 = sphi 0, %s18
    %s21 = sphi 0, %s19
    %s29 = sphi 0, %s29
    %s31 = sphi 0, %s29
    %s32 = sphi 0, %s31
    %s46 = sphi 0, %s32
    %s50 = sphi 0, %s50
    %s52 = sphi 0, %s50
    %s53 = sphi 0, %s52
    %s67 = sphi 0, %s53
    %s75 = sphi 0, %s77
    %s78 = sphi 0, %s75
    %s79 = sphi 0, %s78
    %s95 = sphi 0, %s79
    %s103 = sphi 0, %s105
    %s106 = sphi 0, %s103
    %s107 = sphi 0, %s106
    %s123 = sphi 0, %s107
  $region4: #{forward.24} parent=0 // loop_header_branch
    %12 = sbr.rel (%p10) target = $region8
  $region5: #{forward.24} parent=0 // loop_body
    %s14 = ssub.s32 %s9, 1
    %s15 = ssub.s32 %s9, 2
    %s22 = sadd.s32 1, %s17
    %p23 = scmp.ge.s32.totalorder %s22, 1
    %s24 = scalar_select %p23, 0, %s22
    %s25 = sadd.s32 1, %s16
    %s26 = scalar_select %p23, %s25, %s16
    %p27 = scmp.ge.s32.totalorder %s26, 2
    %s28 = scalar_select %p27, 0, %s26
    %s30 = sadd.s32 %s29, 1
    %p33 = scmp.eq.s32.totalorder %s9, 1
    %p34 = scmp.ne.s32.totalorder %s29, %s31
    %p35 = scmp.eq.s32.totalorder %s9, 0
    %p36 = por %p34, %p35
    %p37 = scmp.ne.s32.totalorder %s29, %s31
    %p38 = scmp.eq.s32.totalorder %s14, 1
    %p39 = por %p37, %p38
    %p40 = scmp.ne.s32.totalorder %s31, %s32
    %p41 = scmp.eq.s32.totalorder %s14, 0
    %p42 = por %p40, %p41
    %p43 = scmp.ne.s32.totalorder %s31, %s32
    %p44 = scmp.eq.s32.totalorder %s15, 1
    %p45 = por %p43, %p44
    %p47 = scmp.ne.s32.totalorder %s32, %s46
    %p48 = scmp.eq.s32.totalorder %s15, 0
    %p49 = por %p47, %p48
    %s51 = sadd.s32 %s50, 1
    %p54 = scmp.eq.s32.totalorder %s9, 1
    %p55 = scmp.ne.s32.totalorder %s50, %s52
    %p56 = scmp.eq.s32.totalorder %s9, 0
    %p57 = por %p55, %p56
    %p58 = scmp.ne.s32.totalorder %s50, %s52
    %p59 = scmp.eq.s32.totalorder %s14, 1
    %p60 = por %p58, %p59
    %p61 = scmp.ne.s32.totalorder %s52, %s53
    %p62 = scmp.eq.s32.totalorder %s14, 0
    %p63 = por %p61, %p62
    %p64 = scmp.ne.s32.totalorder %s52, %s53
    %p65 = scmp.eq.s32.totalorder %s15, 1
    %p66 = por %p64, %p65
    %p68 = scmp.ne.s32.totalorder %s53, %s67
    %p69 = scmp.eq.s32.totalorder %s15, 0
    %p70 = por %p68, %p69
    %s71 = ssub.s32 %s16, %s28
    %s72 = ssub.s32 %s17, %s24
    %s73 = sor.u32 %s71, %s72
    %p74 = scmp.eq.s32.totalorder %s73, 0
    %s76 = sadd.s32 %s75, 1
    %s77 = scalar_select %p74, %s75, %s76
    %p80 = pneg %p74
    %p81 = scmp.eq.s32.totalorder %s9, 1
    %p82 = por %p80, %p81
    %p83 = scmp.ne.s32.totalorder %s75, %s78
    %p84 = scmp.eq.s32.totalorder %s9, 0
    %p85 = por %p83, %p84
    %p86 = scmp.ne.s32.totalorder %s75, %s78
    %p87 = scmp.eq.s32.totalorder %s14, 1
    %p88 = por %p86, %p87
    %p89 = scmp.ne.s32.totalorder %s78, %s79
    %p90 = scmp.eq.s32.totalorder %s14, 0
    %p91 = por %p89, %p90
    %p92 = scmp.ne.s32.totalorder %s78, %s79
    %p93 = scmp.eq.s32.totalorder %s15, 1
    %p94 = por %p92, %p93
    %p96 = scmp.ne.s32.totalorder %s79, %s95
    %p97 = scmp.eq.s32.totalorder %s15, 0
    %p98 = por %p96, %p97
    %s99 = ssub.s32 %s16, %s28
    %s100 = ssub.s32 %s17, %s24
    %s101 = sor.u32 %s99, %s100
    %p102 = scmp.eq.s32.totalorder %s101, 0
    %s104 = sadd.s32 %s103, 1
    %s105 = scalar_select %p102, %s103, %s104
    %p108 = pneg %p102
    %p109 = scmp.eq.s32.totalorder %s9, 1
    %p110 = por %p108, %p109
    %p111 = scmp.ne.s32.totalorder %s103, %s106
    %p112 = scmp.eq.s32.totalorder %s9, 0
    %p113 = por %p111, %p112
    %p114 = scmp.ne.s32.totalorder %s103, %s106
    %p115 = scmp.eq.s32.totalorder %s14, 1
    %p116 = por %p114, %p115
    %p117 = scmp.ne.s32.totalorder %s106, %s107
    %p118 = scmp.eq.s32.totalorder %s14, 0
    %p119 = por %p117, %p118
    %p120 = scmp.ne.s32.totalorder %s106, %s107
    %p121 = scmp.eq.s32.totalorder %s15, 1
    %p122 = por %p120, %p121
    %p124 = scmp.ne.s32.totalorder %s107, %s123
    %p125 = scmp.eq.s32.totalorder %s15, 0
    %p126 = por %p124, %p125
    %p127 = scmp.le.s32.totalorder 1, %s9
    %p128 = scmp.lt.s32.totalorder %s9, 3
    %p129 = pnand %p127, %p128
    %p130 = pneg %p129
    // Predicated region
    $region9: #{forward.24} parent=5 // pred_check
      _
    $region10: #{forward.24} parent=5 // pred_check_branch
      %132 = sbr.rel (%p129) target = $region12
    $region11: #{forward.24} parent=5 // pred_region
      %s133 = ssub.s32 %s9, 1
      // Predicated region
      $region13: #{forward.24} parent=11 // pred_check
        %p134 = pneg %p42
      $region14: #{forward.24} parent=11 // pred_check_branch
        %136 = sbr.rel (%p134) target = $region16
      $region15: #{forward.24} parent=11 // pred_region
        _
      $region16: #{forward.24} parent=11 // pred_fallthru
        _
      // Predicated region
      $region17: #{forward.24} parent=11 // pred_check
        %p137 = pneg %p63
      $region18: #{forward.24} parent=11 // pred_check_branch
        %139 = sbr.rel (%p137) target = $region20
      $region19: #{forward.24} parent=11 // pred_region
        _
      $region20: #{forward.24} parent=11 // pred_fallthru
        _
    $region12: #{forward.24} parent=5 // pred_fallthru
      _
    %p140 = scmp.lt.s32.totalorder %s9, 2
    // Predicated region
    $region21: #{forward.24} parent=5 // pred_check
      %p141 = pneg %p140
    $region22: #{forward.24} parent=5 // pred_check_branch
      %143 = sbr.rel (%p141) target = $region24
    $region23: #{forward.24} parent=5 // pred_region
      // Predicated region
      $region25: #{forward.24} parent=23 // pred_check
        %p144 = pneg %p85
      $region26: #{forward.24} parent=23 // pred_check_branch
        %146 = sbr.rel (%p144) target = $region28
      $region27: #{forward.24} parent=23 // pred_region
        %s147 = smul.u32 2, %s17
        %p148 = scmp.lt.s32.totalorder %s16, 1
        %s149 = scalar_select %p148, %s16, 1
        %p150 = scmp.lt.s32.totalorder %s147, 1
        %s151 = scalar_select %p150, %s147, 1
        %s152 = smul.addr %s149, 108
        %s153 = sadd.s32 %s151, %s152
        %s154 = smul.addr %s153, 4
        %s155 = scalar_lea.vmem %s2, %s154
        %s156 = smul.u32 2, %s17
      $region28: #{forward.24} parent=23 // pred_fallthru
        _
    $region24: #{forward.24} parent=5 // pred_fallthru
      _
    %p157 = scmp.le.s32.totalorder 1, %s9
    %p158 = scmp.lt.s32.totalorder %s9, 3
    %p159 = pnand %p157, %p158
    %p160 = pneg %p159
    // Predicated region
    $region29: #{forward.24} parent=5 // pred_check
      _
    $region30: #{forward.24} parent=5 // pred_check_branch
      %162 = sbr.rel (%p159) target = $region32
    $region31: #{forward.24} parent=5 // pred_region
      %s163 = ssub.s32 %s9, 1
      %p164 = pneg %p42
      %p165 = pneg %p39
      %p166 = pneg %p63
      %p167 = pneg %p60
      %s168 = smul.u32 2, %s19
      %p169 = scmp.lt.s32.totalorder %s18, 1
      %s170 = scalar_select %p169, %s18, 1
      %p171 = scmp.lt.s32.totalorder %s168, 1
      %s172 = scalar_select %p171, %s168, 1
      %s173 = smul.addr %s170, 108
      %s174 = sadd.s32 %s172, %s173
      %s175 = smul.addr %s174, 4
      %s176 = scalar_lea.vmem %s2, %s175
      %p177 = pneg %p91
      %p178 = pneg %p88
      %p179 = pneg %p119
      %p180 = pneg %p116
      %s181 = smul.u32 2, %s19
      %p182 = scmp.lt.s32.totalorder %s18, 1
      %s183 = scalar_select %p182, %s18, 1
      %p184 = scmp.lt.s32.totalorder %s181, 1
      %s185 = scalar_select %p184, %s181, 1
      %s186 = smul.addr %s183, 8
      %s187 = sadd.s32 %s185, %s186
      %s188 = smul.addr %s187, 4
      %s189 = scalar_lea.vmem %s3, %s188
      %s190 = smul.u32 2, %s19
      %p191 = scmp.lt.s32.totalorder %s18, 1
      %s192 = scalar_select %p191, %s18, 1
      %p193 = scmp.lt.s32.totalorder %s190, 1
      %s194 = scalar_select %p193, %s190, 1
      %s195 = smul.addr %s192, 108
      %s196 = sadd.s32 %s194, %s195
      %s197 = smul.addr %s196, 4
      %s198 = scalar_lea.vmem %s2, %s197
      %s199 = smul.u32 2, %s19
      %s200 = smul.u32 2, %s19
      %p201 = scmp.lt.s32.totalorder %s18, 1
      %s202 = scalar_select %p201, %s18, 1
      %p203 = scmp.lt.s32.totalorder %s200, 1
      %s204 = scalar_select %p203, %s200, 1
      %s205 = smul.addr %s202, 8
      %s206 = sadd.s32 %s204, %s205
      %s207 = smul.addr %s206, 4
      %s208 = scalar_lea.vmem %s3, %s207
      %s209 = smul.u32 2, %s19
      %v211 = vld [vmem:[%s0] sm:$0xff]
      %v212 = vld [vmem:[%s0 + $0x8] sm:$0xff]
      %v213 = vld [vmem:[%s0 + $0x10] sm:$0xff]
      %v214 = vld [vmem:[%s0 + $0x18] sm:$0xff]
      %v215 = vld [vmem:[%s0 + $0x20] sm:$0xff]
      %v216 = vld [vmem:[%s0 + $0x28] sm:$0xff]
      %v217 = vld [vmem:[%s0 + $0x30] sm:$0xff]
      %v218 = vld [vmem:[%s0 + $0x38] sm:$0xff]
      %v219 = vld [vmem:[%s198] sm:$0xff]
      %v220 = vld [vmem:[%s198 + $0x8] sm:$0xff]
      %v221 = vld [vmem:[%s198 + $0x10] sm:$0xff]
      %v222 = vld [vmem:[%s198 + $0x18] sm:$0xff]
      %v223 = vld [vmem:[%s198 + $0x20] sm:$0xff]
      %v224 = vld [vmem:[%s198 + $0x28] sm:$0xff]
      %v225 = vld [vmem:[%s198 + $0x30] sm:$0xff]
      %v226 = vld [vmem:[%s198 + $0x38] sm:$0xff]
      %v227 = vld [vmem:[%s198 + $0x40] sm:$0xff]
      %v228 = vld [vmem:[%s198 + $0x48] sm:$0xff]
      %v229 = vld [vmem:[%s198 + $0x50] sm:$0xff]
      %v230 = vld [vmem:[%s198 + $0x58] sm:$0xff]
      %v231 = vld [vmem:[%s198 + $0x60] sm:$0xff]
      %v232 = vld [vmem:[%s198 + $0x68] sm:$0xff]
      %v233 = vld [vmem:[%s198 + $0x70] sm:$0xff]
      %v234 = vld [vmem:[%s198 + $0x78] sm:$0xff]
      %v235 = vld [vmem:[%s198 + $0x80] sm:$0xff]
      %v236 = vld [vmem:[%s198 + $0x88] sm:$0xff]
      %v237 = vld [vmem:[%s198 + $0x90] sm:$0xff]
      %v238 = vld [vmem:[%s198 + $0x98] sm:$0xff]
      %v239 = vld [vmem:[%s198 + $0xa0] sm:$0xff]
      %v240 = vld [vmem:[%s198 + $0xa8] sm:$0xff]
      %v241 = vld [vmem:[%s198 + $0xb0] sm:$0xff]
      %v242 = vld [vmem:[%s198 + $0xb8] sm:$0xff]
      %v243 = vld [vmem:[%s198 + $0xc0] sm:$0xff]
      %v244 = vld [vmem:[%s198 + $0xc8] sm:$0xff]
      %v245 = vld [vmem:[%s198 + $0xd0] sm:$0xff]
      %v246 = vld [vmem:[%s198 + $0xd8] sm:$0xff]
      %v247 = vld [vmem:[%s198 + $0xe0] sm:$0xff]
      %v248 = vld [vmem:[%s198 + $0xe8] sm:$0xff]
      %v249 = vld [vmem:[%s198 + $0xf0] sm:$0xff]
      %v250 = vld [vmem:[%s198 + $0xf8] sm:$0xff]
      %v251 = vld [vmem:[%s198 + $0x100] sm:$0xff]
      %v252 = vld [vmem:[%s198 + $0x108] sm:$0xff]
      %v253 = vld [vmem:[%s198 + $0x110] sm:$0xff]
      %v254 = vld [vmem:[%s198 + $0x118] sm:$0xff]
      %v255 = vld [vmem:[%s198 + $0x120] sm:$0xff]
      %v256 = vld [vmem:[%s198 + $0x128] sm:$0xff]
      %v257 = vld [vmem:[%s198 + $0x130] sm:$0xff]
      %v258 = vld [vmem:[%s198 + $0x138] sm:$0xff]
      %v259 = vld [vmem:[%s198 + $0x140] sm:$0xff]
      %v260 = vld [vmem:[%s198 + $0x148] sm:$0xff]
      %v261 = vld [vmem:[%s198 + $0x150] sm:$0xff]
      %v262 = vld [vmem:[%s198 + $0x158] sm:$0xff]
      %v263 = vld [vmem:[%s198 + $0x160] sm:$0xff]
      %v264 = vld [vmem:[%s198 + $0x168] sm:$0xff]
      %v265 = vld [vmem:[%s198 + $0x170] sm:$0xff]
      %v266 = vld [vmem:[%s198 + $0x178] sm:$0xff]
      %v267 = vld [vmem:[%s198 + $0x180] sm:$0xff]
      %v268 = vld [vmem:[%s198 + $0x188] sm:$0xff]
      %v269 = vld [vmem:[%s198 + $0x190] sm:$0xff]
      %v270 = vld [vmem:[%s198 + $0x198] sm:$0xff]
      %v271 = vld [vmem:[%s198 + $0x1a0] sm:$0xff]
      %v272 = vld [vmem:[%s198 + $0x1a8] sm:$0xff]
      %v273 = vld [vmem:[%s1] sm:$0xff]
      %v274 = vld [vmem:[%s1 + $0x8] sm:$0xff]
      %v275 = vld [vmem:[%s1 + $0x10] sm:$0xff]
      %v276 = vld [vmem:[%s1 + $0x18] sm:$0xff]
      %278 = vset.pattern.permute.xlu0 0
      %279 = vperm.xlu0 %278, %v273
      %v280 = vpop.permute.xlu0 %279
      %283 = vset.pattern.permute.xlu0 0
      %284 = vperm.xlu0 %283, %v274
      %v285 = vpop.permute.xlu0 %284
      %288 = vset.pattern.permute.xlu0 0
      %289 = vperm.xlu0 %288, %v275
      %v290 = vpop.permute.xlu0 %289
      %293 = vset.pattern.permute.xlu0 0
      %294 = vperm.xlu0 %293, %v276
      %v295 = vpop.permute.xlu0 %294
      %v305 = vunpack.c.l.b16 %v211
      %v306 = vunpack.c.h.b16 %v211
      %v307 = vunpack.c.l.b16 %v212
      %v308 = vunpack.c.h.b16 %v212
      %v309 = vunpack.c.l.b16 %v213
      %v310 = vunpack.c.h.b16 %v213
      %v311 = vunpack.c.l.b16 %v214
      %v312 = vunpack.c.h.b16 %v214
      %v313 = vunpack.c.l.b16 %v215
      %v314 = vunpack.c.h.b16 %v215
      %v315 = vunpack.c.l.b16 %v216
      %v316 = vunpack.c.h.b16 %v216
      %v317 = vunpack.c.l.b16 %v217
      %v318 = vunpack.c.h.b16 %v217
      %v319 = vunpack.c.l.b16 %v218
      %v320 = vunpack.c.h.b16 %v218
      %v321 = vpack.c.b16 %v309, %v305
      %v322 = vpack.c.b16 %v310, %v306
      %v323 = vpack.c.b16 %v311, %v307
      %v324 = vpack.c.b16 %v312, %v308
      %v325 = vpack.c.b16 %v317, %v313
      %v326 = vpack.c.b16 %v318, %v314
      %v327 = vpack.c.b16 %v319, %v315
      %v328 = vpack.c.b16 %v320, %v316
      %v389 = vunpack.c.l.b16 %v219
      %v390 = vunpack.c.h.b16 %v219
      %v391 = vunpack.c.l.b16 %v220
      %v392 = vunpack.c.h.b16 %v220
      %v393 = vunpack.c.l.b16 %v221
      %v394 = vunpack.c.h.b16 %v221
      %v395 = vunpack.c.l.b16 %v222
      %v396 = vunpack.c.h.b16 %v222
      %v397 = vunpack.c.l.b16 %v223
      %v398 = vunpack.c.h.b16 %v223
      %v399 = vunpack.c.l.b16 %v224
      %v400 = vunpack.c.h.b16 %v224
      %v401 = vunpack.c.l.b16 %v225
      %v402 = vunpack.c.h.b16 %v225
      %v403 = vunpack.c.l.b16 %v226
      %v404 = vunpack.c.h.b16 %v226
      %v405 = vunpack.c.l.b16 %v227
      %v406 = vunpack.c.h.b16 %v227
      %v407 = vunpack.c.l.b16 %v228
      %v408 = vunpack.c.h.b16 %v228
      %v409 = vunpack.c.l.b16 %v229
      %v410 = vunpack.c.h.b16 %v229
      %v411 = vunpack.c.l.b16 %v230
      %v412 = vunpack.c.h.b16 %v230
      %v413 = vunpack.c.l.b16 %v231
      %v414 = vunpack.c.h.b16 %v231
      %v415 = vunpack.c.l.b16 %v232
      %v416 = vunpack.c.h.b16 %v232
      %v417 = vunpack.c.l.b16 %v233
      %v418 = vunpack.c.h.b16 %v233
      %v419 = vunpack.c.l.b16 %v234
      %v420 = vunpack.c.h.b16 %v234
      %v421 = vunpack.c.l.b16 %v235
      %v422 = vunpack.c.h.b16 %v235
      %v423 = vunpack.c.l.b16 %v236
      %v424 = vunpack.c.h.b16 %v236
      %v425 = vunpack.c.l.b16 %v237
      %v426 = vunpack.c.h.b16 %v237
      %v427 = vunpack.c.l.b16 %v238
      %v428 = vunpack.c.h.b16 %v238
      %v429 = vunpack.c.l.b16 %v239
      %v430 = vunpack.c.h.b16 %v239
      %v431 = vunpack.c.l.b16 %v240
      %v432 = vunpack.c.h.b16 %v240
      %v433 = vunpack.c.l.b16 %v241
      %v434 = vunpack.c.h.b16 %v241
      %v435 = vunpack.c.l.b16 %v242
      %v436 = vunpack.c.h.b16 %v242
      %v437 = vunpack.c.l.b16 %v243
      %v438 = vunpack.c.h.b16 %v243
      %v439 = vunpack.c.l.b16 %v244
      %v440 = vunpack.c.h.b16 %v244
      %v441 = vunpack.c.l.b16 %v245
      %v442 = vunpack.c.h.b16 %v245
      %v443 = vunpack.c.l.b16 %v246
      %v444 = vunpack.c.h.b16 %v246
      %v445 = vunpack.c.l.b16 %v247
      %v446 = vunpack.c.h.b16 %v247
      %v447 = vunpack.c.l.b16 %v248
      %v448 = vunpack.c.h.b16 %v248
      %v449 = vunpack.c.l.b16 %v249
      %v450 = vunpack.c.h.b16 %v249
      %v451 = vunpack.c.l.b16 %v250
      %v452 = vunpack.c.h.b16 %v250
      %v453 = vunpack.c.l.b16 %v251
      %v454 = vunpack.c.h.b16 %v251
      %v455 = vunpack.c.l.b16 %v252
      %v456 = vunpack.c.h.b16 %v252
      %v457 = vunpack.c.l.b16 %v253
      %v458 = vunpack.c.h.b16 %v253
      %v459 = vunpack.c.l.b16 %v254
      %v460 = vunpack.c.h.b16 %v254
      %v461 = vunpack.c.l.b16 %v255
      %v462 = vunpack.c.h.b16 %v255
      %v463 = vunpack.c.l.b16 %v256
      %v464 = vunpack.c.h.b16 %v256
      %v465 = vunpack.c.l.b16 %v257
      %v466 = vunpack.c.h.b16 %v257
      %v467 = vunpack.c.l.b16 %v258
      %v468 = vunpack.c.h.b16 %v258
      %v469 = vunpack.c.l.b16 %v259
      %v470 = vunpack.c.h.b16 %v259
      %v471 = vunpack.c.l.b16 %v260
      %v472 = vunpack.c.h.b16 %v260
      %v473 = vunpack.c.l.b16 %v261
      %v474 = vunpack.c.h.b16 %v261
      %v475 = vunpack.c.l.b16 %v262
      %v476 = vunpack.c.h.b16 %v262
      %v477 = vunpack.c.l.b16 %v263
      %v478 = vunpack.c.h.b16 %v263
      %v479 = vunpack.c.l.b16 %v264
      %v480 = vunpack.c.h.b16 %v264
      %v481 = vunpack.c.l.b16 %v265
      %v482 = vunpack.c.h.b16 %v265
      %v483 = vunpack.c.l.b16 %v266
      %v484 = vunpack.c.h.b16 %v266
      %v485 = vunpack.c.l.b16 %v267
      %v486 = vunpack.c.h.b16 %v267
      %v487 = vunpack.c.l.b16 %v268
      %v488 = vunpack.c.h.b16 %v268
      %v489 = vunpack.c.l.b16 %v269
      %v490 = vunpack.c.h.b16 %v269
      %v491 = vunpack.c.l.b16 %v270
      %v492 = vunpack.c.h.b16 %v270
      %v493 = vunpack.c.l.b16 %v271
      %v494 = vunpack.c.h.b16 %v271
      %v495 = vunpack.c.l.b16 %v272
      %v496 = vunpack.c.h.b16 %v272
      %v497 = vpack.c.b16 %v391, %v389
      %v498 = vpack.c.b16 %v392, %v390
      %v499 = vpack.c.b16 %v395, %v393
      %v500 = vpack.c.b16 %v396, %v394
      %v501 = vpack.c.b16 %v399, %v397
      %v502 = vpack.c.b16 %v400, %v398
      %v503 = vpack.c.b16 %v403, %v401
      %v504 = vpack.c.b16 %v404, %v402
      %v505 = vpack.c.b16 %v407, %v405
      %v506 = vpack.c.b16 %v408, %v406
      %v507 = vpack.c.b16 %v411, %v409
      %v508 = vpack.c.b16 %v412, %v410
      %v509 = vpack.c.b16 %v415, %v413
      %v510 = vpack.c.b16 %v416, %v414
      %v511 = vpack.c.b16 %v419, %v417
      %v512 = vpack.c.b16 %v420, %v418
      %v513 = vpack.c.b16 %v423, %v421
      %v514 = vpack.c.b16 %v424, %v422
      %v515 = vpack.c.b16 %v427, %v425
      %v516 = vpack.c.b16 %v428, %v426
      %v517 = vpack.c.b16 %v431, %v429
      %v518 = vpack.c.b16 %v432, %v430
      %v519 = vpack.c.b16 %v435, %v433
      %v520 = vpack.c.b16 %v436, %v434
      %v521 = vpack.c.b16 %v439, %v437
      %v522 = vpack.c.b16 %v440, %v438
      %v523 = vpack.c.b16 %v443, %v441
      %v524 = vpack.c.b16 %v444, %v442
      %v525 = vpack.c.b16 %v447, %v445
      %v526 = vpack.c.b16 %v448, %v446
      %v527 = vpack.c.b16 %v451, %v449
      %v528 = vpack.c.b16 %v452, %v450
      %v529 = vpack.c.b16 %v455, %v453
      %v530 = vpack.c.b16 %v456, %v454
      %v531 = vpack.c.b16 %v459, %v457
      %v532 = vpack.c.b16 %v460, %v458
      %v533 = vpack.c.b16 %v463, %v461
      %v534 = vpack.c.b16 %v464, %v462
      %v535 = vpack.c.b16 %v467, %v465
      %v536 = vpack.c.b16 %v468, %v466
      %v537 = vpack.c.b16 %v471, %v469
      %v538 = vpack.c.b16 %v472, %v470
      %v539 = vpack.c.b16 %v475, %v473
      %v540 = vpack.c.b16 %v476, %v474
      %v541 = vpack.c.b16 %v479, %v477
      %v542 = vpack.c.b16 %v480, %v478
      %v543 = vpack.c.b16 %v483, %v481
      %v544 = vpack.c.b16 %v484, %v482
      %v545 = vpack.c.b16 %v487, %v485
      %v546 = vpack.c.b16 %v488, %v486
      %v547 = vpack.c.b16 %v491, %v489
      %v548 = vpack.c.b16 %v492, %v490
      %v549 = vpack.c.b16 %v495, %v493
      %v550 = vpack.c.b16 %v496, %v494
      %vm605 = vcmask 392192
      %v607 = vsel %vm605, %v324, 0
      %v610 = vsel %vm605, %v328, 0
      %612 = vmatprep.subr.bf16.mxu0 %v512
      %613 = vmatpush1.bf16.msra.mxu0 %v511
      %614 = vmatprep.subr.bf16.mxu0 %v510
      %615 = vmatpush1.bf16.msra.mxu0 %v509
      %616 = vmatprep.subr.bf16.mxu0 %v508
      %617 = vmatpush1.bf16.msra.mxu0 %v507
      %618 = vmatprep.subr.bf16.mxu0 %v506
      %619 = vmatpush1.bf16.msra.mxu0 %v505
      %620 = vmatprep.subr.bf16.mxu0 %v504
      %621 = vmatpush1.bf16.msra.mxu0 %v503
      %622 = vmatprep.subr.bf16.mxu0 %v502
      %623 = vmatpush1.bf16.msra.mxu0 %v501
      %624 = vmatprep.subr.bf16.mxu0 %v500
      %625 = vmatpush1.bf16.msra.mxu0 %v499
      %626 = vmatprep.subr.bf16.mxu0 %v498
      %627 = vmatpush1.bf16.msra.mxu0 %v497
      %628 = vmatprep.subr.bf16.mxu0 %v528
      %629 = vmatpush2.bf16.msra.mxu0 %v527
      %630 = vmatprep.subr.bf16.mxu0 %v526
      %631 = vmatpush2.bf16.msra.mxu0 %v525
      %632 = vmatprep.subr.bf16.mxu0 %v524
      %633 = vmatpush2.bf16.msra.mxu0 %v523
      %634 = vmatprep.subr.bf16.mxu0 %v522
      %635 = vmatpush2.bf16.msra.mxu0 %v521
      %636 = vmatprep.subr.bf16.mxu0 %v520
      %637 = vmatpush2.bf16.msra.mxu0 %v519
      %638 = vmatprep.subr.bf16.mxu0 %v518
      %639 = vmatpush2.bf16.msra.mxu0 %v517
      %640 = vmatprep.subr.bf16.mxu0 %v516
      %641 = vmatpush2.bf16.msra.mxu0 %v515
      %642 = vmatprep.subr.bf16.mxu0 %v514
      %643 = vmatpush2.bf16.msra.mxu0 %v513
      %644 = vmatprep.mubr.bf16.mxu0 %v322
      %645 = vmatmul.mubr.bf16.gmra.mxu0 %v321
      %v646 = vpop.f32.mrf.mxu0
      %v647 = vadd.f32 %v280, %v646
      %v648 = vpop.f32.mrf.mxu0
      %v649 = vadd.f32 %v280, %v648
      %v650 = vpop.f32.mrf.mxu0
      %v651 = vadd.f32 %v285, %v650
      %v652 = vpop.f32.mrf.mxu0
      %v653 = vadd.f32 %v285, %v652
      %654 = vmatprep.mubr.bf16.mxu0 %v326
      %655 = vmatmul.mubr.bf16.gmra.mxu0 %v325
      %v656 = vpop.f32.mrf.mxu0
      %v657 = vadd.f32 %v290, %v656
      %v658 = vpop.f32.mrf.mxu0
      %v659 = vadd.f32 %v290, %v658
      %v660 = vpop.f32.mrf.mxu0
      %v661 = vadd.f32 %v295, %v660
      %v662 = vpop.f32.mrf.mxu0
      %v663 = vadd.f32 %v295, %v662
      %664 = vdwg.mxu0
      %665 = vmatprep.subr.bf16.mxu0 %v544
      %666 = vmatpush1.bf16.msra.mxu0 %v543
      %667 = vmatprep.subr.bf16.mxu0 %v542
      %668 = vmatpush1.bf16.msra.mxu0 %v541
      %669 = vmatprep.subr.bf16.mxu0 %v540
      %670 = vmatpush1.bf16.msra.mxu0 %v539
      %671 = vmatprep.subr.bf16.mxu0 %v538
      %672 = vmatpush1.bf16.msra.mxu0 %v537
      %673 = vmatprep.subr.bf16.mxu0 %v536
      %674 = vmatpush1.bf16.msra.mxu0 %v535
      %675 = vmatprep.subr.bf16.mxu0 %v534
      %676 = vmatpush1.bf16.msra.mxu0 %v533
      %677 = vmatprep.subr.bf16.mxu0 %v532
      %678 = vmatpush1.bf16.msra.mxu0 %v531
      %679 = vmatprep.subr.bf16.mxu0 %v530
      %680 = vmatpush1.bf16.msra.mxu0 %v529
      %681 = vmatprep.subr.bf16.mxu0 0
      %682 = vmatpush2.bf16.msra.mxu0 0
      %683 = vmatprep.subr.bf16.mxu0 0
      %684 = vmatpush2.bf16.msra.mxu0 0
      %685 = vmatprep.subr.bf16.mxu0 0
      %686 = vmatpush2.bf16.msra.mxu0 0
      %687 = vmatprep.subr.bf16.mxu0 0
      %688 = vmatpush2.bf16.msra.mxu0 0
      %689 = vmatprep.subr.bf16.mxu0 0
      %690 = vmatpush2.bf16.msra.mxu0 0
      %691 = vmatprep.subr.bf16.mxu0 %v550
      %692 = vmatpush2.bf16.msra.mxu0 %v549
      %693 = vmatprep.subr.bf16.mxu0 %v548
      %694 = vmatpush2.bf16.msra.mxu0 %v547
      %695 = vmatprep.subr.bf16.mxu0 %v546
      %696 = vmatpush2.bf16.msra.mxu0 %v545
      %697 = vmatprep.mubr.bf16.mxu0 %v607
      %698 = vmatmul.mubr.bf16.gmra.mxu0 %v323
      %v699 = vpop.f32.mrf.mxu0
      %v700 = vadd.f32 %v647, %v699
      %v701 = vpop.f32.mrf.mxu0
      %v702 = vadd.f32 %v649, %v701
      %v703 = vpop.f32.mrf.mxu0
      %v704 = vadd.f32 %v651, %v703
      %v705 = vpop.f32.mrf.mxu0
      %v706 = vadd.f32 %v653, %v705
      %707 = vmatprep.mubr.bf16.mxu0 %v610
      %708 = vmatmul.mubr.bf16.gmra.mxu0 %v327
      %v709 = vpop.f32.mrf.mxu0
      %v710 = vadd.f32 %v657, %v709
      %v711 = vpop.f32.mrf.mxu0
      %v712 = vadd.f32 %v659, %v711
      %v713 = vpop.f32.mrf.mxu0
      %v714 = vadd.f32 %v661, %v713
      %v715 = vpop.f32.mrf.mxu0
      %v716 = vadd.f32 %v663, %v715
      %717 = vdwg.mxu0
      %v718 = vmax.f32 %v700, 0.0
      %v719 = vmax.f32 %v702, 0.0
      %v720 = vmax.f32 %v704, 0.0
      %v721 = vmax.f32 %v706, 0.0
      %v722 = vmax.f32 %v710, 0.0
      %v723 = vmax.f32 %v712, 0.0
      %v724 = vmax.f32 %v714, 0.0
      %v725 = vmax.f32 %v716, 0.0
      %v726 = vpack.c.bf16 %v720, %v718
      %v727 = vpack.c.bf16 %v721, %v719
      %v728 = vpack.c.bf16 %v724, %v722
      %v729 = vpack.c.bf16 %v725, %v723
      %v734 = vunpack.c.l.b16 %v726
      %v735 = vunpack.c.l.b16 %v727
      %v736 = vunpack.c.h.b16 %v726
      %v737 = vunpack.c.h.b16 %v727
      %v738 = vunpack.c.l.b16 %v728
      %v739 = vunpack.c.l.b16 %v729
      %v740 = vunpack.c.h.b16 %v728
      %v741 = vunpack.c.h.b16 %v729
      %v742 = vpack.c.b16 %v735, %v734
      %v743 = vpack.c.b16 %v737, %v736
      %v744 = vpack.c.b16 %v739, %v738
      %v745 = vpack.c.b16 %v741, %v740
      %750 = vst [vmem:[%s208] sm:$0xff] %v742
      %751 = vst [vmem:[%s208 + $0x8] sm:$0xff] %v743
      %752 = vst [vmem:[%s208 + $0x10] sm:$0xff] %v744
      %753 = vst [vmem:[%s208 + $0x18] sm:$0xff] %v745
      %s754 = smul.u32 2, %s19
      %p755 = scmp.lt.s32.totalorder %s18, 1
      %s756 = scalar_select %p755, %s18, 1
      %p757 = scmp.lt.s32.totalorder %s754, 1
      %s758 = scalar_select %p757, %s754, 1
      %s759 = smul.addr %s756, 8
      %s760 = sadd.s32 %s758, %s759
      %s761 = smul.addr %s760, 4
      %s762 = scalar_lea.vmem %s3, %s761
      // Predicated region
      $region33: #{forward.24} parent=31 // pred_check
        %p763 = pneg %p116
      $region34: #{forward.24} parent=31 // pred_check_branch
        %765 = sbr.rel (%p763) target = $region36
      $region35: #{forward.24} parent=31 // pred_region
        %s766 = smul.u32 2, %s19
      $region36: #{forward.24} parent=31 // pred_fallthru
        _
    $region32: #{forward.24} parent=5 // pred_fallthru
      _
    %p767 = scmp.le.s32.totalorder 2, %s9
    // Predicated region
    $region37: #{forward.24} parent=5 // pred_check
      %p768 = pneg %p767
    $region38: #{forward.24} parent=5 // pred_check_branch
      %770 = sbr.rel (%p768) target = $region40
    $region39: #{forward.24} parent=5 // pred_region
      %s771 = ssub.s32 %s9, 2
      // Predicated region
      $region41: #{forward.24} parent=39 // pred_check
        %p772 = pneg %p122
      $region42: #{forward.24} parent=39 // pred_check_branch
        %774 = sbr.rel (%p772) target = $region44
      $region43: #{forward.24} parent=39 // pred_region
        %s775 = smul.u32 2, %s21
        %p776 = scmp.lt.s32.totalorder %s20, 1
        %s777 = scalar_select %p776, %s20, 1
        %p778 = scmp.lt.s32.totalorder %s775, 1
        %s779 = scalar_select %p778, %s775, 1
        %s780 = smul.addr %s777, 8
        %s781 = sadd.s32 %s779, %s780
        %s782 = smul.addr %s781, 4
        %s783 = scalar_lea.vmem %s3, %s782
      $region44: #{forward.24} parent=39 // pred_fallthru
        _
    $region40: #{forward.24} parent=5 // pred_fallthru
      _
  $region6: #{forward.24} parent=0 // loop_footer
    %s13 = sadd.s32 1, %s9
  $region7: #{forward.24} parent=0 // loop_footer_branch
    %8 = sbr.rel target = $region3
  $region8: #{forward.24} parent=0 // loop_exit
    _

// kernel: forward.25
$region0: #{forward.25}
  #allocation0 [shape = 'u32[]', space=smem, size = 0x4, offset = 0x4, fixed_abs, tag = 'smem constant byte address 0x4 - core index']
  #allocation1 [shape = 'u32[144,128]{1,0:T(1,128)}', space=vmem, size = 0x12000, scoped, tag = 'internal scratch']
  %s0 = inlined_call_operand.vmem [shape: bf16[16,288], index: 0, kind: input, shape index: {}]
  %s1 = inlined_call_operand.vmem [shape: f32[16,1], index: 1, kind: input, shape index: {}]
  %s2 = inlined_call_operand.vmem [shape: f32[6,16], index: 2, kind: input, shape index: {}]
  %s3 = inlined_call_operand.vmem [shape: f32[6,1], index: 3, kind: input, shape index: {}]
  %s4 = inlined_call_operand.vmem [shape: bf16[2,288,256], index: 4, kind: input, shape index: {}]
  %s5 = inlined_call_operand.vmem [shape: f32[2,16,256], index: 5, kind: output, shape index: {0}]
  %s6 = inlined_call_operand.vmem [shape: f32[2,6,256], index: 6, kind: output, shape index: {1}]
  %7 = xla_tuple %s5, %s6
  %s8 = sld [smem:[#allocation0]]
  $region61: #{forward.25} parent=0
    _
  %s10 = ssub.s32 1, %s8
  %s11 = scalar_select 0, %s10, %s8
  loop: start=0, step=1, limit=4
  $region2: #{forward.25} parent=0 // loop_pre_header
    _
  $region3: #{forward.25} parent=0 // loop_header
    %s13 = sphi 0, %s17
    %p14 = scmp.ge.s32.totalorder %s13, 4
    %s20 = sphi 0, %s32
    %s21 = sphi 0, %s28
    %s22 = sphi 0, %s20
    %s23 = sphi 0, %s21
    %s24 = sphi 0, %s22
    %s25 = sphi 0, %s23
    %s33 = sphi 0, %s33
    %s35 = sphi 0, %s33
    %s36 = sphi 0, %s35
    %s50 = sphi 0, %s36
    %s54 = sphi 0, %s54
    %s56 = sphi 0, %s54
    %s57 = sphi 0, %s56
    %s71 = sphi 0, %s57
    %s75 = sphi 0, %s75
    %s77 = sphi 0, %s75
    %s78 = sphi 0, %s77
    %s92 = sphi 0, %s78
    %s96 = sphi 0, %s96
    %s98 = sphi 0, %s96
    %s99 = sphi 0, %s98
    %s113 = sphi 0, %s99
    %s121 = sphi 0, %s123
    %s124 = sphi 0, %s121
    %s125 = sphi 0, %s124
    %s141 = sphi 0, %s125
    %s149 = sphi 0, %s151
    %s152 = sphi 0, %s149
    %s153 = sphi 0, %s152
    %s169 = sphi 0, %s153
    %s177 = sphi 0, %s179
    %s180 = sphi 0, %s177
    %s181 = sphi 0, %s180
    %s197 = sphi 0, %s181
  $region4: #{forward.25} parent=0 // loop_header_branch
    %16 = sbr.rel (%p14) target = $region8
  $region5: #{forward.25} parent=0 // loop_body
    %s18 = ssub.s32 %s13, 1
    %s19 = ssub.s32 %s13, 2
    %s26 = sadd.s32 1, %s21
    %p27 = scmp.ge.s32.totalorder %s26, 1
    %s28 = scalar_select %p27, 0, %s26
    %s29 = sadd.s32 1, %s20
    %s30 = scalar_select %p27, %s29, %s20
    %p31 = scmp.ge.s32.totalorder %s30, 2
    %s32 = scalar_select %p31, 0, %s30
    %s34 = sadd.s32 %s33, 1
    %p37 = scmp.eq.s32.totalorder %s13, 1
    %p38 = scmp.ne.s32.totalorder %s33, %s35
    %p39 = scmp.eq.s32.totalorder %s13, 0
    %p40 = por %p38, %p39
    %p41 = scmp.ne.s32.totalorder %s33, %s35
    %p42 = scmp.eq.s32.totalorder %s18, 1
    %p43 = por %p41, %p42
    %p44 = scmp.ne.s32.totalorder %s35, %s36
    %p45 = scmp.eq.s32.totalorder %s18, 0
    %p46 = por %p44, %p45
    %p47 = scmp.ne.s32.totalorder %s35, %s36
    %p48 = scmp.eq.s32.totalorder %s19, 1
    %p49 = por %p47, %p48
    %p51 = scmp.ne.s32.totalorder %s36, %s50
    %p52 = scmp.eq.s32.totalorder %s19, 0
    %p53 = por %p51, %p52
    %s55 = sadd.s32 %s54, 1
    %p58 = scmp.eq.s32.totalorder %s13, 1
    %p59 = scmp.ne.s32.totalorder %s54, %s56
    %p60 = scmp.eq.s32.totalorder %s13, 0
    %p61 = por %p59, %p60
    %p62 = scmp.ne.s32.totalorder %s54, %s56
    %p63 = scmp.eq.s32.totalorder %s18, 1
    %p64 = por %p62, %p63
    %p65 = scmp.ne.s32.totalorder %s56, %s57
    %p66 = scmp.eq.s32.totalorder %s18, 0
    %p67 = por %p65, %p66
    %p68 = scmp.ne.s32.totalorder %s56, %s57
    %p69 = scmp.eq.s32.totalorder %s19, 1
    %p70 = por %p68, %p69
    %p72 = scmp.ne.s32.totalorder %s57, %s71
    %p73 = scmp.eq.s32.totalorder %s19, 0
    %p74 = por %p72, %p73
    %s76 = sadd.s32 %s75, 1
    %p79 = scmp.eq.s32.totalorder %s13, 1
    %p80 = scmp.ne.s32.totalorder %s75, %s77
    %p81 = scmp.eq.s32.totalorder %s13, 0
    %p82 = por %p80, %p81
    %p83 = scmp.ne.s32.totalorder %s75, %s77
    %p84 = scmp.eq.s32.totalorder %s18, 1
    %p85 = por %p83, %p84
    %p86 = scmp.ne.s32.totalorder %s77, %s78
    %p87 = scmp.eq.s32.totalorder %s18, 0
    %p88 = por %p86, %p87
    %p89 = scmp.ne.s32.totalorder %s77, %s78
    %p90 = scmp.eq.s32.totalorder %s19, 1
    %p91 = por %p89, %p90
    %p93 = scmp.ne.s32.totalorder %s78, %s92
    %p94 = scmp.eq.s32.totalorder %s19, 0
    %p95 = por %p93, %p94
    %s97 = sadd.s32 %s96, 1
    %p100 = scmp.eq.s32.totalorder %s13, 1
    %p101 = scmp.ne.s32.totalorder %s96, %s98
    %p102 = scmp.eq.s32.totalorder %s13, 0
    %p103 = por %p101, %p102
    %p104 = scmp.ne.s32.totalorder %s96, %s98
    %p105 = scmp.eq.s32.totalorder %s18, 1
    %p106 = por %p104, %p105
    %p107 = scmp.ne.s32.totalorder %s98, %s99
    %p108 = scmp.eq.s32.totalorder %s18, 0
    %p109 = por %p107, %p108
    %p110 = scmp.ne.s32.totalorder %s98, %s99
    %p111 = scmp.eq.s32.totalorder %s19, 1
    %p112 = por %p110, %p111
    %p114 = scmp.ne.s32.totalorder %s99, %s113
    %p115 = scmp.eq.s32.totalorder %s19, 0
    %p116 = por %p114, %p115
    %s117 = ssub.s32 %s20, %s32
    %s118 = ssub.s32 %s21, %s28
    %s119 = sor.u32 %s117, %s118
    %p120 = scmp.eq.s32.totalorder %s119, 0
    %s122 = sadd.s32 %s121, 1
    %s123 = scalar_select %p120, %s121, %s122
    %p126 = pneg %p120
    %p127 = scmp.eq.s32.totalorder %s13, 1
    %p128 = por %p126, %p127
    %p129 = scmp.ne.s32.totalorder %s121, %s124
    %p130 = scmp.eq.s32.totalorder %s13, 0
    %p131 = por %p129, %p130
    %p132 = scmp.ne.s32.totalorder %s121, %s124
    %p133 = scmp.eq.s32.totalorder %s18, 1
    %p134 = por %p132, %p133
    %p135 = scmp.ne.s32.totalorder %s124, %s125
    %p136 = scmp.eq.s32.totalorder %s18, 0
    %p137 = por %p135, %p136
    %p138 = scmp.ne.s32.totalorder %s124, %s125
    %p139 = scmp.eq.s32.totalorder %s19, 1
    %p140 = por %p138, %p139
    %p142 = scmp.ne.s32.totalorder %s125, %s141
    %p143 = scmp.eq.s32.totalorder %s19, 0
    %p144 = por %p142, %p143
    %s145 = ssub.s32 %s20, %s32
    %s146 = ssub.s32 %s21, %s28
    %s147 = sor.u32 %s145, %s146
    %p148 = scmp.eq.s32.totalorder %s147, 0
    %s150 = sadd.s32 %s149, 1
    %s151 = scalar_select %p148, %s149, %s150
    %p154 = pneg %p148
    %p155 = scmp.eq.s32.totalorder %s13, 1
    %p156 = por %p154, %p155
    %p157 = scmp.ne.s32.totalorder %s149, %s152
    %p158 = scmp.eq.s32.totalorder %s13, 0
    %p159 = por %p157, %p158
    %p160 = scmp.ne.s32.totalorder %s149, %s152
    %p161 = scmp.eq.s32.totalorder %s18, 1
    %p162 = por %p160, %p161
    %p163 = scmp.ne.s32.totalorder %s152, %s153
    %p164 = scmp.eq.s32.totalorder %s18, 0
    %p165 = por %p163, %p164
    %p166 = scmp.ne.s32.totalorder %s152, %s153
    %p167 = scmp.eq.s32.totalorder %s19, 1
    %p168 = por %p166, %p167
    %p170 = scmp.ne.s32.totalorder %s153, %s169
    %p171 = scmp.eq.s32.totalorder %s19, 0
    %p172 = por %p170, %p171
    %s173 = ssub.s32 %s20, %s32
    %s174 = ssub.s32 %s21, %s28
    %s175 = sor.u32 %s173, %s174
    %p176 = scmp.eq.s32.totalorder %s175, 0
    %s178 = sadd.s32 %s177, 1
    %s179 = scalar_select %p176, %s177, %s178
    %p182 = pneg %p176
    %p183 = scmp.eq.s32.totalorder %s13, 1
    %p184 = por %p182, %p183
    %p185 = scmp.ne.s32.totalorder %s177, %s180
    %p186 = scmp.eq.s32.totalorder %s13, 0
    %p187 = por %p185, %p186
    %p188 = scmp.ne.s32.totalorder %s177, %s180
    %p189 = scmp.eq.s32.totalorder %s18, 1
    %p190 = por %p188, %p189
    %p191 = scmp.ne.s32.totalorder %s180, %s181
    %p192 = scmp.eq.s32.totalorder %s18, 0
    %p193 = por %p191, %p192
    %p194 = scmp.ne.s32.totalorder %s180, %s181
    %p195 = scmp.eq.s32.totalorder %s19, 1
    %p196 = por %p194, %p195
    %p198 = scmp.ne.s32.totalorder %s181, %s197
    %p199 = scmp.eq.s32.totalorder %s19, 0
    %p200 = por %p198, %p199
    %p201 = scmp.le.s32.totalorder 1, %s13
    %p202 = scmp.lt.s32.totalorder %s13, 3
    %p203 = pnand %p201, %p202
    %p204 = pneg %p203
    // Predicated region
    $region9: #{forward.25} parent=5 // pred_check
      _
    $region10: #{forward.25} parent=5 // pred_check_branch
      %206 = sbr.rel (%p203) target = $region12
    $region11: #{forward.25} parent=5 // pred_region
      %s207 = ssub.s32 %s13, 1
      // Predicated region
      $region13: #{forward.25} parent=11 // pred_check
        %p208 = pneg %p46
      $region14: #{forward.25} parent=11 // pred_check_branch
        %210 = sbr.rel (%p208) target = $region16
      $region15: #{forward.25} parent=11 // pred_region
        _
      $region16: #{forward.25} parent=11 // pred_fallthru
        _
      // Predicated region
      $region17: #{forward.25} parent=11 // pred_check
        %p211 = pneg %p67
      $region18: #{forward.25} parent=11 // pred_check_branch
        %213 = sbr.rel (%p211) target = $region20
      $region19: #{forward.25} parent=11 // pred_region
        _
      $region20: #{forward.25} parent=11 // pred_fallthru
        _
      // Predicated region
      $region21: #{forward.25} parent=11 // pred_check
        %p214 = pneg %p88
      $region22: #{forward.25} parent=11 // pred_check_branch
        %216 = sbr.rel (%p214) target = $region24
      $region23: #{forward.25} parent=11 // pred_region
        _
      $region24: #{forward.25} parent=11 // pred_fallthru
        _
      // Predicated region
      $region25: #{forward.25} parent=11 // pred_check
        %p217 = pneg %p109
      $region26: #{forward.25} parent=11 // pred_check_branch
        %219 = sbr.rel (%p217) target = $region28
      $region27: #{forward.25} parent=11 // pred_region
        _
      $region28: #{forward.25} parent=11 // pred_fallthru
        _
    $region12: #{forward.25} parent=5 // pred_fallthru
      _
    %p220 = scmp.lt.s32.totalorder %s13, 2
    // Predicated region
    $region29: #{forward.25} parent=5 // pred_check
      %p221 = pneg %p220
    $region30: #{forward.25} parent=5 // pred_check_branch
      %223 = sbr.rel (%p221) target = $region32
    $region31: #{forward.25} parent=5 // pred_region
      // Predicated region
      $region33: #{forward.25} parent=31 // pred_check
        %p224 = pneg %p131
      $region34: #{forward.25} parent=31 // pred_check_branch
        %226 = sbr.rel (%p224) target = $region36
      $region35: #{forward.25} parent=31 // pred_region
        %s227 = smul.u32 2, %s21
        %p228 = scmp.lt.s32.totalorder %s20, 1
        %s229 = scalar_select %p228, %s20, 1
        %p230 = scmp.lt.s32.totalorder %s227, 1
        %s231 = scalar_select %p230, %s227, 1
        %s232 = smul.addr %s229, 72
        %s233 = sadd.s32 %s231, %s232
        %s234 = smul.addr %s233, 4
        %s235 = scalar_lea.vmem %s4, %s234
        %s236 = smul.u32 2, %s21
      $region36: #{forward.25} parent=31 // pred_fallthru
        _
    $region32: #{forward.25} parent=5 // pred_fallthru
      _
    %p237 = scmp.le.s32.totalorder 1, %s13
    %p238 = scmp.lt.s32.totalorder %s13, 3
    %p239 = pnand %p237, %p238
    %p240 = pneg %p239
    // Predicated region
    $region37: #{forward.25} parent=5 // pred_check
      _
    $region38: #{forward.25} parent=5 // pred_check_branch
      %242 = sbr.rel (%p239) target = $region40
    $region39: #{forward.25} parent=5 // pred_region
      %s243 = ssub.s32 %s13, 1
      %p244 = pneg %p46
      %p245 = pneg %p43
      %p246 = pneg %p67
      %p247 = pneg %p64
      %p248 = pneg %p88
      %p249 = pneg %p85
      %p250 = pneg %p109
      %p251 = pneg %p106
      %s252 = smul.u32 2, %s23
      %p253 = scmp.lt.s32.totalorder %s22, 1
      %s254 = scalar_select %p253, %s22, 1
      %p255 = scmp.lt.s32.totalorder %s252, 1
      %s256 = scalar_select %p255, %s252, 1
      %s257 = smul.addr %s254, 72
      %s258 = sadd.s32 %s256, %s257
      %s259 = smul.addr %s258, 4
      %s260 = scalar_lea.vmem %s4, %s259
      %p261 = pneg %p137
      %p262 = pneg %p134
      %p263 = pneg %p165
      %p264 = pneg %p162
      %s265 = smul.u32 2, %s23
      %p266 = scmp.lt.s32.totalorder %s22, 1
      %s267 = scalar_select %p266, %s22, 1
      %p268 = scmp.lt.s32.totalorder %s265, 1
      %s269 = scalar_select %p268, %s265, 1
      %s270 = smul.addr %s267, 4
      %s271 = sadd.s32 %s269, %s270
      %s272 = smul.addr %s271, 8
      %s273 = scalar_lea.vmem %s5, %s272
      %p274 = pneg %p193
      %p275 = pneg %p190
      %s276 = smul.u32 2, %s23
      %p277 = scmp.lt.s32.totalorder %s22, 1
      %s278 = scalar_select %p277, %s22, 1
      %p279 = scmp.lt.s32.totalorder %s276, 1
      %s280 = scalar_select %p279, %s276, 1
      %s281 = smul.addr %s278, 2
      %s282 = sadd.s32 %s280, %s281
      %s283 = smul.addr %s282, 8
      %s284 = scalar_lea.vmem %s6, %s283
      %s285 = smul.u32 2, %s23
      %p286 = scmp.lt.s32.totalorder %s22, 1
      %s287 = scalar_select %p286, %s22, 1
      %p288 = scmp.lt.s32.totalorder %s285, 1
      %s289 = scalar_select %p288, %s285, 1
      %s290 = smul.addr %s287, 72
      %s291 = sadd.s32 %s289, %s290
      %s292 = smul.addr %s291, 4
      %s293 = scalar_lea.vmem %s4, %s292
      %s294 = smul.u32 2, %s23
      %s295 = smul.u32 2, %s23
      %p296 = scmp.lt.s32.totalorder %s22, 1
      %s297 = scalar_select %p296, %s22, 1
      %p298 = scmp.lt.s32.totalorder %s295, 1
      %s299 = scalar_select %p298, %s295, 1
      %s300 = smul.addr %s297, 4
      %s301 = sadd.s32 %s299, %s300
      %s302 = smul.addr %s301, 8
      %s303 = scalar_lea.vmem %s5, %s302
      %s304 = smul.u32 2, %s23
      %s305 = smul.u32 2, %s23
      %p306 = scmp.lt.s32.totalorder %s22, 1
      %s307 = scalar_select %p306, %s22, 1
      %p308 = scmp.lt.s32.totalorder %s305, 1
      %s309 = scalar_select %p308, %s305, 1
      %s310 = smul.addr %s307, 2
      %s311 = sadd.s32 %s309, %s310
      %s312 = smul.addr %s311, 8
      %s313 = scalar_lea.vmem %s6, %s312
      %s314 = smul.u32 2, %s23
      %v316 = vld [vmem:[%s0] sm:$0xff]
      %v317 = vld [vmem:[%s0 + $0x8] sm:$0xf]
      %v318 = vld [vmem:[%s0 + $0xc] sm:$0xff]
      %v319 = vld [vmem:[%s0 + $0x14] sm:$0xf]
      %v320 = vld [vmem:[%s293] sm:$0xff]
      %v321 = vld [vmem:[%s293 + $0x8] sm:$0xff]
      %v322 = vld [vmem:[%s293 + $0x10] sm:$0xff]
      %v323 = vld [vmem:[%s293 + $0x18] sm:$0xff]
      %v324 = vld [vmem:[%s293 + $0x20] sm:$0xff]
      %v325 = vld [vmem:[%s293 + $0x28] sm:$0xff]
      %v326 = vld [vmem:[%s293 + $0x30] sm:$0xff]
      %v327 = vld [vmem:[%s293 + $0x38] sm:$0xff]
      %v328 = vld [vmem:[%s293 + $0x40] sm:$0xff]
      %v329 = vld [vmem:[%s293 + $0x48] sm:$0xff]
      %v330 = vld [vmem:[%s293 + $0x50] sm:$0xff]
      %v331 = vld [vmem:[%s293 + $0x58] sm:$0xff]
      %v332 = vld [vmem:[%s293 + $0x60] sm:$0xff]
      %v333 = vld [vmem:[%s293 + $0x68] sm:$0xff]
      %v334 = vld [vmem:[%s293 + $0x70] sm:$0xff]
      %v335 = vld [vmem:[%s293 + $0x78] sm:$0xff]
      %v336 = vld [vmem:[%s293 + $0x80] sm:$0xff]
      %v337 = vld [vmem:[%s293 + $0x88] sm:$0xff]
      %v338 = vld [vmem:[%s293 + $0x90] sm:$0xff]
      %v339 = vld [vmem:[%s293 + $0x98] sm:$0xff]
      %v340 = vld [vmem:[%s293 + $0xa0] sm:$0xff]
      %v341 = vld [vmem:[%s293 + $0xa8] sm:$0xff]
      %v342 = vld [vmem:[%s293 + $0xb0] sm:$0xff]
      %v343 = vld [vmem:[%s293 + $0xb8] sm:$0xff]
      %v344 = vld [vmem:[%s293 + $0xc0] sm:$0xff]
      %v345 = vld [vmem:[%s293 + $0xc8] sm:$0xff]
      %v346 = vld [vmem:[%s293 + $0xd0] sm:$0xff]
      %v347 = vld [vmem:[%s293 + $0xd8] sm:$0xff]
      %v348 = vld [vmem:[%s293 + $0xe0] sm:$0xff]
      %v349 = vld [vmem:[%s293 + $0xe8] sm:$0xff]
      %v350 = vld [vmem:[%s293 + $0xf0] sm:$0xff]
      %v351 = vld [vmem:[%s293 + $0xf8] sm:$0xff]
      %v352 = vld [vmem:[%s293 + $0x100] sm:$0xff]
      %v353 = vld [vmem:[%s293 + $0x108] sm:$0xff]
      %v354 = vld [vmem:[%s293 + $0x110] sm:$0xff]
      %v355 = vld [vmem:[%s293 + $0x118] sm:$0xff]
      %v356 = vld [vmem:[%s1] sm:$0xff]
      %v357 = vld [vmem:[%s1 + $0x8] sm:$0xff]
      %359 = vset.pattern.permute.xlu0 0
      %360 = vperm.xlu0 %359, %v356
      %v361 = vpop.permute.xlu0 %360
      %364 = vset.pattern.permute.xlu0 0
      %365 = vperm.xlu0 %364, %v357
      %v366 = vpop.permute.xlu0 %365
      %v372 = vunpack.c.l.b16 %v316
      %v373 = vunpack.c.h.b16 %v316
      %v374 = vunpack.c.l.b16 %v317
      %v375 = vunpack.c.l.b16 %v318
      %v376 = vunpack.c.h.b16 %v318
      %v377 = vunpack.c.l.b16 %v319
      %v378 = vpack.c.b16 %v375, %v372
      %v379 = vpack.c.b16 %v376, %v373
      %v380 = vpack.c.b16 %v377, %v374
      %v419 = vunpack.c.l.b16 %v320
      %v420 = vunpack.c.h.b16 %v320
      %v421 = vunpack.c.l.b16 %v321
      %v422 = vunpack.c.h.b16 %v321
      %v423 = vunpack.c.l.b16 %v322
      %v424 = vunpack.c.h.b16 %v322
      %v425 = vunpack.c.l.b16 %v323
      %v426 = vunpack.c.h.b16 %v323
      %v427 = vunpack.c.l.b16 %v324
      %v428 = vunpack.c.h.b16 %v324
      %v429 = vunpack.c.l.b16 %v325
      %v430 = vunpack.c.h.b16 %v325
      %v431 = vunpack.c.l.b16 %v326
      %v432 = vunpack.c.h.b16 %v326
      %v433 = vunpack.c.l.b16 %v327
      %v434 = vunpack.c.h.b16 %v327
      %v435 = vunpack.c.l.b16 %v328
      %v436 = vunpack.c.h.b16 %v328
      %v437 = vunpack.c.l.b16 %v329
      %v438 = vunpack.c.h.b16 %v329
      %v439 = vunpack.c.l.b16 %v330
      %v440 = vunpack.c.h.b16 %v330
      %v441 = vunpack.c.l.b16 %v331
      %v442 = vunpack.c.h.b16 %v331
      %v443 = vunpack.c.l.b16 %v332
      %v444 = vunpack.c.h.b16 %v332
      %v445 = vunpack.c.l.b16 %v333
      %v446 = vunpack.c.h.b16 %v333
      %v447 = vunpack.c.l.b16 %v334
      %v448 = vunpack.c.h.b16 %v334
      %v449 = vunpack.c.l.b16 %v335
      %v450 = vunpack.c.h.b16 %v335
      %v451 = vunpack.c.l.b16 %v336
      %v452 = vunpack.c.h.b16 %v336
      %v453 = vunpack.c.l.b16 %v337
      %v454 = vunpack.c.h.b16 %v337
      %v455 = vunpack.c.l.b16 %v338
      %v456 = vunpack.c.h.b16 %v338
      %v457 = vunpack.c.l.b16 %v339
      %v458 = vunpack.c.h.b16 %v339
      %v459 = vunpack.c.l.b16 %v340
      %v460 = vunpack.c.h.b16 %v340
      %v461 = vunpack.c.l.b16 %v341
      %v462 = vunpack.c.h.b16 %v341
      %v463 = vunpack.c.l.b16 %v342
      %v464 = vunpack.c.h.b16 %v342
      %v465 = vunpack.c.l.b16 %v343
      %v466 = vunpack.c.h.b16 %v343
      %v467 = vunpack.c.l.b16 %v344
      %v468 = vunpack.c.h.b16 %v344
      %v469 = vunpack.c.l.b16 %v345
      %v470 = vunpack.c.h.b16 %v345
      %v471 = vunpack.c.l.b16 %v346
      %v472 = vunpack.c.h.b16 %v346
      %v473 = vunpack.c.l.b16 %v347
      %v474 = vunpack.c.h.b16 %v347
      %v475 = vunpack.c.l.b16 %v348
      %v476 = vunpack.c.h.b16 %v348
      %v477 = vunpack.c.l.b16 %v349
      %v478 = vunpack.c.h.b16 %v349
      %v479 = vunpack.c.l.b16 %v350
      %v480 = vunpack.c.h.b16 %v350
      %v481 = vunpack.c.l.b16 %v351
      %v482 = vunpack.c.h.b16 %v351
      %v483 = vunpack.c.l.b16 %v352
      %v484 = vunpack.c.h.b16 %v352
      %v485 = vunpack.c.l.b16 %v353
      %v486 = vunpack.c.h.b16 %v353
      %v487 = vunpack.c.l.b16 %v354
      %v488 = vunpack.c.h.b16 %v354
      %v489 = vunpack.c.l.b16 %v355
      %v490 = vunpack.c.h.b16 %v355
      %v491 = vpack.c.b16 %v421, %v419
      %v492 = vpack.c.b16 %v422, %v420
      %v493 = vpack.c.b16 %v425, %v423
      %v494 = vpack.c.b16 %v426, %v424
      %v495 = vpack.c.b16 %v429, %v427
      %v496 = vpack.c.b16 %v430, %v428
      %v497 = vpack.c.b16 %v433, %v431
      %v498 = vpack.c.b16 %v434, %v432
      %v499 = vpack.c.b16 %v437, %v435
      %v500 = vpack.c.b16 %v438, %v436
      %v501 = vpack.c.b16 %v441, %v439
      %v502 = vpack.c.b16 %v442, %v440
      %v503 = vpack.c.b16 %v445, %v443
      %v504 = vpack.c.b16 %v446, %v444
      %v505 = vpack.c.b16 %v449, %v447
      %v506 = vpack.c.b16 %v450, %v448
      %v507 = vpack.c.b16 %v453, %v451
      %v508 = vpack.c.b16 %v454, %v452
      %v509 = vpack.c.b16 %v457, %v455
      %v510 = vpack.c.b16 %v458, %v456
      %v511 = vpack.c.b16 %v461, %v459
      %v512 = vpack.c.b16 %v462, %v460
      %v513 = vpack.c.b16 %v465, %v463
      %v514 = vpack.c.b16 %v466, %v464
      %v515 = vpack.c.b16 %v469, %v467
      %v516 = vpack.c.b16 %v470, %v468
      %v517 = vpack.c.b16 %v473, %v471
      %v518 = vpack.c.b16 %v474, %v472
      %v519 = vpack.c.b16 %v477, %v475
      %v520 = vpack.c.b16 %v478, %v476
      %v521 = vpack.c.b16 %v481, %v479
      %v522 = vpack.c.b16 %v482, %v480
      %v523 = vpack.c.b16 %v485, %v483
      %v524 = vpack.c.b16 %v486, %v484
      %v525 = vpack.c.b16 %v489, %v487
      %v526 = vpack.c.b16 %v490, %v488
      %vm563 = vcmask 261120
      %v565 = vsel %vm563, %v380, 0
      %567 = vmatprep.subr.bf16.mxu0 %v506
      %568 = vmatpush1.bf16.msra.mxu0 %v505
      %569 = vmatprep.subr.bf16.mxu0 %v504
      %570 = vmatpush1.bf16.msra.mxu0 %v503
      %571 = vmatprep.subr.bf16.mxu0 %v502
      %572 = vmatpush1.bf16.msra.mxu0 %v501
      %573 = vmatprep.subr.bf16.mxu0 %v500
      %574 = vmatpush1.bf16.msra.mxu0 %v499
      %575 = vmatprep.subr.bf16.mxu0 %v498
      %576 = vmatpush1.bf16.msra.mxu0 %v497
      %577 = vmatprep.subr.bf16.mxu0 %v496
      %578 = vmatpush1.bf16.msra.mxu0 %v495
      %579 = vmatprep.subr.bf16.mxu0 %v494
      %580 = vmatpush1.bf16.msra.mxu0 %v493
      %581 = vmatprep.subr.bf16.mxu0 %v492
      %582 = vmatpush1.bf16.msra.mxu0 %v491
      %583 = vmatprep.subr.bf16.mxu0 %v522
      %584 = vmatpush2.bf16.msra.mxu0 %v521
      %585 = vmatprep.subr.bf16.mxu0 %v520
      %586 = vmatpush2.bf16.msra.mxu0 %v519
      %587 = vmatprep.subr.bf16.mxu0 %v518
      %588 = vmatpush2.bf16.msra.mxu0 %v517
      %589 = vmatprep.subr.bf16.mxu0 %v516
      %590 = vmatpush2.bf16.msra.mxu0 %v515
      %591 = vmatprep.subr.bf16.mxu0 %v514
      %592 = vmatpush2.bf16.msra.mxu0 %v513
      %593 = vmatprep.subr.bf16.mxu0 %v512
      %594 = vmatpush2.bf16.msra.mxu0 %v511
      %595 = vmatprep.subr.bf16.mxu0 %v510
      %596 = vmatpush2.bf16.msra.mxu0 %v509
      %597 = vmatprep.subr.bf16.mxu0 %v508
      %598 = vmatpush2.bf16.msra.mxu0 %v507
      %599 = vmatprep.mubr.bf16.mxu0 %v379
      %600 = vmatmul.mubr.bf16.gmra.mxu0 %v378
      %v601 = vpop.f32.mrf.mxu0
      %v602 = vadd.f32 %v361, %v601
      %v603 = vpop.f32.mrf.mxu0
      %v604 = vadd.f32 %v361, %v603
      %v605 = vpop.f32.mrf.mxu0
      %v606 = vadd.f32 %v366, %v605
      %v607 = vpop.f32.mrf.mxu0
      %v608 = vadd.f32 %v366, %v607
      %609 = vdwg.mxu0
      %610 = vmatprep.subr.bf16.mxu0 0
      %611 = vmatpush1.bf16.msra.mxu0 0
      %612 = vmatprep.subr.bf16.mxu0 0
      %613 = vmatpush1.bf16.msra.mxu0 0
      %614 = vmatprep.subr.bf16.mxu0 0
      %615 = vmatpush1.bf16.msra.mxu0 0
      %616 = vmatprep.subr.bf16.mxu0 0
      %617 = vmatpush1.bf16.msra.mxu0 0
      %618 = vmatprep.subr.bf16.mxu0 0
      %619 = vmatpush1.bf16.msra.mxu0 0
      %620 = vmatprep.subr.bf16.mxu0 0
      %621 = vmatpush1.bf16.msra.mxu0 0
      %622 = vmatprep.subr.bf16.mxu0 %v526
      %623 = vmatpush1.bf16.msra.mxu0 %v525
      %624 = vmatprep.subr.bf16.mxu0 %v524
      %625 = vmatpush1.bf16.msra.mxu0 %v523
      %626 = vmatprep.subr.bf16.mxu0 0
      %627 = vmatpush2.bf16.msra.mxu0 0
      %628 = vmatprep.subr.bf16.mxu0 0
      %629 = vmatpush2.bf16.msra.mxu0 0
      %630 = vmatprep.subr.bf16.mxu0 0
      %631 = vmatpush2.bf16.msra.mxu0 0
      %632 = vmatprep.subr.bf16.mxu0 0
      %633 = vmatpush2.bf16.msra.mxu0 0
      %634 = vmatprep.subr.bf16.mxu0 0
      %635 = vmatpush2.bf16.msra.mxu0 0
      %636 = vmatprep.subr.bf16.mxu0 0
      %637 = vmatpush2.bf16.msra.mxu0 0
      %638 = vmatprep.subr.bf16.mxu0 0
      %639 = vmatpush2.bf16.msra.mxu0 0
      %640 = vmatprep.subr.bf16.mxu0 0
      %641 = vmatpush2.bf16.msra.mxu0 0
      %642 = vmatprep.mubr.bf16.mxu0 0
      %643 = vmatmul.mubr.bf16.gmra.mxu0 %v565
      %v644 = vpop.f32.mrf.mxu0
      %v645 = vadd.f32 %v602, %v644
      %v646 = vpop.f32.mrf.mxu0
      %v647 = vadd.f32 %v604, %v646
      %v648 = vpop.f32.mrf.mxu0
      %v649 = vadd.f32 %v606, %v648
      %v650 = vpop.f32.mrf.mxu0
      %v651 = vadd.f32 %v608, %v650
      %652 = vdwg.mxu0
      %v653 = vmax.f32 %v645, 0.0
      %v654 = vmax.f32 %v647, 0.0
      %v655 = vmax.f32 %v649, 0.0
      %v656 = vmax.f32 %v651, 0.0
      %657 = vst [vmem:[%s303] sm:$0xff] %v653
      %658 = vst [vmem:[%s303 + $0x8] sm:$0xff] %v654
      %659 = vst [vmem:[%s303 + $0x10] sm:$0xff] %v655
      %660 = vst [vmem:[%s303 + $0x18] sm:$0xff] %v656
      %v661 = vld [vmem:[%s2] sm:$0x3f]
      %v662 = vld [vmem:[%s3] sm:$0x3f]
      %664 = vset.pattern.permute.xlu0 0
      %665 = vperm.xlu0 %664, %v662
      %v666 = vpop.permute.xlu0 %665
      %vm668 = vcmask 130048
      %v670 = vsel %vm668, %v661, 0
      %672 = vmatprep.subr.mxu0 0.0
      %673 = vmatpush1.msra.mxu0 0.0
      %674 = vmatprep.subr.mxu0 0.0
      %675 = vmatpush1.msra.mxu0 0.0
      %676 = vmatprep.subr.mxu0 0.0
      %677 = vmatpush1.msra.mxu0 0.0
      %678 = vmatprep.subr.mxu0 0.0
      %679 = vmatpush1.msra.mxu0 0.0
      %680 = vmatprep.subr.mxu0 0.0
      %681 = vmatpush1.msra.mxu0 0.0
      %682 = vmatprep.subr.mxu0 0.0
      %683 = vmatpush1.msra.mxu0 0.0
      %684 = vmatprep.subr.mxu0 0.0
      %685 = vmatpush1.msra.mxu0 0.0
      %686 = vmatprep.subr.mxu0 0.0
      %687 = vmatpush1.msra.mxu0 0.0
      %688 = vmatprep.subr.mxu0 0.0
      %689 = vmatpush1.msra.mxu0 0.0
      %690 = vmatprep.subr.mxu0 0.0
      %691 = vmatpush1.msra.mxu0 0.0
      %692 = vmatprep.subr.mxu0 0.0
      %693 = vmatpush1.msra.mxu0 0.0
      %694 = vmatprep.subr.mxu0 0.0
      %695 = vmatpush1.msra.mxu0 0.0
      %696 = vmatprep.subr.mxu0 0.0
      %697 = vmatpush1.msra.mxu0 0.0
      %698 = vmatprep.subr.mxu0 0.0
      %699 = vmatpush1.msra.mxu0 0.0
      %700 = vmatprep.subr.mxu0 %v656
      %701 = vmatpush1.msra.mxu0 %v655
      %702 = vmatprep.subr.mxu0 %v654
      %703 = vmatpush1.msra.mxu0 %v653
      %704 = vmatprep.subr.mxu0 0.0
      %705 = vmatpush2.msra.mxu0 0.0
      %706 = vmatprep.subr.mxu0 0.0
      %707 = vmatpush2.msra.mxu0 0.0
      %708 = vmatprep.subr.mxu0 0.0
      %709 = vmatpush2.msra.mxu0 0.0
      %710 = vmatprep.subr.mxu0 0.0
      %711 = vmatpush2.msra.mxu0 0.0
      %712 = vmatprep.subr.mxu0 0.0
      %713 = vmatpush2.msra.mxu0 0.0
      %714 = vmatprep.subr.mxu0 0.0
      %715 = vmatpush2.msra.mxu0 0.0
      %716 = vmatprep.subr.mxu0 0.0
      %717 = vmatpush2.msra.mxu0 0.0
      %718 = vmatprep.subr.mxu0 0.0
      %719 = vmatpush2.msra.mxu0 0.0
      %720 = vmatprep.subr.mxu0 0.0
      %721 = vmatpush2.msra.mxu0 0.0
      %722 = vmatprep.subr.mxu0 0.0
      %723 = vmatpush2.msra.mxu0 0.0
      %724 = vmatprep.subr.mxu0 0.0
      %725 = vmatpush2.msra.mxu0 0.0
      %726 = vmatprep.subr.mxu0 0.0
      %727 = vmatpush2.msra.mxu0 0.0
      %728 = vmatprep.subr.mxu0 0.0
      %729 = vmatpush2.msra.mxu0 0.0
      %730 = vmatprep.subr.mxu0 0.0
      %731 = vmatpush2.msra.mxu0 0.0
      %732 = vmatprep.subr.mxu0 0.0
      %733 = vmatpush2.msra.mxu0 0.0
      %734 = vmatprep.subr.mxu0 0.0
      %735 = vmatpush2.msra.mxu0 0.0
      %736 = vmatprep.mubr.f32.mxu0 0.0
      %737 = vmatmul.mubr.f32.gmra.mxu0 %v670
      %v738 = vpop.f32.mrf.mxu0
      %v739 = vadd.f32 %v666, %v738
      %v740 = vpop.f32.mrf.mxu0
      %v741 = vadd.f32 %v666, %v740
      %742 = vdwg.mxu0
      %743 = vst [vmem:[%s313] sm:$0x3f] %v739
      %744 = vst [vmem:[%s313 + $0x8] sm:$0x3f] %v741
      %s745 = smul.u32 2, %s23
      %p746 = scmp.lt.s32.totalorder %s22, 1
      %s747 = scalar_select %p746, %s22, 1
      %p748 = scmp.lt.s32.totalorder %s745, 1
      %s749 = scalar_select %p748, %s745, 1
      %s750 = smul.addr %s747, 4
      %s751 = sadd.s32 %s749, %s750
      %s752 = smul.addr %s751, 8
      %s753 = scalar_lea.vmem %s5, %s752
      %s754 = smul.u32 2, %s23
      %p755 = scmp.lt.s32.totalorder %s22, 1
      %s756 = scalar_select %p755, %s22, 1
      %p757 = scmp.lt.s32.totalorder %s754, 1
      %s758 = scalar_select %p757, %s754, 1
      %s759 = smul.addr %s756, 2
      %s760 = sadd.s32 %s758, %s759
      %s761 = smul.addr %s760, 8
      %s762 = scalar_lea.vmem %s6, %s761
      // Predicated region
      $region41: #{forward.25} parent=39 // pred_check
        %p763 = pneg %p162
      $region42: #{forward.25} parent=39 // pred_check_branch
        %765 = sbr.rel (%p763) target = $region44
      $region43: #{forward.25} parent=39 // pred_region
        %s766 = smul.u32 2, %s23
      $region44: #{forward.25} parent=39 // pred_fallthru
        _
      // Predicated region
      $region45: #{forward.25} parent=39 // pred_check
        %p767 = pneg %p190
      $region46: #{forward.25} parent=39 // pred_check_branch
        %769 = sbr.rel (%p767) target = $region48
      $region47: #{forward.25} parent=39 // pred_region
        %s770 = smul.u32 2, %s23
      $region48: #{forward.25} parent=39 // pred_fallthru
        _
    $region40: #{forward.25} parent=5 // pred_fallthru
      _
    %p771 = scmp.le.s32.totalorder 2, %s13
    // Predicated region
    $region49: #{forward.25} parent=5 // pred_check
      %p772 = pneg %p771
    $region50: #{forward.25} parent=5 // pred_check_branch
      %774 = sbr.rel (%p772) target = $region52
    $region51: #{forward.25} parent=5 // pred_region
      %s775 = ssub.s32 %s13, 2
      // Predicated region
      $region53: #{forward.25} parent=51 // pred_check
        %p776 = pneg %p168
      $region54: #{forward.25} parent=51 // pred_check_branch
        %778 = sbr.rel (%p776) target = $region56
      $region55: #{forward.25} parent=51 // pred_region
        %s779 = smul.u32 2, %s25
        %p780 = scmp.lt.s32.totalorder %s24, 1
        %s781 = scalar_select %p780, %s24, 1
        %p782 = scmp.lt.s32.totalorder %s779, 1
        %s783 = scalar_select %p782, %s779, 1
        %s784 = smul.addr %s781, 4
        %s785 = sadd.s32 %s783, %s784
        %s786 = smul.addr %s785, 8
        %s787 = scalar_lea.vmem %s5, %s786
      $region56: #{forward.25} parent=51 // pred_fallthru
        _
      // Predicated region
      $region57: #{forward.25} parent=51 // pred_check
        %p788 = pneg %p196
      $region58: #{forward.25} parent=51 // pred_check_branch
        %790 = sbr.rel (%p788) target = $region60
      $region59: #{forward.25} parent=51 // pred_region
        %s791 = smul.u32 2, %s25
        %p792 = scmp.lt.s32.totalorder %s24, 1
        %s793 = scalar_select %p792, %s24, 1
        %p794 = scmp.lt.s32.totalorder %s791, 1
        %s795 = scalar_select %p794, %s791, 1
        %s796 = smul.addr %s793, 2
        %s797 = sadd.s32 %s795, %s796
        %s798 = smul.addr %s797, 8
        %s799 = scalar_lea.vmem %s6, %s798
      $region60: #{forward.25} parent=51 // pred_fallthru
        _
    $region52: #{forward.25} parent=5 // pred_fallthru
      _
  $region6: #{forward.25} parent=0 // loop_footer
    %s17 = sadd.s32 1, %s13
  $region7: #{forward.25} parent=0 // loop_footer_branch
    %12 = sbr.rel target = $region3
  $region8: #{forward.25} parent=0 // loop_exit
    _

// kernel: forward.26
$region0: #{forward.26}
  #allocation0 [shape = 'u32[]', space=smem, size = 0x4, offset = 0x4, fixed_abs, tag = 'smem constant byte address 0x4 - core index']
  #allocation1 [shape = 'u32[144,128]{1,0:T(1,128)}', space=vmem, size = 0x12000, scoped, tag = 'internal scratch']
  %s0 = inlined_call_operand.vmem [shape: f32[2,6,256], index: 0, kind: input, shape index: {}]
  %s1 = inlined_call_operand.vmem [shape: f32[2,16,256], index: 1, kind: input, shape index: {}]
  %s2 = inlined_call_operand.vmem [shape: f32[2,6,16], index: 2, kind: output, shape index: {0}]
  %s3 = inlined_call_operand.vmem [shape: f32[2,6,1], index: 3, kind: output, shape index: {1}]
  %4 = xla_tuple %s2, %s3
  %s5 = sld [smem:[#allocation0]]
  $region49: #{forward.26} parent=0
    _
  %s7 = ssub.s32 1, %s5
  %s8 = scalar_select 0, %s7, %s5
  loop: start=0, step=1, limit=4
  $region2: #{forward.26} parent=0 // loop_pre_header
    _
  $region3: #{forward.26} parent=0 // loop_header
    %s10 = sphi 0, %s14
    %p11 = scmp.ge.s32.totalorder %s10, 4
    %s20 = sphi 0, %s22
    %s23 = sphi 0, %s20
    %s24 = sphi 0, %s23
    %s40 = sphi 0, %s24
    %s46 = sphi 0, %s48
    %s49 = sphi 0, %s46
    %s50 = sphi 0, %s49
    %s66 = sphi 0, %s50
    %s72 = sphi 0, %s74
    %s75 = sphi 0, %s72
    %s76 = sphi 0, %s75
    %s92 = sphi 0, %s76
    %s98 = sphi 0, %s100
    %s101 = sphi 0, %s98
    %s102 = sphi 0, %s101
    %s118 = sphi 0, %s102
  $region4: #{forward.26} parent=0 // loop_header_branch
    %13 = sbr.rel (%p11) target = $region8
  $region5: #{forward.26} parent=0 // loop_body
    %s15 = ssub.s32 %s10, 1
    %s16 = ssub.s32 %s10, 2
    %s17 = sadd.s32 %s10, 1
    %s18 = ssub.s32 %s10, %s17
    %p19 = scmp.eq.s32.totalorder %s18, 0
    %s21 = sadd.s32 %s20, 1
    %s22 = scalar_select %p19, %s20, %s21
    %p25 = pneg %p19
    %p26 = scmp.eq.s32.totalorder %s10, 1
    %p27 = por %p25, %p26
    %p28 = scmp.ne.s32.totalorder %s20, %s23
    %p29 = scmp.eq.s32.totalorder %s10, 0
    %p30 = por %p28, %p29
    %p31 = scmp.ne.s32.totalorder %s20, %s23
    %p32 = scmp.eq.s32.totalorder %s15, 1
    %p33 = por %p31, %p32
    %p34 = scmp.ne.s32.totalorder %s23, %s24
    %p35 = scmp.eq.s32.totalorder %s15, 0
    %p36 = por %p34, %p35
    %p37 = scmp.ne.s32.totalorder %s23, %s24
    %p38 = scmp.eq.s32.totalorder %s16, 1
    %p39 = por %p37, %p38
    %p41 = scmp.ne.s32.totalorder %s24, %s40
    %p42 = scmp.eq.s32.totalorder %s16, 0
    %p43 = por %p41, %p42
    %s44 = ssub.s32 %s10, %s17
    %p45 = scmp.eq.s32.totalorder %s44, 0
    %s47 = sadd.s32 %s46, 1
    %s48 = scalar_select %p45, %s46, %s47
    %p51 = pneg %p45
    %p52 = scmp.eq.s32.totalorder %s10, 1
    %p53 = por %p51, %p52
    %p54 = scmp.ne.s32.totalorder %s46, %s49
    %p55 = scmp.eq.s32.totalorder %s10, 0
    %p56 = por %p54, %p55
    %p57 = scmp.ne.s32.totalorder %s46, %s49
    %p58 = scmp.eq.s32.totalorder %s15, 1
    %p59 = por %p57, %p58
    %p60 = scmp.ne.s32.totalorder %s49, %s50
    %p61 = scmp.eq.s32.totalorder %s15, 0
    %p62 = por %p60, %p61
    %p63 = scmp.ne.s32.totalorder %s49, %s50
    %p64 = scmp.eq.s32.totalorder %s16, 1
    %p65 = por %p63, %p64
    %p67 = scmp.ne.s32.totalorder %s50, %s66
    %p68 = scmp.eq.s32.totalorder %s16, 0
    %p69 = por %p67, %p68
    %s70 = ssub.s32 %s10, %s17
    %p71 = scmp.eq.s32.totalorder %s70, 0
    %s73 = sadd.s32 %s72, 1
    %s74 = scalar_select %p71, %s72, %s73
    %p77 = pneg %p71
    %p78 = scmp.eq.s32.totalorder %s10, 1
    %p79 = por %p77, %p78
    %p80 = scmp.ne.s32.totalorder %s72, %s75
    %p81 = scmp.eq.s32.totalorder %s10, 0
    %p82 = por %p80, %p81
    %p83 = scmp.ne.s32.totalorder %s72, %s75
    %p84 = scmp.eq.s32.totalorder %s15, 1
    %p85 = por %p83, %p84
    %p86 = scmp.ne.s32.totalorder %s75, %s76
    %p87 = scmp.eq.s32.totalorder %s15, 0
    %p88 = por %p86, %p87
    %p89 = scmp.ne.s32.totalorder %s75, %s76
    %p90 = scmp.eq.s32.totalorder %s16, 1
    %p91 = por %p89, %p90
    %p93 = scmp.ne.s32.totalorder %s76, %s92
    %p94 = scmp.eq.s32.totalorder %s16, 0
    %p95 = por %p93, %p94
    %s96 = ssub.s32 %s10, %s17
    %p97 = scmp.eq.s32.totalorder %s96, 0
    %s99 = sadd.s32 %s98, 1
    %s100 = scalar_select %p97, %s98, %s99
    %p103 = pneg %p97
    %p104 = scmp.eq.s32.totalorder %s10, 1
    %p105 = por %p103, %p104
    %p106 = scmp.ne.s32.totalorder %s98, %s101
    %p107 = scmp.eq.s32.totalorder %s10, 0
    %p108 = por %p106, %p107
    %p109 = scmp.ne.s32.totalorder %s98, %s101
    %p110 = scmp.eq.s32.totalorder %s15, 1
    %p111 = por %p109, %p110
    %p112 = scmp.ne.s32.totalorder %s101, %s102
    %p113 = scmp.eq.s32.totalorder %s15, 0
    %p114 = por %p112, %p113
    %p115 = scmp.ne.s32.totalorder %s101, %s102
    %p116 = scmp.eq.s32.totalorder %s16, 1
    %p117 = por %p115, %p116
    %p119 = scmp.ne.s32.totalorder %s102, %s118
    %p120 = scmp.eq.s32.totalorder %s16, 0
    %p121 = por %p119, %p120
    %p122 = scmp.le.s32.totalorder 1, %s10
    %p123 = scmp.lt.s32.totalorder %s10, 3
    %p124 = pnand %p122, %p123
    %p125 = pneg %p124
    // Predicated region
    $region9: #{forward.26} parent=5 // pred_check
      _
    $region10: #{forward.26} parent=5 // pred_check_branch
      %127 = sbr.rel (%p124) target = $region12
    $region11: #{forward.26} parent=5 // pred_region
      %s128 = ssub.s32 %s10, 1
    $region12: #{forward.26} parent=5 // pred_fallthru
      _
    %p129 = scmp.lt.s32.totalorder %s10, 2
    // Predicated region
    $region13: #{forward.26} parent=5 // pred_check
      %p130 = pneg %p129
    $region14: #{forward.26} parent=5 // pred_check_branch
      %132 = sbr.rel (%p130) target = $region16
    $region15: #{forward.26} parent=5 // pred_region
      // Predicated region
      $region17: #{forward.26} parent=15 // pred_check
        %p133 = pneg %p30
      $region18: #{forward.26} parent=15 // pred_check_branch
        %135 = sbr.rel (%p133) target = $region20
      $region19: #{forward.26} parent=15 // pred_region
        %p136 = scmp.lt.s32.totalorder %s10, 1
        %s137 = scalar_select %p136, %s10, 1
        %s138 = smul.addr %s137, 2
        %s139 = smul.addr %s138, 8
        %s140 = scalar_lea.vmem %s0, %s139
      $region20: #{forward.26} parent=15 // pred_fallthru
        _
      // Predicated region
      $region21: #{forward.26} parent=15 // pred_check
        %p141 = pneg %p56
      $region22: #{forward.26} parent=15 // pred_check_branch
        %143 = sbr.rel (%p141) target = $region24
      $region23: #{forward.26} parent=15 // pred_region
        %p144 = scmp.lt.s32.totalorder %s10, 1
        %s145 = scalar_select %p144, %s10, 1
        %s146 = smul.addr %s145, 4
        %s147 = smul.addr %s146, 8
        %s148 = scalar_lea.vmem %s1, %s147
      $region24: #{forward.26} parent=15 // pred_fallthru
        _
    $region16: #{forward.26} parent=5 // pred_fallthru
      _
    %p149 = scmp.le.s32.totalorder 1, %s10
    %p150 = scmp.lt.s32.totalorder %s10, 3
    %p151 = pnand %p149, %p150
    %p152 = pneg %p151
    // Predicated region
    $region25: #{forward.26} parent=5 // pred_check
      _
    $region26: #{forward.26} parent=5 // pred_check_branch
      %154 = sbr.rel (%p151) target = $region28
    $region27: #{forward.26} parent=5 // pred_region
      %s155 = ssub.s32 %s10, 1
      %p156 = scmp.lt.s32.totalorder %s15, 1
      %s157 = scalar_select %p156, %s15, 1
      %s158 = smul.addr %s157, 2
      %s159 = smul.addr %s158, 8
      %s160 = scalar_lea.vmem %s0, %s159
      %p161 = pneg %p36
      %p162 = pneg %p33
      %p163 = scmp.lt.s32.totalorder %s15, 1
      %s164 = scalar_select %p163, %s15, 1
      %s165 = smul.addr %s164, 4
      %s166 = smul.addr %s165, 8
      %s167 = scalar_lea.vmem %s1, %s166
      %p168 = pneg %p62
      %p169 = pneg %p59
      %p170 = pneg %p88
      %p171 = pneg %p85
      %p172 = scmp.lt.s32.totalorder %s15, 1
      %s173 = scalar_select %p172, %s15, 1
      %s174 = smul.addr %s173, 8
      %s175 = scalar_lea.vmem %s2, %s174
      %p176 = pneg %p114
      %p177 = pneg %p111
      %p178 = scmp.lt.s32.totalorder %s15, 1
      %s179 = scalar_select %p178, %s15, 1
      %s180 = smul.addr %s179, 8
      %s181 = scalar_lea.vmem %s3, %s180
      %p182 = scmp.lt.s32.totalorder %s15, 1
      %s183 = scalar_select %p182, %s15, 1
      %s184 = smul.addr %s183, 2
      %s185 = smul.addr %s184, 8
      %s186 = scalar_lea.vmem %s0, %s185
      %p187 = scmp.lt.s32.totalorder %s15, 1
      %s188 = scalar_select %p187, %s15, 1
      %s189 = smul.addr %s188, 4
      %s190 = smul.addr %s189, 8
      %s191 = scalar_lea.vmem %s1, %s190
      %p192 = scmp.lt.s32.totalorder %s15, 1
      %s193 = scalar_select %p192, %s15, 1
      %s194 = smul.addr %s193, 8
      %s195 = scalar_lea.vmem %s2, %s194
      %p196 = scmp.lt.s32.totalorder %s15, 1
      %s197 = scalar_select %p196, %s15, 1
      %s198 = smul.addr %s197, 8
      %s199 = scalar_lea.vmem %s3, %s198
      %v200 = vld [vmem:[%s186] sm:$0x3f]
      %v201 = vld [vmem:[%s186 + $0x8] sm:$0x3f]
      %v202 = vld [vmem:[%s191] sm:$0xff]
      %v203 = vld [vmem:[%s191 + $0x8] sm:$0xff]
      %v204 = vld [vmem:[%s191 + $0x10] sm:$0xff]
      %v205 = vld [vmem:[%s191 + $0x18] sm:$0xff]
      %v206 = vlaneseq
      %v207 = vshrl.u32 %v206, 7
      %vm208 = vcmask 1045504
      %v209 = vsel %vm208, %v200, -inf
      %v210 = vrot.slane %v209, 4
      %v211 = vmax.f32 %v209, %v210
      %v212 = vrot.slane %v211, 2
      %v213 = vmax.f32 %v211, %v212
      %v214 = vrot.slane %v213, 1
      %v215 = vmax.f32 %v213, %v214
      %v216 = vsel %vm208, %v201, -inf
      %v217 = vrot.slane %v216, 4
      %v218 = vmax.f32 %v216, %v217
      %v219 = vrot.slane %v218, 2
      %v220 = vmax.f32 %v218, %v219
      %v221 = vrot.slane %v220, 1
      %v222 = vmax.f32 %v220, %v221
      %vm223 = vcmp.ge.f32.partialorder %v200, %v215
      %vm224 = vcmp.ge.f32.partialorder %v201, %v222
      %v225 = vsel %vm223, %v207, 6
      %v226 = vsel %vm224, %v207, 6
      %v227 = vsel %vm208, %v225, 2147483647
      %v228 = vrot.slane %v227, 4
      %vm229 = vcmp.lt.s32.totalorder %v227, %v228
      %v230 = vsel %vm229, %v227, %v228
      %v231 = vrot.slane %v230, 2
      %vm232 = vcmp.lt.s32.totalorder %v230, %v231
      %v233 = vsel %vm232, %v230, %v231
      %v234 = vrot.slane %v233, 1
      %vm235 = vcmp.lt.s32.totalorder %v233, %v234
      %v236 = vsel %vm235, %v233, %v234
      %v237 = vsel %vm208, %v226, 2147483647
      %v238 = vrot.slane %v237, 4
      %vm239 = vcmp.lt.s32.totalorder %v237, %v238
      %v240 = vsel %vm239, %v237, %v238
      %v241 = vrot.slane %v240, 2
      %vm242 = vcmp.lt.s32.totalorder %v240, %v241
      %v243 = vsel %vm242, %v240, %v241
      %v244 = vrot.slane %v243, 1
      %vm245 = vcmp.lt.s32.totalorder %v243, %v244
      %v246 = vsel %vm245, %v243, %v244
      %vm247 = vcmp.eq.s32.totalorder %v207, %v236
      %vm248 = vcmp.eq.s32.totalorder %v207, %v246
      %v249 = vsel %vm247, 1, 0
      %v250 = vsel %vm248, 1, 0
      %v251 = vcvt.s32.f32 %v249
      %v252 = vcvt.s32.f32 %v250
      %253 = vmatprep.subr.mxu0 0.0
      %254 = vmatpush1.xpose.msra.mxu0 0.0
      %255 = vmatprep.subr.mxu0 0.0
      %256 = vmatpush1.xpose.msra.mxu0 0.0
      %257 = vmatprep.subr.mxu0 0.0
      %258 = vmatpush1.xpose.msra.mxu0 0.0
      %259 = vmatprep.subr.mxu0 0.0
      %260 = vmatpush1.xpose.msra.mxu0 0.0
      %261 = vmatprep.subr.mxu0 0.0
      %262 = vmatpush1.xpose.msra.mxu0 0.0
      %263 = vmatprep.subr.mxu0 0.0
      %264 = vmatpush1.xpose.msra.mxu0 0.0
      %265 = vmatprep.subr.mxu0 0.0
      %266 = vmatpush1.xpose.msra.mxu0 0.0
      %267 = vmatprep.subr.mxu0 0.0
      %268 = vmatpush1.xpose.msra.mxu0 0.0
      %269 = vmatprep.subr.mxu0 0.0
      %270 = vmatpush1.xpose.msra.mxu0 0.0
      %271 = vmatprep.subr.mxu0 0.0
      %272 = vmatpush1.xpose.msra.mxu0 0.0
      %273 = vmatprep.subr.mxu0 0.0
      %274 = vmatpush1.xpose.msra.mxu0 0.0
      %275 = vmatprep.subr.mxu0 0.0
      %276 = vmatpush1.xpose.msra.mxu0 0.0
      %277 = vmatprep.subr.mxu0 0.0
      %278 = vmatpush1.xpose.msra.mxu0 0.0
      %279 = vmatprep.subr.mxu0 0.0
      %280 = vmatpush1.xpose.msra.mxu0 0.0
      %281 = vmatprep.subr.mxu0 %v205
      %282 = vmatpush1.xpose.msra.mxu0 %v204
      %283 = vmatprep.subr.mxu0 %v203
      %284 = vmatpush1.xpose.msra.mxu0 %v202
      %285 = vmatprep.subr.mxu0 0.0
      %286 = vmatpush2.xpose.msra.mxu0 0.0
      %287 = vmatprep.subr.mxu0 0.0
      %288 = vmatpush2.xpose.msra.mxu0 0.0
      %289 = vmatprep.subr.mxu0 0.0
      %290 = vmatpush2.xpose.msra.mxu0 0.0
      %291 = vmatprep.subr.mxu0 0.0
      %292 = vmatpush2.xpose.msra.mxu0 0.0
      %293 = vmatprep.subr.mxu0 0.0
      %294 = vmatpush2.xpose.msra.mxu0 0.0
      %295 = vmatprep.subr.mxu0 0.0
      %296 = vmatpush2.xpose.msra.mxu0 0.0
      %297 = vmatprep.subr.mxu0 0.0
      %298 = vmatpush2.xpose.msra.mxu0 0.0
      %299 = vmatprep.subr.mxu0 0.0
      %300 = vmatpush2.xpose.msra.mxu0 0.0
      %301 = vmatprep.subr.mxu0 0.0
      %302 = vmatpush2.xpose.msra.mxu0 0.0
      %303 = vmatprep.subr.mxu0 0.0
      %304 = vmatpush2.xpose.msra.mxu0 0.0
      %305 = vmatprep.subr.mxu0 0.0
      %306 = vmatpush2.xpose.msra.mxu0 0.0
      %307 = vmatprep.subr.mxu0 0.0
      %308 = vmatpush2.xpose.msra.mxu0 0.0
      %309 = vmatprep.subr.mxu0 0.0
      %310 = vmatpush2.xpose.msra.mxu0 0.0
      %311 = vmatprep.subr.mxu0 0.0
      %312 = vmatpush2.xpose.msra.mxu0 0.0
      %313 = vmatprep.subr.mxu0 0.0
      %314 = vmatpush2.xpose.msra.mxu0 0.0
      %315 = vmatprep.subr.mxu0 0.0
      %316 = vmatpush2.xpose.msra.mxu0 0.0
      %317 = vmatprep.mubr.f32.mxu0 %v252
      %318 = vmatmul.mubr.f32.gmra.mxu0 %v251
      %v319 = vpop.f32.mrf.mxu0
      %v320 = vadd.f32 0.0, %v319
      %v321 = vpop.f32.mrf.mxu0
      %322 = vdwg.mxu0
      %vm323 = vcmask 128000
      %324 = vst.msk [vmem:[%s195] sm:$0x3f] %vm323, %v320
      %v325 = vsel %vm208, %v251, 0.0
      %v326 = vsel %vm208, %v252, 0.0
      %v327 = vadd.f32 %v325, %v326
      %328 = vadd.xlane.f32.xlu0 %v327
      %v329 = vpop.xlane.xlu0 %328
      %vm330 = vcmask 5120
      %331 = vst.msk [vmem:[%s199] sm:$0x3f] %vm330, %v329
      %p332 = scmp.lt.s32.totalorder %s15, 1
      %s333 = scalar_select %p332, %s15, 1
      %s334 = smul.addr %s333, 8
      %s335 = scalar_lea.vmem %s2, %s334
      %p336 = scmp.lt.s32.totalorder %s15, 1
      %s337 = scalar_select %p336, %s15, 1
      %s338 = smul.addr %s337, 8
      %s339 = scalar_lea.vmem %s3, %s338
      // Predicated region
      $region29: #{forward.26} parent=27 // pred_check
        %p340 = pneg %p85
      $region30: #{forward.26} parent=27 // pred_check_branch
        %342 = sbr.rel (%p340) target = $region32
      $region31: #{forward.26} parent=27 // pred_region
        _
      $region32: #{forward.26} parent=27 // pred_fallthru
        _
      // Predicated region
      $region33: #{forward.26} parent=27 // pred_check
        %p343 = pneg %p111
      $region34: #{forward.26} parent=27 // pred_check_branch
        %345 = sbr.rel (%p343) target = $region36
      $region35: #{forward.26} parent=27 // pred_region
        _
      $region36: #{forward.26} parent=27 // pred_fallthru
        _
    $region28: #{forward.26} parent=5 // pred_fallthru
      _
    %p346 = scmp.le.s32.totalorder 2, %s10
    // Predicated region
    $region37: #{forward.26} parent=5 // pred_check
      %p347 = pneg %p346
    $region38: #{forward.26} parent=5 // pred_check_branch
      %349 = sbr.rel (%p347) target = $region40
    $region39: #{forward.26} parent=5 // pred_region
      %s350 = ssub.s32 %s10, 2
      // Predicated region
      $region41: #{forward.26} parent=39 // pred_check
        %p351 = pneg %p91
      $region42: #{forward.26} parent=39 // pred_check_branch
        %353 = sbr.rel (%p351) target = $region44
      $region43: #{forward.26} parent=39 // pred_region
        %p354 = scmp.lt.s32.totalorder %s16, 1
        %s355 = scalar_select %p354, %s16, 1
        %s356 = smul.addr %s355, 8
        %s357 = scalar_lea.vmem %s2, %s356
      $region44: #{forward.26} parent=39 // pred_fallthru
        _
      // Predicated region
      $region45: #{forward.26} parent=39 // pred_check
        %p358 = pneg %p117
      $region46: #{forward.26} parent=39 // pred_check_branch
        %360 = sbr.rel (%p358) target = $region48
      $region47: #{forward.26} parent=39 // pred_region
        %p361 = scmp.lt.s32.totalorder %s16, 1
        %s362 = scalar_select %p361, %s16, 1
        %s363 = smul.addr %s362, 8
        %s364 = scalar_lea.vmem %s3, %s363
      $region48: #{forward.26} parent=39 // pred_fallthru
        _
    $region40: #{forward.26} parent=5 // pred_fallthru
      _
  $region6: #{forward.26} parent=0 // loop_footer
    %s14 = sadd.s32 1, %s10
  $region7: #{forward.26} parent=0 // loop_footer_branch
    %9 = sbr.rel target = $region3
  $region8: #{forward.26} parent=0 // loop_exit
    _

// kernel: forward.27
$region0: #{forward.27}
  #allocation0 [shape = 'u32[]', space=smem, size = 0x4, offset = 0x4, fixed_abs, tag = 'smem constant byte address 0x4 - core index']
  #allocation1 [shape = 'u32[144,128]{1,0:T(1,128)}', space=vmem, size = 0x12000, scoped, tag = 'internal scratch']
  %s0 = inlined_call_operand.vmem [shape: f32[2,16,256], index: 0, kind: input, shape index: {}]
  %s1 = inlined_call_operand.vmem [shape: f32[2,6,16], index: 1, kind: input, shape index: {}]
  %s2 = inlined_call_operand.vmem [shape: f32[2,6,256], index: 2, kind: output, shape index: {0}]
  %s3 = inlined_call_operand.vmem [shape: f32[2,6,256], index: 3, kind: output, shape index: {1}]
  %s4 = inlined_call_operand.vmem [shape: f32[2,1,256], index: 4, kind: output, shape index: {2}]
  %s5 = inlined_call_operand.vmem [shape: f32[2,16,256], index: 5, kind: output, shape index: {3}]
  %6 = xla_tuple %s2, %s3, %s4, %s5
  %s7 = sld [smem:[#allocation0]]
  $region65: #{forward.27} parent=0
    _
  %s9 = ssub.s32 1, %s7
  %s10 = scalar_select 0, %s9, %s7
  loop: start=0, step=1, limit=4
  $region2: #{forward.27} parent=0 // loop_pre_header
    _
  $region3: #{forward.27} parent=0 // loop_header
    %s12 = sphi 0, %s16
    %p13 = scmp.ge.s32.totalorder %s12, 4
    %s22 = sphi 0, %s24
    %s25 = sphi 0, %s22
    %s26 = sphi 0, %s25
    %s42 = sphi 0, %s26
    %s48 = sphi 0, %s50
    %s51 = sphi 0, %s48
    %s52 = sphi 0, %s51
    %s68 = sphi 0, %s52
    %s74 = sphi 0, %s76
    %s77 = sphi 0, %s74
    %s78 = sphi 0, %s77
    %s94 = sphi 0, %s78
    %s100 = sphi 0, %s102
    %s103 = sphi 0, %s100
    %s104 = sphi 0, %s103
    %s120 = sphi 0, %s104
    %s126 = sphi 0, %s128
    %s129 = sphi 0, %s126
    %s130 = sphi 0, %s129
    %s146 = sphi 0, %s130
    %s152 = sphi 0, %s154
    %s155 = sphi 0, %s152
    %s156 = sphi 0, %s155
    %s172 = sphi 0, %s156
  $region4: #{forward.27} parent=0 // loop_header_branch
    %15 = sbr.rel (%p13) target = $region8
  $region5: #{forward.27} parent=0 // loop_body
    %s17 = ssub.s32 %s12, 1
    %s18 = ssub.s32 %s12, 2
    %s19 = sadd.s32 %s12, 1
    %s20 = ssub.s32 %s12, %s19
    %p21 = scmp.eq.s32.totalorder %s20, 0
    %s23 = sadd.s32 %s22, 1
    %s24 = scalar_select %p21, %s22, %s23
    %p27 = pneg %p21
    %p28 = scmp.eq.s32.totalorder %s12, 1
    %p29 = por %p27, %p28
    %p30 = scmp.ne.s32.totalorder %s22, %s25
    %p31 = scmp.eq.s32.totalorder %s12, 0
    %p32 = por %p30, %p31
    %p33 = scmp.ne.s32.totalorder %s22, %s25
    %p34 = scmp.eq.s32.totalorder %s17, 1
    %p35 = por %p33, %p34
    %p36 = scmp.ne.s32.totalorder %s25, %s26
    %p37 = scmp.eq.s32.totalorder %s17, 0
    %p38 = por %p36, %p37
    %p39 = scmp.ne.s32.totalorder %s25, %s26
    %p40 = scmp.eq.s32.totalorder %s18, 1
    %p41 = por %p39, %p40
    %p43 = scmp.ne.s32.totalorder %s26, %s42
    %p44 = scmp.eq.s32.totalorder %s18, 0
    %p45 = por %p43, %p44
    %s46 = ssub.s32 %s12, %s19
    %p47 = scmp.eq.s32.totalorder %s46, 0
    %s49 = sadd.s32 %s48, 1
    %s50 = scalar_select %p47, %s48, %s49
    %p53 = pneg %p47
    %p54 = scmp.eq.s32.totalorder %s12, 1
    %p55 = por %p53, %p54
    %p56 = scmp.ne.s32.totalorder %s48, %s51
    %p57 = scmp.eq.s32.totalorder %s12, 0
    %p58 = por %p56, %p57
    %p59 = scmp.ne.s32.totalorder %s48, %s51
    %p60 = scmp.eq.s32.totalorder %s17, 1
    %p61 = por %p59, %p60
    %p62 = scmp.ne.s32.totalorder %s51, %s52
    %p63 = scmp.eq.s32.totalorder %s17, 0
    %p64 = por %p62, %p63
    %p65 = scmp.ne.s32.totalorder %s51, %s52
    %p66 = scmp.eq.s32.totalorder %s18, 1
    %p67 = por %p65, %p66
    %p69 = scmp.ne.s32.totalorder %s52, %s68
    %p70 = scmp.eq.s32.totalorder %s18, 0
    %p71 = por %p69, %p70
    %s72 = ssub.s32 %s12, %s19
    %p73 = scmp.eq.s32.totalorder %s72, 0
    %s75 = sadd.s32 %s74, 1
    %s76 = scalar_select %p73, %s74, %s75
    %p79 = pneg %p73
    %p80 = scmp.eq.s32.totalorder %s12, 1
    %p81 = por %p79, %p80
    %p82 = scmp.ne.s32.totalorder %s74, %s77
    %p83 = scmp.eq.s32.totalorder %s12, 0
    %p84 = por %p82, %p83
    %p85 = scmp.ne.s32.totalorder %s74, %s77
    %p86 = scmp.eq.s32.totalorder %s17, 1
    %p87 = por %p85, %p86
    %p88 = scmp.ne.s32.totalorder %s77, %s78
    %p89 = scmp.eq.s32.totalorder %s17, 0
    %p90 = por %p88, %p89
    %p91 = scmp.ne.s32.totalorder %s77, %s78
    %p92 = scmp.eq.s32.totalorder %s18, 1
    %p93 = por %p91, %p92
    %p95 = scmp.ne.s32.totalorder %s78, %s94
    %p96 = scmp.eq.s32.totalorder %s18, 0
    %p97 = por %p95, %p96
    %s98 = ssub.s32 %s12, %s19
    %p99 = scmp.eq.s32.totalorder %s98, 0
    %s101 = sadd.s32 %s100, 1
    %s102 = scalar_select %p99, %s100, %s101
    %p105 = pneg %p99
    %p106 = scmp.eq.s32.totalorder %s12, 1
    %p107 = por %p105, %p106
    %p108 = scmp.ne.s32.totalorder %s100, %s103
    %p109 = scmp.eq.s32.totalorder %s12, 0
    %p110 = por %p108, %p109
    %p111 = scmp.ne.s32.totalorder %s100, %s103
    %p112 = scmp.eq.s32.totalorder %s17, 1
    %p113 = por %p111, %p112
    %p114 = scmp.ne.s32.totalorder %s103, %s104
    %p115 = scmp.eq.s32.totalorder %s17, 0
    %p116 = por %p114, %p115
    %p117 = scmp.ne.s32.totalorder %s103, %s104
    %p118 = scmp.eq.s32.totalorder %s18, 1
    %p119 = por %p117, %p118
    %p121 = scmp.ne.s32.totalorder %s104, %s120
    %p122 = scmp.eq.s32.totalorder %s18, 0
    %p123 = por %p121, %p122
    %s124 = ssub.s32 %s12, %s19
    %p125 = scmp.eq.s32.totalorder %s124, 0
    %s127 = sadd.s32 %s126, 1
    %s128 = scalar_select %p125, %s126, %s127
    %p131 = pneg %p125
    %p132 = scmp.eq.s32.totalorder %s12, 1
    %p133 = por %p131, %p132
    %p134 = scmp.ne.s32.totalorder %s126, %s129
    %p135 = scmp.eq.s32.totalorder %s12, 0
    %p136 = por %p134, %p135
    %p137 = scmp.ne.s32.totalorder %s126, %s129
    %p138 = scmp.eq.s32.totalorder %s17, 1
    %p139 = por %p137, %p138
    %p140 = scmp.ne.s32.totalorder %s129, %s130
    %p141 = scmp.eq.s32.totalorder %s17, 0
    %p142 = por %p140, %p141
    %p143 = scmp.ne.s32.totalorder %s129, %s130
    %p144 = scmp.eq.s32.totalorder %s18, 1
    %p145 = por %p143, %p144
    %p147 = scmp.ne.s32.totalorder %s130, %s146
    %p148 = scmp.eq.s32.totalorder %s18, 0
    %p149 = por %p147, %p148
    %s150 = ssub.s32 %s12, %s19
    %p151 = scmp.eq.s32.totalorder %s150, 0
    %s153 = sadd.s32 %s152, 1
    %s154 = scalar_select %p151, %s152, %s153
    %p157 = pneg %p151
    %p158 = scmp.eq.s32.totalorder %s12, 1
    %p159 = por %p157, %p158
    %p160 = scmp.ne.s32.totalorder %s152, %s155
    %p161 = scmp.eq.s32.totalorder %s12, 0
    %p162 = por %p160, %p161
    %p163 = scmp.ne.s32.totalorder %s152, %s155
    %p164 = scmp.eq.s32.totalorder %s17, 1
    %p165 = por %p163, %p164
    %p166 = scmp.ne.s32.totalorder %s155, %s156
    %p167 = scmp.eq.s32.totalorder %s17, 0
    %p168 = por %p166, %p167
    %p169 = scmp.ne.s32.totalorder %s155, %s156
    %p170 = scmp.eq.s32.totalorder %s18, 1
    %p171 = por %p169, %p170
    %p173 = scmp.ne.s32.totalorder %s156, %s172
    %p174 = scmp.eq.s32.totalorder %s18, 0
    %p175 = por %p173, %p174
    %p176 = scmp.le.s32.totalorder 1, %s12
    %p177 = scmp.lt.s32.totalorder %s12, 3
    %p178 = pnand %p176, %p177
    %p179 = pneg %p178
    // Predicated region
    $region9: #{forward.27} parent=5 // pred_check
      _
    $region10: #{forward.27} parent=5 // pred_check_branch
      %181 = sbr.rel (%p178) target = $region12
    $region11: #{forward.27} parent=5 // pred_region
      %s182 = ssub.s32 %s12, 1
    $region12: #{forward.27} parent=5 // pred_fallthru
      _
    %p183 = scmp.lt.s32.totalorder %s12, 2
    // Predicated region
    $region13: #{forward.27} parent=5 // pred_check
      %p184 = pneg %p183
    $region14: #{forward.27} parent=5 // pred_check_branch
      %186 = sbr.rel (%p184) target = $region16
    $region15: #{forward.27} parent=5 // pred_region
      // Predicated region
      $region17: #{forward.27} parent=15 // pred_check
        %p187 = pneg %p32
      $region18: #{forward.27} parent=15 // pred_check_branch
        %189 = sbr.rel (%p187) target = $region20
      $region19: #{forward.27} parent=15 // pred_region
        %p190 = scmp.lt.s32.totalorder %s12, 1
        %s191 = scalar_select %p190, %s12, 1
        %s192 = smul.addr %s191, 4
        %s193 = smul.addr %s192, 8
        %s194 = scalar_lea.vmem %s0, %s193
      $region20: #{forward.27} parent=15 // pred_fallthru
        _
      // Predicated region
      $region21: #{forward.27} parent=15 // pred_check
        %p195 = pneg %p58
      $region22: #{forward.27} parent=15 // pred_check_branch
        %197 = sbr.rel (%p195) target = $region24
      $region23: #{forward.27} parent=15 // pred_region
        %p198 = scmp.lt.s32.totalorder %s12, 1
        %s199 = scalar_select %p198, %s12, 1
        %s200 = smul.addr %s199, 8
        %s201 = scalar_lea.vmem %s1, %s200
      $region24: #{forward.27} parent=15 // pred_fallthru
        _
    $region16: #{forward.27} parent=5 // pred_fallthru
      _
    %p202 = scmp.le.s32.totalorder 1, %s12
    %p203 = scmp.lt.s32.totalorder %s12, 3
    %p204 = pnand %p202, %p203
    %p205 = pneg %p204
    // Predicated region
    $region25: #{forward.27} parent=5 // pred_check
      _
    $region26: #{forward.27} parent=5 // pred_check_branch
      %207 = sbr.rel (%p204) target = $region28
    $region27: #{forward.27} parent=5 // pred_region
      %s208 = ssub.s32 %s12, 1
      %p209 = scmp.lt.s32.totalorder %s17, 1
      %s210 = scalar_select %p209, %s17, 1
      %s211 = smul.addr %s210, 4
      %s212 = smul.addr %s211, 8
      %s213 = scalar_lea.vmem %s0, %s212
      %p214 = pneg %p38
      %p215 = pneg %p35
      %p216 = scmp.lt.s32.totalorder %s17, 1
      %s217 = scalar_select %p216, %s17, 1
      %s218 = smul.addr %s217, 8
      %s219 = scalar_lea.vmem %s1, %s218
      %p220 = pneg %p64
      %p221 = pneg %p61
      %p222 = pneg %p90
      %p223 = pneg %p87
      %p224 = scmp.lt.s32.totalorder %s17, 1
      %s225 = scalar_select %p224, %s17, 1
      %s226 = smul.addr %s225, 2
      %s227 = smul.addr %s226, 8
      %s228 = scalar_lea.vmem %s2, %s227
      %p229 = pneg %p116
      %p230 = pneg %p113
      %p231 = scmp.lt.s32.totalorder %s17, 1
      %s232 = scalar_select %p231, %s17, 1
      %s233 = smul.addr %s232, 2
      %s234 = smul.addr %s233, 8
      %s235 = scalar_lea.vmem %s3, %s234
      %p236 = pneg %p142
      %p237 = pneg %p139
      %p238 = scmp.lt.s32.totalorder %s17, 1
      %s239 = scalar_select %p238, %s17, 1
      %s240 = smul.addr %s239, 2
      %s241 = scalar_lea.vmem %s4, %s240
      %p242 = pneg %p168
      %p243 = pneg %p165
      %p244 = scmp.lt.s32.totalorder %s17, 1
      %s245 = scalar_select %p244, %s17, 1
      %s246 = smul.addr %s245, 4
      %s247 = smul.addr %s246, 8
      %s248 = scalar_lea.vmem %s5, %s247
      %p249 = scmp.lt.s32.totalorder %s17, 1
      %s250 = scalar_select %p249, %s17, 1
      %s251 = smul.addr %s250, 4
      %s252 = smul.addr %s251, 8
      %s253 = scalar_lea.vmem %s0, %s252
      %p254 = scmp.lt.s32.totalorder %s17, 1
      %s255 = scalar_select %p254, %s17, 1
      %s256 = smul.addr %s255, 8
      %s257 = scalar_lea.vmem %s1, %s256
      %p258 = scmp.lt.s32.totalorder %s17, 1
      %s259 = scalar_select %p258, %s17, 1
      %s260 = smul.addr %s259, 2
      %s261 = smul.addr %s260, 8
      %s262 = scalar_lea.vmem %s2, %s261
      %p263 = scmp.lt.s32.totalorder %s17, 1
      %s264 = scalar_select %p263, %s17, 1
      %s265 = smul.addr %s264, 2
      %s266 = smul.addr %s265, 8
      %s267 = scalar_lea.vmem %s3, %s266
      %p268 = scmp.lt.s32.totalorder %s17, 1
      %s269 = scalar_select %p268, %s17, 1
      %s270 = smul.addr %s269, 2
      %s271 = scalar_lea.vmem %s4, %s270
      %p272 = scmp.lt.s32.totalorder %s17, 1
      %s273 = scalar_select %p272, %s17, 1
      %s274 = smul.addr %s273, 4
      %s275 = smul.addr %s274, 8
      %s276 = scalar_lea.vmem %s5, %s275
      %v277 = vld [vmem:[%s253] sm:$0xff]
      %v278 = vld [vmem:[%s253 + $0x8] sm:$0xff]
      %v279 = vld [vmem:[%s253 + $0x10] sm:$0xff]
      %v280 = vld [vmem:[%s253 + $0x18] sm:$0xff]
      %v281 = vld [vmem:[%s257] sm:$0x3f]
      %v282 = vmul.f32 %v277, %v277
      %v283 = vmul.f32 %v278, %v278
      %v284 = vmul.f32 %v279, %v279
      %v285 = vmul.f32 %v280, %v280
      %v286 = vadd.f32 %v282, %v284
      %v287 = vrot.slane %v286, 4
      %v288 = vadd.f32 %v286, %v287
      %v289 = vrot.slane %v288, 2
      %v290 = vadd.f32 %v288, %v289
      %v291 = vrot.slane %v290, 1
      %v292 = vadd.f32 %v290, %v291
      %v293 = vadd.f32 %v283, %v285
      %v294 = vrot.slane %v293, 4
      %v295 = vadd.f32 %v293, %v294
      %v296 = vrot.slane %v295, 2
      %v297 = vadd.f32 %v295, %v296
      %v298 = vrot.slane %v297, 1
      %v299 = vadd.f32 %v297, %v298
      %v300 = vmax.f32 %v292, 1e-24
      %v301 = vmax.f32 %v299, 1e-24
      %v302 = vrsqrt.pop %v300
      %v303 = vrsqrt.pop %v301
      %v304 = vmul.f32 %v277, %v302
      %v305 = vmul.f32 %v278, %v303
      %v306 = vmul.f32 %v279, %v302
      %v307 = vmul.f32 %v280, %v303
      %v308 = vmul.f32 %v281, %v281
      %vm309 = vcmask 128000
      %v310 = vsel %vm309, %v308, 0.0
      %311 = vadd.xlane.f32.xlu0 %v310
      %v312 = vpop.xlane.xlu0 %311
      %v313 = vmax.f32 %v312, 1e-24
      %v314 = vrsqrt.pop %v313
      %v315 = vmul.f32 %v281, %v314
      %vm316 = vcmask 130048
      %v318 = vsel %vm316, %v315, 0
      %320 = vmatprep.subr.mxu0 0.0
      %321 = vmatpush1.msra.mxu0 0.0
      %322 = vmatprep.subr.mxu0 0.0
      %323 = vmatpush1.msra.mxu0 0.0
      %324 = vmatprep.subr.mxu0 0.0
      %325 = vmatpush1.msra.mxu0 0.0
      %326 = vmatprep.subr.mxu0 0.0
      %327 = vmatpush1.msra.mxu0 0.0
      %328 = vmatprep.subr.mxu0 0.0
      %329 = vmatpush1.msra.mxu0 0.0
      %330 = vmatprep.subr.mxu0 0.0
      %331 = vmatpush1.msra.mxu0 0.0
      %332 = vmatprep.subr.mxu0 0.0
      %333 = vmatpush1.msra.mxu0 0.0
      %334 = vmatprep.subr.mxu0 0.0
      %335 = vmatpush1.msra.mxu0 0.0
      %336 = vmatprep.subr.mxu0 0.0
      %337 = vmatpush1.msra.mxu0 0.0
      %338 = vmatprep.subr.mxu0 0.0
      %339 = vmatpush1.msra.mxu0 0.0
      %340 = vmatprep.subr.mxu0 0.0
      %341 = vmatpush1.msra.mxu0 0.0
      %342 = vmatprep.subr.mxu0 0.0
      %343 = vmatpush1.msra.mxu0 0.0
      %344 = vmatprep.subr.mxu0 0.0
      %345 = vmatpush1.msra.mxu0 0.0
      %346 = vmatprep.subr.mxu0 0.0
      %347 = vmatpush1.msra.mxu0 0.0
      %348 = vmatprep.subr.mxu0 %v307
      %349 = vmatpush1.msra.mxu0 %v306
      %350 = vmatprep.subr.mxu0 %v305
      %351 = vmatpush1.msra.mxu0 %v304
      %352 = vmatprep.subr.mxu0 0.0
      %353 = vmatpush2.msra.mxu0 0.0
      %354 = vmatprep.subr.mxu0 0.0
      %355 = vmatpush2.msra.mxu0 0.0
      %356 = vmatprep.subr.mxu0 0.0
      %357 = vmatpush2.msra.mxu0 0.0
      %358 = vmatprep.subr.mxu0 0.0
      %359 = vmatpush2.msra.mxu0 0.0
      %360 = vmatprep.subr.mxu0 0.0
      %361 = vmatpush2.msra.mxu0 0.0
      %362 = vmatprep.subr.mxu0 0.0
      %363 = vmatpush2.msra.mxu0 0.0
      %364 = vmatprep.subr.mxu0 0.0
      %365 = vmatpush2.msra.mxu0 0.0
      %366 = vmatprep.subr.mxu0 0.0
      %367 = vmatpush2.msra.mxu0 0.0
      %368 = vmatprep.subr.mxu0 0.0
      %369 = vmatpush2.msra.mxu0 0.0
      %370 = vmatprep.subr.mxu0 0.0
      %371 = vmatpush2.msra.mxu0 0.0
      %372 = vmatprep.subr.mxu0 0.0
      %373 = vmatpush2.msra.mxu0 0.0
      %374 = vmatprep.subr.mxu0 0.0
      %375 = vmatpush2.msra.mxu0 0.0
      %376 = vmatprep.subr.mxu0 0.0
      %377 = vmatpush2.msra.mxu0 0.0
      %378 = vmatprep.subr.mxu0 0.0
      %379 = vmatpush2.msra.mxu0 0.0
      %380 = vmatprep.subr.mxu0 0.0
      %381 = vmatpush2.msra.mxu0 0.0
      %382 = vmatprep.subr.mxu0 0.0
      %383 = vmatpush2.msra.mxu0 0.0
      %384 = vmatprep.mubr.f32.mxu0 0.0
      %385 = vmatmul.mubr.f32.gmra.mxu0 %v318
      %v386 = vpop.f32.mrf.mxu0
      %v387 = vadd.f32 0.0, %v386
      %v388 = vpop.f32.mrf.mxu0
      %v389 = vadd.f32 0.0, %v388
      %390 = vdwg.mxu0
      %391 = vst [vmem:[%s262] sm:$0x3f] %v387
      %392 = vst [vmem:[%s262 + $0x8] sm:$0x3f] %v389
      %vm393 = vcmask 1045504
      %v394 = vsel %vm393, %v387, -inf
      %v395 = vrot.slane %v394, 4
      %v396 = vmax.f32 %v394, %v395
      %v397 = vrot.slane %v396, 2
      %v398 = vmax.f32 %v396, %v397
      %v399 = vrot.slane %v398, 1
      %v400 = vmax.f32 %v398, %v399
      %v401 = vsel %vm393, %v389, -inf
      %v402 = vrot.slane %v401, 4
      %v403 = vmax.f32 %v401, %v402
      %v404 = vrot.slane %v403, 2
      %v405 = vmax.f32 %v403, %v404
      %v406 = vrot.slane %v405, 1
      %v407 = vmax.f32 %v405, %v406
      %v408 = vsub.f32 %v387, %v400
      %v409 = vsub.f32 %v389, %v407
      %v410 = vmul.f32 %v408, 1.442695
      %v411 = vpow.pop %v410
      %v412 = vmul.f32 %v409, 1.442695
      %v413 = vpow.pop %v412
      %v414 = vsel %vm393, %v411, 0.0
      %v415 = vrot.slane %v414, 4
      %v416 = vadd.f32 %v414, %v415
      %v417 = vrot.slane %v416, 2
      %v418 = vadd.f32 %v416, %v417
      %v419 = vrot.slane %v418, 1
      %v420 = vadd.f32 %v418, %v419
      %v421 = vsel %vm393, %v413, 0.0
      %v422 = vrot.slane %v421, 4
      %v423 = vadd.f32 %v421, %v422
      %v424 = vrot.slane %v423, 2
      %v425 = vadd.f32 %v423, %v424
      %v426 = vrot.slane %v425, 1
      %v427 = vadd.f32 %v425, %v426
      %v428 = vrcp.pop %v420
      %v429 = vrcp.pop %v427
      %v430 = vmul.f32 %v411, %v428
      %v431 = vmul.f32 %v413, %v429
      %432 = vst [vmem:[%s267] sm:$0x3f] %v430
      %433 = vst [vmem:[%s267 + $0x8] sm:$0x3f] %v431
      %v434 = vsel %vm393, %v430, -inf
      %v435 = vrot.slane %v434, 4
      %v436 = vmax.f32 %v434, %v435
      %v437 = vrot.slane %v436, 2
      %v438 = vmax.f32 %v436, %v437
      %v439 = vrot.slane %v438, 1
      %v440 = vmax.f32 %v438, %v439
      %v441 = vsel %vm393, %v431, -inf
      %v442 = vrot.slane %v441, 4
      %v443 = vmax.f32 %v441, %v442
      %v444 = vrot.slane %v443, 2
      %v445 = vmax.f32 %v443, %v444
      %v446 = vrot.slane %v445, 1
      %v447 = vmax.f32 %v445, %v446
      %v450 = vcombine.low %v440, %v447
      %v452 = vunpack.c.l.s4 1966171168
      %v453 = vunpack.c.0.s8 %v452
      %v454 = vlaneseq
      %v455 = vshrl.u32 %v454, 7
      %v456 = vsub.s32 %v453, %v455
      %v457 = vrot.slane %v450, %v456
      %v459 = vunpack.c.l.s4 1966171168
      %v460 = vunpack.c.0.s8 %v459
      %v461 = vlaneseq
      %v462 = vshrl.u32 %v461, 7
      %v463 = vsub.s32 %v460, %v462
      %v464 = vrot.slane %v457, %v463
      %v466 = vlaneseq
      %vm467 = vcmp.ge.s32.totalorder %v466, 0
      %vm468 = vcmp.lt.s32.totalorder %v466, 256
      %vm469 = vmand %vm467, %vm468
      %470 = vst.msk [vmem:[%s271] sm:$0x3] %vm469, %v464
      %v471 = vadd.f32 %v277, %v440
      %v472 = vadd.f32 %v278, %v447
      %v473 = vadd.f32 %v279, %v440
      %v474 = vadd.f32 %v280, %v447
      %v475 = vmul.f32 %v471, 0.5
      %v476 = vmul.f32 %v472, 0.5
      %v477 = vmul.f32 %v473, 0.5
      %v478 = vmul.f32 %v474, 0.5
      %479 = vst [vmem:[%s276] sm:$0xff] %v475
      %480 = vst [vmem:[%s276 + $0x8] sm:$0xff] %v476
      %481 = vst [vmem:[%s276 + $0x10] sm:$0xff] %v477
      %482 = vst [vmem:[%s276 + $0x18] sm:$0xff] %v478
      %p483 = scmp.lt.s32.totalorder %s17, 1
      %s484 = scalar_select %p483, %s17, 1
      %s485 = smul.addr %s484, 2
      %s486 = smul.addr %s485, 8
      %s487 = scalar_lea.vmem %s2, %s486
      %p488 = scmp.lt.s32.totalorder %s17, 1
      %s489 = scalar_select %p488, %s17, 1
      %s490 = smul.addr %s489, 2
      %s491 = smul.addr %s490, 8
      %s492 = scalar_lea.vmem %s3, %s491
      %p493 = scmp.lt.s32.totalorder %s17, 1
      %s494 = scalar_select %p493, %s17, 1
      %s495 = smul.addr %s494, 2
      %s496 = scalar_lea.vmem %s4, %s495
      %p497 = scmp.lt.s32.totalorder %s17, 1
      %s498 = scalar_select %p497, %s17, 1
      %s499 = smul.addr %s498, 4
      %s500 = smul.addr %s499, 8
      %s501 = scalar_lea.vmem %s5, %s500
      // Predicated region
      $region29: #{forward.27} parent=27 // pred_check
        %p502 = pneg %p87
      $region30: #{forward.27} parent=27 // pred_check_branch
        %504 = sbr.rel (%p502) target = $region32
      $region31: #{forward.27} parent=27 // pred_region
        _
      $region32: #{forward.27} parent=27 // pred_fallthru
        _
      // Predicated region
      $region33: #{forward.27} parent=27 // pred_check
        %p505 = pneg %p113
      $region34: #{forward.27} parent=27 // pred_check_branch
        %507 = sbr.rel (%p505) target = $region36
      $region35: #{forward.27} parent=27 // pred_region
        _
      $region36: #{forward.27} parent=27 // pred_fallthru
        _
      // Predicated region
      $region37: #{forward.27} parent=27 // pred_check
        %p508 = pneg %p139
      $region38: #{forward.27} parent=27 // pred_check_branch
        %510 = sbr.rel (%p508) target = $region40
      $region39: #{forward.27} parent=27 // pred_region
        _
      $region40: #{forward.27} parent=27 // pred_fallthru
        _
      // Predicated region
      $region41: #{forward.27} parent=27 // pred_check
        %p511 = pneg %p165
      $region42: #{forward.27} parent=27 // pred_check_branch
        %513 = sbr.rel (%p511) target = $region44
      $region43: #{forward.27} parent=27 // pred_region
        _
      $region44: #{forward.27} parent=27 // pred_fallthru
        _
    $region28: #{forward.27} parent=5 // pred_fallthru
      _
    %p514 = scmp.le.s32.totalorder 2, %s12
    // Predicated region
    $region45: #{forward.27} parent=5 // pred_check
      %p515 = pneg %p514
    $region46: #{forward.27} parent=5 // pred_check_branch
      %517 = sbr.rel (%p515) target = $region48
    $region47: #{forward.27} parent=5 // pred_region
      %s518 = ssub.s32 %s12, 2
      // Predicated region
      $region49: #{forward.27} parent=47 // pred_check
        %p519 = pneg %p93
      $region50: #{forward.27} parent=47 // pred_check_branch
        %521 = sbr.rel (%p519) target = $region52
      $region51: #{forward.27} parent=47 // pred_region
        %p522 = scmp.lt.s32.totalorder %s18, 1
        %s523 = scalar_select %p522, %s18, 1
        %s524 = smul.addr %s523, 2
        %s525 = smul.addr %s524, 8
        %s526 = scalar_lea.vmem %s2, %s525
      $region52: #{forward.27} parent=47 // pred_fallthru
        _
      // Predicated region
      $region53: #{forward.27} parent=47 // pred_check
        %p527 = pneg %p119
      $region54: #{forward.27} parent=47 // pred_check_branch
        %529 = sbr.rel (%p527) target = $region56
      $region55: #{forward.27} parent=47 // pred_region
        %p530 = scmp.lt.s32.totalorder %s18, 1
        %s531 = scalar_select %p530, %s18, 1
        %s532 = smul.addr %s531, 2
        %s533 = smul.addr %s532, 8
        %s534 = scalar_lea.vmem %s3, %s533
      $region56: #{forward.27} parent=47 // pred_fallthru
        _
      // Predicated region
      $region57: #{forward.27} parent=47 // pred_check
        %p535 = pneg %p145
      $region58: #{forward.27} parent=47 // pred_check_branch
        %537 = sbr.rel (%p535) target = $region60
      $region59: #{forward.27} parent=47 // pred_region
        %p538 = scmp.lt.s32.totalorder %s18, 1
        %s539 = scalar_select %p538, %s18, 1
        %s540 = smul.addr %s539, 2
        %s541 = scalar_lea.vmem %s4, %s540
      $region60: #{forward.27} parent=47 // pred_fallthru
        _
      // Predicated region
      $region61: #{forward.27} parent=47 // pred_check
        %p542 = pneg %p171
      $region62: #{forward.27} parent=47 // pred_check_branch
        %544 = sbr.rel (%p542) target = $region64
      $region63: #{forward.27} parent=47 // pred_region
        %p545 = scmp.lt.s32.totalorder %s18, 1
        %s546 = scalar_select %p545, %s18, 1
        %s547 = smul.addr %s546, 4
        %s548 = smul.addr %s547, 8
        %s549 = scalar_lea.vmem %s5, %s548
      $region64: #{forward.27} parent=47 // pred_fallthru
        _
    $region48: #{forward.27} parent=5 // pred_fallthru
      _
  $region6: #{forward.27} parent=0 // loop_footer
    %s16 = sadd.s32 1, %s12
  $region7: #{forward.27} parent=0 // loop_footer_branch
    %11 = sbr.rel target = $region3
  $region8: #{forward.27} parent=0 // loop_exit
    _

</llo_original>
